<compile_context>
chip_gen: v5e
topology: v5e:2x2
jax: 0.10.0
libtpu: 0.0.40
codegen_flags: <defaults>
</compile_context>

<pallas_src>
import functools

import numpy as np
import jax
import jax.numpy as jnp
from jax.experimental import pallas as pl
from jax.experimental.pallas import tpu as pltpu


# ---------------------------------------------------------------------------------
# Fused forward kernel: one grid step processes `tb` images.
#
# Global row layout (second-minor / sublane axis):
#   input   x2d : row i*32 + h   = image i, input row h        lane = w*4  + c (c: 3->4 pad)
#   conv1   a1  : row i*32 + h   = conv1 output row h          lane = pw*6 + co (84 used)
#   pool1   p1  : row i*16 + r   = pooled conv1 row r          (garbage rows r in [14,16) unused)
#   conv2   a2  : row i*16 + h2  = conv2 output row h2         lane = pw2*16 + co2 (80 used)
#   pool2   p2  : row i*8  + r   = pooled conv2 row r          (garbage rows r in [5,8) unused)
# Rows that mix adjacent images ("garbage") are computed but never consumed.
# ---------------------------------------------------------------------------------
def _fused_forward_kernel(x_ref, t1_ref, b1_ref, t2_ref, b2_ref,
                          wf1_ref, bf1_ref, wf2_ref, bf2_ref, wf3_ref, bf3_ref,
                          o_ref, a1_ref, p1_ref, a2_ref, p2_ref, *, tb):
    f32 = jnp.float32
    m1 = tb * 32 - 4     # conv1 rows computed
    n1 = tb * 16 - 2     # rows after conv1 H-pool
    m2 = tb * 16 - 6     # conv2 rows computed
    n2 = tb * 8 - 3      # rows after conv2 H-pool

    # ---- conv1: 5 block-Toeplitz matmuls; even|odd W-columns fused into a 256-lane RHS ----
    acc = jnp.dot(x_ref[pl.ds(0, m1), :], t1_ref[0], preferred_element_type=f32)
    for dh in range(1, 5):
        acc = acc + jnp.dot(x_ref[pl.ds(dh, m1), :], t1_ref[dh], preferred_element_type=f32)
    # W-pool = lane-half max, + bias + ReLU; H-pool = max of two stride-2 sublane reads.
    a1_ref[...] = jnp.maximum(jnp.maximum(acc[:, :128], acc[:, 128:]) + b1_ref[...], 0.0)
    p1_ref[...] = jnp.maximum(a1_ref[pl.ds(0, n1, 2), :], a1_ref[pl.ds(1, n1, 2), :])

    # ---- conv2: same scheme ------------------------------------------------------------
    acc = jnp.dot(p1_ref[pl.ds(0, m2), :], t2_ref[0], preferred_element_type=f32)
    for dh in range(1, 5):
        acc = acc + jnp.dot(p1_ref[pl.ds(dh, m2), :], t2_ref[dh], preferred_element_type=f32)
    a2_ref[...] = jnp.maximum(jnp.maximum(acc[:, :128], acc[:, 128:]) + b2_ref[...], 0.0)
    p2_ref[...] = jnp.maximum(a2_ref[pl.ds(0, n2, 2), :], a2_ref[pl.ds(1, n2, 2), :])

    # ---- fc1: 5 matmuls with M = tb; stride-8 reads gather pooled row r of every image.
    #      Torch's x.view(-1, 400) NCHW-flatten permutation is folded into wf1's packing. ----
    h = jnp.dot(p2_ref[pl.ds(0, tb, 8), :], wf1_ref[0], preferred_element_type=f32)
    for r in range(1, 5):
        h = h + jnp.dot(p2_ref[pl.ds(r, tb, 8), :], wf1_ref[r], preferred_element_type=f32)
    h = jnp.maximum(h + bf1_ref[...], 0.0)
    # TODO(synk): nn.Dropout(0.25) is identity in eval/inference mode; train-mode masking not implemented.

    # ---- fc2 -----------------------------------------------------------------------------
    h = jnp.maximum(jnp.dot(h, wf2_ref[...], preferred_element_type=f32) + bf2_ref[...], 0.0)
    # TODO(synk): nn.Dropout(0.5) is identity in eval/inference mode.

    # ---- fc3 + log_softmax over 128 lanes (padded logit lanes carry a -1e30 bias) ---------
    logits = jnp.dot(h, wf3_ref[...], preferred_element_type=f32) + bf3_ref[...]
    z = logits - jnp.max(logits, axis=-1, keepdims=True)
    z = z - jnp.log(jnp.sum(jnp.exp(z), axis=-1, keepdims=True))
    o_ref[...] = z.astype(o_ref.dtype)                       # (tb, 128) dense store


# ---------------------------------------------------------------------------------
# Parameters in the original PyTorch layouts.
# ---------------------------------------------------------------------------------
def init_params(key, num_classes=10):
    ks = jax.random.split(key, 10)
    s = 0.1
    return {
        "conv1_w": jax.random.normal(ks[0], (6, 3, 5, 5), jnp.float32) * s,
        "conv1_b": jax.random.normal(ks[1], (6,), jnp.float32) * s,
        "conv2_w": jax.random.normal(ks[2], (16, 6, 5, 5), jnp.float32) * s,
        "conv2_b": jax.random.normal(ks[3], (16,), jnp.float32) * s,
        "fc1_w": jax.random.normal(ks[4], (120, 400), jnp.float32) * s,
        "fc1_b": jax.random.normal(ks[5], (120,), jnp.float32) * s,
        "fc2_w": jax.random.normal(ks[6], (84, 120), jnp.float32) * s,
        "fc2_b": jax.random.normal(ks[7], (84,), jnp.float32) * s,
        "fc3_w": jax.random.normal(ks[8], (num_classes, 84), jnp.float32) * s,
        "fc3_b": jax.random.normal(ks[9], (num_classes,), jnp.float32) * s,
    }


# ---------------------------------------------------------------------------------
# One-time weight packing (outside the jitted forward).
# ---------------------------------------------------------------------------------
def pack_params(params, num_classes=10):
    w1 = np.asarray(params["conv1_w"], np.float32)   # (6, 3, 5, 5)  = (co, ci, kh, kw)
    b1 = np.asarray(params["conv1_b"], np.float32)
    w2 = np.asarray(params["conv2_w"], np.float32)   # (16, 6, 5, 5)
    b2 = np.asarray(params["conv2_b"], np.float32)
    f1 = np.asarray(params["fc1_w"], np.float32)     # (120, 400)
    f2 = np.asarray(params["fc2_w"], np.float32)     # (84, 120)
    f3 = np.asarray(params["fc3_w"], np.float32)     # (num_classes, 84)

    # conv1 Toeplitz (one per kernel row).  K lane = w_in*4 + ci ; N lane = parity*128 + pw*6 + co.
    t1 = np.zeros((5, 128, 256), np.float32)
    for dh in range(5):
        for pw in range(14):
            for dw in range(5):
                for ci in range(3):
                    t1[dh, (2 * pw + dw) * 4 + ci, pw * 6:(pw + 1) * 6] = w1[:, ci, dh, dw]
                    t1[dh, (2 * pw + 1 + dw) * 4 + ci, 128 + pw * 6:128 + (pw + 1) * 6] = w1[:, ci, dh, dw]
    b1r = np.zeros((1, 128), np.float32)
    b1r[0, :84] = np.tile(b1, 14)

    # conv2 Toeplitz.  K lane = pw1*6 + c1 (conv1 layout) ; N lane = parity*128 + pw2*16 + co2.
    t2 = np.zeros((5, 128, 256), np.float32)
    for dh in range(5):
        for pw in range(5):
            for dw in range(5):
                for ci in range(6):
                    t2[dh, (2 * pw + dw) * 6 + ci, pw * 16:(pw + 1) * 16] = w2[:, ci, dh, dw]
                    t2[dh, (2 * pw + 1 + dw) * 6 + ci, 128 + pw * 16:128 + (pw + 1) * 16] = w2[:, ci, dh, dw]
    b2r = np.zeros((1, 128), np.float32)
    b2r[0, :80] = np.tile(b2, 5)

    # fc1: fold torch's x.view(-1, 16*5*5) (c, h, w) flatten order; one (128,128) slab per pooled row.
    wf1 = np.zeros((5, 128, 128), np.float32)
    for h in range(5):
        for w in range(5):
            for c in range(16):
                wf1[h, w * 16 + c, :120] = f1[:, c * 25 + h * 5 + w]
    bf1 = np.zeros((1, 128), np.float32)
    bf1[0, :120] = np.asarray(params["fc1_b"], np.float32)

    wf2 = np.zeros((128, 128), np.float32)
    wf2[:120, :84] = f2.T
    bf2 = np.zeros((1, 128), np.float32)
    bf2[0, :84] = np.asarray(params["fc2_b"], np.float32)

    wf3 = np.zeros((128, 128), np.float32)
    wf3[:84, :num_classes] = f3.T
    bf3 = np.full((1, 128), -1e30, np.float32)       # padded logit lanes -> ~zero probability
    bf3[0, :num_classes] = np.asarray(params["fc3_b"], np.float32)

    packed = dict(t1=t1, b1=b1r, t2=t2, b2=b2r, wf1=wf1, bf1=bf1,
                  wf2=wf2, bf2=bf2, wf3=wf3, bf3=bf3)
    return {k: jnp.asarray(v) for k, v in packed.items()}


# ---------------------------------------------------------------------------------
# Jitted forward: light layout glue + single batch-blocked pallas_call.
# ---------------------------------------------------------------------------------
@functools.partial(jax.jit, static_argnames=("num_classes", "block_b"))
def cnn_cifar_forward(x_nchw, packed, num_classes=10, block_b=32):
    """x_nchw: (B, 3, 32, 32) float32 -> (B, num_classes) log-probs (eval mode)."""
    assert block_b % 8 == 0, "block_b must be a multiple of 8 (sublane-dense output blocks)"
    B = x_nchw.shape[0]
    tb = min(block_b, B)          # images per grid step
    nb = -(-B // tb)              # grid length
    Bp = nb * tb                  # padded batch

    # Lane-dense input packing: rows = (image, H), lane = W*4 + C (channels padded 3 -> 4).
    # TODO(synk): this NCHW repack is a separate XLA op; feed pre-packed activations to skip it.
    x = jnp.transpose(x_nchw, (0, 2, 3, 1)).astype(jnp.float32)       # (B, 32, 32, 3)
    x = jnp.pad(x, ((0, Bp - B), (0, 0), (0, 0), (0, 1)))             # (Bp, 32, 32, 4)
    x2d = x.reshape(Bp * 32, 128)

    fix2 = lambda b: (0, 0)
    fix3 = lambda b: (0, 0, 0)
    kernel = functools.partial(_fused_forward_kernel, tb=tb)

    out = pl.pallas_call(
        kernel,
        out_shape=jax.ShapeDtypeStruct((Bp, 128), jnp.float32),
        grid=(nb,),
        in_specs=[
            pl.BlockSpec((tb * 32, 128), lambda b: (b, 0)),   # tb stacked images
            pl.BlockSpec((5, 128, 256), fix3),                # t1   (resident)
            pl.BlockSpec((1, 128), fix2),                     # b1
            pl.BlockSpec((5, 128, 256), fix3),                # t2
            pl.BlockSpec((1, 128), fix2),                     # b2
            pl.BlockSpec((5, 128, 128), fix3),                # wf1
            pl.BlockSpec((1, 128), fix2),                     # bf1
            pl.BlockSpec((128, 128), fix2),                   # wf2
            pl.BlockSpec((1, 128), fix2),                     # bf2
            pl.BlockSpec((128, 128), fix2),                   # wf3
            pl.BlockSpec((1, 128), fix2),                     # bf3
        ],
        out_specs=pl.BlockSpec((tb, 128), lambda b: (b, 0)),
        scratch_shapes=[
            pltpu.VMEM((tb * 32 - 4, 128), jnp.float32),      # a1  (conv1, W-pooled, ReLU)
            pltpu.VMEM((tb * 16 - 2, 128), jnp.float32),      # p1  (conv1, fully pooled)
            pltpu.VMEM((tb * 16 - 6, 128), jnp.float32),      # a2  (conv2, W-pooled, ReLU)
            pltpu.VMEM((tb * 8 - 3, 128), jnp.float32),       # p2  (conv2, fully pooled)
        ],
        compiler_params=pltpu.CompilerParams(dimension_semantics=("parallel",)),
    )(x2d, packed["t1"], packed["b1"], packed["t2"], packed["b2"],
      packed["wf1"], packed["bf1"], packed["wf2"], packed["bf2"],
      packed["wf3"], packed["bf3"])

    return out[:B, :num_classes]


# ---------------------------------------------------------------------------------
# Pure-JAX reference (mirrors the PyTorch module) for correctness checking.
# ---------------------------------------------------------------------------------
def reference_forward(x_nchw, params):
    hp = jax.lax.Precision.HIGHEST
    y = jax.lax.conv_general_dilated(
        x_nchw, params["conv1_w"], (1, 1), "VALID",
        dimension_numbers=("NCHW", "OIHW", "NCHW"), precision=hp)
    y = jnp.maximum(y + params["conv1_b"].reshape(1, -1, 1, 1), 0.0)
    y = jax.lax.reduce_window(y, -jnp.inf, jax.lax.max, (1, 1, 2, 2), (1, 1, 2, 2), "VALID")
    y = jax.lax.conv_general_dilated(
        y, params["conv2_w"], (1, 1), "VALID",
        dimension_numbers=("NCHW", "OIHW", "NCHW"), precision=hp)
    y = jnp.maximum(y + params["conv2_b"].reshape(1, -1, 1, 1), 0.0)
    y = jax.lax.reduce_window(y, -jnp.inf, jax.lax.max, (1, 1, 2, 2), (1, 1, 2, 2), "VALID")
    y = y.reshape(y.shape[0], -1)                                  # NCHW (c, h, w) flatten
    y = jnp.maximum(jnp.dot(y, params["fc1_w"].T, precision=hp) + params["fc1_b"], 0.0)
    y = jnp.maximum(jnp.dot(y, params["fc2_w"].T, precision=hp) + params["fc2_b"], 0.0)
    y = jnp.dot(y, params["fc3_w"].T, precision=hp) + params["fc3_b"]
    return jax.nn.log_softmax(y, axis=-1)


if __name__ == "__main__":
    key = jax.random.PRNGKey(0)
    k_in, k_par = jax.random.split(key)

    B = 16
    x = jax.random.normal(k_in, (B, 3, 32, 32), jnp.float32)   # 32x32x3 is forced by fc1
    params = init_params(k_par, num_classes=10)
    packed = pack_params(params, num_classes=10)               # one-time weight pre-packing

    ref = reference_forward(x, params)

    # Single grid step (tb = B = 16).
    out = jax.block_until_ready(cnn_cifar_forward(x, packed, num_classes=10))
    assert out.shape == (B, 10)
    assert bool(jnp.allclose(jnp.exp(out).sum(axis=-1), 1.0, atol=1e-3))
    err = float(jnp.max(jnp.abs(out - ref)))
    # ~50x tighter than before: catches any Toeplitz/fc packing bug while leaving
    # headroom for MXU f32 rounding differences vs the HIGHEST-precision reference.
    assert err < 5e-3, f"mismatch vs reference: max |diff| = {err}"

    # Multi-step grid + batch-padding path (B=13 -> padded to 16, tb=8, 2 parallel grid steps).
    out2 = jax.block_until_ready(cnn_cifar_forward(x[:13], packed, num_classes=10, block_b=8))
    assert out2.shape == (13, 10)
    err2 = float(jnp.max(jnp.abs(out2 - ref[:13])))
    assert err2 < 5e-3, f"mismatch vs reference (blocked path): max |diff| = {err2}"

    print("KERNEL_OK")
</pallas_src>

<mosaic_0001>
module attributes {stable_mosaic.version = 11 : i64} {
  func.func @_fused_forward_kernel(%arg0: i32, %arg1: memref<512x128xf32, #tpu.memory_space<vmem>>, %arg2: memref<5x128x256xf32, #tpu.memory_space<vmem>>, %arg3: memref<1x128xf32, #tpu.memory_space<vmem>>, %arg4: memref<5x128x256xf32, #tpu.memory_space<vmem>>, %arg5: memref<1x128xf32, #tpu.memory_space<vmem>>, %arg6: memref<5x128x128xf32, #tpu.memory_space<vmem>>, %arg7: memref<1x128xf32, #tpu.memory_space<vmem>>, %arg8: memref<128x128xf32, #tpu.memory_space<vmem>>, %arg9: memref<1x128xf32, #tpu.memory_space<vmem>>, %arg10: memref<128x128xf32, #tpu.memory_space<vmem>>, %arg11: memref<1x128xf32, #tpu.memory_space<vmem>>, %arg12: memref<16x128xf32, #tpu.memory_space<vmem>>, %arg13: memref<508x128xf32, #tpu.memory_space<vmem>>, %arg14: memref<254x128xf32, #tpu.memory_space<vmem>>, %arg15: memref<250x128xf32, #tpu.memory_space<vmem>>, %arg16: memref<125x128xf32, #tpu.memory_space<vmem>>) attributes {dimension_semantics = [#tpu.dimension_semantics<parallel>], iteration_bounds = array<i64: 1>, scalar_prefetch = 0 : i64, scratch_operands = 4 : i64, tpu.core_type = #tpu.core_type<tc>, window_params = [{transform_indices = @transform_0, window_bounds = array<i64: 512, 128>}, {pipeline_mode = #tpu.pipeline_mode<synchronous>, transform_indices = @transform_1, window_bounds = array<i64: 5, 128, 256>}, {pipeline_mode = #tpu.pipeline_mode<synchronous>, transform_indices = @transform_2, window_bounds = array<i64: 1, 128>}, {pipeline_mode = #tpu.pipeline_mode<synchronous>, transform_indices = @transform_3, window_bounds = array<i64: 5, 128, 256>}, {pipeline_mode = #tpu.pipeline_mode<synchronous>, transform_indices = @transform_4, window_bounds = array<i64: 1, 128>}, {pipeline_mode = #tpu.pipeline_mode<synchronous>, transform_indices = @transform_5, window_bounds = array<i64: 5, 128, 128>}, {pipeline_mode = #tpu.pipeline_mode<synchronous>, transform_indices = @transform_6, window_bounds = array<i64: 1, 128>}, {pipeline_mode = #tpu.pipeline_mode<synchronous>, transform_indices = @transform_7, window_bounds = array<i64: 128, 128>}, {pipeline_mode = #tpu.pipeline_mode<synchronous>, transform_indices = @transform_8, window_bounds = array<i64: 1, 128>}, {pipeline_mode = #tpu.pipeline_mode<synchronous>, transform_indices = @transform_9, window_bounds = array<i64: 128, 128>}, {pipeline_mode = #tpu.pipeline_mode<synchronous>, transform_indices = @transform_10, window_bounds = array<i64: 1, 128>}, {transform_indices = @transform_11, window_bounds = array<i64: 16, 128>}]} {
    %c0 = arith.constant 0 : index
    %c0_0 = arith.constant 0 : index
    %0 = vector.load %arg1[%c0, %c0_0] : memref<512x128xf32, #tpu.memory_space<vmem>>, vector<508x128xf32>
    %c0_1 = arith.constant 0 : index
    %c0_2 = arith.constant 0 : index
    %c0_3 = arith.constant 0 : index
    %1 = vector.load %arg2[%c0_1, %c0_2, %c0_3] : memref<5x128x256xf32, #tpu.memory_space<vmem>>, vector<1x128x256xf32>
    %2 = vector.shape_cast %1 : vector<1x128x256xf32> to vector<128x256xf32>
    %cst = arith.constant dense<0.000000e+00> : vector<508x256xf32>
    %3 = tpu.matmul %0, %2, %cst {dimension_numbers = #tpu.dot_dimension_numbers<[1], [0], [0], [1], [0, 0, 1, 1], [], []>} : vector<508x128xf32>, vector<128x256xf32>, vector<508x256xf32> -> vector<508x256xf32>
    %c1 = arith.constant 1 : index
    %c0_4 = arith.constant 0 : index
    %4 = vector.load %arg1[%c1, %c0_4] : memref<512x128xf32, #tpu.memory_space<vmem>>, vector<508x128xf32>
    %c1_5 = arith.constant 1 : index
    %c0_6 = arith.constant 0 : index
    %c0_7 = arith.constant 0 : index
    %5 = vector.load %arg2[%c1_5, %c0_6, %c0_7] : memref<5x128x256xf32, #tpu.memory_space<vmem>>, vector<1x128x256xf32>
    %6 = vector.shape_cast %5 : vector<1x128x256xf32> to vector<128x256xf32>
    %cst_8 = arith.constant dense<0.000000e+00> : vector<508x256xf32>
    %7 = tpu.matmul %4, %6, %cst_8 {dimension_numbers = #tpu.dot_dimension_numbers<[1], [0], [0], [1], [0, 0, 1, 1], [], []>} : vector<508x128xf32>, vector<128x256xf32>, vector<508x256xf32> -> vector<508x256xf32>
    %8 = arith.addf %3, %7 : vector<508x256xf32>
    %c2 = arith.constant 2 : index
    %c0_9 = arith.constant 0 : index
    %9 = vector.load %arg1[%c2, %c0_9] : memref<512x128xf32, #tpu.memory_space<vmem>>, vector<508x128xf32>
    %c2_10 = arith.constant 2 : index
    %c0_11 = arith.constant 0 : index
    %c0_12 = arith.constant 0 : index
    %10 = vector.load %arg2[%c2_10, %c0_11, %c0_12] : memref<5x128x256xf32, #tpu.memory_space<vmem>>, vector<1x128x256xf32>
    %11 = vector.shape_cast %10 : vector<1x128x256xf32> to vector<128x256xf32>
    %cst_13 = arith.constant dense<0.000000e+00> : vector<508x256xf32>
    %12 = tpu.matmul %9, %11, %cst_13 {dimension_numbers = #tpu.dot_dimension_numbers<[1], [0], [0], [1], [0, 0, 1, 1], [], []>} : vector<508x128xf32>, vector<128x256xf32>, vector<508x256xf32> -> vector<508x256xf32>
    %13 = arith.addf %8, %12 : vector<508x256xf32>
    %c3 = arith.constant 3 : index
    %c0_14 = arith.constant 0 : index
    %14 = vector.load %arg1[%c3, %c0_14] : memref<512x128xf32, #tpu.memory_space<vmem>>, vector<508x128xf32>
    %c3_15 = arith.constant 3 : index
    %c0_16 = arith.constant 0 : index
    %c0_17 = arith.constant 0 : index
    %15 = vector.load %arg2[%c3_15, %c0_16, %c0_17] : memref<5x128x256xf32, #tpu.memory_space<vmem>>, vector<1x128x256xf32>
    %16 = vector.shape_cast %15 : vector<1x128x256xf32> to vector<128x256xf32>
    %cst_18 = arith.constant dense<0.000000e+00> : vector<508x256xf32>
    %17 = tpu.matmul %14, %16, %cst_18 {dimension_numbers = #tpu.dot_dimension_numbers<[1], [0], [0], [1], [0, 0, 1, 1], [], []>} : vector<508x128xf32>, vector<128x256xf32>, vector<508x256xf32> -> vector<508x256xf32>
    %18 = arith.addf %13, %17 : vector<508x256xf32>
    %c4 = arith.constant 4 : index
    %c0_19 = arith.constant 0 : index
    %19 = vector.load %arg1[%c4, %c0_19] : memref<512x128xf32, #tpu.memory_space<vmem>>, vector<508x128xf32>
    %c4_20 = arith.constant 4 : index
    %c0_21 = arith.constant 0 : index
    %c0_22 = arith.constant 0 : index
    %20 = vector.load %arg2[%c4_20, %c0_21, %c0_22] : memref<5x128x256xf32, #tpu.memory_space<vmem>>, vector<1x128x256xf32>
    %21 = vector.shape_cast %20 : vector<1x128x256xf32> to vector<128x256xf32>
    %cst_23 = arith.constant dense<0.000000e+00> : vector<508x256xf32>
    %22 = tpu.matmul %19, %21, %cst_23 {dimension_numbers = #tpu.dot_dimension_numbers<[1], [0], [0], [1], [0, 0, 1, 1], [], []>} : vector<508x128xf32>, vector<128x256xf32>, vector<508x256xf32> -> vector<508x256xf32>
    %23 = arith.addf %18, %22 : vector<508x256xf32>
    %24 = vector.extract_strided_slice %23 {offsets = [0, 0], sizes = [508, 128], strides = [1, 1]} : vector<508x256xf32> to vector<508x128xf32>
    %25 = vector.extract_strided_slice %23 {offsets = [0, 128], sizes = [508, 128], strides = [1, 1]} : vector<508x256xf32> to vector<508x128xf32>
    %26 = arith.maximumf %24, %25 : vector<508x128xf32>
    %c0_24 = arith.constant 0 : index
    %c0_25 = arith.constant 0 : index
    %27 = vector.load %arg3[%c0_24, %c0_25] : memref<1x128xf32, #tpu.memory_space<vmem>>, vector<1x128xf32>
    %28 = vector.broadcast %27 : vector<1x128xf32> to vector<508x128xf32>
    %29 = arith.addf %26, %28 : vector<508x128xf32>
    %cst_26 = arith.constant 0.000000e+00 : f32
    %30 = vector.broadcast %cst_26 : f32 to vector<508x128xf32>
    %31 = arith.maximumf %29, %30 : vector<508x128xf32>
    %c0_27 = arith.constant 0 : index
    %c0_28 = arith.constant 0 : index
    %32 = vector.load %arg13[%c0_27, %c0_28] : memref<508x128xf32, #tpu.memory_space<vmem>>, vector<508x128xf32>
    tpu.vector_store %arg13[%c0_27, %c0_28], %31 {strides = array<i32>} : memref<508x128xf32, #tpu.memory_space<vmem>>, vector<508x128xf32>,
    %c0_29 = arith.constant 0 : index
    %c0_30 = arith.constant 0 : index
    %33 = tpu.strided_load %arg13[%c0_29, %c0_30] {strides = array<i32: 2, 1>} : memref<508x128xf32, #tpu.memory_space<vmem>>, vector<254x128xf32>
    %c1_31 = arith.constant 1 : index
    %c0_32 = arith.constant 0 : index
    %34 = tpu.strided_load %arg13[%c1_31, %c0_32] {strides = array<i32: 2, 1>} : memref<508x128xf32, #tpu.memory_space<vmem>>, vector<254x128xf32>
    %35 = arith.maximumf %33, %34 : vector<254x128xf32>
    %c0_33 = arith.constant 0 : index
    %c0_34 = arith.constant 0 : index
    %36 = vector.load %arg14[%c0_33, %c0_34] : memref<254x128xf32, #tpu.memory_space<vmem>>, vector<254x128xf32>
    tpu.vector_store %arg14[%c0_33, %c0_34], %35 {strides = array<i32>} : memref<254x128xf32, #tpu.memory_space<vmem>>, vector<254x128xf32>,
    %c0_35 = arith.constant 0 : index
    %c0_36 = arith.constant 0 : index
    %37 = vector.load %arg14[%c0_35, %c0_36] : memref<254x128xf32, #tpu.memory_space<vmem>>, vector<250x128xf32>
    %c0_37 = arith.constant 0 : index
    %c0_38 = arith.constant 0 : index
    %c0_39 = arith.constant 0 : index
    %38 = vector.load %arg4[%c0_37, %c0_38, %c0_39] : memref<5x128x256xf32, #tpu.memory_space<vmem>>, vector<1x128x256xf32>
    %39 = vector.shape_cast %38 : vector<1x128x256xf32> to vector<128x256xf32>
    %cst_40 = arith.constant dense<0.000000e+00> : vector<250x256xf32>
    %40 = tpu.matmul %37, %39, %cst_40 {dimension_numbers = #tpu.dot_dimension_numbers<[1], [0], [0], [1], [0, 0, 1, 1], [], []>} : vector<250x128xf32>, vector<128x256xf32>, vector<250x256xf32> -> vector<250x256xf32>
    %c1_41 = arith.constant 1 : index
    %c0_42 = arith.constant 0 : index
    %41 = vector.load %arg14[%c1_41, %c0_42] : memref<254x128xf32, #tpu.memory_space<vmem>>, vector<250x128xf32>
    %c1_43 = arith.constant 1 : index
    %c0_44 = arith.constant 0 : index
    %c0_45 = arith.constant 0 : index
    %42 = vector.load %arg4[%c1_43, %c0_44, %c0_45] : memref<5x128x256xf32, #tpu.memory_space<vmem>>, vector<1x128x256xf32>
    %43 = vector.shape_cast %42 : vector<1x128x256xf32> to vector<128x256xf32>
    %cst_46 = arith.constant dense<0.000000e+00> : vector<250x256xf32>
    %44 = tpu.matmul %41, %43, %cst_46 {dimension_numbers = #tpu.dot_dimension_numbers<[1], [0], [0], [1], [0, 0, 1, 1], [], []>} : vector<250x128xf32>, vector<128x256xf32>, vector<250x256xf32> -> vector<250x256xf32>
    %45 = arith.addf %40, %44 : vector<250x256xf32>
    %c2_47 = arith.constant 2 : index
    %c0_48 = arith.constant 0 : index
    %46 = vector.load %arg14[%c2_47, %c0_48] : memref<254x128xf32, #tpu.memory_space<vmem>>, vector<250x128xf32>
    %c2_49 = arith.constant 2 : index
    %c0_50 = arith.constant 0 : index
    %c0_51 = arith.constant 0 : index
    %47 = vector.load %arg4[%c2_49, %c0_50, %c0_51] : memref<5x128x256xf32, #tpu.memory_space<vmem>>, vector<1x128x256xf32>
    %48 = vector.shape_cast %47 : vector<1x128x256xf32> to vector<128x256xf32>
    %cst_52 = arith.constant dense<0.000000e+00> : vector<250x256xf32>
    %49 = tpu.matmul %46, %48, %cst_52 {dimension_numbers = #tpu.dot_dimension_numbers<[1], [0], [0], [1], [0, 0, 1, 1], [], []>} : vector<250x128xf32>, vector<128x256xf32>, vector<250x256xf32> -> vector<250x256xf32>
    %50 = arith.addf %45, %49 : vector<250x256xf32>
    %c3_53 = arith.constant 3 : index
    %c0_54 = arith.constant 0 : index
    %51 = vector.load %arg14[%c3_53, %c0_54] : memref<254x128xf32, #tpu.memory_space<vmem>>, vector<250x128xf32>
    %c3_55 = arith.constant 3 : index
    %c0_56 = arith.constant 0 : index
    %c0_57 = arith.constant 0 : index
    %52 = vector.load %arg4[%c3_55, %c0_56, %c0_57] : memref<5x128x256xf32, #tpu.memory_space<vmem>>, vector<1x128x256xf32>
    %53 = vector.shape_cast %52 : vector<1x128x256xf32> to vector<128x256xf32>
    %cst_58 = arith.constant dense<0.000000e+00> : vector<250x256xf32>
    %54 = tpu.matmul %51, %53, %cst_58 {dimension_numbers = #tpu.dot_dimension_numbers<[1], [0], [0], [1], [0, 0, 1, 1], [], []>} : vector<250x128xf32>, vector<128x256xf32>, vector<250x256xf32> -> vector<250x256xf32>
    %55 = arith.addf %50, %54 : vector<250x256xf32>
    %c4_59 = arith.constant 4 : index
    %c0_60 = arith.constant 0 : index
    %56 = vector.load %arg14[%c4_59, %c0_60] : memref<254x128xf32, #tpu.memory_space<vmem>>, vector<250x128xf32>
    %c4_61 = arith.constant 4 : index
    %c0_62 = arith.constant 0 : index
    %c0_63 = arith.constant 0 : index
    %57 = vector.load %arg4[%c4_61, %c0_62, %c0_63] : memref<5x128x256xf32, #tpu.memory_space<vmem>>, vector<1x128x256xf32>
    %58 = vector.shape_cast %57 : vector<1x128x256xf32> to vector<128x256xf32>
    %cst_64 = arith.constant dense<0.000000e+00> : vector<250x256xf32>
    %59 = tpu.matmul %56, %58, %cst_64 {dimension_numbers = #tpu.dot_dimension_numbers<[1], [0], [0], [1], [0, 0, 1, 1], [], []>} : vector<250x128xf32>, vector<128x256xf32>, vector<250x256xf32> -> vector<250x256xf32>
    %60 = arith.addf %55, %59 : vector<250x256xf32>
    %61 = vector.extract_strided_slice %60 {offsets = [0, 0], sizes = [250, 128], strides = [1, 1]} : vector<250x256xf32> to vector<250x128xf32>
    %62 = vector.extract_strided_slice %60 {offsets = [0, 128], sizes = [250, 128], strides = [1, 1]} : vector<250x256xf32> to vector<250x128xf32>
    %63 = arith.maximumf %61, %62 : vector<250x128xf32>
    %c0_65 = arith.constant 0 : index
    %c0_66 = arith.constant 0 : index
    %64 = vector.load %arg5[%c0_65, %c0_66] : memref<1x128xf32, #tpu.memory_space<vmem>>, vector<1x128xf32>
    %65 = vector.broadcast %64 : vector<1x128xf32> to vector<250x128xf32>
    %66 = arith.addf %63, %65 : vector<250x128xf32>
    %cst_67 = arith.constant 0.000000e+00 : f32
    %67 = vector.broadcast %cst_67 : f32 to vector<250x128xf32>
    %68 = arith.maximumf %66, %67 : vector<250x128xf32>
    %c0_68 = arith.constant 0 : index
    %c0_69 = arith.constant 0 : index
    %69 = vector.load %arg15[%c0_68, %c0_69] : memref<250x128xf32, #tpu.memory_space<vmem>>, vector<250x128xf32>
    tpu.vector_store %arg15[%c0_68, %c0_69], %68 {strides = array<i32>} : memref<250x128xf32, #tpu.memory_space<vmem>>, vector<250x128xf32>,
    %c0_70 = arith.constant 0 : index
    %c0_71 = arith.constant 0 : index
    %70 = tpu.strided_load %arg15[%c0_70, %c0_71] {strides = array<i32: 2, 1>} : memref<250x128xf32, #tpu.memory_space<vmem>>, vector<125x128xf32>
    %c1_72 = arith.constant 1 : index
    %c0_73 = arith.constant 0 : index
    %71 = tpu.strided_load %arg15[%c1_72, %c0_73] {strides = array<i32: 2, 1>} : memref<250x128xf32, #tpu.memory_space<vmem>>, vector<125x128xf32>
    %72 = arith.maximumf %70, %71 : vector<125x128xf32>
    %c0_74 = arith.constant 0 : index
    %c0_75 = arith.constant 0 : index
    %73 = vector.load %arg16[%c0_74, %c0_75] : memref<125x128xf32, #tpu.memory_space<vmem>>, vector<125x128xf32>
    tpu.vector_store %arg16[%c0_74, %c0_75], %72 {strides = array<i32>} : memref<125x128xf32, #tpu.memory_space<vmem>>, vector<125x128xf32>,
    %c0_76 = arith.constant 0 : index
    %c0_77 = arith.constant 0 : index
    %74 = tpu.strided_load %arg16[%c0_76, %c0_77] {strides = array<i32: 8, 1>} : memref<125x128xf32, #tpu.memory_space<vmem>>, vector<16x128xf32>
    %c0_78 = arith.constant 0 : index
    %c0_79 = arith.constant 0 : index
    %c0_80 = arith.constant 0 : index
    %75 = vector.load %arg6[%c0_78, %c0_79, %c0_80] : memref<5x128x128xf32, #tpu.memory_space<vmem>>, vector<1x128x128xf32>
    %76 = vector.shape_cast %75 : vector<1x128x128xf32> to vector<128x128xf32>
    %cst_81 = arith.constant dense<0.000000e+00> : vector<16x128xf32>
    %77 = tpu.matmul %74, %76, %cst_81 {dimension_numbers = #tpu.dot_dimension_numbers<[1], [0], [0], [1], [0, 0, 1, 1], [], []>} : vector<16x128xf32>, vector<128x128xf32>, vector<16x128xf32> -> vector<16x128xf32>
    %c1_82 = arith.constant 1 : index
    %c0_83 = arith.constant 0 : index
    %78 = tpu.strided_load %arg16[%c1_82, %c0_83] {strides = array<i32: 8, 1>} : memref<125x128xf32, #tpu.memory_space<vmem>>, vector<16x128xf32>
    %c1_84 = arith.constant 1 : index
    %c0_85 = arith.constant 0 : index
    %c0_86 = arith.constant 0 : index
    %79 = vector.load %arg6[%c1_84, %c0_85, %c0_86] : memref<5x128x128xf32, #tpu.memory_space<vmem>>, vector<1x128x128xf32>
    %80 = vector.shape_cast %79 : vector<1x128x128xf32> to vector<128x128xf32>
    %cst_87 = arith.constant dense<0.000000e+00> : vector<16x128xf32>
    %81 = tpu.matmul %78, %80, %cst_87 {dimension_numbers = #tpu.dot_dimension_numbers<[1], [0], [0], [1], [0, 0, 1, 1], [], []>} : vector<16x128xf32>, vector<128x128xf32>, vector<16x128xf32> -> vector<16x128xf32>
    %82 = arith.addf %77, %81 : vector<16x128xf32>
    %c2_88 = arith.constant 2 : index
    %c0_89 = arith.constant 0 : index
    %83 = tpu.strided_load %arg16[%c2_88, %c0_89] {strides = array<i32: 8, 1>} : memref<125x128xf32, #tpu.memory_space<vmem>>, vector<16x128xf32>
    %c2_90 = arith.constant 2 : index
    %c0_91 = arith.constant 0 : index
    %c0_92 = arith.constant 0 : index
    %84 = vector.load %arg6[%c2_90, %c0_91, %c0_92] : memref<5x128x128xf32, #tpu.memory_space<vmem>>, vector<1x128x128xf32>
    %85 = vector.shape_cast %84 : vector<1x128x128xf32> to vector<128x128xf32>
    %cst_93 = arith.constant dense<0.000000e+00> : vector<16x128xf32>
    %86 = tpu.matmul %83, %85, %cst_93 {dimension_numbers = #tpu.dot_dimension_numbers<[1], [0], [0], [1], [0, 0, 1, 1], [], []>} : vector<16x128xf32>, vector<128x128xf32>, vector<16x128xf32> -> vector<16x128xf32>
    %87 = arith.addf %82, %86 : vector<16x128xf32>
    %c3_94 = arith.constant 3 : index
    %c0_95 = arith.constant 0 : index
    %88 = tpu.strided_load %arg16[%c3_94, %c0_95] {strides = array<i32: 8, 1>} : memref<125x128xf32, #tpu.memory_space<vmem>>, vector<16x128xf32>
    %c3_96 = arith.constant 3 : index
    %c0_97 = arith.constant 0 : index
    %c0_98 = arith.constant 0 : index
    %89 = vector.load %arg6[%c3_96, %c0_97, %c0_98] : memref<5x128x128xf32, #tpu.memory_space<vmem>>, vector<1x128x128xf32>
    %90 = vector.shape_cast %89 : vector<1x128x128xf32> to vector<128x128xf32>
    %cst_99 = arith.constant dense<0.000000e+00> : vector<16x128xf32>
    %91 = tpu.matmul %88, %90, %cst_99 {dimension_numbers = #tpu.dot_dimension_numbers<[1], [0], [0], [1], [0, 0, 1, 1], [], []>} : vector<16x128xf32>, vector<128x128xf32>, vector<16x128xf32> -> vector<16x128xf32>
    %92 = arith.addf %87, %91 : vector<16x128xf32>
    %c4_100 = arith.constant 4 : index
    %c0_101 = arith.constant 0 : index
    %93 = tpu.strided_load %arg16[%c4_100, %c0_101] {strides = array<i32: 8, 1>} : memref<125x128xf32, #tpu.memory_space<vmem>>, vector<16x128xf32>
    %c4_102 = arith.constant 4 : index
    %c0_103 = arith.constant 0 : index
    %c0_104 = arith.constant 0 : index
    %94 = vector.load %arg6[%c4_102, %c0_103, %c0_104] : memref<5x128x128xf32, #tpu.memory_space<vmem>>, vector<1x128x128xf32>
    %95 = vector.shape_cast %94 : vector<1x128x128xf32> to vector<128x128xf32>
    %cst_105 = arith.constant dense<0.000000e+00> : vector<16x128xf32>
    %96 = tpu.matmul %93, %95, %cst_105 {dimension_numbers = #tpu.dot_dimension_numbers<[1], [0], [0], [1], [0, 0, 1, 1], [], []>} : vector<16x128xf32>, vector<128x128xf32>, vector<16x128xf32> -> vector<16x128xf32>
    %97 = arith.addf %92, %96 : vector<16x128xf32>
    %c0_106 = arith.constant 0 : index
    %c0_107 = arith.constant 0 : index
    %98 = vector.load %arg7[%c0_106, %c0_107] : memref<1x128xf32, #tpu.memory_space<vmem>>, vector<1x128xf32>
    %99 = vector.broadcast %98 : vector<1x128xf32> to vector<16x128xf32>
    %100 = arith.addf %97, %99 : vector<16x128xf32>
    %cst_108 = arith.constant 0.000000e+00 : f32
    %101 = vector.broadcast %cst_108 : f32 to vector<16x128xf32>
    %102 = arith.maximumf %100, %101 : vector<16x128xf32>
    %c0_109 = arith.constant 0 : index
    %c0_110 = arith.constant 0 : index
    %103 = vector.load %arg8[%c0_109, %c0_110] : memref<128x128xf32, #tpu.memory_space<vmem>>, vector<128x128xf32>
    %cst_111 = arith.constant dense<0.000000e+00> : vector<16x128xf32>
    %104 = tpu.matmul %102, %103, %cst_111 {dimension_numbers = #tpu.dot_dimension_numbers<[1], [0], [0], [1], [0, 0, 1, 1], [], []>} : vector<16x128xf32>, vector<128x128xf32>, vector<16x128xf32> -> vector<16x128xf32>
    %c0_112 = arith.constant 0 : index
    %c0_113 = arith.constant 0 : index
    %105 = vector.load %arg9[%c0_112, %c0_113] : memref<1x128xf32, #tpu.memory_space<vmem>>, vector<1x128xf32>
    %106 = vector.broadcast %105 : vector<1x128xf32> to vector<16x128xf32>
    %107 = arith.addf %104, %106 : vector<16x128xf32>
    %cst_114 = arith.constant 0.000000e+00 : f32
    %108 = vector.broadcast %cst_114 : f32 to vector<16x128xf32>
    %109 = arith.maximumf %107, %108 : vector<16x128xf32>
    %c0_115 = arith.constant 0 : index
    %c0_116 = arith.constant 0 : index
    %110 = vector.load %arg10[%c0_115, %c0_116] : memref<128x128xf32, #tpu.memory_space<vmem>>, vector<128x128xf32>
    %cst_117 = arith.constant dense<0.000000e+00> : vector<16x128xf32>
    %111 = tpu.matmul %109, %110, %cst_117 {dimension_numbers = #tpu.dot_dimension_numbers<[1], [0], [0], [1], [0, 0, 1, 1], [], []>} : vector<16x128xf32>, vector<128x128xf32>, vector<16x128xf32> -> vector<16x128xf32>
    %c0_118 = arith.constant 0 : index
    %c0_119 = arith.constant 0 : index
    %112 = vector.load %arg11[%c0_118, %c0_119] : memref<1x128xf32, #tpu.memory_space<vmem>>, vector<1x128xf32>
    %113 = vector.broadcast %112 : vector<1x128xf32> to vector<16x128xf32>
    %114 = arith.addf %111, %113 : vector<16x128xf32>
    %cst_120 = arith.constant dense<0xFF800000> : vector<16xf32>
    %115 = vector.multi_reduction <maximumf>, %114, %cst_120 [1] : vector<16x128xf32> to vector<16xf32>
    %116 = vector.shape_cast %115 : vector<16xf32> to vector<16x1xf32>
    %117 = vector.broadcast %116 : vector<16x1xf32> to vector<16x128xf32>
    %118 = arith.subf %114, %117 : vector<16x128xf32>
    %119 = math.exp %118 : vector<16x128xf32>
    %cst_121 = arith.constant dense<0.000000e+00> : vector<16xf32>
    %120 = vector.multi_reduction <add>, %119, %cst_121 [1] : vector<16x128xf32> to vector<16xf32>
    %121 = vector.shape_cast %120 : vector<16xf32> to vector<16x1xf32>
    %122 = math.log %121 : vector<16x1xf32>
    %123 = vector.broadcast %122 : vector<16x1xf32> to vector<16x128xf32>
    %124 = arith.subf %118, %123 : vector<16x128xf32>
    %c0_122 = arith.constant 0 : index
    %c0_123 = arith.constant 0 : index
    %125 = vector.load %arg12[%c0_122, %c0_123] : memref<16x128xf32, #tpu.memory_space<vmem>>, vector<16x128xf32>
    tpu.vector_store %arg12[%c0_122, %c0_123], %124 {strides = array<i32>} : memref<16x128xf32, #tpu.memory_space<vmem>>, vector<16x128xf32>,
    return
  }
  func.func @transform_0(%arg0: i32) -> (i32, i32) {
    %c0_i32 = arith.constant 0 : i32
    %c0_i32_0 = arith.constant 0 : i32
    return %arg0, %c0_i32 : i32, i32
  }
  func.func @transform_1(%arg0: i32) -> (i32, i32, i32) {
    %c0_i32 = arith.constant 0 : i32
    %c0_i32_0 = arith.constant 0 : i32
    %c0_i32_1 = arith.constant 0 : i32
    %c0_i32_2 = arith.constant 0 : i32
    return %c0_i32, %c0_i32_0, %c0_i32_1 : i32, i32, i32
  }
  func.func @transform_2(%arg0: i32) -> (i32, i32) {
    %c0_i32 = arith.constant 0 : i32
    %c0_i32_0 = arith.constant 0 : i32
    %c0_i32_1 = arith.constant 0 : i32
    return %c0_i32, %c0_i32_0 : i32, i32
  }
  func.func @transform_3(%arg0: i32) -> (i32, i32, i32) {
    %c0_i32 = arith.constant 0 : i32
    %c0_i32_0 = arith.constant 0 : i32
    %c0_i32_1 = arith.constant 0 : i32
    %c0_i32_2 = arith.constant 0 : i32
    return %c0_i32, %c0_i32_0, %c0_i32_1 : i32, i32, i32
  }
  func.func @transform_4(%arg0: i32) -> (i32, i32) {
    %c0_i32 = arith.constant 0 : i32
    %c0_i32_0 = arith.constant 0 : i32
    %c0_i32_1 = arith.constant 0 : i32
    return %c0_i32, %c0_i32_0 : i32, i32
  }
  func.func @transform_5(%arg0: i32) -> (i32, i32, i32) {
    %c0_i32 = arith.constant 0 : i32
    %c0_i32_0 = arith.constant 0 : i32
    %c0_i32_1 = arith.constant 0 : i32
    %c0_i32_2 = arith.constant 0 : i32
    return %c0_i32, %c0_i32_0, %c0_i32_1 : i32, i32, i32
  }
  func.func @transform_6(%arg0: i32) -> (i32, i32) {
    %c0_i32 = arith.constant 0 : i32
    %c0_i32_0 = arith.constant 0 : i32
    %c0_i32_1 = arith.constant 0 : i32
    return %c0_i32, %c0_i32_0 : i32, i32
  }
  func.func @transform_7(%arg0: i32) -> (i32, i32) {
    %c0_i32 = arith.constant 0 : i32
    %c0_i32_0 = arith.constant 0 : i32
    %c0_i32_1 = arith.constant 0 : i32
    return %c0_i32, %c0_i32_0 : i32, i32
  }
  func.func @transform_8(%arg0: i32) -> (i32, i32) {
    %c0_i32 = arith.constant 0 : i32
    %c0_i32_0 = arith.constant 0 : i32
    %c0_i32_1 = arith.constant 0 : i32
    return %c0_i32, %c0_i32_0 : i32, i32
  }
  func.func @transform_9(%arg0: i32) -> (i32, i32) {
    %c0_i32 = arith.constant 0 : i32
    %c0_i32_0 = arith.constant 0 : i32
    %c0_i32_1 = arith.constant 0 : i32
    return %c0_i32, %c0_i32_0 : i32, i32
  }
  func.func @transform_10(%arg0: i32) -> (i32, i32) {
    %c0_i32 = arith.constant 0 : i32
    %c0_i32_0 = arith.constant 0 : i32
    %c0_i32_1 = arith.constant 0 : i32
    return %c0_i32, %c0_i32_0 : i32, i32
  }
  func.func @transform_11(%arg0: i32) -> (i32, i32) {
    %c0_i32 = arith.constant 0 : i32
    %c0_i32_0 = arith.constant 0 : i32
    return %arg0, %c0_i32 : i32, i32
  }
}

</mosaic_0001>

<llo_original>
// kernel: cnn_cifar_forward.1
$region0: #{cnn_cifar_forward.1}
  #allocation0 [shape = 'u32[]', space=smem, size = 0x4, offset = 0x4, fixed_abs, tag = 'smem constant byte address 0x4 - core index']
  #allocation1 [shape = 'u32[72,128]{1,0:T(1,128)}', space=vmem, size = 0x9000, scoped, tag = 'internal scratch']
  #allocation2 [shape = 'f32[508,128]{1,0:T(8,128)}', space=vmem, size = 0x40000, scoped, tag = 'scratch operand']
  #allocation3 [shape = 'f32[254,128]{1,0:T(8,128)}', space=vmem, size = 0x20000, scoped, tag = 'scratch operand']
  #allocation4 [shape = 'f32[250,128]{1,0:T(8,128)}', space=vmem, size = 0x20000, scoped, tag = 'scratch operand']
  #allocation5 [shape = 'f32[125,128]{1,0:T(8,128)}', space=vmem, size = 0x10000, scoped, tag = 'scratch operand']
  %s0 = inlined_call_operand.vmem [shape: f32[512,128], index: 0, kind: input, shape index: {}]
  %s1 = inlined_call_operand.vmem [shape: f32[5,128,256], index: 1, kind: input, shape index: {}]
  %s2 = inlined_call_operand.vmem [shape: f32[1,128], index: 2, kind: input, shape index: {}]
  %s3 = inlined_call_operand.vmem [shape: f32[5,128,256], index: 3, kind: input, shape index: {}]
  %s4 = inlined_call_operand.vmem [shape: f32[1,128], index: 4, kind: input, shape index: {}]
  %s5 = inlined_call_operand.vmem [shape: f32[5,128,128], index: 5, kind: input, shape index: {}]
  %s6 = inlined_call_operand.vmem [shape: f32[1,128], index: 6, kind: input, shape index: {}]
  %s7 = inlined_call_operand.vmem [shape: f32[128,128], index: 7, kind: input, shape index: {}]
  %s8 = inlined_call_operand.vmem [shape: f32[1,128], index: 8, kind: input, shape index: {}]
  %s9 = inlined_call_operand.vmem [shape: f32[128,128], index: 9, kind: input, shape index: {}]
  %s10 = inlined_call_operand.vmem [shape: f32[1,128], index: 10, kind: input, shape index: {}]
  %s11 = inlined_call_operand.hbm [shape: f32[16,128], index: 11, kind: output, shape index: {}]
  %s12 = sld [smem:[#allocation0]]
  $region54: #{cnn_cifar_forward.1} parent=0
    _
  %s14 = ssub.s32 1, %s12
  %s15 = scalar_select 0, %s14, %s12
  $region1: #{cnn_cifar_forward.1} parent=0
    #allocation6 [shape = 'u8[8192]{0}', space=vmem, size = 0x2000, scoped, tag = 'output window, operand 0, single buffered']
    #allocation7 [shape = 's32[1]{0}', space=sflag, size = 0x4, scoped, tag = 'scoped memory for cnn_cifar_forward.1']
    %16 = vsyncpa [#allocation7], 0
    // Predicated region
    $region2: #{cnn_cifar_forward.1} parent=1 // pred_check
      _
    $region3: #{cnn_cifar_forward.1} parent=1 // pred_check_branch
      %18 = sbr.rel (0) target = $region5
    $region4: #{cnn_cifar_forward.1} parent=1 // pred_region
      _
    $region5: #{cnn_cifar_forward.1} parent=1 // pred_fallthru
      _
    // Predicated region
    $region6: #{cnn_cifar_forward.1} parent=1 // pred_check
      _
    $region7: #{cnn_cifar_forward.1} parent=1 // pred_check_branch
      %20 = sbr.rel (0) target = $region9
    $region8: #{cnn_cifar_forward.1} parent=1 // pred_region
      _
    $region9: #{cnn_cifar_forward.1} parent=1 // pred_fallthru
      _
    // Predicated region
    $region10: #{cnn_cifar_forward.1} parent=1 // pred_check
      _
    $region11: #{cnn_cifar_forward.1} parent=1 // pred_check_branch
      %22 = sbr.rel (0) target = $region13
    $region12: #{cnn_cifar_forward.1} parent=1 // pred_region
      _
    $region13: #{cnn_cifar_forward.1} parent=1 // pred_fallthru
      _
    // Predicated region
    $region14: #{cnn_cifar_forward.1} parent=1 // pred_check
      _
    $region15: #{cnn_cifar_forward.1} parent=1 // pred_check_branch
      %24 = sbr.rel (0) target = $region17
    $region16: #{cnn_cifar_forward.1} parent=1 // pred_region
      _
    $region17: #{cnn_cifar_forward.1} parent=1 // pred_fallthru
      _
    // Predicated region
    $region18: #{cnn_cifar_forward.1} parent=1 // pred_check
      _
    $region19: #{cnn_cifar_forward.1} parent=1 // pred_check_branch
      %26 = sbr.rel (0) target = $region21
    $region20: #{cnn_cifar_forward.1} parent=1 // pred_region
      _
    $region21: #{cnn_cifar_forward.1} parent=1 // pred_fallthru
      _
    // Predicated region
    $region22: #{cnn_cifar_forward.1} parent=1 // pred_check
      _
    $region23: #{cnn_cifar_forward.1} parent=1 // pred_check_branch
      %28 = sbr.rel (0) target = $region25
    $region24: #{cnn_cifar_forward.1} parent=1 // pred_region
      _
    $region25: #{cnn_cifar_forward.1} parent=1 // pred_fallthru
      _
    // Predicated region
    $region26: #{cnn_cifar_forward.1} parent=1 // pred_check
      _
    $region27: #{cnn_cifar_forward.1} parent=1 // pred_check_branch
      %30 = sbr.rel (0) target = $region29
    $region28: #{cnn_cifar_forward.1} parent=1 // pred_region
      _
    $region29: #{cnn_cifar_forward.1} parent=1 // pred_fallthru
      _
    // Predicated region
    $region30: #{cnn_cifar_forward.1} parent=1 // pred_check
      _
    $region31: #{cnn_cifar_forward.1} parent=1 // pred_check_branch
      %32 = sbr.rel (0) target = $region33
    $region32: #{cnn_cifar_forward.1} parent=1 // pred_region
      _
    $region33: #{cnn_cifar_forward.1} parent=1 // pred_fallthru
      _
    // Predicated region
    $region34: #{cnn_cifar_forward.1} parent=1 // pred_check
      _
    $region35: #{cnn_cifar_forward.1} parent=1 // pred_check_branch
      %34 = sbr.rel (0) target = $region37
    $region36: #{cnn_cifar_forward.1} parent=1 // pred_region
      _
    $region37: #{cnn_cifar_forward.1} parent=1 // pred_fallthru
      _
    // Predicated region
    $region38: #{cnn_cifar_forward.1} parent=1 // pred_check
      _
    $region39: #{cnn_cifar_forward.1} parent=1 // pred_check_branch
      %36 = sbr.rel (0) target = $region41
    $region40: #{cnn_cifar_forward.1} parent=1 // pred_region
      _
    $region41: #{cnn_cifar_forward.1} parent=1 // pred_fallthru
      _
    // Predicated region
    $region42: #{cnn_cifar_forward.1} parent=1 // pred_check
      _
    $region43: #{cnn_cifar_forward.1} parent=1 // pred_check_branch
      %38 = sbr.rel (0) target = $region45
    $region44: #{cnn_cifar_forward.1} parent=1 // pred_region
      _
    $region45: #{cnn_cifar_forward.1} parent=1 // pred_fallthru
      _
    %v39 = vld [vmem:[%s0] sm:$0xff]
    %v40 = vld [vmem:[%s0 + $0x8] sm:$0xff]
    %v41 = vld [vmem:[%s0 + $0x10] sm:$0xff]
    %v42 = vld [vmem:[%s0 + $0x18] sm:$0xff]
    %v43 = vld [vmem:[%s0 + $0x20] sm:$0xff]
    %v44 = vld [vmem:[%s0 + $0x28] sm:$0xff]
    %v45 = vld [vmem:[%s0 + $0x30] sm:$0xff]
    %v46 = vld [vmem:[%s0 + $0x38] sm:$0xff]
    %v47 = vld [vmem:[%s0 + $0x40] sm:$0xff]
    %v48 = vld [vmem:[%s0 + $0x48] sm:$0xff]
    %v49 = vld [vmem:[%s0 + $0x50] sm:$0xff]
    %v50 = vld [vmem:[%s0 + $0x58] sm:$0xff]
    %v51 = vld [vmem:[%s0 + $0x60] sm:$0xff]
    %v52 = vld [vmem:[%s0 + $0x68] sm:$0xff]
    %v53 = vld [vmem:[%s0 + $0x70] sm:$0xff]
    %v54 = vld [vmem:[%s0 + $0x78] sm:$0xff]
    %v55 = vld [vmem:[%s0 + $0x80] sm:$0xff]
    %v56 = vld [vmem:[%s0 + $0x88] sm:$0xff]
    %v57 = vld [vmem:[%s0 + $0x90] sm:$0xff]
    %v58 = vld [vmem:[%s0 + $0x98] sm:$0xff]
    %v59 = vld [vmem:[%s0 + $0xa0] sm:$0xff]
    %v60 = vld [vmem:[%s0 + $0xa8] sm:$0xff]
    %v61 = vld [vmem:[%s0 + $0xb0] sm:$0xff]
    %v62 = vld [vmem:[%s0 + $0xb8] sm:$0xff]
    %v63 = vld [vmem:[%s0 + $0xc0] sm:$0xff]
    %v64 = vld [vmem:[%s0 + $0xc8] sm:$0xff]
    %v65 = vld [vmem:[%s0 + $0xd0] sm:$0xff]
    %v66 = vld [vmem:[%s0 + $0xd8] sm:$0xff]
    %v67 = vld [vmem:[%s0 + $0xe0] sm:$0xff]
    %v68 = vld [vmem:[%s0 + $0xe8] sm:$0xff]
    %v69 = vld [vmem:[%s0 + $0xf0] sm:$0xff]
    %v70 = vld [vmem:[%s0 + $0xf8] sm:$0xff]
    %v71 = vld [vmem:[%s0 + $0x100] sm:$0xff]
    %v72 = vld [vmem:[%s0 + $0x108] sm:$0xff]
    %v73 = vld [vmem:[%s0 + $0x110] sm:$0xff]
    %v74 = vld [vmem:[%s0 + $0x118] sm:$0xff]
    %v75 = vld [vmem:[%s0 + $0x120] sm:$0xff]
    %v76 = vld [vmem:[%s0 + $0x128] sm:$0xff]
    %v77 = vld [vmem:[%s0 + $0x130] sm:$0xff]
    %v78 = vld [vmem:[%s0 + $0x138] sm:$0xff]
    %v79 = vld [vmem:[%s0 + $0x140] sm:$0xff]
    %v80 = vld [vmem:[%s0 + $0x148] sm:$0xff]
    %v81 = vld [vmem:[%s0 + $0x150] sm:$0xff]
    %v82 = vld [vmem:[%s0 + $0x158] sm:$0xff]
    %v83 = vld [vmem:[%s0 + $0x160] sm:$0xff]
    %v84 = vld [vmem:[%s0 + $0x168] sm:$0xff]
    %v85 = vld [vmem:[%s0 + $0x170] sm:$0xff]
    %v86 = vld [vmem:[%s0 + $0x178] sm:$0xff]
    %v87 = vld [vmem:[%s0 + $0x180] sm:$0xff]
    %v88 = vld [vmem:[%s0 + $0x188] sm:$0xff]
    %v89 = vld [vmem:[%s0 + $0x190] sm:$0xff]
    %v90 = vld [vmem:[%s0 + $0x198] sm:$0xff]
    %v91 = vld [vmem:[%s0 + $0x1a0] sm:$0xff]
    %v92 = vld [vmem:[%s0 + $0x1a8] sm:$0xff]
    %v93 = vld [vmem:[%s0 + $0x1b0] sm:$0xff]
    %v94 = vld [vmem:[%s0 + $0x1b8] sm:$0xff]
    %v95 = vld [vmem:[%s0 + $0x1c0] sm:$0xff]
    %v96 = vld [vmem:[%s0 + $0x1c8] sm:$0xff]
    %v97 = vld [vmem:[%s0 + $0x1d0] sm:$0xff]
    %v98 = vld [vmem:[%s0 + $0x1d8] sm:$0xff]
    %v99 = vld [vmem:[%s0 + $0x1e0] sm:$0xff]
    %v100 = vld [vmem:[%s0 + $0x1e8] sm:$0xff]
    %v101 = vld [vmem:[%s0 + $0x1f0] sm:$0xff]
    %v102 = vld [vmem:[%s0 + $0x1f8] sm:$0xf]
    %v103 = vld [vmem:[%s1] sm:$0xff]
    %v104 = vld [vmem:[%s1 + $0x8] sm:$0xff]
    %v105 = vld [vmem:[%s1 + $0x10] sm:$0xff]
    %v106 = vld [vmem:[%s1 + $0x18] sm:$0xff]
    %v107 = vld [vmem:[%s1 + $0x20] sm:$0xff]
    %v108 = vld [vmem:[%s1 + $0x28] sm:$0xff]
    %v109 = vld [vmem:[%s1 + $0x30] sm:$0xff]
    %v110 = vld [vmem:[%s1 + $0x38] sm:$0xff]
    %v111 = vld [vmem:[%s1 + $0x40] sm:$0xff]
    %v112 = vld [vmem:[%s1 + $0x48] sm:$0xff]
    %v113 = vld [vmem:[%s1 + $0x50] sm:$0xff]
    %v114 = vld [vmem:[%s1 + $0x58] sm:$0xff]
    %v115 = vld [vmem:[%s1 + $0x60] sm:$0xff]
    %v116 = vld [vmem:[%s1 + $0x68] sm:$0xff]
    %v117 = vld [vmem:[%s1 + $0x70] sm:$0xff]
    %v118 = vld [vmem:[%s1 + $0x78] sm:$0xff]
    %v119 = vld [vmem:[%s1 + $0x80] sm:$0xff]
    %v120 = vld [vmem:[%s1 + $0x88] sm:$0xff]
    %v121 = vld [vmem:[%s1 + $0x90] sm:$0xff]
    %v122 = vld [vmem:[%s1 + $0x98] sm:$0xff]
    %v123 = vld [vmem:[%s1 + $0xa0] sm:$0xff]
    %v124 = vld [vmem:[%s1 + $0xa8] sm:$0xff]
    %v125 = vld [vmem:[%s1 + $0xb0] sm:$0xff]
    %v126 = vld [vmem:[%s1 + $0xb8] sm:$0xff]
    %v127 = vld [vmem:[%s1 + $0xc0] sm:$0xff]
    %v128 = vld [vmem:[%s1 + $0xc8] sm:$0xff]
    %v129 = vld [vmem:[%s1 + $0xd0] sm:$0xff]
    %v130 = vld [vmem:[%s1 + $0xd8] sm:$0xff]
    %v131 = vld [vmem:[%s1 + $0xe0] sm:$0xff]
    %v132 = vld [vmem:[%s1 + $0xe8] sm:$0xff]
    %v133 = vld [vmem:[%s1 + $0xf0] sm:$0xff]
    %v134 = vld [vmem:[%s1 + $0xf8] sm:$0xff]
    %v135 = vld [vmem:[%s0 + $0x1] sm:$0xff]
    %v136 = vld [vmem:[%s0 + $0x9] sm:$0xff]
    %v137 = vld [vmem:[%s0 + $0x11] sm:$0xff]
    %v138 = vld [vmem:[%s0 + $0x19] sm:$0xff]
    %v139 = vld [vmem:[%s0 + $0x21] sm:$0xff]
    %v140 = vld [vmem:[%s0 + $0x29] sm:$0xff]
    %v141 = vld [vmem:[%s0 + $0x31] sm:$0xff]
    %v142 = vld [vmem:[%s0 + $0x39] sm:$0xff]
    %v143 = vld [vmem:[%s0 + $0x41] sm:$0xff]
    %v144 = vld [vmem:[%s0 + $0x49] sm:$0xff]
    %v145 = vld [vmem:[%s0 + $0x51] sm:$0xff]
    %v146 = vld [vmem:[%s0 + $0x59] sm:$0xff]
    %v147 = vld [vmem:[%s0 + $0x61] sm:$0xff]
    %v148 = vld [vmem:[%s0 + $0x69] sm:$0xff]
    %v149 = vld [vmem:[%s0 + $0x71] sm:$0xff]
    %v150 = vld [vmem:[%s0 + $0x79] sm:$0xff]
    %v151 = vld [vmem:[%s0 + $0x81] sm:$0xff]
    %v152 = vld [vmem:[%s0 + $0x89] sm:$0xff]
    %v153 = vld [vmem:[%s0 + $0x91] sm:$0xff]
    %v154 = vld [vmem:[%s0 + $0x99] sm:$0xff]
    %v155 = vld [vmem:[%s0 + $0xa1] sm:$0xff]
    %v156 = vld [vmem:[%s0 + $0xa9] sm:$0xff]
    %v157 = vld [vmem:[%s0 + $0xb1] sm:$0xff]
    %v158 = vld [vmem:[%s0 + $0xb9] sm:$0xff]
    %v159 = vld [vmem:[%s0 + $0xc1] sm:$0xff]
    %v160 = vld [vmem:[%s0 + $0xc9] sm:$0xff]
    %v161 = vld [vmem:[%s0 + $0xd1] sm:$0xff]
    %v162 = vld [vmem:[%s0 + $0xd9] sm:$0xff]
    %v163 = vld [vmem:[%s0 + $0xe1] sm:$0xff]
    %v164 = vld [vmem:[%s0 + $0xe9] sm:$0xff]
    %v165 = vld [vmem:[%s0 + $0xf1] sm:$0xff]
    %v166 = vld [vmem:[%s0 + $0xf9] sm:$0xff]
    %v167 = vld [vmem:[%s0 + $0x101] sm:$0xff]
    %v168 = vld [vmem:[%s0 + $0x109] sm:$0xff]
    %v169 = vld [vmem:[%s0 + $0x111] sm:$0xff]
    %v170 = vld [vmem:[%s0 + $0x119] sm:$0xff]
    %v171 = vld [vmem:[%s0 + $0x121] sm:$0xff]
    %v172 = vld [vmem:[%s0 + $0x129] sm:$0xff]
    %v173 = vld [vmem:[%s0 + $0x131] sm:$0xff]
    %v174 = vld [vmem:[%s0 + $0x139] sm:$0xff]
    %v175 = vld [vmem:[%s0 + $0x141] sm:$0xff]
    %v176 = vld [vmem:[%s0 + $0x149] sm:$0xff]
    %v177 = vld [vmem:[%s0 + $0x151] sm:$0xff]
    %v178 = vld [vmem:[%s0 + $0x159] sm:$0xff]
    %v179 = vld [vmem:[%s0 + $0x161] sm:$0xff]
    %v180 = vld [vmem:[%s0 + $0x169] sm:$0xff]
    %v181 = vld [vmem:[%s0 + $0x171] sm:$0xff]
    %v182 = vld [vmem:[%s0 + $0x179] sm:$0xff]
    %v183 = vld [vmem:[%s0 + $0x181] sm:$0xff]
    %v184 = vld [vmem:[%s0 + $0x189] sm:$0xff]
    %v185 = vld [vmem:[%s0 + $0x191] sm:$0xff]
    %v186 = vld [vmem:[%s0 + $0x199] sm:$0xff]
    %v187 = vld [vmem:[%s0 + $0x1a1] sm:$0xff]
    %v188 = vld [vmem:[%s0 + $0x1a9] sm:$0xff]
    %v189 = vld [vmem:[%s0 + $0x1b1] sm:$0xff]
    %v190 = vld [vmem:[%s0 + $0x1b9] sm:$0xff]
    %v191 = vld [vmem:[%s0 + $0x1c1] sm:$0xff]
    %v192 = vld [vmem:[%s0 + $0x1c9] sm:$0xff]
    %v193 = vld [vmem:[%s0 + $0x1d1] sm:$0xff]
    %v194 = vld [vmem:[%s0 + $0x1d9] sm:$0xff]
    %v195 = vld [vmem:[%s0 + $0x1e1] sm:$0xff]
    %v196 = vld [vmem:[%s0 + $0x1e9] sm:$0xff]
    %v197 = vld [vmem:[%s0 + $0x1f1] sm:$0xff]
    %v198 = vld [vmem:[%s0 + $0x1f9] sm:$0xf]
    %s199 = scalar_lea.vmem %s1, 256
    %v200 = vld [vmem:[%s199] sm:$0xff]
    %v201 = vld [vmem:[%s199 + $0x8] sm:$0xff]
    %v202 = vld [vmem:[%s199 + $0x10] sm:$0xff]
    %v203 = vld [vmem:[%s199 + $0x18] sm:$0xff]
    %v204 = vld [vmem:[%s199 + $0x20] sm:$0xff]
    %v205 = vld [vmem:[%s199 + $0x28] sm:$0xff]
    %v206 = vld [vmem:[%s199 + $0x30] sm:$0xff]
    %v207 = vld [vmem:[%s199 + $0x38] sm:$0xff]
    %v208 = vld [vmem:[%s199 + $0x40] sm:$0xff]
    %v209 = vld [vmem:[%s199 + $0x48] sm:$0xff]
    %v210 = vld [vmem:[%s199 + $0x50] sm:$0xff]
    %v211 = vld [vmem:[%s199 + $0x58] sm:$0xff]
    %v212 = vld [vmem:[%s199 + $0x60] sm:$0xff]
    %v213 = vld [vmem:[%s199 + $0x68] sm:$0xff]
    %v214 = vld [vmem:[%s199 + $0x70] sm:$0xff]
    %v215 = vld [vmem:[%s199 + $0x78] sm:$0xff]
    %v216 = vld [vmem:[%s199 + $0x80] sm:$0xff]
    %v217 = vld [vmem:[%s199 + $0x88] sm:$0xff]
    %v218 = vld [vmem:[%s199 + $0x90] sm:$0xff]
    %v219 = vld [vmem:[%s199 + $0x98] sm:$0xff]
    %v220 = vld [vmem:[%s199 + $0xa0] sm:$0xff]
    %v221 = vld [vmem:[%s199 + $0xa8] sm:$0xff]
    %v222 = vld [vmem:[%s199 + $0xb0] sm:$0xff]
    %v223 = vld [vmem:[%s199 + $0xb8] sm:$0xff]
    %v224 = vld [vmem:[%s199 + $0xc0] sm:$0xff]
    %v225 = vld [vmem:[%s199 + $0xc8] sm:$0xff]
    %v226 = vld [vmem:[%s199 + $0xd0] sm:$0xff]
    %v227 = vld [vmem:[%s199 + $0xd8] sm:$0xff]
    %v228 = vld [vmem:[%s199 + $0xe0] sm:$0xff]
    %v229 = vld [vmem:[%s199 + $0xe8] sm:$0xff]
    %v230 = vld [vmem:[%s199 + $0xf0] sm:$0xff]
    %v231 = vld [vmem:[%s199 + $0xf8] sm:$0xff]
    %232 = vmatpush.msra.mxu0 %v230
    %233 = vmatpush.msra.mxu0 %v228
    %234 = vmatpush.msra.mxu0 %v226
    %235 = vmatpush.msra.mxu0 %v224
    %236 = vmatpush.msra.mxu0 %v222
    %237 = vmatpush.msra.mxu0 %v220
    %238 = vmatpush.msra.mxu0 %v218
    %239 = vmatpush.msra.mxu0 %v216
    %240 = vmatpush.msra.mxu0 %v214
    %241 = vmatpush.msra.mxu0 %v212
    %242 = vmatpush.msra.mxu0 %v210
    %243 = vmatpush.msra.mxu0 %v208
    %244 = vmatpush.msra.mxu0 %v206
    %245 = vmatpush.msra.mxu0 %v204
    %246 = vmatpush.msra.mxu0 %v202
    %247 = vmatpush.msra.mxu0 %v200
    %248 = vmatmul.f32.gmra.mxu0 %v135
    %v249 = vpop.f32.mrf.mxu0
    %v250 = vadd.f32 0.0, %v249
    %251 = vmatmul.f32.gmra.mxu0 %v136
    %v252 = vpop.f32.mrf.mxu0
    %v253 = vadd.f32 0.0, %v252
    %254 = vmatmul.f32.gmra.mxu0 %v137
    %v255 = vpop.f32.mrf.mxu0
    %v256 = vadd.f32 0.0, %v255
    %257 = vmatmul.f32.gmra.mxu0 %v138
    %v258 = vpop.f32.mrf.mxu0
    %v259 = vadd.f32 0.0, %v258
    %260 = vmatmul.f32.gmra.mxu0 %v139
    %v261 = vpop.f32.mrf.mxu0
    %v262 = vadd.f32 0.0, %v261
    %263 = vmatmul.f32.gmra.mxu0 %v140
    %v264 = vpop.f32.mrf.mxu0
    %v265 = vadd.f32 0.0, %v264
    %266 = vmatmul.f32.gmra.mxu0 %v141
    %v267 = vpop.f32.mrf.mxu0
    %v268 = vadd.f32 0.0, %v267
    %269 = vmatmul.f32.gmra.mxu0 %v142
    %v270 = vpop.f32.mrf.mxu0
    %v271 = vadd.f32 0.0, %v270
    %272 = vmatmul.f32.gmra.mxu0 %v143
    %v273 = vpop.f32.mrf.mxu0
    %v274 = vadd.f32 0.0, %v273
    %275 = vmatmul.f32.gmra.mxu0 %v144
    %v276 = vpop.f32.mrf.mxu0
    %v277 = vadd.f32 0.0, %v276
    %278 = vmatmul.f32.gmra.mxu0 %v145
    %v279 = vpop.f32.mrf.mxu0
    %v280 = vadd.f32 0.0, %v279
    %281 = vmatmul.f32.gmra.mxu0 %v146
    %v282 = vpop.f32.mrf.mxu0
    %v283 = vadd.f32 0.0, %v282
    %284 = vmatmul.f32.gmra.mxu0 %v147
    %v285 = vpop.f32.mrf.mxu0
    %v286 = vadd.f32 0.0, %v285
    %287 = vmatmul.f32.gmra.mxu0 %v148
    %v288 = vpop.f32.mrf.mxu0
    %v289 = vadd.f32 0.0, %v288
    %290 = vmatmul.f32.gmra.mxu0 %v149
    %v291 = vpop.f32.mrf.mxu0
    %v292 = vadd.f32 0.0, %v291
    %293 = vmatmul.f32.gmra.mxu0 %v150
    %v294 = vpop.f32.mrf.mxu0
    %v295 = vadd.f32 0.0, %v294
    %296 = vmatmul.f32.gmra.mxu0 %v151
    %v297 = vpop.f32.mrf.mxu0
    %v298 = vadd.f32 0.0, %v297
    %299 = vmatmul.f32.gmra.mxu0 %v152
    %v300 = vpop.f32.mrf.mxu0
    %v301 = vadd.f32 0.0, %v300
    %302 = vmatmul.f32.gmra.mxu0 %v153
    %v303 = vpop.f32.mrf.mxu0
    %v304 = vadd.f32 0.0, %v303
    %305 = vmatmul.f32.gmra.mxu0 %v154
    %v306 = vpop.f32.mrf.mxu0
    %v307 = vadd.f32 0.0, %v306
    %308 = vmatmul.f32.gmra.mxu0 %v155
    %v309 = vpop.f32.mrf.mxu0
    %v310 = vadd.f32 0.0, %v309
    %311 = vmatmul.f32.gmra.mxu0 %v156
    %v312 = vpop.f32.mrf.mxu0
    %v313 = vadd.f32 0.0, %v312
    %314 = vmatmul.f32.gmra.mxu0 %v157
    %v315 = vpop.f32.mrf.mxu0
    %v316 = vadd.f32 0.0, %v315
    %317 = vmatmul.f32.gmra.mxu0 %v158
    %v318 = vpop.f32.mrf.mxu0
    %v319 = vadd.f32 0.0, %v318
    %320 = vmatmul.f32.gmra.mxu0 %v159
    %v321 = vpop.f32.mrf.mxu0
    %v322 = vadd.f32 0.0, %v321
    %323 = vmatmul.f32.gmra.mxu0 %v160
    %v324 = vpop.f32.mrf.mxu0
    %v325 = vadd.f32 0.0, %v324
    %326 = vmatmul.f32.gmra.mxu0 %v161
    %v327 = vpop.f32.mrf.mxu0
    %v328 = vadd.f32 0.0, %v327
    %329 = vmatmul.f32.gmra.mxu0 %v162
    %v330 = vpop.f32.mrf.mxu0
    %v331 = vadd.f32 0.0, %v330
    %332 = vmatmul.f32.gmra.mxu0 %v163
    %v333 = vpop.f32.mrf.mxu0
    %v334 = vadd.f32 0.0, %v333
    %335 = vmatmul.f32.gmra.mxu0 %v164
    %v336 = vpop.f32.mrf.mxu0
    %v337 = vadd.f32 0.0, %v336
    %338 = vmatmul.f32.gmra.mxu0 %v165
    %v339 = vpop.f32.mrf.mxu0
    %v340 = vadd.f32 0.0, %v339
    %341 = vmatmul.f32.gmra.mxu0 %v166
    %v342 = vpop.f32.mrf.mxu0
    %v343 = vadd.f32 0.0, %v342
    %344 = vmatmul.f32.gmra.mxu0 %v167
    %v345 = vpop.f32.mrf.mxu0
    %v346 = vadd.f32 0.0, %v345
    %347 = vmatmul.f32.gmra.mxu0 %v168
    %v348 = vpop.f32.mrf.mxu0
    %v349 = vadd.f32 0.0, %v348
    %350 = vmatmul.f32.gmra.mxu0 %v169
    %v351 = vpop.f32.mrf.mxu0
    %v352 = vadd.f32 0.0, %v351
    %353 = vmatmul.f32.gmra.mxu0 %v170
    %v354 = vpop.f32.mrf.mxu0
    %v355 = vadd.f32 0.0, %v354
    %356 = vmatmul.f32.gmra.mxu0 %v171
    %v357 = vpop.f32.mrf.mxu0
    %v358 = vadd.f32 0.0, %v357
    %359 = vmatmul.f32.gmra.mxu0 %v172
    %v360 = vpop.f32.mrf.mxu0
    %v361 = vadd.f32 0.0, %v360
    %362 = vmatmul.f32.gmra.mxu0 %v173
    %v363 = vpop.f32.mrf.mxu0
    %v364 = vadd.f32 0.0, %v363
    %365 = vmatmul.f32.gmra.mxu0 %v174
    %v366 = vpop.f32.mrf.mxu0
    %v367 = vadd.f32 0.0, %v366
    %368 = vmatmul.f32.gmra.mxu0 %v175
    %v369 = vpop.f32.mrf.mxu0
    %v370 = vadd.f32 0.0, %v369
    %371 = vmatmul.f32.gmra.mxu0 %v176
    %v372 = vpop.f32.mrf.mxu0
    %v373 = vadd.f32 0.0, %v372
    %374 = vmatmul.f32.gmra.mxu0 %v177
    %v375 = vpop.f32.mrf.mxu0
    %v376 = vadd.f32 0.0, %v375
    %377 = vmatmul.f32.gmra.mxu0 %v178
    %v378 = vpop.f32.mrf.mxu0
    %v379 = vadd.f32 0.0, %v378
    %380 = vmatmul.f32.gmra.mxu0 %v179
    %v381 = vpop.f32.mrf.mxu0
    %v382 = vadd.f32 0.0, %v381
    %383 = vmatmul.f32.gmra.mxu0 %v180
    %v384 = vpop.f32.mrf.mxu0
    %v385 = vadd.f32 0.0, %v384
    %386 = vmatmul.f32.gmra.mxu0 %v181
    %v387 = vpop.f32.mrf.mxu0
    %v388 = vadd.f32 0.0, %v387
    %389 = vmatmul.f32.gmra.mxu0 %v182
    %v390 = vpop.f32.mrf.mxu0
    %v391 = vadd.f32 0.0, %v390
    %392 = vmatmul.f32.gmra.mxu0 %v183
    %v393 = vpop.f32.mrf.mxu0
    %v394 = vadd.f32 0.0, %v393
    %395 = vmatmul.f32.gmra.mxu0 %v184
    %v396 = vpop.f32.mrf.mxu0
    %v397 = vadd.f32 0.0, %v396
    %398 = vmatmul.f32.gmra.mxu0 %v185
    %v399 = vpop.f32.mrf.mxu0
    %v400 = vadd.f32 0.0, %v399
    %401 = vmatmul.f32.gmra.mxu0 %v186
    %v402 = vpop.f32.mrf.mxu0
    %v403 = vadd.f32 0.0, %v402
    %404 = vmatmul.f32.gmra.mxu0 %v187
    %v405 = vpop.f32.mrf.mxu0
    %v406 = vadd.f32 0.0, %v405
    %407 = vmatmul.f32.gmra.mxu0 %v188
    %v408 = vpop.f32.mrf.mxu0
    %v409 = vadd.f32 0.0, %v408
    %410 = vmatmul.f32.gmra.mxu0 %v189
    %v411 = vpop.f32.mrf.mxu0
    %v412 = vadd.f32 0.0, %v411
    %413 = vmatmul.f32.gmra.mxu0 %v190
    %v414 = vpop.f32.mrf.mxu0
    %v415 = vadd.f32 0.0, %v414
    %416 = vmatmul.f32.gmra.mxu0 %v191
    %v417 = vpop.f32.mrf.mxu0
    %v418 = vadd.f32 0.0, %v417
    %419 = vmatmul.f32.gmra.mxu0 %v192
    %v420 = vpop.f32.mrf.mxu0
    %v421 = vadd.f32 0.0, %v420
    %422 = vmatmul.f32.gmra.mxu0 %v193
    %v423 = vpop.f32.mrf.mxu0
    %v424 = vadd.f32 0.0, %v423
    %425 = vmatmul.f32.gmra.mxu0 %v194
    %v426 = vpop.f32.mrf.mxu0
    %v427 = vadd.f32 0.0, %v426
    %428 = vmatmul.f32.gmra.mxu0 %v195
    %v429 = vpop.f32.mrf.mxu0
    %v430 = vadd.f32 0.0, %v429
    %431 = vmatmul.f32.gmra.mxu0 %v196
    %v432 = vpop.f32.mrf.mxu0
    %v433 = vadd.f32 0.0, %v432
    %434 = vmatmul.f32.gmra.mxu0 %v197
    %v435 = vpop.f32.mrf.mxu0
    %v436 = vadd.f32 0.0, %v435
    %437 = vmatmul.f32.gmra.mxu0 %v198
    %v438 = vpop.f32.mrf.mxu0
    %v439 = vadd.f32 0.0, %v438
    %440 = vdwg.mxu0
    %441 = vmatpush.msra.mxu0 %v231
    %442 = vmatpush.msra.mxu0 %v229
    %443 = vmatpush.msra.mxu0 %v227
    %444 = vmatpush.msra.mxu0 %v225
    %445 = vmatpush.msra.mxu0 %v223
    %446 = vmatpush.msra.mxu0 %v221
    %447 = vmatpush.msra.mxu0 %v219
    %448 = vmatpush.msra.mxu0 %v217
    %449 = vmatpush.msra.mxu0 %v215
    %450 = vmatpush.msra.mxu0 %v213
    %451 = vmatpush.msra.mxu0 %v211
    %452 = vmatpush.msra.mxu0 %v209
    %453 = vmatpush.msra.mxu0 %v207
    %454 = vmatpush.msra.mxu0 %v205
    %455 = vmatpush.msra.mxu0 %v203
    %456 = vmatpush.msra.mxu0 %v201
    %457 = vmatmul.f32.gmra.mxu0 %v135
    %v458 = vpop.f32.mrf.mxu0
    %v459 = vadd.f32 0.0, %v458
    %460 = vmatmul.f32.gmra.mxu0 %v136
    %v461 = vpop.f32.mrf.mxu0
    %v462 = vadd.f32 0.0, %v461
    %463 = vmatmul.f32.gmra.mxu0 %v137
    %v464 = vpop.f32.mrf.mxu0
    %v465 = vadd.f32 0.0, %v464
    %466 = vmatmul.f32.gmra.mxu0 %v138
    %v467 = vpop.f32.mrf.mxu0
    %v468 = vadd.f32 0.0, %v467
    %469 = vmatmul.f32.gmra.mxu0 %v139
    %v470 = vpop.f32.mrf.mxu0
    %v471 = vadd.f32 0.0, %v470
    %472 = vmatmul.f32.gmra.mxu0 %v140
    %v473 = vpop.f32.mrf.mxu0
    %v474 = vadd.f32 0.0, %v473
    %475 = vmatmul.f32.gmra.mxu0 %v141
    %v476 = vpop.f32.mrf.mxu0
    %v477 = vadd.f32 0.0, %v476
    %478 = vmatmul.f32.gmra.mxu0 %v142
    %v479 = vpop.f32.mrf.mxu0
    %v480 = vadd.f32 0.0, %v479
    %481 = vmatmul.f32.gmra.mxu0 %v143
    %v482 = vpop.f32.mrf.mxu0
    %v483 = vadd.f32 0.0, %v482
    %484 = vmatmul.f32.gmra.mxu0 %v144
    %v485 = vpop.f32.mrf.mxu0
    %v486 = vadd.f32 0.0, %v485
    %487 = vmatmul.f32.gmra.mxu0 %v145
    %v488 = vpop.f32.mrf.mxu0
    %v489 = vadd.f32 0.0, %v488
    %490 = vmatmul.f32.gmra.mxu0 %v146
    %v491 = vpop.f32.mrf.mxu0
    %v492 = vadd.f32 0.0, %v491
    %493 = vmatmul.f32.gmra.mxu0 %v147
    %v494 = vpop.f32.mrf.mxu0
    %v495 = vadd.f32 0.0, %v494
    %496 = vmatmul.f32.gmra.mxu0 %v148
    %v497 = vpop.f32.mrf.mxu0
    %v498 = vadd.f32 0.0, %v497
    %499 = vmatmul.f32.gmra.mxu0 %v149
    %v500 = vpop.f32.mrf.mxu0
    %v501 = vadd.f32 0.0, %v500
    %502 = vmatmul.f32.gmra.mxu0 %v150
    %v503 = vpop.f32.mrf.mxu0
    %v504 = vadd.f32 0.0, %v503
    %505 = vmatmul.f32.gmra.mxu0 %v151
    %v506 = vpop.f32.mrf.mxu0
    %v507 = vadd.f32 0.0, %v506
    %508 = vmatmul.f32.gmra.mxu0 %v152
    %v509 = vpop.f32.mrf.mxu0
    %v510 = vadd.f32 0.0, %v509
    %511 = vmatmul.f32.gmra.mxu0 %v153
    %v512 = vpop.f32.mrf.mxu0
    %v513 = vadd.f32 0.0, %v512
    %514 = vmatmul.f32.gmra.mxu0 %v154
    %v515 = vpop.f32.mrf.mxu0
    %v516 = vadd.f32 0.0, %v515
    %517 = vmatmul.f32.gmra.mxu0 %v155
    %v518 = vpop.f32.mrf.mxu0
    %v519 = vadd.f32 0.0, %v518
    %520 = vmatmul.f32.gmra.mxu0 %v156
    %v521 = vpop.f32.mrf.mxu0
    %v522 = vadd.f32 0.0, %v521
    %523 = vmatmul.f32.gmra.mxu0 %v157
    %v524 = vpop.f32.mrf.mxu0
    %v525 = vadd.f32 0.0, %v524
    %526 = vmatmul.f32.gmra.mxu0 %v158
    %v527 = vpop.f32.mrf.mxu0
    %v528 = vadd.f32 0.0, %v527
    %529 = vmatmul.f32.gmra.mxu0 %v159
    %v530 = vpop.f32.mrf.mxu0
    %v531 = vadd.f32 0.0, %v530
    %532 = vmatmul.f32.gmra.mxu0 %v160
    %v533 = vpop.f32.mrf.mxu0
    %v534 = vadd.f32 0.0, %v533
    %535 = vmatmul.f32.gmra.mxu0 %v161
    %v536 = vpop.f32.mrf.mxu0
    %v537 = vadd.f32 0.0, %v536
    %538 = vmatmul.f32.gmra.mxu0 %v162
    %v539 = vpop.f32.mrf.mxu0
    %v540 = vadd.f32 0.0, %v539
    %541 = vmatmul.f32.gmra.mxu0 %v163
    %v542 = vpop.f32.mrf.mxu0
    %v543 = vadd.f32 0.0, %v542
    %544 = vmatmul.f32.gmra.mxu0 %v164
    %v545 = vpop.f32.mrf.mxu0
    %v546 = vadd.f32 0.0, %v545
    %547 = vmatmul.f32.gmra.mxu0 %v165
    %v548 = vpop.f32.mrf.mxu0
    %v549 = vadd.f32 0.0, %v548
    %550 = vmatmul.f32.gmra.mxu0 %v166
    %v551 = vpop.f32.mrf.mxu0
    %v552 = vadd.f32 0.0, %v551
    %553 = vmatmul.f32.gmra.mxu0 %v167
    %v554 = vpop.f32.mrf.mxu0
    %v555 = vadd.f32 0.0, %v554
    %556 = vmatmul.f32.gmra.mxu0 %v168
    %v557 = vpop.f32.mrf.mxu0
    %v558 = vadd.f32 0.0, %v557
    %559 = vmatmul.f32.gmra.mxu0 %v169
    %v560 = vpop.f32.mrf.mxu0
    %v561 = vadd.f32 0.0, %v560
    %562 = vmatmul.f32.gmra.mxu0 %v170
    %v563 = vpop.f32.mrf.mxu0
    %v564 = vadd.f32 0.0, %v563
    %565 = vmatmul.f32.gmra.mxu0 %v171
    %v566 = vpop.f32.mrf.mxu0
    %v567 = vadd.f32 0.0, %v566
    %568 = vmatmul.f32.gmra.mxu0 %v172
    %v569 = vpop.f32.mrf.mxu0
    %v570 = vadd.f32 0.0, %v569
    %571 = vmatmul.f32.gmra.mxu0 %v173
    %v572 = vpop.f32.mrf.mxu0
    %v573 = vadd.f32 0.0, %v572
    %574 = vmatmul.f32.gmra.mxu0 %v174
    %v575 = vpop.f32.mrf.mxu0
    %v576 = vadd.f32 0.0, %v575
    %577 = vmatmul.f32.gmra.mxu0 %v175
    %v578 = vpop.f32.mrf.mxu0
    %v579 = vadd.f32 0.0, %v578
    %580 = vmatmul.f32.gmra.mxu0 %v176
    %v581 = vpop.f32.mrf.mxu0
    %v582 = vadd.f32 0.0, %v581
    %583 = vmatmul.f32.gmra.mxu0 %v177
    %v584 = vpop.f32.mrf.mxu0
    %v585 = vadd.f32 0.0, %v584
    %586 = vmatmul.f32.gmra.mxu0 %v178
    %v587 = vpop.f32.mrf.mxu0
    %v588 = vadd.f32 0.0, %v587
    %589 = vmatmul.f32.gmra.mxu0 %v179
    %v590 = vpop.f32.mrf.mxu0
    %v591 = vadd.f32 0.0, %v590
    %592 = vmatmul.f32.gmra.mxu0 %v180
    %v593 = vpop.f32.mrf.mxu0
    %v594 = vadd.f32 0.0, %v593
    %595 = vmatmul.f32.gmra.mxu0 %v181
    %v596 = vpop.f32.mrf.mxu0
    %v597 = vadd.f32 0.0, %v596
    %598 = vmatmul.f32.gmra.mxu0 %v182
    %v599 = vpop.f32.mrf.mxu0
    %v600 = vadd.f32 0.0, %v599
    %601 = vmatmul.f32.gmra.mxu0 %v183
    %v602 = vpop.f32.mrf.mxu0
    %v603 = vadd.f32 0.0, %v602
    %604 = vmatmul.f32.gmra.mxu0 %v184
    %v605 = vpop.f32.mrf.mxu0
    %v606 = vadd.f32 0.0, %v605
    %607 = vmatmul.f32.gmra.mxu0 %v185
    %v608 = vpop.f32.mrf.mxu0
    %v609 = vadd.f32 0.0, %v608
    %610 = vmatmul.f32.gmra.mxu0 %v186
    %v611 = vpop.f32.mrf.mxu0
    %v612 = vadd.f32 0.0, %v611
    %613 = vmatmul.f32.gmra.mxu0 %v187
    %v614 = vpop.f32.mrf.mxu0
    %v615 = vadd.f32 0.0, %v614
    %616 = vmatmul.f32.gmra.mxu0 %v188
    %v617 = vpop.f32.mrf.mxu0
    %v618 = vadd.f32 0.0, %v617
    %619 = vmatmul.f32.gmra.mxu0 %v189
    %v620 = vpop.f32.mrf.mxu0
    %v621 = vadd.f32 0.0, %v620
    %622 = vmatmul.f32.gmra.mxu0 %v190
    %v623 = vpop.f32.mrf.mxu0
    %v624 = vadd.f32 0.0, %v623
    %625 = vmatmul.f32.gmra.mxu0 %v191
    %v626 = vpop.f32.mrf.mxu0
    %v627 = vadd.f32 0.0, %v626
    %628 = vmatmul.f32.gmra.mxu0 %v192
    %v629 = vpop.f32.mrf.mxu0
    %v630 = vadd.f32 0.0, %v629
    %631 = vmatmul.f32.gmra.mxu0 %v193
    %v632 = vpop.f32.mrf.mxu0
    %v633 = vadd.f32 0.0, %v632
    %634 = vmatmul.f32.gmra.mxu0 %v194
    %v635 = vpop.f32.mrf.mxu0
    %v636 = vadd.f32 0.0, %v635
    %637 = vmatmul.f32.gmra.mxu0 %v195
    %v638 = vpop.f32.mrf.mxu0
    %v639 = vadd.f32 0.0, %v638
    %640 = vmatmul.f32.gmra.mxu0 %v196
    %v641 = vpop.f32.mrf.mxu0
    %v642 = vadd.f32 0.0, %v641
    %643 = vmatmul.f32.gmra.mxu0 %v197
    %v644 = vpop.f32.mrf.mxu0
    %v645 = vadd.f32 0.0, %v644
    %646 = vmatmul.f32.gmra.mxu0 %v198
    %v647 = vpop.f32.mrf.mxu0
    %v648 = vadd.f32 0.0, %v647
    %649 = vdwg.mxu0
    %650 = vmatpush.msra.mxu0 %v133
    %651 = vmatpush.msra.mxu0 %v131
    %652 = vmatpush.msra.mxu0 %v129
    %653 = vmatpush.msra.mxu0 %v127
    %654 = vmatpush.msra.mxu0 %v125
    %655 = vmatpush.msra.mxu0 %v123
    %656 = vmatpush.msra.mxu0 %v121
    %657 = vmatpush.msra.mxu0 %v119
    %658 = vmatpush.msra.mxu0 %v117
    %659 = vmatpush.msra.mxu0 %v115
    %660 = vmatpush.msra.mxu0 %v113
    %661 = vmatpush.msra.mxu0 %v111
    %662 = vmatpush.msra.mxu0 %v109
    %663 = vmatpush.msra.mxu0 %v107
    %664 = vmatpush.msra.mxu0 %v105
    %665 = vmatpush.msra.mxu0 %v103
    %666 = vmatmul.f32.gmra.mxu0 %v39
    %v667 = vpop.f32.mrf.mxu0
    %v668 = vadd.f32 %v250, %v667
    %669 = vmatmul.f32.gmra.mxu0 %v40
    %v670 = vpop.f32.mrf.mxu0
    %v671 = vadd.f32 %v253, %v670
    %672 = vmatmul.f32.gmra.mxu0 %v41
    %v673 = vpop.f32.mrf.mxu0
    %v674 = vadd.f32 %v256, %v673
    %675 = vmatmul.f32.gmra.mxu0 %v42
    %v676 = vpop.f32.mrf.mxu0
    %v677 = vadd.f32 %v259, %v676
    %678 = vmatmul.f32.gmra.mxu0 %v43
    %v679 = vpop.f32.mrf.mxu0
    %v680 = vadd.f32 %v262, %v679
    %681 = vmatmul.f32.gmra.mxu0 %v44
    %v682 = vpop.f32.mrf.mxu0
    %v683 = vadd.f32 %v265, %v682
    %684 = vmatmul.f32.gmra.mxu0 %v45
    %v685 = vpop.f32.mrf.mxu0
    %v686 = vadd.f32 %v268, %v685
    %687 = vmatmul.f32.gmra.mxu0 %v46
    %v688 = vpop.f32.mrf.mxu0
    %v689 = vadd.f32 %v271, %v688
    %690 = vmatmul.f32.gmra.mxu0 %v47
    %v691 = vpop.f32.mrf.mxu0
    %v692 = vadd.f32 %v274, %v691
    %693 = vmatmul.f32.gmra.mxu0 %v48
    %v694 = vpop.f32.mrf.mxu0
    %v695 = vadd.f32 %v277, %v694
    %696 = vmatmul.f32.gmra.mxu0 %v49
    %v697 = vpop.f32.mrf.mxu0
    %v698 = vadd.f32 %v280, %v697
    %699 = vmatmul.f32.gmra.mxu0 %v50
    %v700 = vpop.f32.mrf.mxu0
    %v701 = vadd.f32 %v283, %v700
    %702 = vmatmul.f32.gmra.mxu0 %v51
    %v703 = vpop.f32.mrf.mxu0
    %v704 = vadd.f32 %v286, %v703
    %705 = vmatmul.f32.gmra.mxu0 %v52
    %v706 = vpop.f32.mrf.mxu0
    %v707 = vadd.f32 %v289, %v706
    %708 = vmatmul.f32.gmra.mxu0 %v53
    %v709 = vpop.f32.mrf.mxu0
    %v710 = vadd.f32 %v292, %v709
    %711 = vmatmul.f32.gmra.mxu0 %v54
    %v712 = vpop.f32.mrf.mxu0
    %v713 = vadd.f32 %v295, %v712
    %714 = vmatmul.f32.gmra.mxu0 %v55
    %v715 = vpop.f32.mrf.mxu0
    %v716 = vadd.f32 %v298, %v715
    %717 = vmatmul.f32.gmra.mxu0 %v56
    %v718 = vpop.f32.mrf.mxu0
    %v719 = vadd.f32 %v301, %v718
    %720 = vmatmul.f32.gmra.mxu0 %v57
    %v721 = vpop.f32.mrf.mxu0
    %v722 = vadd.f32 %v304, %v721
    %723 = vmatmul.f32.gmra.mxu0 %v58
    %v724 = vpop.f32.mrf.mxu0
    %v725 = vadd.f32 %v307, %v724
    %726 = vmatmul.f32.gmra.mxu0 %v59
    %v727 = vpop.f32.mrf.mxu0
    %v728 = vadd.f32 %v310, %v727
    %729 = vmatmul.f32.gmra.mxu0 %v60
    %v730 = vpop.f32.mrf.mxu0
    %v731 = vadd.f32 %v313, %v730
    %732 = vmatmul.f32.gmra.mxu0 %v61
    %v733 = vpop.f32.mrf.mxu0
    %v734 = vadd.f32 %v316, %v733
    %735 = vmatmul.f32.gmra.mxu0 %v62
    %v736 = vpop.f32.mrf.mxu0
    %v737 = vadd.f32 %v319, %v736
    %738 = vmatmul.f32.gmra.mxu0 %v63
    %v739 = vpop.f32.mrf.mxu0
    %v740 = vadd.f32 %v322, %v739
    %741 = vmatmul.f32.gmra.mxu0 %v64
    %v742 = vpop.f32.mrf.mxu0
    %v743 = vadd.f32 %v325, %v742
    %744 = vmatmul.f32.gmra.mxu0 %v65
    %v745 = vpop.f32.mrf.mxu0
    %v746 = vadd.f32 %v328, %v745
    %747 = vmatmul.f32.gmra.mxu0 %v66
    %v748 = vpop.f32.mrf.mxu0
    %v749 = vadd.f32 %v331, %v748
    %750 = vmatmul.f32.gmra.mxu0 %v67
    %v751 = vpop.f32.mrf.mxu0
    %v752 = vadd.f32 %v334, %v751
    %753 = vmatmul.f32.gmra.mxu0 %v68
    %v754 = vpop.f32.mrf.mxu0
    %v755 = vadd.f32 %v337, %v754
    %756 = vmatmul.f32.gmra.mxu0 %v69
    %v757 = vpop.f32.mrf.mxu0
    %v758 = vadd.f32 %v340, %v757
    %759 = vmatmul.f32.gmra.mxu0 %v70
    %v760 = vpop.f32.mrf.mxu0
    %v761 = vadd.f32 %v343, %v760
    %762 = vmatmul.f32.gmra.mxu0 %v71
    %v763 = vpop.f32.mrf.mxu0
    %v764 = vadd.f32 %v346, %v763
    %765 = vmatmul.f32.gmra.mxu0 %v72
    %v766 = vpop.f32.mrf.mxu0
    %v767 = vadd.f32 %v349, %v766
    %768 = vmatmul.f32.gmra.mxu0 %v73
    %v769 = vpop.f32.mrf.mxu0
    %v770 = vadd.f32 %v352, %v769
    %771 = vmatmul.f32.gmra.mxu0 %v74
    %v772 = vpop.f32.mrf.mxu0
    %v773 = vadd.f32 %v355, %v772
    %774 = vmatmul.f32.gmra.mxu0 %v75
    %v775 = vpop.f32.mrf.mxu0
    %v776 = vadd.f32 %v358, %v775
    %777 = vmatmul.f32.gmra.mxu0 %v76
    %v778 = vpop.f32.mrf.mxu0
    %v779 = vadd.f32 %v361, %v778
    %780 = vmatmul.f32.gmra.mxu0 %v77
    %v781 = vpop.f32.mrf.mxu0
    %v782 = vadd.f32 %v364, %v781
    %783 = vmatmul.f32.gmra.mxu0 %v78
    %v784 = vpop.f32.mrf.mxu0
    %v785 = vadd.f32 %v367, %v784
    %786 = vmatmul.f32.gmra.mxu0 %v79
    %v787 = vpop.f32.mrf.mxu0
    %v788 = vadd.f32 %v370, %v787
    %789 = vmatmul.f32.gmra.mxu0 %v80
    %v790 = vpop.f32.mrf.mxu0
    %v791 = vadd.f32 %v373, %v790
    %792 = vmatmul.f32.gmra.mxu0 %v81
    %v793 = vpop.f32.mrf.mxu0
    %v794 = vadd.f32 %v376, %v793
    %795 = vmatmul.f32.gmra.mxu0 %v82
    %v796 = vpop.f32.mrf.mxu0
    %v797 = vadd.f32 %v379, %v796
    %798 = vmatmul.f32.gmra.mxu0 %v83
    %v799 = vpop.f32.mrf.mxu0
    %v800 = vadd.f32 %v382, %v799
    %801 = vmatmul.f32.gmra.mxu0 %v84
    %v802 = vpop.f32.mrf.mxu0
    %v803 = vadd.f32 %v385, %v802
    %804 = vmatmul.f32.gmra.mxu0 %v85
    %v805 = vpop.f32.mrf.mxu0
    %v806 = vadd.f32 %v388, %v805
    %807 = vmatmul.f32.gmra.mxu0 %v86
    %v808 = vpop.f32.mrf.mxu0
    %v809 = vadd.f32 %v391, %v808
    %810 = vmatmul.f32.gmra.mxu0 %v87
    %v811 = vpop.f32.mrf.mxu0
    %v812 = vadd.f32 %v394, %v811
    %813 = vmatmul.f32.gmra.mxu0 %v88
    %v814 = vpop.f32.mrf.mxu0
    %v815 = vadd.f32 %v397, %v814
    %816 = vmatmul.f32.gmra.mxu0 %v89
    %v817 = vpop.f32.mrf.mxu0
    %v818 = vadd.f32 %v400, %v817
    %819 = vmatmul.f32.gmra.mxu0 %v90
    %v820 = vpop.f32.mrf.mxu0
    %v821 = vadd.f32 %v403, %v820
    %822 = vmatmul.f32.gmra.mxu0 %v91
    %v823 = vpop.f32.mrf.mxu0
    %v824 = vadd.f32 %v406, %v823
    %825 = vmatmul.f32.gmra.mxu0 %v92
    %v826 = vpop.f32.mrf.mxu0
    %v827 = vadd.f32 %v409, %v826
    %828 = vmatmul.f32.gmra.mxu0 %v93
    %v829 = vpop.f32.mrf.mxu0
    %v830 = vadd.f32 %v412, %v829
    %831 = vmatmul.f32.gmra.mxu0 %v94
    %v832 = vpop.f32.mrf.mxu0
    %v833 = vadd.f32 %v415, %v832
    %834 = vmatmul.f32.gmra.mxu0 %v95
    %v835 = vpop.f32.mrf.mxu0
    %v836 = vadd.f32 %v418, %v835
    %837 = vmatmul.f32.gmra.mxu0 %v96
    %v838 = vpop.f32.mrf.mxu0
    %v839 = vadd.f32 %v421, %v838
    %840 = vmatmul.f32.gmra.mxu0 %v97
    %v841 = vpop.f32.mrf.mxu0
    %v842 = vadd.f32 %v424, %v841
    %843 = vmatmul.f32.gmra.mxu0 %v98
    %v844 = vpop.f32.mrf.mxu0
    %v845 = vadd.f32 %v427, %v844
    %846 = vmatmul.f32.gmra.mxu0 %v99
    %v847 = vpop.f32.mrf.mxu0
    %v848 = vadd.f32 %v430, %v847
    %849 = vmatmul.f32.gmra.mxu0 %v100
    %v850 = vpop.f32.mrf.mxu0
    %v851 = vadd.f32 %v433, %v850
    %852 = vmatmul.f32.gmra.mxu0 %v101
    %v853 = vpop.f32.mrf.mxu0
    %v854 = vadd.f32 %v436, %v853
    %855 = vmatmul.f32.gmra.mxu0 %v102
    %v856 = vpop.f32.mrf.mxu0
    %v857 = vadd.f32 %v439, %v856
    %858 = vdwg.mxu0
    %859 = vmatpush.msra.mxu0 %v134
    %860 = vmatpush.msra.mxu0 %v132
    %861 = vmatpush.msra.mxu0 %v130
    %862 = vmatpush.msra.mxu0 %v128
    %863 = vmatpush.msra.mxu0 %v126
    %864 = vmatpush.msra.mxu0 %v124
    %865 = vmatpush.msra.mxu0 %v122
    %866 = vmatpush.msra.mxu0 %v120
    %867 = vmatpush.msra.mxu0 %v118
    %868 = vmatpush.msra.mxu0 %v116
    %869 = vmatpush.msra.mxu0 %v114
    %870 = vmatpush.msra.mxu0 %v112
    %871 = vmatpush.msra.mxu0 %v110
    %872 = vmatpush.msra.mxu0 %v108
    %873 = vmatpush.msra.mxu0 %v106
    %874 = vmatpush.msra.mxu0 %v104
    %875 = vmatmul.f32.gmra.mxu0 %v39
    %v876 = vpop.f32.mrf.mxu0
    %v877 = vadd.f32 %v459, %v876
    %878 = vmatmul.f32.gmra.mxu0 %v40
    %v879 = vpop.f32.mrf.mxu0
    %v880 = vadd.f32 %v462, %v879
    %881 = vmatmul.f32.gmra.mxu0 %v41
    %v882 = vpop.f32.mrf.mxu0
    %v883 = vadd.f32 %v465, %v882
    %884 = vmatmul.f32.gmra.mxu0 %v42
    %v885 = vpop.f32.mrf.mxu0
    %v886 = vadd.f32 %v468, %v885
    %887 = vmatmul.f32.gmra.mxu0 %v43
    %v888 = vpop.f32.mrf.mxu0
    %v889 = vadd.f32 %v471, %v888
    %890 = vmatmul.f32.gmra.mxu0 %v44
    %v891 = vpop.f32.mrf.mxu0
    %v892 = vadd.f32 %v474, %v891
    %893 = vmatmul.f32.gmra.mxu0 %v45
    %v894 = vpop.f32.mrf.mxu0
    %v895 = vadd.f32 %v477, %v894
    %896 = vmatmul.f32.gmra.mxu0 %v46
    %v897 = vpop.f32.mrf.mxu0
    %v898 = vadd.f32 %v480, %v897
    %899 = vmatmul.f32.gmra.mxu0 %v47
    %v900 = vpop.f32.mrf.mxu0
    %v901 = vadd.f32 %v483, %v900
    %902 = vmatmul.f32.gmra.mxu0 %v48
    %v903 = vpop.f32.mrf.mxu0
    %v904 = vadd.f32 %v486, %v903
    %905 = vmatmul.f32.gmra.mxu0 %v49
    %v906 = vpop.f32.mrf.mxu0
    %v907 = vadd.f32 %v489, %v906
    %908 = vmatmul.f32.gmra.mxu0 %v50
    %v909 = vpop.f32.mrf.mxu0
    %v910 = vadd.f32 %v492, %v909
    %911 = vmatmul.f32.gmra.mxu0 %v51
    %v912 = vpop.f32.mrf.mxu0
    %v913 = vadd.f32 %v495, %v912
    %914 = vmatmul.f32.gmra.mxu0 %v52
    %v915 = vpop.f32.mrf.mxu0
    %v916 = vadd.f32 %v498, %v915
    %917 = vmatmul.f32.gmra.mxu0 %v53
    %v918 = vpop.f32.mrf.mxu0
    %v919 = vadd.f32 %v501, %v918
    %920 = vmatmul.f32.gmra.mxu0 %v54
    %v921 = vpop.f32.mrf.mxu0
    %v922 = vadd.f32 %v504, %v921
    %923 = vmatmul.f32.gmra.mxu0 %v55
    %v924 = vpop.f32.mrf.mxu0
    %v925 = vadd.f32 %v507, %v924
    %926 = vmatmul.f32.gmra.mxu0 %v56
    %v927 = vpop.f32.mrf.mxu0
    %v928 = vadd.f32 %v510, %v927
    %929 = vmatmul.f32.gmra.mxu0 %v57
    %v930 = vpop.f32.mrf.mxu0
    %v931 = vadd.f32 %v513, %v930
    %932 = vmatmul.f32.gmra.mxu0 %v58
    %v933 = vpop.f32.mrf.mxu0
    %v934 = vadd.f32 %v516, %v933
    %935 = vmatmul.f32.gmra.mxu0 %v59
    %v936 = vpop.f32.mrf.mxu0
    %v937 = vadd.f32 %v519, %v936
    %938 = vmatmul.f32.gmra.mxu0 %v60
    %v939 = vpop.f32.mrf.mxu0
    %v940 = vadd.f32 %v522, %v939
    %941 = vmatmul.f32.gmra.mxu0 %v61
    %v942 = vpop.f32.mrf.mxu0
    %v943 = vadd.f32 %v525, %v942
    %944 = vmatmul.f32.gmra.mxu0 %v62
    %v945 = vpop.f32.mrf.mxu0
    %v946 = vadd.f32 %v528, %v945
    %947 = vmatmul.f32.gmra.mxu0 %v63
    %v948 = vpop.f32.mrf.mxu0
    %v949 = vadd.f32 %v531, %v948
    %950 = vmatmul.f32.gmra.mxu0 %v64
    %v951 = vpop.f32.mrf.mxu0
    %v952 = vadd.f32 %v534, %v951
    %953 = vmatmul.f32.gmra.mxu0 %v65
    %v954 = vpop.f32.mrf.mxu0
    %v955 = vadd.f32 %v537, %v954
    %956 = vmatmul.f32.gmra.mxu0 %v66
    %v957 = vpop.f32.mrf.mxu0
    %v958 = vadd.f32 %v540, %v957
    %959 = vmatmul.f32.gmra.mxu0 %v67
    %v960 = vpop.f32.mrf.mxu0
    %v961 = vadd.f32 %v543, %v960
    %962 = vmatmul.f32.gmra.mxu0 %v68
    %v963 = vpop.f32.mrf.mxu0
    %v964 = vadd.f32 %v546, %v963
    %965 = vmatmul.f32.gmra.mxu0 %v69
    %v966 = vpop.f32.mrf.mxu0
    %v967 = vadd.f32 %v549, %v966
    %968 = vmatmul.f32.gmra.mxu0 %v70
    %v969 = vpop.f32.mrf.mxu0
    %v970 = vadd.f32 %v552, %v969
    %971 = vmatmul.f32.gmra.mxu0 %v71
    %v972 = vpop.f32.mrf.mxu0
    %v973 = vadd.f32 %v555, %v972
    %974 = vmatmul.f32.gmra.mxu0 %v72
    %v975 = vpop.f32.mrf.mxu0
    %v976 = vadd.f32 %v558, %v975
    %977 = vmatmul.f32.gmra.mxu0 %v73
    %v978 = vpop.f32.mrf.mxu0
    %v979 = vadd.f32 %v561, %v978
    %980 = vmatmul.f32.gmra.mxu0 %v74
    %v981 = vpop.f32.mrf.mxu0
    %v982 = vadd.f32 %v564, %v981
    %983 = vmatmul.f32.gmra.mxu0 %v75
    %v984 = vpop.f32.mrf.mxu0
    %v985 = vadd.f32 %v567, %v984
    %986 = vmatmul.f32.gmra.mxu0 %v76
    %v987 = vpop.f32.mrf.mxu0
    %v988 = vadd.f32 %v570, %v987
    %989 = vmatmul.f32.gmra.mxu0 %v77
    %v990 = vpop.f32.mrf.mxu0
    %v991 = vadd.f32 %v573, %v990
    %992 = vmatmul.f32.gmra.mxu0 %v78
    %v993 = vpop.f32.mrf.mxu0
    %v994 = vadd.f32 %v576, %v993
    %995 = vmatmul.f32.gmra.mxu0 %v79
    %v996 = vpop.f32.mrf.mxu0
    %v997 = vadd.f32 %v579, %v996
    %998 = vmatmul.f32.gmra.mxu0 %v80
    %v999 = vpop.f32.mrf.mxu0
    %v1000 = vadd.f32 %v582, %v999
    %1001 = vmatmul.f32.gmra.mxu0 %v81
    %v1002 = vpop.f32.mrf.mxu0
    %v1003 = vadd.f32 %v585, %v1002
    %1004 = vmatmul.f32.gmra.mxu0 %v82
    %v1005 = vpop.f32.mrf.mxu0
    %v1006 = vadd.f32 %v588, %v1005
    %1007 = vmatmul.f32.gmra.mxu0 %v83
    %v1008 = vpop.f32.mrf.mxu0
    %v1009 = vadd.f32 %v591, %v1008
    %1010 = vmatmul.f32.gmra.mxu0 %v84
    %v1011 = vpop.f32.mrf.mxu0
    %v1012 = vadd.f32 %v594, %v1011
    %1013 = vmatmul.f32.gmra.mxu0 %v85
    %v1014 = vpop.f32.mrf.mxu0
    %v1015 = vadd.f32 %v597, %v1014
    %1016 = vmatmul.f32.gmra.mxu0 %v86
    %v1017 = vpop.f32.mrf.mxu0
    %v1018 = vadd.f32 %v600, %v1017
    %1019 = vmatmul.f32.gmra.mxu0 %v87
    %v1020 = vpop.f32.mrf.mxu0
    %v1021 = vadd.f32 %v603, %v1020
    %1022 = vmatmul.f32.gmra.mxu0 %v88
    %v1023 = vpop.f32.mrf.mxu0
    %v1024 = vadd.f32 %v606, %v1023
    %1025 = vmatmul.f32.gmra.mxu0 %v89
    %v1026 = vpop.f32.mrf.mxu0
    %v1027 = vadd.f32 %v609, %v1026
    %1028 = vmatmul.f32.gmra.mxu0 %v90
    %v1029 = vpop.f32.mrf.mxu0
    %v1030 = vadd.f32 %v612, %v1029
    %1031 = vmatmul.f32.gmra.mxu0 %v91
    %v1032 = vpop.f32.mrf.mxu0
    %v1033 = vadd.f32 %v615, %v1032
    %1034 = vmatmul.f32.gmra.mxu0 %v92
    %v1035 = vpop.f32.mrf.mxu0
    %v1036 = vadd.f32 %v618, %v1035
    %1037 = vmatmul.f32.gmra.mxu0 %v93
    %v1038 = vpop.f32.mrf.mxu0
    %v1039 = vadd.f32 %v621, %v1038
    %1040 = vmatmul.f32.gmra.mxu0 %v94
    %v1041 = vpop.f32.mrf.mxu0
    %v1042 = vadd.f32 %v624, %v1041
    %1043 = vmatmul.f32.gmra.mxu0 %v95
    %v1044 = vpop.f32.mrf.mxu0
    %v1045 = vadd.f32 %v627, %v1044
    %1046 = vmatmul.f32.gmra.mxu0 %v96
    %v1047 = vpop.f32.mrf.mxu0
    %v1048 = vadd.f32 %v630, %v1047
    %1049 = vmatmul.f32.gmra.mxu0 %v97
    %v1050 = vpop.f32.mrf.mxu0
    %v1051 = vadd.f32 %v633, %v1050
    %1052 = vmatmul.f32.gmra.mxu0 %v98
    %v1053 = vpop.f32.mrf.mxu0
    %v1054 = vadd.f32 %v636, %v1053
    %1055 = vmatmul.f32.gmra.mxu0 %v99
    %v1056 = vpop.f32.mrf.mxu0
    %v1057 = vadd.f32 %v639, %v1056
    %1058 = vmatmul.f32.gmra.mxu0 %v100
    %v1059 = vpop.f32.mrf.mxu0
    %v1060 = vadd.f32 %v642, %v1059
    %1061 = vmatmul.f32.gmra.mxu0 %v101
    %v1062 = vpop.f32.mrf.mxu0
    %v1063 = vadd.f32 %v645, %v1062
    %1064 = vmatmul.f32.gmra.mxu0 %v102
    %v1065 = vpop.f32.mrf.mxu0
    %v1066 = vadd.f32 %v648, %v1065
    %1067 = vdwg.mxu0
    %v1068 = vld [vmem:[%s0 + $0x2] sm:$0xff]
    %v1069 = vld [vmem:[%s0 + $0xa] sm:$0xff]
    %v1070 = vld [vmem:[%s0 + $0x12] sm:$0xff]
    %v1071 = vld [vmem:[%s0 + $0x1a] sm:$0xff]
    %v1072 = vld [vmem:[%s0 + $0x22] sm:$0xff]
    %v1073 = vld [vmem:[%s0 + $0x2a] sm:$0xff]
    %v1074 = vld [vmem:[%s0 + $0x32] sm:$0xff]
    %v1075 = vld [vmem:[%s0 + $0x3a] sm:$0xff]
    %v1076 = vld [vmem:[%s0 + $0x42] sm:$0xff]
    %v1077 = vld [vmem:[%s0 + $0x4a] sm:$0xff]
    %v1078 = vld [vmem:[%s0 + $0x52] sm:$0xff]
    %v1079 = vld [vmem:[%s0 + $0x5a] sm:$0xff]
    %v1080 = vld [vmem:[%s0 + $0x62] sm:$0xff]
    %v1081 = vld [vmem:[%s0 + $0x6a] sm:$0xff]
    %v1082 = vld [vmem:[%s0 + $0x72] sm:$0xff]
    %v1083 = vld [vmem:[%s0 + $0x7a] sm:$0xff]
    %v1084 = vld [vmem:[%s0 + $0x82] sm:$0xff]
    %v1085 = vld [vmem:[%s0 + $0x8a] sm:$0xff]
    %v1086 = vld [vmem:[%s0 + $0x92] sm:$0xff]
    %v1087 = vld [vmem:[%s0 + $0x9a] sm:$0xff]
    %v1088 = vld [vmem:[%s0 + $0xa2] sm:$0xff]
    %v1089 = vld [vmem:[%s0 + $0xaa] sm:$0xff]
    %v1090 = vld [vmem:[%s0 + $0xb2] sm:$0xff]
    %v1091 = vld [vmem:[%s0 + $0xba] sm:$0xff]
    %v1092 = vld [vmem:[%s0 + $0xc2] sm:$0xff]
    %v1093 = vld [vmem:[%s0 + $0xca] sm:$0xff]
    %v1094 = vld [vmem:[%s0 + $0xd2] sm:$0xff]
    %v1095 = vld [vmem:[%s0 + $0xda] sm:$0xff]
    %v1096 = vld [vmem:[%s0 + $0xe2] sm:$0xff]
    %v1097 = vld [vmem:[%s0 + $0xea] sm:$0xff]
    %v1098 = vld [vmem:[%s0 + $0xf2] sm:$0xff]
    %v1099 = vld [vmem:[%s0 + $0xfa] sm:$0xff]
    %v1100 = vld [vmem:[%s0 + $0x102] sm:$0xff]
    %v1101 = vld [vmem:[%s0 + $0x10a] sm:$0xff]
    %v1102 = vld [vmem:[%s0 + $0x112] sm:$0xff]
    %v1103 = vld [vmem:[%s0 + $0x11a] sm:$0xff]
    %v1104 = vld [vmem:[%s0 + $0x122] sm:$0xff]
    %v1105 = vld [vmem:[%s0 + $0x12a] sm:$0xff]
    %v1106 = vld [vmem:[%s0 + $0x132] sm:$0xff]
    %v1107 = vld [vmem:[%s0 + $0x13a] sm:$0xff]
    %v1108 = vld [vmem:[%s0 + $0x142] sm:$0xff]
    %v1109 = vld [vmem:[%s0 + $0x14a] sm:$0xff]
    %v1110 = vld [vmem:[%s0 + $0x152] sm:$0xff]
    %v1111 = vld [vmem:[%s0 + $0x15a] sm:$0xff]
    %v1112 = vld [vmem:[%s0 + $0x162] sm:$0xff]
    %v1113 = vld [vmem:[%s0 + $0x16a] sm:$0xff]
    %v1114 = vld [vmem:[%s0 + $0x172] sm:$0xff]
    %v1115 = vld [vmem:[%s0 + $0x17a] sm:$0xff]
    %v1116 = vld [vmem:[%s0 + $0x182] sm:$0xff]
    %v1117 = vld [vmem:[%s0 + $0x18a] sm:$0xff]
    %v1118 = vld [vmem:[%s0 + $0x192] sm:$0xff]
    %v1119 = vld [vmem:[%s0 + $0x19a] sm:$0xff]
    %v1120 = vld [vmem:[%s0 + $0x1a2] sm:$0xff]
    %v1121 = vld [vmem:[%s0 + $0x1aa] sm:$0xff]
    %v1122 = vld [vmem:[%s0 + $0x1b2] sm:$0xff]
    %v1123 = vld [vmem:[%s0 + $0x1ba] sm:$0xff]
    %v1124 = vld [vmem:[%s0 + $0x1c2] sm:$0xff]
    %v1125 = vld [vmem:[%s0 + $0x1ca] sm:$0xff]
    %v1126 = vld [vmem:[%s0 + $0x1d2] sm:$0xff]
    %v1127 = vld [vmem:[%s0 + $0x1da] sm:$0xff]
    %v1128 = vld [vmem:[%s0 + $0x1e2] sm:$0xff]
    %v1129 = vld [vmem:[%s0 + $0x1ea] sm:$0xff]
    %v1130 = vld [vmem:[%s0 + $0x1f2] sm:$0xff]
    %v1131 = vld [vmem:[%s0 + $0x1fa] sm:$0xf]
    %s1132 = scalar_lea.vmem %s1, 512
    %v1133 = vld [vmem:[%s1132] sm:$0xff]
    %v1134 = vld [vmem:[%s1132 + $0x8] sm:$0xff]
    %v1135 = vld [vmem:[%s1132 + $0x10] sm:$0xff]
    %v1136 = vld [vmem:[%s1132 + $0x18] sm:$0xff]
    %v1137 = vld [vmem:[%s1132 + $0x20] sm:$0xff]
    %v1138 = vld [vmem:[%s1132 + $0x28] sm:$0xff]
    %v1139 = vld [vmem:[%s1132 + $0x30] sm:$0xff]
    %v1140 = vld [vmem:[%s1132 + $0x38] sm:$0xff]
    %v1141 = vld [vmem:[%s1132 + $0x40] sm:$0xff]
    %v1142 = vld [vmem:[%s1132 + $0x48] sm:$0xff]
    %v1143 = vld [vmem:[%s1132 + $0x50] sm:$0xff]
    %v1144 = vld [vmem:[%s1132 + $0x58] sm:$0xff]
    %v1145 = vld [vmem:[%s1132 + $0x60] sm:$0xff]
    %v1146 = vld [vmem:[%s1132 + $0x68] sm:$0xff]
    %v1147 = vld [vmem:[%s1132 + $0x70] sm:$0xff]
    %v1148 = vld [vmem:[%s1132 + $0x78] sm:$0xff]
    %v1149 = vld [vmem:[%s1132 + $0x80] sm:$0xff]
    %v1150 = vld [vmem:[%s1132 + $0x88] sm:$0xff]
    %v1151 = vld [vmem:[%s1132 + $0x90] sm:$0xff]
    %v1152 = vld [vmem:[%s1132 + $0x98] sm:$0xff]
    %v1153 = vld [vmem:[%s1132 + $0xa0] sm:$0xff]
    %v1154 = vld [vmem:[%s1132 + $0xa8] sm:$0xff]
    %v1155 = vld [vmem:[%s1132 + $0xb0] sm:$0xff]
    %v1156 = vld [vmem:[%s1132 + $0xb8] sm:$0xff]
    %v1157 = vld [vmem:[%s1132 + $0xc0] sm:$0xff]
    %v1158 = vld [vmem:[%s1132 + $0xc8] sm:$0xff]
    %v1159 = vld [vmem:[%s1132 + $0xd0] sm:$0xff]
    %v1160 = vld [vmem:[%s1132 + $0xd8] sm:$0xff]
    %v1161 = vld [vmem:[%s1132 + $0xe0] sm:$0xff]
    %v1162 = vld [vmem:[%s1132 + $0xe8] sm:$0xff]
    %v1163 = vld [vmem:[%s1132 + $0xf0] sm:$0xff]
    %v1164 = vld [vmem:[%s1132 + $0xf8] sm:$0xff]
    %1165 = vmatpush.msra.mxu0 %v1163
    %1166 = vmatpush.msra.mxu0 %v1161
    %1167 = vmatpush.msra.mxu0 %v1159
    %1168 = vmatpush.msra.mxu0 %v1157
    %1169 = vmatpush.msra.mxu0 %v1155
    %1170 = vmatpush.msra.mxu0 %v1153
    %1171 = vmatpush.msra.mxu0 %v1151
    %1172 = vmatpush.msra.mxu0 %v1149
    %1173 = vmatpush.msra.mxu0 %v1147
    %1174 = vmatpush.msra.mxu0 %v1145
    %1175 = vmatpush.msra.mxu0 %v1143
    %1176 = vmatpush.msra.mxu0 %v1141
    %1177 = vmatpush.msra.mxu0 %v1139
    %1178 = vmatpush.msra.mxu0 %v1137
    %1179 = vmatpush.msra.mxu0 %v1135
    %1180 = vmatpush.msra.mxu0 %v1133
    %1181 = vmatmul.f32.gmra.mxu0 %v1068
    %v1182 = vpop.f32.mrf.mxu0
    %v1183 = vadd.f32 0.0, %v1182
    %1184 = vmatmul.f32.gmra.mxu0 %v1069
    %v1185 = vpop.f32.mrf.mxu0
    %v1186 = vadd.f32 0.0, %v1185
    %1187 = vmatmul.f32.gmra.mxu0 %v1070
    %v1188 = vpop.f32.mrf.mxu0
    %v1189 = vadd.f32 0.0, %v1188
    %1190 = vmatmul.f32.gmra.mxu0 %v1071
    %v1191 = vpop.f32.mrf.mxu0
    %v1192 = vadd.f32 0.0, %v1191
    %1193 = vmatmul.f32.gmra.mxu0 %v1072
    %v1194 = vpop.f32.mrf.mxu0
    %v1195 = vadd.f32 0.0, %v1194
    %1196 = vmatmul.f32.gmra.mxu0 %v1073
    %v1197 = vpop.f32.mrf.mxu0
    %v1198 = vadd.f32 0.0, %v1197
    %1199 = vmatmul.f32.gmra.mxu0 %v1074
    %v1200 = vpop.f32.mrf.mxu0
    %v1201 = vadd.f32 0.0, %v1200
    %1202 = vmatmul.f32.gmra.mxu0 %v1075
    %v1203 = vpop.f32.mrf.mxu0
    %v1204 = vadd.f32 0.0, %v1203
    %1205 = vmatmul.f32.gmra.mxu0 %v1076
    %v1206 = vpop.f32.mrf.mxu0
    %v1207 = vadd.f32 0.0, %v1206
    %1208 = vmatmul.f32.gmra.mxu0 %v1077
    %v1209 = vpop.f32.mrf.mxu0
    %v1210 = vadd.f32 0.0, %v1209
    %1211 = vmatmul.f32.gmra.mxu0 %v1078
    %v1212 = vpop.f32.mrf.mxu0
    %v1213 = vadd.f32 0.0, %v1212
    %1214 = vmatmul.f32.gmra.mxu0 %v1079
    %v1215 = vpop.f32.mrf.mxu0
    %v1216 = vadd.f32 0.0, %v1215
    %1217 = vmatmul.f32.gmra.mxu0 %v1080
    %v1218 = vpop.f32.mrf.mxu0
    %v1219 = vadd.f32 0.0, %v1218
    %1220 = vmatmul.f32.gmra.mxu0 %v1081
    %v1221 = vpop.f32.mrf.mxu0
    %v1222 = vadd.f32 0.0, %v1221
    %1223 = vmatmul.f32.gmra.mxu0 %v1082
    %v1224 = vpop.f32.mrf.mxu0
    %v1225 = vadd.f32 0.0, %v1224
    %1226 = vmatmul.f32.gmra.mxu0 %v1083
    %v1227 = vpop.f32.mrf.mxu0
    %v1228 = vadd.f32 0.0, %v1227
    %1229 = vmatmul.f32.gmra.mxu0 %v1084
    %v1230 = vpop.f32.mrf.mxu0
    %v1231 = vadd.f32 0.0, %v1230
    %1232 = vmatmul.f32.gmra.mxu0 %v1085
    %v1233 = vpop.f32.mrf.mxu0
    %v1234 = vadd.f32 0.0, %v1233
    %1235 = vmatmul.f32.gmra.mxu0 %v1086
    %v1236 = vpop.f32.mrf.mxu0
    %v1237 = vadd.f32 0.0, %v1236
    %1238 = vmatmul.f32.gmra.mxu0 %v1087
    %v1239 = vpop.f32.mrf.mxu0
    %v1240 = vadd.f32 0.0, %v1239
    %1241 = vmatmul.f32.gmra.mxu0 %v1088
    %v1242 = vpop.f32.mrf.mxu0
    %v1243 = vadd.f32 0.0, %v1242
    %1244 = vmatmul.f32.gmra.mxu0 %v1089
    %v1245 = vpop.f32.mrf.mxu0
    %v1246 = vadd.f32 0.0, %v1245
    %1247 = vmatmul.f32.gmra.mxu0 %v1090
    %v1248 = vpop.f32.mrf.mxu0
    %v1249 = vadd.f32 0.0, %v1248
    %1250 = vmatmul.f32.gmra.mxu0 %v1091
    %v1251 = vpop.f32.mrf.mxu0
    %v1252 = vadd.f32 0.0, %v1251
    %1253 = vmatmul.f32.gmra.mxu0 %v1092
    %v1254 = vpop.f32.mrf.mxu0
    %v1255 = vadd.f32 0.0, %v1254
    %1256 = vmatmul.f32.gmra.mxu0 %v1093
    %v1257 = vpop.f32.mrf.mxu0
    %v1258 = vadd.f32 0.0, %v1257
    %1259 = vmatmul.f32.gmra.mxu0 %v1094
    %v1260 = vpop.f32.mrf.mxu0
    %v1261 = vadd.f32 0.0, %v1260
    %1262 = vmatmul.f32.gmra.mxu0 %v1095
    %v1263 = vpop.f32.mrf.mxu0
    %v1264 = vadd.f32 0.0, %v1263
    %1265 = vmatmul.f32.gmra.mxu0 %v1096
    %v1266 = vpop.f32.mrf.mxu0
    %v1267 = vadd.f32 0.0, %v1266
    %1268 = vmatmul.f32.gmra.mxu0 %v1097
    %v1269 = vpop.f32.mrf.mxu0
    %v1270 = vadd.f32 0.0, %v1269
    %1271 = vmatmul.f32.gmra.mxu0 %v1098
    %v1272 = vpop.f32.mrf.mxu0
    %v1273 = vadd.f32 0.0, %v1272
    %1274 = vmatmul.f32.gmra.mxu0 %v1099
    %v1275 = vpop.f32.mrf.mxu0
    %v1276 = vadd.f32 0.0, %v1275
    %1277 = vmatmul.f32.gmra.mxu0 %v1100
    %v1278 = vpop.f32.mrf.mxu0
    %v1279 = vadd.f32 0.0, %v1278
    %1280 = vmatmul.f32.gmra.mxu0 %v1101
    %v1281 = vpop.f32.mrf.mxu0
    %v1282 = vadd.f32 0.0, %v1281
    %1283 = vmatmul.f32.gmra.mxu0 %v1102
    %v1284 = vpop.f32.mrf.mxu0
    %v1285 = vadd.f32 0.0, %v1284
    %1286 = vmatmul.f32.gmra.mxu0 %v1103
    %v1287 = vpop.f32.mrf.mxu0
    %v1288 = vadd.f32 0.0, %v1287
    %1289 = vmatmul.f32.gmra.mxu0 %v1104
    %v1290 = vpop.f32.mrf.mxu0
    %v1291 = vadd.f32 0.0, %v1290
    %1292 = vmatmul.f32.gmra.mxu0 %v1105
    %v1293 = vpop.f32.mrf.mxu0
    %v1294 = vadd.f32 0.0, %v1293
    %1295 = vmatmul.f32.gmra.mxu0 %v1106
    %v1296 = vpop.f32.mrf.mxu0
    %v1297 = vadd.f32 0.0, %v1296
    %1298 = vmatmul.f32.gmra.mxu0 %v1107
    %v1299 = vpop.f32.mrf.mxu0
    %v1300 = vadd.f32 0.0, %v1299
    %1301 = vmatmul.f32.gmra.mxu0 %v1108
    %v1302 = vpop.f32.mrf.mxu0
    %v1303 = vadd.f32 0.0, %v1302
    %1304 = vmatmul.f32.gmra.mxu0 %v1109
    %v1305 = vpop.f32.mrf.mxu0
    %v1306 = vadd.f32 0.0, %v1305
    %1307 = vmatmul.f32.gmra.mxu0 %v1110
    %v1308 = vpop.f32.mrf.mxu0
    %v1309 = vadd.f32 0.0, %v1308
    %1310 = vmatmul.f32.gmra.mxu0 %v1111
    %v1311 = vpop.f32.mrf.mxu0
    %v1312 = vadd.f32 0.0, %v1311
    %1313 = vmatmul.f32.gmra.mxu0 %v1112
    %v1314 = vpop.f32.mrf.mxu0
    %v1315 = vadd.f32 0.0, %v1314
    %1316 = vmatmul.f32.gmra.mxu0 %v1113
    %v1317 = vpop.f32.mrf.mxu0
    %v1318 = vadd.f32 0.0, %v1317
    %1319 = vmatmul.f32.gmra.mxu0 %v1114
    %v1320 = vpop.f32.mrf.mxu0
    %v1321 = vadd.f32 0.0, %v1320
    %1322 = vmatmul.f32.gmra.mxu0 %v1115
    %v1323 = vpop.f32.mrf.mxu0
    %v1324 = vadd.f32 0.0, %v1323
    %1325 = vmatmul.f32.gmra.mxu0 %v1116
    %v1326 = vpop.f32.mrf.mxu0
    %v1327 = vadd.f32 0.0, %v1326
    %1328 = vmatmul.f32.gmra.mxu0 %v1117
    %v1329 = vpop.f32.mrf.mxu0
    %v1330 = vadd.f32 0.0, %v1329
    %1331 = vmatmul.f32.gmra.mxu0 %v1118
    %v1332 = vpop.f32.mrf.mxu0
    %v1333 = vadd.f32 0.0, %v1332
    %1334 = vmatmul.f32.gmra.mxu0 %v1119
    %v1335 = vpop.f32.mrf.mxu0
    %v1336 = vadd.f32 0.0, %v1335
    %1337 = vmatmul.f32.gmra.mxu0 %v1120
    %v1338 = vpop.f32.mrf.mxu0
    %v1339 = vadd.f32 0.0, %v1338
    %1340 = vmatmul.f32.gmra.mxu0 %v1121
    %v1341 = vpop.f32.mrf.mxu0
    %v1342 = vadd.f32 0.0, %v1341
    %1343 = vmatmul.f32.gmra.mxu0 %v1122
    %v1344 = vpop.f32.mrf.mxu0
    %v1345 = vadd.f32 0.0, %v1344
    %1346 = vmatmul.f32.gmra.mxu0 %v1123
    %v1347 = vpop.f32.mrf.mxu0
    %v1348 = vadd.f32 0.0, %v1347
    %1349 = vmatmul.f32.gmra.mxu0 %v1124
    %v1350 = vpop.f32.mrf.mxu0
    %v1351 = vadd.f32 0.0, %v1350
    %1352 = vmatmul.f32.gmra.mxu0 %v1125
    %v1353 = vpop.f32.mrf.mxu0
    %v1354 = vadd.f32 0.0, %v1353
    %1355 = vmatmul.f32.gmra.mxu0 %v1126
    %v1356 = vpop.f32.mrf.mxu0
    %v1357 = vadd.f32 0.0, %v1356
    %1358 = vmatmul.f32.gmra.mxu0 %v1127
    %v1359 = vpop.f32.mrf.mxu0
    %v1360 = vadd.f32 0.0, %v1359
    %1361 = vmatmul.f32.gmra.mxu0 %v1128
    %v1362 = vpop.f32.mrf.mxu0
    %v1363 = vadd.f32 0.0, %v1362
    %1364 = vmatmul.f32.gmra.mxu0 %v1129
    %v1365 = vpop.f32.mrf.mxu0
    %v1366 = vadd.f32 0.0, %v1365
    %1367 = vmatmul.f32.gmra.mxu0 %v1130
    %v1368 = vpop.f32.mrf.mxu0
    %v1369 = vadd.f32 0.0, %v1368
    %1370 = vmatmul.f32.gmra.mxu0 %v1131
    %v1371 = vpop.f32.mrf.mxu0
    %v1372 = vadd.f32 0.0, %v1371
    %1373 = vdwg.mxu0
    %1374 = vmatpush.msra.mxu0 %v1164
    %1375 = vmatpush.msra.mxu0 %v1162
    %1376 = vmatpush.msra.mxu0 %v1160
    %1377 = vmatpush.msra.mxu0 %v1158
    %1378 = vmatpush.msra.mxu0 %v1156
    %1379 = vmatpush.msra.mxu0 %v1154
    %1380 = vmatpush.msra.mxu0 %v1152
    %1381 = vmatpush.msra.mxu0 %v1150
    %1382 = vmatpush.msra.mxu0 %v1148
    %1383 = vmatpush.msra.mxu0 %v1146
    %1384 = vmatpush.msra.mxu0 %v1144
    %1385 = vmatpush.msra.mxu0 %v1142
    %1386 = vmatpush.msra.mxu0 %v1140
    %1387 = vmatpush.msra.mxu0 %v1138
    %1388 = vmatpush.msra.mxu0 %v1136
    %1389 = vmatpush.msra.mxu0 %v1134
    %1390 = vmatmul.f32.gmra.mxu0 %v1068
    %v1391 = vpop.f32.mrf.mxu0
    %v1392 = vadd.f32 0.0, %v1391
    %1393 = vmatmul.f32.gmra.mxu0 %v1069
    %v1394 = vpop.f32.mrf.mxu0
    %v1395 = vadd.f32 0.0, %v1394
    %1396 = vmatmul.f32.gmra.mxu0 %v1070
    %v1397 = vpop.f32.mrf.mxu0
    %v1398 = vadd.f32 0.0, %v1397
    %1399 = vmatmul.f32.gmra.mxu0 %v1071
    %v1400 = vpop.f32.mrf.mxu0
    %v1401 = vadd.f32 0.0, %v1400
    %1402 = vmatmul.f32.gmra.mxu0 %v1072
    %v1403 = vpop.f32.mrf.mxu0
    %v1404 = vadd.f32 0.0, %v1403
    %1405 = vmatmul.f32.gmra.mxu0 %v1073
    %v1406 = vpop.f32.mrf.mxu0
    %v1407 = vadd.f32 0.0, %v1406
    %1408 = vmatmul.f32.gmra.mxu0 %v1074
    %v1409 = vpop.f32.mrf.mxu0
    %v1410 = vadd.f32 0.0, %v1409
    %1411 = vmatmul.f32.gmra.mxu0 %v1075
    %v1412 = vpop.f32.mrf.mxu0
    %v1413 = vadd.f32 0.0, %v1412
    %1414 = vmatmul.f32.gmra.mxu0 %v1076
    %v1415 = vpop.f32.mrf.mxu0
    %v1416 = vadd.f32 0.0, %v1415
    %1417 = vmatmul.f32.gmra.mxu0 %v1077
    %v1418 = vpop.f32.mrf.mxu0
    %v1419 = vadd.f32 0.0, %v1418
    %1420 = vmatmul.f32.gmra.mxu0 %v1078
    %v1421 = vpop.f32.mrf.mxu0
    %v1422 = vadd.f32 0.0, %v1421
    %1423 = vmatmul.f32.gmra.mxu0 %v1079
    %v1424 = vpop.f32.mrf.mxu0
    %v1425 = vadd.f32 0.0, %v1424
    %1426 = vmatmul.f32.gmra.mxu0 %v1080
    %v1427 = vpop.f32.mrf.mxu0
    %v1428 = vadd.f32 0.0, %v1427
    %1429 = vmatmul.f32.gmra.mxu0 %v1081
    %v1430 = vpop.f32.mrf.mxu0
    %v1431 = vadd.f32 0.0, %v1430
    %1432 = vmatmul.f32.gmra.mxu0 %v1082
    %v1433 = vpop.f32.mrf.mxu0
    %v1434 = vadd.f32 0.0, %v1433
    %1435 = vmatmul.f32.gmra.mxu0 %v1083
    %v1436 = vpop.f32.mrf.mxu0
    %v1437 = vadd.f32 0.0, %v1436
    %1438 = vmatmul.f32.gmra.mxu0 %v1084
    %v1439 = vpop.f32.mrf.mxu0
    %v1440 = vadd.f32 0.0, %v1439
    %1441 = vmatmul.f32.gmra.mxu0 %v1085
    %v1442 = vpop.f32.mrf.mxu0
    %v1443 = vadd.f32 0.0, %v1442
    %1444 = vmatmul.f32.gmra.mxu0 %v1086
    %v1445 = vpop.f32.mrf.mxu0
    %v1446 = vadd.f32 0.0, %v1445
    %1447 = vmatmul.f32.gmra.mxu0 %v1087
    %v1448 = vpop.f32.mrf.mxu0
    %v1449 = vadd.f32 0.0, %v1448
    %1450 = vmatmul.f32.gmra.mxu0 %v1088
    %v1451 = vpop.f32.mrf.mxu0
    %v1452 = vadd.f32 0.0, %v1451
    %1453 = vmatmul.f32.gmra.mxu0 %v1089
    %v1454 = vpop.f32.mrf.mxu0
    %v1455 = vadd.f32 0.0, %v1454
    %1456 = vmatmul.f32.gmra.mxu0 %v1090
    %v1457 = vpop.f32.mrf.mxu0
    %v1458 = vadd.f32 0.0, %v1457
    %1459 = vmatmul.f32.gmra.mxu0 %v1091
    %v1460 = vpop.f32.mrf.mxu0
    %v1461 = vadd.f32 0.0, %v1460
    %1462 = vmatmul.f32.gmra.mxu0 %v1092
    %v1463 = vpop.f32.mrf.mxu0
    %v1464 = vadd.f32 0.0, %v1463
    %1465 = vmatmul.f32.gmra.mxu0 %v1093
    %v1466 = vpop.f32.mrf.mxu0
    %v1467 = vadd.f32 0.0, %v1466
    %1468 = vmatmul.f32.gmra.mxu0 %v1094
    %v1469 = vpop.f32.mrf.mxu0
    %v1470 = vadd.f32 0.0, %v1469
    %1471 = vmatmul.f32.gmra.mxu0 %v1095
    %v1472 = vpop.f32.mrf.mxu0
    %v1473 = vadd.f32 0.0, %v1472
    %1474 = vmatmul.f32.gmra.mxu0 %v1096
    %v1475 = vpop.f32.mrf.mxu0
    %v1476 = vadd.f32 0.0, %v1475
    %1477 = vmatmul.f32.gmra.mxu0 %v1097
    %v1478 = vpop.f32.mrf.mxu0
    %v1479 = vadd.f32 0.0, %v1478
    %1480 = vmatmul.f32.gmra.mxu0 %v1098
    %v1481 = vpop.f32.mrf.mxu0
    %v1482 = vadd.f32 0.0, %v1481
    %1483 = vmatmul.f32.gmra.mxu0 %v1099
    %v1484 = vpop.f32.mrf.mxu0
    %v1485 = vadd.f32 0.0, %v1484
    %1486 = vmatmul.f32.gmra.mxu0 %v1100
    %v1487 = vpop.f32.mrf.mxu0
    %v1488 = vadd.f32 0.0, %v1487
    %1489 = vmatmul.f32.gmra.mxu0 %v1101
    %v1490 = vpop.f32.mrf.mxu0
    %v1491 = vadd.f32 0.0, %v1490
    %1492 = vmatmul.f32.gmra.mxu0 %v1102
    %v1493 = vpop.f32.mrf.mxu0
    %v1494 = vadd.f32 0.0, %v1493
    %1495 = vmatmul.f32.gmra.mxu0 %v1103
    %v1496 = vpop.f32.mrf.mxu0
    %v1497 = vadd.f32 0.0, %v1496
    %1498 = vmatmul.f32.gmra.mxu0 %v1104
    %v1499 = vpop.f32.mrf.mxu0
    %v1500 = vadd.f32 0.0, %v1499
    %1501 = vmatmul.f32.gmra.mxu0 %v1105
    %v1502 = vpop.f32.mrf.mxu0
    %v1503 = vadd.f32 0.0, %v1502
    %1504 = vmatmul.f32.gmra.mxu0 %v1106
    %v1505 = vpop.f32.mrf.mxu0
    %v1506 = vadd.f32 0.0, %v1505
    %1507 = vmatmul.f32.gmra.mxu0 %v1107
    %v1508 = vpop.f32.mrf.mxu0
    %v1509 = vadd.f32 0.0, %v1508
    %1510 = vmatmul.f32.gmra.mxu0 %v1108
    %v1511 = vpop.f32.mrf.mxu0
    %v1512 = vadd.f32 0.0, %v1511
    %1513 = vmatmul.f32.gmra.mxu0 %v1109
    %v1514 = vpop.f32.mrf.mxu0
    %v1515 = vadd.f32 0.0, %v1514
    %1516 = vmatmul.f32.gmra.mxu0 %v1110
    %v1517 = vpop.f32.mrf.mxu0
    %v1518 = vadd.f32 0.0, %v1517
    %1519 = vmatmul.f32.gmra.mxu0 %v1111
    %v1520 = vpop.f32.mrf.mxu0
    %v1521 = vadd.f32 0.0, %v1520
    %1522 = vmatmul.f32.gmra.mxu0 %v1112
    %v1523 = vpop.f32.mrf.mxu0
    %v1524 = vadd.f32 0.0, %v1523
    %1525 = vmatmul.f32.gmra.mxu0 %v1113
    %v1526 = vpop.f32.mrf.mxu0
    %v1527 = vadd.f32 0.0, %v1526
    %1528 = vmatmul.f32.gmra.mxu0 %v1114
    %v1529 = vpop.f32.mrf.mxu0
    %v1530 = vadd.f32 0.0, %v1529
    %1531 = vmatmul.f32.gmra.mxu0 %v1115
    %v1532 = vpop.f32.mrf.mxu0
    %v1533 = vadd.f32 0.0, %v1532
    %1534 = vmatmul.f32.gmra.mxu0 %v1116
    %v1535 = vpop.f32.mrf.mxu0
    %v1536 = vadd.f32 0.0, %v1535
    %1537 = vmatmul.f32.gmra.mxu0 %v1117
    %v1538 = vpop.f32.mrf.mxu0
    %v1539 = vadd.f32 0.0, %v1538
    %1540 = vmatmul.f32.gmra.mxu0 %v1118
    %v1541 = vpop.f32.mrf.mxu0
    %v1542 = vadd.f32 0.0, %v1541
    %1543 = vmatmul.f32.gmra.mxu0 %v1119
    %v1544 = vpop.f32.mrf.mxu0
    %v1545 = vadd.f32 0.0, %v1544
    %1546 = vmatmul.f32.gmra.mxu0 %v1120
    %v1547 = vpop.f32.mrf.mxu0
    %v1548 = vadd.f32 0.0, %v1547
    %1549 = vmatmul.f32.gmra.mxu0 %v1121
    %v1550 = vpop.f32.mrf.mxu0
    %v1551 = vadd.f32 0.0, %v1550
    %1552 = vmatmul.f32.gmra.mxu0 %v1122
    %v1553 = vpop.f32.mrf.mxu0
    %v1554 = vadd.f32 0.0, %v1553
    %1555 = vmatmul.f32.gmra.mxu0 %v1123
    %v1556 = vpop.f32.mrf.mxu0
    %v1557 = vadd.f32 0.0, %v1556
    %1558 = vmatmul.f32.gmra.mxu0 %v1124
    %v1559 = vpop.f32.mrf.mxu0
    %v1560 = vadd.f32 0.0, %v1559
    %1561 = vmatmul.f32.gmra.mxu0 %v1125
    %v1562 = vpop.f32.mrf.mxu0
    %v1563 = vadd.f32 0.0, %v1562
    %1564 = vmatmul.f32.gmra.mxu0 %v1126
    %v1565 = vpop.f32.mrf.mxu0
    %v1566 = vadd.f32 0.0, %v1565
    %1567 = vmatmul.f32.gmra.mxu0 %v1127
    %v1568 = vpop.f32.mrf.mxu0
    %v1569 = vadd.f32 0.0, %v1568
    %1570 = vmatmul.f32.gmra.mxu0 %v1128
    %v1571 = vpop.f32.mrf.mxu0
    %v1572 = vadd.f32 0.0, %v1571
    %1573 = vmatmul.f32.gmra.mxu0 %v1129
    %v1574 = vpop.f32.mrf.mxu0
    %v1575 = vadd.f32 0.0, %v1574
    %1576 = vmatmul.f32.gmra.mxu0 %v1130
    %v1577 = vpop.f32.mrf.mxu0
    %v1578 = vadd.f32 0.0, %v1577
    %1579 = vmatmul.f32.gmra.mxu0 %v1131
    %v1580 = vpop.f32.mrf.mxu0
    %v1581 = vadd.f32 0.0, %v1580
    %1582 = vdwg.mxu0
    %v1583 = vadd.f32 %v668, %v1183
    %v1584 = vadd.f32 %v877, %v1392
    %v1585 = vadd.f32 %v671, %v1186
    %v1586 = vadd.f32 %v880, %v1395
    %v1587 = vadd.f32 %v674, %v1189
    %v1588 = vadd.f32 %v883, %v1398
    %v1589 = vadd.f32 %v677, %v1192
    %v1590 = vadd.f32 %v886, %v1401
    %v1591 = vadd.f32 %v680, %v1195
    %v1592 = vadd.f32 %v889, %v1404
    %v1593 = vadd.f32 %v683, %v1198
    %v1594 = vadd.f32 %v892, %v1407
    %v1595 = vadd.f32 %v686, %v1201
    %v1596 = vadd.f32 %v895, %v1410
    %v1597 = vadd.f32 %v689, %v1204
    %v1598 = vadd.f32 %v898, %v1413
    %v1599 = vadd.f32 %v692, %v1207
    %v1600 = vadd.f32 %v901, %v1416
    %v1601 = vadd.f32 %v695, %v1210
    %v1602 = vadd.f32 %v904, %v1419
    %v1603 = vadd.f32 %v698, %v1213
    %v1604 = vadd.f32 %v907, %v1422
    %v1605 = vadd.f32 %v701, %v1216
    %v1606 = vadd.f32 %v910, %v1425
    %v1607 = vadd.f32 %v704, %v1219
    %v1608 = vadd.f32 %v913, %v1428
    %v1609 = vadd.f32 %v707, %v1222
    %v1610 = vadd.f32 %v916, %v1431
    %v1611 = vadd.f32 %v710, %v1225
    %v1612 = vadd.f32 %v919, %v1434
    %v1613 = vadd.f32 %v713, %v1228
    %v1614 = vadd.f32 %v922, %v1437
    %v1615 = vadd.f32 %v716, %v1231
    %v1616 = vadd.f32 %v925, %v1440
    %v1617 = vadd.f32 %v719, %v1234
    %v1618 = vadd.f32 %v928, %v1443
    %v1619 = vadd.f32 %v722, %v1237
    %v1620 = vadd.f32 %v931, %v1446
    %v1621 = vadd.f32 %v725, %v1240
    %v1622 = vadd.f32 %v934, %v1449
    %v1623 = vadd.f32 %v728, %v1243
    %v1624 = vadd.f32 %v937, %v1452
    %v1625 = vadd.f32 %v731, %v1246
    %v1626 = vadd.f32 %v940, %v1455
    %v1627 = vadd.f32 %v734, %v1249
    %v1628 = vadd.f32 %v943, %v1458
    %v1629 = vadd.f32 %v737, %v1252
    %v1630 = vadd.f32 %v946, %v1461
    %v1631 = vadd.f32 %v740, %v1255
    %v1632 = vadd.f32 %v949, %v1464
    %v1633 = vadd.f32 %v743, %v1258
    %v1634 = vadd.f32 %v952, %v1467
    %v1635 = vadd.f32 %v746, %v1261
    %v1636 = vadd.f32 %v955, %v1470
    %v1637 = vadd.f32 %v749, %v1264
    %v1638 = vadd.f32 %v958, %v1473
    %v1639 = vadd.f32 %v752, %v1267
    %v1640 = vadd.f32 %v961, %v1476
    %v1641 = vadd.f32 %v755, %v1270
    %v1642 = vadd.f32 %v964, %v1479
    %v1643 = vadd.f32 %v758, %v1273
    %v1644 = vadd.f32 %v967, %v1482
    %v1645 = vadd.f32 %v761, %v1276
    %v1646 = vadd.f32 %v970, %v1485
    %v1647 = vadd.f32 %v764, %v1279
    %v1648 = vadd.f32 %v973, %v1488
    %v1649 = vadd.f32 %v767, %v1282
    %v1650 = vadd.f32 %v976, %v1491
    %v1651 = vadd.f32 %v770, %v1285
    %v1652 = vadd.f32 %v979, %v1494
    %v1653 = vadd.f32 %v773, %v1288
    %v1654 = vadd.f32 %v982, %v1497
    %v1655 = vadd.f32 %v776, %v1291
    %v1656 = vadd.f32 %v985, %v1500
    %v1657 = vadd.f32 %v779, %v1294
    %v1658 = vadd.f32 %v988, %v1503
    %v1659 = vadd.f32 %v782, %v1297
    %v1660 = vadd.f32 %v991, %v1506
    %v1661 = vadd.f32 %v785, %v1300
    %v1662 = vadd.f32 %v994, %v1509
    %v1663 = vadd.f32 %v788, %v1303
    %v1664 = vadd.f32 %v997, %v1512
    %v1665 = vadd.f32 %v791, %v1306
    %v1666 = vadd.f32 %v1000, %v1515
    %v1667 = vadd.f32 %v794, %v1309
    %v1668 = vadd.f32 %v1003, %v1518
    %v1669 = vadd.f32 %v797, %v1312
    %v1670 = vadd.f32 %v1006, %v1521
    %v1671 = vadd.f32 %v800, %v1315
    %v1672 = vadd.f32 %v1009, %v1524
    %v1673 = vadd.f32 %v803, %v1318
    %v1674 = vadd.f32 %v1012, %v1527
    %v1675 = vadd.f32 %v806, %v1321
    %v1676 = vadd.f32 %v1015, %v1530
    %v1677 = vadd.f32 %v809, %v1324
    %v1678 = vadd.f32 %v1018, %v1533
    %v1679 = vadd.f32 %v812, %v1327
    %v1680 = vadd.f32 %v1021, %v1536
    %v1681 = vadd.f32 %v815, %v1330
    %v1682 = vadd.f32 %v1024, %v1539
    %v1683 = vadd.f32 %v818, %v1333
    %v1684 = vadd.f32 %v1027, %v1542
    %v1685 = vadd.f32 %v821, %v1336
    %v1686 = vadd.f32 %v1030, %v1545
    %v1687 = vadd.f32 %v824, %v1339
    %v1688 = vadd.f32 %v1033, %v1548
    %v1689 = vadd.f32 %v827, %v1342
    %v1690 = vadd.f32 %v1036, %v1551
    %v1691 = vadd.f32 %v830, %v1345
    %v1692 = vadd.f32 %v1039, %v1554
    %v1693 = vadd.f32 %v833, %v1348
    %v1694 = vadd.f32 %v1042, %v1557
    %v1695 = vadd.f32 %v836, %v1351
    %v1696 = vadd.f32 %v1045, %v1560
    %v1697 = vadd.f32 %v839, %v1354
    %v1698 = vadd.f32 %v1048, %v1563
    %v1699 = vadd.f32 %v842, %v1357
    %v1700 = vadd.f32 %v1051, %v1566
    %v1701 = vadd.f32 %v845, %v1360
    %v1702 = vadd.f32 %v1054, %v1569
    %v1703 = vadd.f32 %v848, %v1363
    %v1704 = vadd.f32 %v1057, %v1572
    %v1705 = vadd.f32 %v851, %v1366
    %v1706 = vadd.f32 %v1060, %v1575
    %v1707 = vadd.f32 %v854, %v1369
    %v1708 = vadd.f32 %v1063, %v1578
    %v1709 = vadd.f32 %v857, %v1372
    %v1710 = vadd.f32 %v1066, %v1581
    %v1711 = vld [vmem:[%s0 + $0x3] sm:$0xff]
    %v1712 = vld [vmem:[%s0 + $0xb] sm:$0xff]
    %v1713 = vld [vmem:[%s0 + $0x13] sm:$0xff]
    %v1714 = vld [vmem:[%s0 + $0x1b] sm:$0xff]
    %v1715 = vld [vmem:[%s0 + $0x23] sm:$0xff]
    %v1716 = vld [vmem:[%s0 + $0x2b] sm:$0xff]
    %v1717 = vld [vmem:[%s0 + $0x33] sm:$0xff]
    %v1718 = vld [vmem:[%s0 + $0x3b] sm:$0xff]
    %v1719 = vld [vmem:[%s0 + $0x43] sm:$0xff]
    %v1720 = vld [vmem:[%s0 + $0x4b] sm:$0xff]
    %v1721 = vld [vmem:[%s0 + $0x53] sm:$0xff]
    %v1722 = vld [vmem:[%s0 + $0x5b] sm:$0xff]
    %v1723 = vld [vmem:[%s0 + $0x63] sm:$0xff]
    %v1724 = vld [vmem:[%s0 + $0x6b] sm:$0xff]
    %v1725 = vld [vmem:[%s0 + $0x73] sm:$0xff]
    %v1726 = vld [vmem:[%s0 + $0x7b] sm:$0xff]
    %v1727 = vld [vmem:[%s0 + $0x83] sm:$0xff]
    %v1728 = vld [vmem:[%s0 + $0x8b] sm:$0xff]
    %v1729 = vld [vmem:[%s0 + $0x93] sm:$0xff]
    %v1730 = vld [vmem:[%s0 + $0x9b] sm:$0xff]
    %v1731 = vld [vmem:[%s0 + $0xa3] sm:$0xff]
    %v1732 = vld [vmem:[%s0 + $0xab] sm:$0xff]
    %v1733 = vld [vmem:[%s0 + $0xb3] sm:$0xff]
    %v1734 = vld [vmem:[%s0 + $0xbb] sm:$0xff]
    %v1735 = vld [vmem:[%s0 + $0xc3] sm:$0xff]
    %v1736 = vld [vmem:[%s0 + $0xcb] sm:$0xff]
    %v1737 = vld [vmem:[%s0 + $0xd3] sm:$0xff]
    %v1738 = vld [vmem:[%s0 + $0xdb] sm:$0xff]
    %v1739 = vld [vmem:[%s0 + $0xe3] sm:$0xff]
    %v1740 = vld [vmem:[%s0 + $0xeb] sm:$0xff]
    %v1741 = vld [vmem:[%s0 + $0xf3] sm:$0xff]
    %v1742 = vld [vmem:[%s0 + $0xfb] sm:$0xff]
    %v1743 = vld [vmem:[%s0 + $0x103] sm:$0xff]
    %v1744 = vld [vmem:[%s0 + $0x10b] sm:$0xff]
    %v1745 = vld [vmem:[%s0 + $0x113] sm:$0xff]
    %v1746 = vld [vmem:[%s0 + $0x11b] sm:$0xff]
    %v1747 = vld [vmem:[%s0 + $0x123] sm:$0xff]
    %v1748 = vld [vmem:[%s0 + $0x12b] sm:$0xff]
    %v1749 = vld [vmem:[%s0 + $0x133] sm:$0xff]
    %v1750 = vld [vmem:[%s0 + $0x13b] sm:$0xff]
    %v1751 = vld [vmem:[%s0 + $0x143] sm:$0xff]
    %v1752 = vld [vmem:[%s0 + $0x14b] sm:$0xff]
    %v1753 = vld [vmem:[%s0 + $0x153] sm:$0xff]
    %v1754 = vld [vmem:[%s0 + $0x15b] sm:$0xff]
    %v1755 = vld [vmem:[%s0 + $0x163] sm:$0xff]
    %v1756 = vld [vmem:[%s0 + $0x16b] sm:$0xff]
    %v1757 = vld [vmem:[%s0 + $0x173] sm:$0xff]
    %v1758 = vld [vmem:[%s0 + $0x17b] sm:$0xff]
    %v1759 = vld [vmem:[%s0 + $0x183] sm:$0xff]
    %v1760 = vld [vmem:[%s0 + $0x18b] sm:$0xff]
    %v1761 = vld [vmem:[%s0 + $0x193] sm:$0xff]
    %v1762 = vld [vmem:[%s0 + $0x19b] sm:$0xff]
    %v1763 = vld [vmem:[%s0 + $0x1a3] sm:$0xff]
    %v1764 = vld [vmem:[%s0 + $0x1ab] sm:$0xff]
    %v1765 = vld [vmem:[%s0 + $0x1b3] sm:$0xff]
    %v1766 = vld [vmem:[%s0 + $0x1bb] sm:$0xff]
    %v1767 = vld [vmem:[%s0 + $0x1c3] sm:$0xff]
    %v1768 = vld [vmem:[%s0 + $0x1cb] sm:$0xff]
    %v1769 = vld [vmem:[%s0 + $0x1d3] sm:$0xff]
    %v1770 = vld [vmem:[%s0 + $0x1db] sm:$0xff]
    %v1771 = vld [vmem:[%s0 + $0x1e3] sm:$0xff]
    %v1772 = vld [vmem:[%s0 + $0x1eb] sm:$0xff]
    %v1773 = vld [vmem:[%s0 + $0x1f3] sm:$0xff]
    %v1774 = vld [vmem:[%s0 + $0x1fb] sm:$0xf]
    %s1775 = scalar_lea.vmem %s1, 768
    %v1776 = vld [vmem:[%s1775] sm:$0xff]
    %v1777 = vld [vmem:[%s1775 + $0x8] sm:$0xff]
    %v1778 = vld [vmem:[%s1775 + $0x10] sm:$0xff]
    %v1779 = vld [vmem:[%s1775 + $0x18] sm:$0xff]
    %v1780 = vld [vmem:[%s1775 + $0x20] sm:$0xff]
    %v1781 = vld [vmem:[%s1775 + $0x28] sm:$0xff]
    %v1782 = vld [vmem:[%s1775 + $0x30] sm:$0xff]
    %v1783 = vld [vmem:[%s1775 + $0x38] sm:$0xff]
    %v1784 = vld [vmem:[%s1775 + $0x40] sm:$0xff]
    %v1785 = vld [vmem:[%s1775 + $0x48] sm:$0xff]
    %v1786 = vld [vmem:[%s1775 + $0x50] sm:$0xff]
    %v1787 = vld [vmem:[%s1775 + $0x58] sm:$0xff]
    %v1788 = vld [vmem:[%s1775 + $0x60] sm:$0xff]
    %v1789 = vld [vmem:[%s1775 + $0x68] sm:$0xff]
    %v1790 = vld [vmem:[%s1775 + $0x70] sm:$0xff]
    %v1791 = vld [vmem:[%s1775 + $0x78] sm:$0xff]
    %v1792 = vld [vmem:[%s1775 + $0x80] sm:$0xff]
    %v1793 = vld [vmem:[%s1775 + $0x88] sm:$0xff]
    %v1794 = vld [vmem:[%s1775 + $0x90] sm:$0xff]
    %v1795 = vld [vmem:[%s1775 + $0x98] sm:$0xff]
    %v1796 = vld [vmem:[%s1775 + $0xa0] sm:$0xff]
    %v1797 = vld [vmem:[%s1775 + $0xa8] sm:$0xff]
    %v1798 = vld [vmem:[%s1775 + $0xb0] sm:$0xff]
    %v1799 = vld [vmem:[%s1775 + $0xb8] sm:$0xff]
    %v1800 = vld [vmem:[%s1775 + $0xc0] sm:$0xff]
    %v1801 = vld [vmem:[%s1775 + $0xc8] sm:$0xff]
    %v1802 = vld [vmem:[%s1775 + $0xd0] sm:$0xff]
    %v1803 = vld [vmem:[%s1775 + $0xd8] sm:$0xff]
    %v1804 = vld [vmem:[%s1775 + $0xe0] sm:$0xff]
    %v1805 = vld [vmem:[%s1775 + $0xe8] sm:$0xff]
    %v1806 = vld [vmem:[%s1775 + $0xf0] sm:$0xff]
    %v1807 = vld [vmem:[%s1775 + $0xf8] sm:$0xff]
    %1808 = vmatpush.msra.mxu0 %v1806
    %1809 = vmatpush.msra.mxu0 %v1804
    %1810 = vmatpush.msra.mxu0 %v1802
    %1811 = vmatpush.msra.mxu0 %v1800
    %1812 = vmatpush.msra.mxu0 %v1798
    %1813 = vmatpush.msra.mxu0 %v1796
    %1814 = vmatpush.msra.mxu0 %v1794
    %1815 = vmatpush.msra.mxu0 %v1792
    %1816 = vmatpush.msra.mxu0 %v1790
    %1817 = vmatpush.msra.mxu0 %v1788
    %1818 = vmatpush.msra.mxu0 %v1786
    %1819 = vmatpush.msra.mxu0 %v1784
    %1820 = vmatpush.msra.mxu0 %v1782
    %1821 = vmatpush.msra.mxu0 %v1780
    %1822 = vmatpush.msra.mxu0 %v1778
    %1823 = vmatpush.msra.mxu0 %v1776
    %1824 = vmatmul.f32.gmra.mxu0 %v1711
    %v1825 = vpop.f32.mrf.mxu0
    %v1826 = vadd.f32 0.0, %v1825
    %1827 = vmatmul.f32.gmra.mxu0 %v1712
    %v1828 = vpop.f32.mrf.mxu0
    %v1829 = vadd.f32 0.0, %v1828
    %1830 = vmatmul.f32.gmra.mxu0 %v1713
    %v1831 = vpop.f32.mrf.mxu0
    %v1832 = vadd.f32 0.0, %v1831
    %1833 = vmatmul.f32.gmra.mxu0 %v1714
    %v1834 = vpop.f32.mrf.mxu0
    %v1835 = vadd.f32 0.0, %v1834
    %1836 = vmatmul.f32.gmra.mxu0 %v1715
    %v1837 = vpop.f32.mrf.mxu0
    %v1838 = vadd.f32 0.0, %v1837
    %1839 = vmatmul.f32.gmra.mxu0 %v1716
    %v1840 = vpop.f32.mrf.mxu0
    %v1841 = vadd.f32 0.0, %v1840
    %1842 = vmatmul.f32.gmra.mxu0 %v1717
    %v1843 = vpop.f32.mrf.mxu0
    %v1844 = vadd.f32 0.0, %v1843
    %1845 = vmatmul.f32.gmra.mxu0 %v1718
    %v1846 = vpop.f32.mrf.mxu0
    %v1847 = vadd.f32 0.0, %v1846
    %1848 = vmatmul.f32.gmra.mxu0 %v1719
    %v1849 = vpop.f32.mrf.mxu0
    %v1850 = vadd.f32 0.0, %v1849
    %1851 = vmatmul.f32.gmra.mxu0 %v1720
    %v1852 = vpop.f32.mrf.mxu0
    %v1853 = vadd.f32 0.0, %v1852
    %1854 = vmatmul.f32.gmra.mxu0 %v1721
    %v1855 = vpop.f32.mrf.mxu0
    %v1856 = vadd.f32 0.0, %v1855
    %1857 = vmatmul.f32.gmra.mxu0 %v1722
    %v1858 = vpop.f32.mrf.mxu0
    %v1859 = vadd.f32 0.0, %v1858
    %1860 = vmatmul.f32.gmra.mxu0 %v1723
    %v1861 = vpop.f32.mrf.mxu0
    %v1862 = vadd.f32 0.0, %v1861
    %1863 = vmatmul.f32.gmra.mxu0 %v1724
    %v1864 = vpop.f32.mrf.mxu0
    %v1865 = vadd.f32 0.0, %v1864
    %1866 = vmatmul.f32.gmra.mxu0 %v1725
    %v1867 = vpop.f32.mrf.mxu0
    %v1868 = vadd.f32 0.0, %v1867
    %1869 = vmatmul.f32.gmra.mxu0 %v1726
    %v1870 = vpop.f32.mrf.mxu0
    %v1871 = vadd.f32 0.0, %v1870
    %1872 = vmatmul.f32.gmra.mxu0 %v1727
    %v1873 = vpop.f32.mrf.mxu0
    %v1874 = vadd.f32 0.0, %v1873
    %1875 = vmatmul.f32.gmra.mxu0 %v1728
    %v1876 = vpop.f32.mrf.mxu0
    %v1877 = vadd.f32 0.0, %v1876
    %1878 = vmatmul.f32.gmra.mxu0 %v1729
    %v1879 = vpop.f32.mrf.mxu0
    %v1880 = vadd.f32 0.0, %v1879
    %1881 = vmatmul.f32.gmra.mxu0 %v1730
    %v1882 = vpop.f32.mrf.mxu0
    %v1883 = vadd.f32 0.0, %v1882
    %1884 = vmatmul.f32.gmra.mxu0 %v1731
    %v1885 = vpop.f32.mrf.mxu0
    %v1886 = vadd.f32 0.0, %v1885
    %1887 = vmatmul.f32.gmra.mxu0 %v1732
    %v1888 = vpop.f32.mrf.mxu0
    %v1889 = vadd.f32 0.0, %v1888
    %1890 = vmatmul.f32.gmra.mxu0 %v1733
    %v1891 = vpop.f32.mrf.mxu0
    %v1892 = vadd.f32 0.0, %v1891
    %1893 = vmatmul.f32.gmra.mxu0 %v1734
    %v1894 = vpop.f32.mrf.mxu0
    %v1895 = vadd.f32 0.0, %v1894
    %1896 = vmatmul.f32.gmra.mxu0 %v1735
    %v1897 = vpop.f32.mrf.mxu0
    %v1898 = vadd.f32 0.0, %v1897
    %1899 = vmatmul.f32.gmra.mxu0 %v1736
    %v1900 = vpop.f32.mrf.mxu0
    %v1901 = vadd.f32 0.0, %v1900
    %1902 = vmatmul.f32.gmra.mxu0 %v1737
    %v1903 = vpop.f32.mrf.mxu0
    %v1904 = vadd.f32 0.0, %v1903
    %1905 = vmatmul.f32.gmra.mxu0 %v1738
    %v1906 = vpop.f32.mrf.mxu0
    %v1907 = vadd.f32 0.0, %v1906
    %1908 = vmatmul.f32.gmra.mxu0 %v1739
    %v1909 = vpop.f32.mrf.mxu0
    %v1910 = vadd.f32 0.0, %v1909
    %1911 = vmatmul.f32.gmra.mxu0 %v1740
    %v1912 = vpop.f32.mrf.mxu0
    %v1913 = vadd.f32 0.0, %v1912
    %1914 = vmatmul.f32.gmra.mxu0 %v1741
    %v1915 = vpop.f32.mrf.mxu0
    %v1916 = vadd.f32 0.0, %v1915
    %1917 = vmatmul.f32.gmra.mxu0 %v1742
    %v1918 = vpop.f32.mrf.mxu0
    %v1919 = vadd.f32 0.0, %v1918
    %1920 = vmatmul.f32.gmra.mxu0 %v1743
    %v1921 = vpop.f32.mrf.mxu0
    %v1922 = vadd.f32 0.0, %v1921
    %1923 = vmatmul.f32.gmra.mxu0 %v1744
    %v1924 = vpop.f32.mrf.mxu0
    %v1925 = vadd.f32 0.0, %v1924
    %1926 = vmatmul.f32.gmra.mxu0 %v1745
    %v1927 = vpop.f32.mrf.mxu0
    %v1928 = vadd.f32 0.0, %v1927
    %1929 = vmatmul.f32.gmra.mxu0 %v1746
    %v1930 = vpop.f32.mrf.mxu0
    %v1931 = vadd.f32 0.0, %v1930
    %1932 = vmatmul.f32.gmra.mxu0 %v1747
    %v1933 = vpop.f32.mrf.mxu0
    %v1934 = vadd.f32 0.0, %v1933
    %1935 = vmatmul.f32.gmra.mxu0 %v1748
    %v1936 = vpop.f32.mrf.mxu0
    %v1937 = vadd.f32 0.0, %v1936
    %1938 = vmatmul.f32.gmra.mxu0 %v1749
    %v1939 = vpop.f32.mrf.mxu0
    %v1940 = vadd.f32 0.0, %v1939
    %1941 = vmatmul.f32.gmra.mxu0 %v1750
    %v1942 = vpop.f32.mrf.mxu0
    %v1943 = vadd.f32 0.0, %v1942
    %1944 = vmatmul.f32.gmra.mxu0 %v1751
    %v1945 = vpop.f32.mrf.mxu0
    %v1946 = vadd.f32 0.0, %v1945
    %1947 = vmatmul.f32.gmra.mxu0 %v1752
    %v1948 = vpop.f32.mrf.mxu0
    %v1949 = vadd.f32 0.0, %v1948
    %1950 = vmatmul.f32.gmra.mxu0 %v1753
    %v1951 = vpop.f32.mrf.mxu0
    %v1952 = vadd.f32 0.0, %v1951
    %1953 = vmatmul.f32.gmra.mxu0 %v1754
    %v1954 = vpop.f32.mrf.mxu0
    %v1955 = vadd.f32 0.0, %v1954
    %1956 = vmatmul.f32.gmra.mxu0 %v1755
    %v1957 = vpop.f32.mrf.mxu0
    %v1958 = vadd.f32 0.0, %v1957
    %1959 = vmatmul.f32.gmra.mxu0 %v1756
    %v1960 = vpop.f32.mrf.mxu0
    %v1961 = vadd.f32 0.0, %v1960
    %1962 = vmatmul.f32.gmra.mxu0 %v1757
    %v1963 = vpop.f32.mrf.mxu0
    %v1964 = vadd.f32 0.0, %v1963
    %1965 = vmatmul.f32.gmra.mxu0 %v1758
    %v1966 = vpop.f32.mrf.mxu0
    %v1967 = vadd.f32 0.0, %v1966
    %1968 = vmatmul.f32.gmra.mxu0 %v1759
    %v1969 = vpop.f32.mrf.mxu0
    %v1970 = vadd.f32 0.0, %v1969
    %1971 = vmatmul.f32.gmra.mxu0 %v1760
    %v1972 = vpop.f32.mrf.mxu0
    %v1973 = vadd.f32 0.0, %v1972
    %1974 = vmatmul.f32.gmra.mxu0 %v1761
    %v1975 = vpop.f32.mrf.mxu0
    %v1976 = vadd.f32 0.0, %v1975
    %1977 = vmatmul.f32.gmra.mxu0 %v1762
    %v1978 = vpop.f32.mrf.mxu0
    %v1979 = vadd.f32 0.0, %v1978
    %1980 = vmatmul.f32.gmra.mxu0 %v1763
    %v1981 = vpop.f32.mrf.mxu0
    %v1982 = vadd.f32 0.0, %v1981
    %1983 = vmatmul.f32.gmra.mxu0 %v1764
    %v1984 = vpop.f32.mrf.mxu0
    %v1985 = vadd.f32 0.0, %v1984
    %1986 = vmatmul.f32.gmra.mxu0 %v1765
    %v1987 = vpop.f32.mrf.mxu0
    %v1988 = vadd.f32 0.0, %v1987
    %1989 = vmatmul.f32.gmra.mxu0 %v1766
    %v1990 = vpop.f32.mrf.mxu0
    %v1991 = vadd.f32 0.0, %v1990
    %1992 = vmatmul.f32.gmra.mxu0 %v1767
    %v1993 = vpop.f32.mrf.mxu0
    %v1994 = vadd.f32 0.0, %v1993
    %1995 = vmatmul.f32.gmra.mxu0 %v1768
    %v1996 = vpop.f32.mrf.mxu0
    %v1997 = vadd.f32 0.0, %v1996
    %1998 = vmatmul.f32.gmra.mxu0 %v1769
    %v1999 = vpop.f32.mrf.mxu0
    %v2000 = vadd.f32 0.0, %v1999
    %2001 = vmatmul.f32.gmra.mxu0 %v1770
    %v2002 = vpop.f32.mrf.mxu0
    %v2003 = vadd.f32 0.0, %v2002
    %2004 = vmatmul.f32.gmra.mxu0 %v1771
    %v2005 = vpop.f32.mrf.mxu0
    %v2006 = vadd.f32 0.0, %v2005
    %2007 = vmatmul.f32.gmra.mxu0 %v1772
    %v2008 = vpop.f32.mrf.mxu0
    %v2009 = vadd.f32 0.0, %v2008
    %2010 = vmatmul.f32.gmra.mxu0 %v1773
    %v2011 = vpop.f32.mrf.mxu0
    %v2012 = vadd.f32 0.0, %v2011
    %2013 = vmatmul.f32.gmra.mxu0 %v1774
    %v2014 = vpop.f32.mrf.mxu0
    %v2015 = vadd.f32 0.0, %v2014
    %2016 = vdwg.mxu0
    %2017 = vmatpush.msra.mxu0 %v1807
    %2018 = vmatpush.msra.mxu0 %v1805
    %2019 = vmatpush.msra.mxu0 %v1803
    %2020 = vmatpush.msra.mxu0 %v1801
    %2021 = vmatpush.msra.mxu0 %v1799
    %2022 = vmatpush.msra.mxu0 %v1797
    %2023 = vmatpush.msra.mxu0 %v1795
    %2024 = vmatpush.msra.mxu0 %v1793
    %2025 = vmatpush.msra.mxu0 %v1791
    %2026 = vmatpush.msra.mxu0 %v1789
    %2027 = vmatpush.msra.mxu0 %v1787
    %2028 = vmatpush.msra.mxu0 %v1785
    %2029 = vmatpush.msra.mxu0 %v1783
    %2030 = vmatpush.msra.mxu0 %v1781
    %2031 = vmatpush.msra.mxu0 %v1779
    %2032 = vmatpush.msra.mxu0 %v1777
    %2033 = vmatmul.f32.gmra.mxu0 %v1711
    %v2034 = vpop.f32.mrf.mxu0
    %v2035 = vadd.f32 0.0, %v2034
    %2036 = vmatmul.f32.gmra.mxu0 %v1712
    %v2037 = vpop.f32.mrf.mxu0
    %v2038 = vadd.f32 0.0, %v2037
    %2039 = vmatmul.f32.gmra.mxu0 %v1713
    %v2040 = vpop.f32.mrf.mxu0
    %v2041 = vadd.f32 0.0, %v2040
    %2042 = vmatmul.f32.gmra.mxu0 %v1714
    %v2043 = vpop.f32.mrf.mxu0
    %v2044 = vadd.f32 0.0, %v2043
    %2045 = vmatmul.f32.gmra.mxu0 %v1715
    %v2046 = vpop.f32.mrf.mxu0
    %v2047 = vadd.f32 0.0, %v2046
    %2048 = vmatmul.f32.gmra.mxu0 %v1716
    %v2049 = vpop.f32.mrf.mxu0
    %v2050 = vadd.f32 0.0, %v2049
    %2051 = vmatmul.f32.gmra.mxu0 %v1717
    %v2052 = vpop.f32.mrf.mxu0
    %v2053 = vadd.f32 0.0, %v2052
    %2054 = vmatmul.f32.gmra.mxu0 %v1718
    %v2055 = vpop.f32.mrf.mxu0
    %v2056 = vadd.f32 0.0, %v2055
    %2057 = vmatmul.f32.gmra.mxu0 %v1719
    %v2058 = vpop.f32.mrf.mxu0
    %v2059 = vadd.f32 0.0, %v2058
    %2060 = vmatmul.f32.gmra.mxu0 %v1720
    %v2061 = vpop.f32.mrf.mxu0
    %v2062 = vadd.f32 0.0, %v2061
    %2063 = vmatmul.f32.gmra.mxu0 %v1721
    %v2064 = vpop.f32.mrf.mxu0
    %v2065 = vadd.f32 0.0, %v2064
    %2066 = vmatmul.f32.gmra.mxu0 %v1722
    %v2067 = vpop.f32.mrf.mxu0
    %v2068 = vadd.f32 0.0, %v2067
    %2069 = vmatmul.f32.gmra.mxu0 %v1723
    %v2070 = vpop.f32.mrf.mxu0
    %v2071 = vadd.f32 0.0, %v2070
    %2072 = vmatmul.f32.gmra.mxu0 %v1724
    %v2073 = vpop.f32.mrf.mxu0
    %v2074 = vadd.f32 0.0, %v2073
    %2075 = vmatmul.f32.gmra.mxu0 %v1725
    %v2076 = vpop.f32.mrf.mxu0
    %v2077 = vadd.f32 0.0, %v2076
    %2078 = vmatmul.f32.gmra.mxu0 %v1726
    %v2079 = vpop.f32.mrf.mxu0
    %v2080 = vadd.f32 0.0, %v2079
    %2081 = vmatmul.f32.gmra.mxu0 %v1727
    %v2082 = vpop.f32.mrf.mxu0
    %v2083 = vadd.f32 0.0, %v2082
    %2084 = vmatmul.f32.gmra.mxu0 %v1728
    %v2085 = vpop.f32.mrf.mxu0
    %v2086 = vadd.f32 0.0, %v2085
    %2087 = vmatmul.f32.gmra.mxu0 %v1729
    %v2088 = vpop.f32.mrf.mxu0
    %v2089 = vadd.f32 0.0, %v2088
    %2090 = vmatmul.f32.gmra.mxu0 %v1730
    %v2091 = vpop.f32.mrf.mxu0
    %v2092 = vadd.f32 0.0, %v2091
    %2093 = vmatmul.f32.gmra.mxu0 %v1731
    %v2094 = vpop.f32.mrf.mxu0
    %v2095 = vadd.f32 0.0, %v2094
    %2096 = vmatmul.f32.gmra.mxu0 %v1732
    %v2097 = vpop.f32.mrf.mxu0
    %v2098 = vadd.f32 0.0, %v2097
    %2099 = vmatmul.f32.gmra.mxu0 %v1733
    %v2100 = vpop.f32.mrf.mxu0
    %v2101 = vadd.f32 0.0, %v2100
    %2102 = vmatmul.f32.gmra.mxu0 %v1734
    %v2103 = vpop.f32.mrf.mxu0
    %v2104 = vadd.f32 0.0, %v2103
    %2105 = vmatmul.f32.gmra.mxu0 %v1735
    %v2106 = vpop.f32.mrf.mxu0
    %v2107 = vadd.f32 0.0, %v2106
    %2108 = vmatmul.f32.gmra.mxu0 %v1736
    %v2109 = vpop.f32.mrf.mxu0
    %v2110 = vadd.f32 0.0, %v2109
    %2111 = vmatmul.f32.gmra.mxu0 %v1737
    %v2112 = vpop.f32.mrf.mxu0
    %v2113 = vadd.f32 0.0, %v2112
    %2114 = vmatmul.f32.gmra.mxu0 %v1738
    %v2115 = vpop.f32.mrf.mxu0
    %v2116 = vadd.f32 0.0, %v2115
    %2117 = vmatmul.f32.gmra.mxu0 %v1739
    %v2118 = vpop.f32.mrf.mxu0
    %v2119 = vadd.f32 0.0, %v2118
    %2120 = vmatmul.f32.gmra.mxu0 %v1740
    %v2121 = vpop.f32.mrf.mxu0
    %v2122 = vadd.f32 0.0, %v2121
    %2123 = vmatmul.f32.gmra.mxu0 %v1741
    %v2124 = vpop.f32.mrf.mxu0
    %v2125 = vadd.f32 0.0, %v2124
    %2126 = vmatmul.f32.gmra.mxu0 %v1742
    %v2127 = vpop.f32.mrf.mxu0
    %v2128 = vadd.f32 0.0, %v2127
    %2129 = vmatmul.f32.gmra.mxu0 %v1743
    %v2130 = vpop.f32.mrf.mxu0
    %v2131 = vadd.f32 0.0, %v2130
    %2132 = vmatmul.f32.gmra.mxu0 %v1744
    %v2133 = vpop.f32.mrf.mxu0
    %v2134 = vadd.f32 0.0, %v2133
    %2135 = vmatmul.f32.gmra.mxu0 %v1745
    %v2136 = vpop.f32.mrf.mxu0
    %v2137 = vadd.f32 0.0, %v2136
    %2138 = vmatmul.f32.gmra.mxu0 %v1746
    %v2139 = vpop.f32.mrf.mxu0
    %v2140 = vadd.f32 0.0, %v2139
    %2141 = vmatmul.f32.gmra.mxu0 %v1747
    %v2142 = vpop.f32.mrf.mxu0
    %v2143 = vadd.f32 0.0, %v2142
    %2144 = vmatmul.f32.gmra.mxu0 %v1748
    %v2145 = vpop.f32.mrf.mxu0
    %v2146 = vadd.f32 0.0, %v2145
    %2147 = vmatmul.f32.gmra.mxu0 %v1749
    %v2148 = vpop.f32.mrf.mxu0
    %v2149 = vadd.f32 0.0, %v2148
    %2150 = vmatmul.f32.gmra.mxu0 %v1750
    %v2151 = vpop.f32.mrf.mxu0
    %v2152 = vadd.f32 0.0, %v2151
    %2153 = vmatmul.f32.gmra.mxu0 %v1751
    %v2154 = vpop.f32.mrf.mxu0
    %v2155 = vadd.f32 0.0, %v2154
    %2156 = vmatmul.f32.gmra.mxu0 %v1752
    %v2157 = vpop.f32.mrf.mxu0
    %v2158 = vadd.f32 0.0, %v2157
    %2159 = vmatmul.f32.gmra.mxu0 %v1753
    %v2160 = vpop.f32.mrf.mxu0
    %v2161 = vadd.f32 0.0, %v2160
    %2162 = vmatmul.f32.gmra.mxu0 %v1754
    %v2163 = vpop.f32.mrf.mxu0
    %v2164 = vadd.f32 0.0, %v2163
    %2165 = vmatmul.f32.gmra.mxu0 %v1755
    %v2166 = vpop.f32.mrf.mxu0
    %v2167 = vadd.f32 0.0, %v2166
    %2168 = vmatmul.f32.gmra.mxu0 %v1756
    %v2169 = vpop.f32.mrf.mxu0
    %v2170 = vadd.f32 0.0, %v2169
    %2171 = vmatmul.f32.gmra.mxu0 %v1757
    %v2172 = vpop.f32.mrf.mxu0
    %v2173 = vadd.f32 0.0, %v2172
    %2174 = vmatmul.f32.gmra.mxu0 %v1758
    %v2175 = vpop.f32.mrf.mxu0
    %v2176 = vadd.f32 0.0, %v2175
    %2177 = vmatmul.f32.gmra.mxu0 %v1759
    %v2178 = vpop.f32.mrf.mxu0
    %v2179 = vadd.f32 0.0, %v2178
    %2180 = vmatmul.f32.gmra.mxu0 %v1760
    %v2181 = vpop.f32.mrf.mxu0
    %v2182 = vadd.f32 0.0, %v2181
    %2183 = vmatmul.f32.gmra.mxu0 %v1761
    %v2184 = vpop.f32.mrf.mxu0
    %v2185 = vadd.f32 0.0, %v2184
    %2186 = vmatmul.f32.gmra.mxu0 %v1762
    %v2187 = vpop.f32.mrf.mxu0
    %v2188 = vadd.f32 0.0, %v2187
    %2189 = vmatmul.f32.gmra.mxu0 %v1763
    %v2190 = vpop.f32.mrf.mxu0
    %v2191 = vadd.f32 0.0, %v2190
    %2192 = vmatmul.f32.gmra.mxu0 %v1764
    %v2193 = vpop.f32.mrf.mxu0
    %v2194 = vadd.f32 0.0, %v2193
    %2195 = vmatmul.f32.gmra.mxu0 %v1765
    %v2196 = vpop.f32.mrf.mxu0
    %v2197 = vadd.f32 0.0, %v2196
    %2198 = vmatmul.f32.gmra.mxu0 %v1766
    %v2199 = vpop.f32.mrf.mxu0
    %v2200 = vadd.f32 0.0, %v2199
    %2201 = vmatmul.f32.gmra.mxu0 %v1767
    %v2202 = vpop.f32.mrf.mxu0
    %v2203 = vadd.f32 0.0, %v2202
    %2204 = vmatmul.f32.gmra.mxu0 %v1768
    %v2205 = vpop.f32.mrf.mxu0
    %v2206 = vadd.f32 0.0, %v2205
    %2207 = vmatmul.f32.gmra.mxu0 %v1769
    %v2208 = vpop.f32.mrf.mxu0
    %v2209 = vadd.f32 0.0, %v2208
    %2210 = vmatmul.f32.gmra.mxu0 %v1770
    %v2211 = vpop.f32.mrf.mxu0
    %v2212 = vadd.f32 0.0, %v2211
    %2213 = vmatmul.f32.gmra.mxu0 %v1771
    %v2214 = vpop.f32.mrf.mxu0
    %v2215 = vadd.f32 0.0, %v2214
    %2216 = vmatmul.f32.gmra.mxu0 %v1772
    %v2217 = vpop.f32.mrf.mxu0
    %v2218 = vadd.f32 0.0, %v2217
    %2219 = vmatmul.f32.gmra.mxu0 %v1773
    %v2220 = vpop.f32.mrf.mxu0
    %v2221 = vadd.f32 0.0, %v2220
    %2222 = vmatmul.f32.gmra.mxu0 %v1774
    %v2223 = vpop.f32.mrf.mxu0
    %v2224 = vadd.f32 0.0, %v2223
    %2225 = vdwg.mxu0
    %v2226 = vadd.f32 %v1583, %v1826
    %v2227 = vadd.f32 %v1584, %v2035
    %v2228 = vadd.f32 %v1585, %v1829
    %v2229 = vadd.f32 %v1586, %v2038
    %v2230 = vadd.f32 %v1587, %v1832
    %v2231 = vadd.f32 %v1588, %v2041
    %v2232 = vadd.f32 %v1589, %v1835
    %v2233 = vadd.f32 %v1590, %v2044
    %v2234 = vadd.f32 %v1591, %v1838
    %v2235 = vadd.f32 %v1592, %v2047
    %v2236 = vadd.f32 %v1593, %v1841
    %v2237 = vadd.f32 %v1594, %v2050
    %v2238 = vadd.f32 %v1595, %v1844
    %v2239 = vadd.f32 %v1596, %v2053
    %v2240 = vadd.f32 %v1597, %v1847
    %v2241 = vadd.f32 %v1598, %v2056
    %v2242 = vadd.f32 %v1599, %v1850
    %v2243 = vadd.f32 %v1600, %v2059
    %v2244 = vadd.f32 %v1601, %v1853
    %v2245 = vadd.f32 %v1602, %v2062
    %v2246 = vadd.f32 %v1603, %v1856
    %v2247 = vadd.f32 %v1604, %v2065
    %v2248 = vadd.f32 %v1605, %v1859
    %v2249 = vadd.f32 %v1606, %v2068
    %v2250 = vadd.f32 %v1607, %v1862
    %v2251 = vadd.f32 %v1608, %v2071
    %v2252 = vadd.f32 %v1609, %v1865
    %v2253 = vadd.f32 %v1610, %v2074
    %v2254 = vadd.f32 %v1611, %v1868
    %v2255 = vadd.f32 %v1612, %v2077
    %v2256 = vadd.f32 %v1613, %v1871
    %v2257 = vadd.f32 %v1614, %v2080
    %v2258 = vadd.f32 %v1615, %v1874
    %v2259 = vadd.f32 %v1616, %v2083
    %v2260 = vadd.f32 %v1617, %v1877
    %v2261 = vadd.f32 %v1618, %v2086
    %v2262 = vadd.f32 %v1619, %v1880
    %v2263 = vadd.f32 %v1620, %v2089
    %v2264 = vadd.f32 %v1621, %v1883
    %v2265 = vadd.f32 %v1622, %v2092
    %v2266 = vadd.f32 %v1623, %v1886
    %v2267 = vadd.f32 %v1624, %v2095
    %v2268 = vadd.f32 %v1625, %v1889
    %v2269 = vadd.f32 %v1626, %v2098
    %v2270 = vadd.f32 %v1627, %v1892
    %v2271 = vadd.f32 %v1628, %v2101
    %v2272 = vadd.f32 %v1629, %v1895
    %v2273 = vadd.f32 %v1630, %v2104
    %v2274 = vadd.f32 %v1631, %v1898
    %v2275 = vadd.f32 %v1632, %v2107
    %v2276 = vadd.f32 %v1633, %v1901
    %v2277 = vadd.f32 %v1634, %v2110
    %v2278 = vadd.f32 %v1635, %v1904
    %v2279 = vadd.f32 %v1636, %v2113
    %v2280 = vadd.f32 %v1637, %v1907
    %v2281 = vadd.f32 %v1638, %v2116
    %v2282 = vadd.f32 %v1639, %v1910
    %v2283 = vadd.f32 %v1640, %v2119
    %v2284 = vadd.f32 %v1641, %v1913
    %v2285 = vadd.f32 %v1642, %v2122
    %v2286 = vadd.f32 %v1643, %v1916
    %v2287 = vadd.f32 %v1644, %v2125
    %v2288 = vadd.f32 %v1645, %v1919
    %v2289 = vadd.f32 %v1646, %v2128
    %v2290 = vadd.f32 %v1647, %v1922
    %v2291 = vadd.f32 %v1648, %v2131
    %v2292 = vadd.f32 %v1649, %v1925
    %v2293 = vadd.f32 %v1650, %v2134
    %v2294 = vadd.f32 %v1651, %v1928
    %v2295 = vadd.f32 %v1652, %v2137
    %v2296 = vadd.f32 %v1653, %v1931
    %v2297 = vadd.f32 %v1654, %v2140
    %v2298 = vadd.f32 %v1655, %v1934
    %v2299 = vadd.f32 %v1656, %v2143
    %v2300 = vadd.f32 %v1657, %v1937
    %v2301 = vadd.f32 %v1658, %v2146
    %v2302 = vadd.f32 %v1659, %v1940
    %v2303 = vadd.f32 %v1660, %v2149
    %v2304 = vadd.f32 %v1661, %v1943
    %v2305 = vadd.f32 %v1662, %v2152
    %v2306 = vadd.f32 %v1663, %v1946
    %v2307 = vadd.f32 %v1664, %v2155
    %v2308 = vadd.f32 %v1665, %v1949
    %v2309 = vadd.f32 %v1666, %v2158
    %v2310 = vadd.f32 %v1667, %v1952
    %v2311 = vadd.f32 %v1668, %v2161
    %v2312 = vadd.f32 %v1669, %v1955
    %v2313 = vadd.f32 %v1670, %v2164
    %v2314 = vadd.f32 %v1671, %v1958
    %v2315 = vadd.f32 %v1672, %v2167
    %v2316 = vadd.f32 %v1673, %v1961
    %v2317 = vadd.f32 %v1674, %v2170
    %v2318 = vadd.f32 %v1675, %v1964
    %v2319 = vadd.f32 %v1676, %v2173
    %v2320 = vadd.f32 %v1677, %v1967
    %v2321 = vadd.f32 %v1678, %v2176
    %v2322 = vadd.f32 %v1679, %v1970
    %v2323 = vadd.f32 %v1680, %v2179
    %v2324 = vadd.f32 %v1681, %v1973
    %v2325 = vadd.f32 %v1682, %v2182
    %v2326 = vadd.f32 %v1683, %v1976
    %v2327 = vadd.f32 %v1684, %v2185
    %v2328 = vadd.f32 %v1685, %v1979
    %v2329 = vadd.f32 %v1686, %v2188
    %v2330 = vadd.f32 %v1687, %v1982
    %v2331 = vadd.f32 %v1688, %v2191
    %v2332 = vadd.f32 %v1689, %v1985
    %v2333 = vadd.f32 %v1690, %v2194
    %v2334 = vadd.f32 %v1691, %v1988
    %v2335 = vadd.f32 %v1692, %v2197
    %v2336 = vadd.f32 %v1693, %v1991
    %v2337 = vadd.f32 %v1694, %v2200
    %v2338 = vadd.f32 %v1695, %v1994
    %v2339 = vadd.f32 %v1696, %v2203
    %v2340 = vadd.f32 %v1697, %v1997
    %v2341 = vadd.f32 %v1698, %v2206
    %v2342 = vadd.f32 %v1699, %v2000
    %v2343 = vadd.f32 %v1700, %v2209
    %v2344 = vadd.f32 %v1701, %v2003
    %v2345 = vadd.f32 %v1702, %v2212
    %v2346 = vadd.f32 %v1703, %v2006
    %v2347 = vadd.f32 %v1704, %v2215
    %v2348 = vadd.f32 %v1705, %v2009
    %v2349 = vadd.f32 %v1706, %v2218
    %v2350 = vadd.f32 %v1707, %v2012
    %v2351 = vadd.f32 %v1708, %v2221
    %v2352 = vadd.f32 %v1709, %v2015
    %v2353 = vadd.f32 %v1710, %v2224
    %v2354 = vld [vmem:[%s0 + $0x4] sm:$0xff]
    %v2355 = vld [vmem:[%s0 + $0xc] sm:$0xff]
    %v2356 = vld [vmem:[%s0 + $0x14] sm:$0xff]
    %v2357 = vld [vmem:[%s0 + $0x1c] sm:$0xff]
    %v2358 = vld [vmem:[%s0 + $0x24] sm:$0xff]
    %v2359 = vld [vmem:[%s0 + $0x2c] sm:$0xff]
    %v2360 = vld [vmem:[%s0 + $0x34] sm:$0xff]
    %v2361 = vld [vmem:[%s0 + $0x3c] sm:$0xff]
    %v2362 = vld [vmem:[%s0 + $0x44] sm:$0xff]
    %v2363 = vld [vmem:[%s0 + $0x4c] sm:$0xff]
    %v2364 = vld [vmem:[%s0 + $0x54] sm:$0xff]
    %v2365 = vld [vmem:[%s0 + $0x5c] sm:$0xff]
    %v2366 = vld [vmem:[%s0 + $0x64] sm:$0xff]
    %v2367 = vld [vmem:[%s0 + $0x6c] sm:$0xff]
    %v2368 = vld [vmem:[%s0 + $0x74] sm:$0xff]
    %v2369 = vld [vmem:[%s0 + $0x7c] sm:$0xff]
    %v2370 = vld [vmem:[%s0 + $0x84] sm:$0xff]
    %v2371 = vld [vmem:[%s0 + $0x8c] sm:$0xff]
    %v2372 = vld [vmem:[%s0 + $0x94] sm:$0xff]
    %v2373 = vld [vmem:[%s0 + $0x9c] sm:$0xff]
    %v2374 = vld [vmem:[%s0 + $0xa4] sm:$0xff]
    %v2375 = vld [vmem:[%s0 + $0xac] sm:$0xff]
    %v2376 = vld [vmem:[%s0 + $0xb4] sm:$0xff]
    %v2377 = vld [vmem:[%s0 + $0xbc] sm:$0xff]
    %v2378 = vld [vmem:[%s0 + $0xc4] sm:$0xff]
    %v2379 = vld [vmem:[%s0 + $0xcc] sm:$0xff]
    %v2380 = vld [vmem:[%s0 + $0xd4] sm:$0xff]
    %v2381 = vld [vmem:[%s0 + $0xdc] sm:$0xff]
    %v2382 = vld [vmem:[%s0 + $0xe4] sm:$0xff]
    %v2383 = vld [vmem:[%s0 + $0xec] sm:$0xff]
    %v2384 = vld [vmem:[%s0 + $0xf4] sm:$0xff]
    %v2385 = vld [vmem:[%s0 + $0xfc] sm:$0xff]
    %v2386 = vld [vmem:[%s0 + $0x104] sm:$0xff]
    %v2387 = vld [vmem:[%s0 + $0x10c] sm:$0xff]
    %v2388 = vld [vmem:[%s0 + $0x114] sm:$0xff]
    %v2389 = vld [vmem:[%s0 + $0x11c] sm:$0xff]
    %v2390 = vld [vmem:[%s0 + $0x124] sm:$0xff]
    %v2391 = vld [vmem:[%s0 + $0x12c] sm:$0xff]
    %v2392 = vld [vmem:[%s0 + $0x134] sm:$0xff]
    %v2393 = vld [vmem:[%s0 + $0x13c] sm:$0xff]
    %v2394 = vld [vmem:[%s0 + $0x144] sm:$0xff]
    %v2395 = vld [vmem:[%s0 + $0x14c] sm:$0xff]
    %v2396 = vld [vmem:[%s0 + $0x154] sm:$0xff]
    %v2397 = vld [vmem:[%s0 + $0x15c] sm:$0xff]
    %v2398 = vld [vmem:[%s0 + $0x164] sm:$0xff]
    %v2399 = vld [vmem:[%s0 + $0x16c] sm:$0xff]
    %v2400 = vld [vmem:[%s0 + $0x174] sm:$0xff]
    %v2401 = vld [vmem:[%s0 + $0x17c] sm:$0xff]
    %v2402 = vld [vmem:[%s0 + $0x184] sm:$0xff]
    %v2403 = vld [vmem:[%s0 + $0x18c] sm:$0xff]
    %v2404 = vld [vmem:[%s0 + $0x194] sm:$0xff]
    %v2405 = vld [vmem:[%s0 + $0x19c] sm:$0xff]
    %v2406 = vld [vmem:[%s0 + $0x1a4] sm:$0xff]
    %v2407 = vld [vmem:[%s0 + $0x1ac] sm:$0xff]
    %v2408 = vld [vmem:[%s0 + $0x1b4] sm:$0xff]
    %v2409 = vld [vmem:[%s0 + $0x1bc] sm:$0xff]
    %v2410 = vld [vmem:[%s0 + $0x1c4] sm:$0xff]
    %v2411 = vld [vmem:[%s0 + $0x1cc] sm:$0xff]
    %v2412 = vld [vmem:[%s0 + $0x1d4] sm:$0xff]
    %v2413 = vld [vmem:[%s0 + $0x1dc] sm:$0xff]
    %v2414 = vld [vmem:[%s0 + $0x1e4] sm:$0xff]
    %v2415 = vld [vmem:[%s0 + $0x1ec] sm:$0xff]
    %v2416 = vld [vmem:[%s0 + $0x1f4] sm:$0xff]
    %v2417 = vld [vmem:[%s0 + $0x1fc] sm:$0xf]
    %s2418 = scalar_lea.vmem %s1, 1024
    %v2419 = vld [vmem:[%s2418] sm:$0xff]
    %v2420 = vld [vmem:[%s2418 + $0x8] sm:$0xff]
    %v2421 = vld [vmem:[%s2418 + $0x10] sm:$0xff]
    %v2422 = vld [vmem:[%s2418 + $0x18] sm:$0xff]
    %v2423 = vld [vmem:[%s2418 + $0x20] sm:$0xff]
    %v2424 = vld [vmem:[%s2418 + $0x28] sm:$0xff]
    %v2425 = vld [vmem:[%s2418 + $0x30] sm:$0xff]
    %v2426 = vld [vmem:[%s2418 + $0x38] sm:$0xff]
    %v2427 = vld [vmem:[%s2418 + $0x40] sm:$0xff]
    %v2428 = vld [vmem:[%s2418 + $0x48] sm:$0xff]
    %v2429 = vld [vmem:[%s2418 + $0x50] sm:$0xff]
    %v2430 = vld [vmem:[%s2418 + $0x58] sm:$0xff]
    %v2431 = vld [vmem:[%s2418 + $0x60] sm:$0xff]
    %v2432 = vld [vmem:[%s2418 + $0x68] sm:$0xff]
    %v2433 = vld [vmem:[%s2418 + $0x70] sm:$0xff]
    %v2434 = vld [vmem:[%s2418 + $0x78] sm:$0xff]
    %v2435 = vld [vmem:[%s2418 + $0x80] sm:$0xff]
    %v2436 = vld [vmem:[%s2418 + $0x88] sm:$0xff]
    %v2437 = vld [vmem:[%s2418 + $0x90] sm:$0xff]
    %v2438 = vld [vmem:[%s2418 + $0x98] sm:$0xff]
    %v2439 = vld [vmem:[%s2418 + $0xa0] sm:$0xff]
    %v2440 = vld [vmem:[%s2418 + $0xa8] sm:$0xff]
    %v2441 = vld [vmem:[%s2418 + $0xb0] sm:$0xff]
    %v2442 = vld [vmem:[%s2418 + $0xb8] sm:$0xff]
    %v2443 = vld [vmem:[%s2418 + $0xc0] sm:$0xff]
    %v2444 = vld [vmem:[%s2418 + $0xc8] sm:$0xff]
    %v2445 = vld [vmem:[%s2418 + $0xd0] sm:$0xff]
    %v2446 = vld [vmem:[%s2418 + $0xd8] sm:$0xff]
    %v2447 = vld [vmem:[%s2418 + $0xe0] sm:$0xff]
    %v2448 = vld [vmem:[%s2418 + $0xe8] sm:$0xff]
    %v2449 = vld [vmem:[%s2418 + $0xf0] sm:$0xff]
    %v2450 = vld [vmem:[%s2418 + $0xf8] sm:$0xff]
    %2451 = vmatpush.msra.mxu0 %v2449
    %2452 = vmatpush.msra.mxu0 %v2447
    %2453 = vmatpush.msra.mxu0 %v2445
    %2454 = vmatpush.msra.mxu0 %v2443
    %2455 = vmatpush.msra.mxu0 %v2441
    %2456 = vmatpush.msra.mxu0 %v2439
    %2457 = vmatpush.msra.mxu0 %v2437
    %2458 = vmatpush.msra.mxu0 %v2435
    %2459 = vmatpush.msra.mxu0 %v2433
    %2460 = vmatpush.msra.mxu0 %v2431
    %2461 = vmatpush.msra.mxu0 %v2429
    %2462 = vmatpush.msra.mxu0 %v2427
    %2463 = vmatpush.msra.mxu0 %v2425
    %2464 = vmatpush.msra.mxu0 %v2423
    %2465 = vmatpush.msra.mxu0 %v2421
    %2466 = vmatpush.msra.mxu0 %v2419
    %2467 = vmatmul.f32.gmra.mxu0 %v2354
    %v2468 = vpop.f32.mrf.mxu0
    %v2469 = vadd.f32 0.0, %v2468
    %2470 = vmatmul.f32.gmra.mxu0 %v2355
    %v2471 = vpop.f32.mrf.mxu0
    %v2472 = vadd.f32 0.0, %v2471
    %2473 = vmatmul.f32.gmra.mxu0 %v2356
    %v2474 = vpop.f32.mrf.mxu0
    %v2475 = vadd.f32 0.0, %v2474
    %2476 = vmatmul.f32.gmra.mxu0 %v2357
    %v2477 = vpop.f32.mrf.mxu0
    %v2478 = vadd.f32 0.0, %v2477
    %2479 = vmatmul.f32.gmra.mxu0 %v2358
    %v2480 = vpop.f32.mrf.mxu0
    %v2481 = vadd.f32 0.0, %v2480
    %2482 = vmatmul.f32.gmra.mxu0 %v2359
    %v2483 = vpop.f32.mrf.mxu0
    %v2484 = vadd.f32 0.0, %v2483
    %2485 = vmatmul.f32.gmra.mxu0 %v2360
    %v2486 = vpop.f32.mrf.mxu0
    %v2487 = vadd.f32 0.0, %v2486
    %2488 = vmatmul.f32.gmra.mxu0 %v2361
    %v2489 = vpop.f32.mrf.mxu0
    %v2490 = vadd.f32 0.0, %v2489
    %2491 = vmatmul.f32.gmra.mxu0 %v2362
    %v2492 = vpop.f32.mrf.mxu0
    %v2493 = vadd.f32 0.0, %v2492
    %2494 = vmatmul.f32.gmra.mxu0 %v2363
    %v2495 = vpop.f32.mrf.mxu0
    %v2496 = vadd.f32 0.0, %v2495
    %2497 = vmatmul.f32.gmra.mxu0 %v2364
    %v2498 = vpop.f32.mrf.mxu0
    %v2499 = vadd.f32 0.0, %v2498
    %2500 = vmatmul.f32.gmra.mxu0 %v2365
    %v2501 = vpop.f32.mrf.mxu0
    %v2502 = vadd.f32 0.0, %v2501
    %2503 = vmatmul.f32.gmra.mxu0 %v2366
    %v2504 = vpop.f32.mrf.mxu0
    %v2505 = vadd.f32 0.0, %v2504
    %2506 = vmatmul.f32.gmra.mxu0 %v2367
    %v2507 = vpop.f32.mrf.mxu0
    %v2508 = vadd.f32 0.0, %v2507
    %2509 = vmatmul.f32.gmra.mxu0 %v2368
    %v2510 = vpop.f32.mrf.mxu0
    %v2511 = vadd.f32 0.0, %v2510
    %2512 = vmatmul.f32.gmra.mxu0 %v2369
    %v2513 = vpop.f32.mrf.mxu0
    %v2514 = vadd.f32 0.0, %v2513
    %2515 = vmatmul.f32.gmra.mxu0 %v2370
    %v2516 = vpop.f32.mrf.mxu0
    %v2517 = vadd.f32 0.0, %v2516
    %2518 = vmatmul.f32.gmra.mxu0 %v2371
    %v2519 = vpop.f32.mrf.mxu0
    %v2520 = vadd.f32 0.0, %v2519
    %2521 = vmatmul.f32.gmra.mxu0 %v2372
    %v2522 = vpop.f32.mrf.mxu0
    %v2523 = vadd.f32 0.0, %v2522
    %2524 = vmatmul.f32.gmra.mxu0 %v2373
    %v2525 = vpop.f32.mrf.mxu0
    %v2526 = vadd.f32 0.0, %v2525
    %2527 = vmatmul.f32.gmra.mxu0 %v2374
    %v2528 = vpop.f32.mrf.mxu0
    %v2529 = vadd.f32 0.0, %v2528
    %2530 = vmatmul.f32.gmra.mxu0 %v2375
    %v2531 = vpop.f32.mrf.mxu0
    %v2532 = vadd.f32 0.0, %v2531
    %2533 = vmatmul.f32.gmra.mxu0 %v2376
    %v2534 = vpop.f32.mrf.mxu0
    %v2535 = vadd.f32 0.0, %v2534
    %2536 = vmatmul.f32.gmra.mxu0 %v2377
    %v2537 = vpop.f32.mrf.mxu0
    %v2538 = vadd.f32 0.0, %v2537
    %2539 = vmatmul.f32.gmra.mxu0 %v2378
    %v2540 = vpop.f32.mrf.mxu0
    %v2541 = vadd.f32 0.0, %v2540
    %2542 = vmatmul.f32.gmra.mxu0 %v2379
    %v2543 = vpop.f32.mrf.mxu0
    %v2544 = vadd.f32 0.0, %v2543
    %2545 = vmatmul.f32.gmra.mxu0 %v2380
    %v2546 = vpop.f32.mrf.mxu0
    %v2547 = vadd.f32 0.0, %v2546
    %2548 = vmatmul.f32.gmra.mxu0 %v2381
    %v2549 = vpop.f32.mrf.mxu0
    %v2550 = vadd.f32 0.0, %v2549
    %2551 = vmatmul.f32.gmra.mxu0 %v2382
    %v2552 = vpop.f32.mrf.mxu0
    %v2553 = vadd.f32 0.0, %v2552
    %2554 = vmatmul.f32.gmra.mxu0 %v2383
    %v2555 = vpop.f32.mrf.mxu0
    %v2556 = vadd.f32 0.0, %v2555
    %2557 = vmatmul.f32.gmra.mxu0 %v2384
    %v2558 = vpop.f32.mrf.mxu0
    %v2559 = vadd.f32 0.0, %v2558
    %2560 = vmatmul.f32.gmra.mxu0 %v2385
    %v2561 = vpop.f32.mrf.mxu0
    %v2562 = vadd.f32 0.0, %v2561
    %2563 = vmatmul.f32.gmra.mxu0 %v2386
    %v2564 = vpop.f32.mrf.mxu0
    %v2565 = vadd.f32 0.0, %v2564
    %2566 = vmatmul.f32.gmra.mxu0 %v2387
    %v2567 = vpop.f32.mrf.mxu0
    %v2568 = vadd.f32 0.0, %v2567
    %2569 = vmatmul.f32.gmra.mxu0 %v2388
    %v2570 = vpop.f32.mrf.mxu0
    %v2571 = vadd.f32 0.0, %v2570
    %2572 = vmatmul.f32.gmra.mxu0 %v2389
    %v2573 = vpop.f32.mrf.mxu0
    %v2574 = vadd.f32 0.0, %v2573
    %2575 = vmatmul.f32.gmra.mxu0 %v2390
    %v2576 = vpop.f32.mrf.mxu0
    %v2577 = vadd.f32 0.0, %v2576
    %2578 = vmatmul.f32.gmra.mxu0 %v2391
    %v2579 = vpop.f32.mrf.mxu0
    %v2580 = vadd.f32 0.0, %v2579
    %2581 = vmatmul.f32.gmra.mxu0 %v2392
    %v2582 = vpop.f32.mrf.mxu0
    %v2583 = vadd.f32 0.0, %v2582
    %2584 = vmatmul.f32.gmra.mxu0 %v2393
    %v2585 = vpop.f32.mrf.mxu0
    %v2586 = vadd.f32 0.0, %v2585
    %2587 = vmatmul.f32.gmra.mxu0 %v2394
    %v2588 = vpop.f32.mrf.mxu0
    %v2589 = vadd.f32 0.0, %v2588
    %2590 = vmatmul.f32.gmra.mxu0 %v2395
    %v2591 = vpop.f32.mrf.mxu0
    %v2592 = vadd.f32 0.0, %v2591
    %2593 = vmatmul.f32.gmra.mxu0 %v2396
    %v2594 = vpop.f32.mrf.mxu0
    %v2595 = vadd.f32 0.0, %v2594
    %2596 = vmatmul.f32.gmra.mxu0 %v2397
    %v2597 = vpop.f32.mrf.mxu0
    %v2598 = vadd.f32 0.0, %v2597
    %2599 = vmatmul.f32.gmra.mxu0 %v2398
    %v2600 = vpop.f32.mrf.mxu0
    %v2601 = vadd.f32 0.0, %v2600
    %2602 = vmatmul.f32.gmra.mxu0 %v2399
    %v2603 = vpop.f32.mrf.mxu0
    %v2604 = vadd.f32 0.0, %v2603
    %2605 = vmatmul.f32.gmra.mxu0 %v2400
    %v2606 = vpop.f32.mrf.mxu0
    %v2607 = vadd.f32 0.0, %v2606
    %2608 = vmatmul.f32.gmra.mxu0 %v2401
    %v2609 = vpop.f32.mrf.mxu0
    %v2610 = vadd.f32 0.0, %v2609
    %2611 = vmatmul.f32.gmra.mxu0 %v2402
    %v2612 = vpop.f32.mrf.mxu0
    %v2613 = vadd.f32 0.0, %v2612
    %2614 = vmatmul.f32.gmra.mxu0 %v2403
    %v2615 = vpop.f32.mrf.mxu0
    %v2616 = vadd.f32 0.0, %v2615
    %2617 = vmatmul.f32.gmra.mxu0 %v2404
    %v2618 = vpop.f32.mrf.mxu0
    %v2619 = vadd.f32 0.0, %v2618
    %2620 = vmatmul.f32.gmra.mxu0 %v2405
    %v2621 = vpop.f32.mrf.mxu0
    %v2622 = vadd.f32 0.0, %v2621
    %2623 = vmatmul.f32.gmra.mxu0 %v2406
    %v2624 = vpop.f32.mrf.mxu0
    %v2625 = vadd.f32 0.0, %v2624
    %2626 = vmatmul.f32.gmra.mxu0 %v2407
    %v2627 = vpop.f32.mrf.mxu0
    %v2628 = vadd.f32 0.0, %v2627
    %2629 = vmatmul.f32.gmra.mxu0 %v2408
    %v2630 = vpop.f32.mrf.mxu0
    %v2631 = vadd.f32 0.0, %v2630
    %2632 = vmatmul.f32.gmra.mxu0 %v2409
    %v2633 = vpop.f32.mrf.mxu0
    %v2634 = vadd.f32 0.0, %v2633
    %2635 = vmatmul.f32.gmra.mxu0 %v2410
    %v2636 = vpop.f32.mrf.mxu0
    %v2637 = vadd.f32 0.0, %v2636
    %2638 = vmatmul.f32.gmra.mxu0 %v2411
    %v2639 = vpop.f32.mrf.mxu0
    %v2640 = vadd.f32 0.0, %v2639
    %2641 = vmatmul.f32.gmra.mxu0 %v2412
    %v2642 = vpop.f32.mrf.mxu0
    %v2643 = vadd.f32 0.0, %v2642
    %2644 = vmatmul.f32.gmra.mxu0 %v2413
    %v2645 = vpop.f32.mrf.mxu0
    %v2646 = vadd.f32 0.0, %v2645
    %2647 = vmatmul.f32.gmra.mxu0 %v2414
    %v2648 = vpop.f32.mrf.mxu0
    %v2649 = vadd.f32 0.0, %v2648
    %2650 = vmatmul.f32.gmra.mxu0 %v2415
    %v2651 = vpop.f32.mrf.mxu0
    %v2652 = vadd.f32 0.0, %v2651
    %2653 = vmatmul.f32.gmra.mxu0 %v2416
    %v2654 = vpop.f32.mrf.mxu0
    %v2655 = vadd.f32 0.0, %v2654
    %2656 = vmatmul.f32.gmra.mxu0 %v2417
    %v2657 = vpop.f32.mrf.mxu0
    %v2658 = vadd.f32 0.0, %v2657
    %2659 = vdwg.mxu0
    %2660 = vmatpush.msra.mxu0 %v2450
    %2661 = vmatpush.msra.mxu0 %v2448
    %2662 = vmatpush.msra.mxu0 %v2446
    %2663 = vmatpush.msra.mxu0 %v2444
    %2664 = vmatpush.msra.mxu0 %v2442
    %2665 = vmatpush.msra.mxu0 %v2440
    %2666 = vmatpush.msra.mxu0 %v2438
    %2667 = vmatpush.msra.mxu0 %v2436
    %2668 = vmatpush.msra.mxu0 %v2434
    %2669 = vmatpush.msra.mxu0 %v2432
    %2670 = vmatpush.msra.mxu0 %v2430
    %2671 = vmatpush.msra.mxu0 %v2428
    %2672 = vmatpush.msra.mxu0 %v2426
    %2673 = vmatpush.msra.mxu0 %v2424
    %2674 = vmatpush.msra.mxu0 %v2422
    %2675 = vmatpush.msra.mxu0 %v2420
    %2676 = vmatmul.f32.gmra.mxu0 %v2354
    %v2677 = vpop.f32.mrf.mxu0
    %v2678 = vadd.f32 0.0, %v2677
    %2679 = vmatmul.f32.gmra.mxu0 %v2355
    %v2680 = vpop.f32.mrf.mxu0
    %v2681 = vadd.f32 0.0, %v2680
    %2682 = vmatmul.f32.gmra.mxu0 %v2356
    %v2683 = vpop.f32.mrf.mxu0
    %v2684 = vadd.f32 0.0, %v2683
    %2685 = vmatmul.f32.gmra.mxu0 %v2357
    %v2686 = vpop.f32.mrf.mxu0
    %v2687 = vadd.f32 0.0, %v2686
    %2688 = vmatmul.f32.gmra.mxu0 %v2358
    %v2689 = vpop.f32.mrf.mxu0
    %v2690 = vadd.f32 0.0, %v2689
    %2691 = vmatmul.f32.gmra.mxu0 %v2359
    %v2692 = vpop.f32.mrf.mxu0
    %v2693 = vadd.f32 0.0, %v2692
    %2694 = vmatmul.f32.gmra.mxu0 %v2360
    %v2695 = vpop.f32.mrf.mxu0
    %v2696 = vadd.f32 0.0, %v2695
    %2697 = vmatmul.f32.gmra.mxu0 %v2361
    %v2698 = vpop.f32.mrf.mxu0
    %v2699 = vadd.f32 0.0, %v2698
    %2700 = vmatmul.f32.gmra.mxu0 %v2362
    %v2701 = vpop.f32.mrf.mxu0
    %v2702 = vadd.f32 0.0, %v2701
    %2703 = vmatmul.f32.gmra.mxu0 %v2363
    %v2704 = vpop.f32.mrf.mxu0
    %v2705 = vadd.f32 0.0, %v2704
    %2706 = vmatmul.f32.gmra.mxu0 %v2364
    %v2707 = vpop.f32.mrf.mxu0
    %v2708 = vadd.f32 0.0, %v2707
    %2709 = vmatmul.f32.gmra.mxu0 %v2365
    %v2710 = vpop.f32.mrf.mxu0
    %v2711 = vadd.f32 0.0, %v2710
    %2712 = vmatmul.f32.gmra.mxu0 %v2366
    %v2713 = vpop.f32.mrf.mxu0
    %v2714 = vadd.f32 0.0, %v2713
    %2715 = vmatmul.f32.gmra.mxu0 %v2367
    %v2716 = vpop.f32.mrf.mxu0
    %v2717 = vadd.f32 0.0, %v2716
    %2718 = vmatmul.f32.gmra.mxu0 %v2368
    %v2719 = vpop.f32.mrf.mxu0
    %v2720 = vadd.f32 0.0, %v2719
    %2721 = vmatmul.f32.gmra.mxu0 %v2369
    %v2722 = vpop.f32.mrf.mxu0
    %v2723 = vadd.f32 0.0, %v2722
    %2724 = vmatmul.f32.gmra.mxu0 %v2370
    %v2725 = vpop.f32.mrf.mxu0
    %v2726 = vadd.f32 0.0, %v2725
    %2727 = vmatmul.f32.gmra.mxu0 %v2371
    %v2728 = vpop.f32.mrf.mxu0
    %v2729 = vadd.f32 0.0, %v2728
    %2730 = vmatmul.f32.gmra.mxu0 %v2372
    %v2731 = vpop.f32.mrf.mxu0
    %v2732 = vadd.f32 0.0, %v2731
    %2733 = vmatmul.f32.gmra.mxu0 %v2373
    %v2734 = vpop.f32.mrf.mxu0
    %v2735 = vadd.f32 0.0, %v2734
    %2736 = vmatmul.f32.gmra.mxu0 %v2374
    %v2737 = vpop.f32.mrf.mxu0
    %v2738 = vadd.f32 0.0, %v2737
    %2739 = vmatmul.f32.gmra.mxu0 %v2375
    %v2740 = vpop.f32.mrf.mxu0
    %v2741 = vadd.f32 0.0, %v2740
    %2742 = vmatmul.f32.gmra.mxu0 %v2376
    %v2743 = vpop.f32.mrf.mxu0
    %v2744 = vadd.f32 0.0, %v2743
    %2745 = vmatmul.f32.gmra.mxu0 %v2377
    %v2746 = vpop.f32.mrf.mxu0
    %v2747 = vadd.f32 0.0, %v2746
    %2748 = vmatmul.f32.gmra.mxu0 %v2378
    %v2749 = vpop.f32.mrf.mxu0
    %v2750 = vadd.f32 0.0, %v2749
    %2751 = vmatmul.f32.gmra.mxu0 %v2379
    %v2752 = vpop.f32.mrf.mxu0
    %v2753 = vadd.f32 0.0, %v2752
    %2754 = vmatmul.f32.gmra.mxu0 %v2380
    %v2755 = vpop.f32.mrf.mxu0
    %v2756 = vadd.f32 0.0, %v2755
    %2757 = vmatmul.f32.gmra.mxu0 %v2381
    %v2758 = vpop.f32.mrf.mxu0
    %v2759 = vadd.f32 0.0, %v2758
    %2760 = vmatmul.f32.gmra.mxu0 %v2382
    %v2761 = vpop.f32.mrf.mxu0
    %v2762 = vadd.f32 0.0, %v2761
    %2763 = vmatmul.f32.gmra.mxu0 %v2383
    %v2764 = vpop.f32.mrf.mxu0
    %v2765 = vadd.f32 0.0, %v2764
    %2766 = vmatmul.f32.gmra.mxu0 %v2384
    %v2767 = vpop.f32.mrf.mxu0
    %v2768 = vadd.f32 0.0, %v2767
    %2769 = vmatmul.f32.gmra.mxu0 %v2385
    %v2770 = vpop.f32.mrf.mxu0
    %v2771 = vadd.f32 0.0, %v2770
    %2772 = vmatmul.f32.gmra.mxu0 %v2386
    %v2773 = vpop.f32.mrf.mxu0
    %v2774 = vadd.f32 0.0, %v2773
    %2775 = vmatmul.f32.gmra.mxu0 %v2387
    %v2776 = vpop.f32.mrf.mxu0
    %v2777 = vadd.f32 0.0, %v2776
    %2778 = vmatmul.f32.gmra.mxu0 %v2388
    %v2779 = vpop.f32.mrf.mxu0
    %v2780 = vadd.f32 0.0, %v2779
    %2781 = vmatmul.f32.gmra.mxu0 %v2389
    %v2782 = vpop.f32.mrf.mxu0
    %v2783 = vadd.f32 0.0, %v2782
    %2784 = vmatmul.f32.gmra.mxu0 %v2390
    %v2785 = vpop.f32.mrf.mxu0
    %v2786 = vadd.f32 0.0, %v2785
    %2787 = vmatmul.f32.gmra.mxu0 %v2391
    %v2788 = vpop.f32.mrf.mxu0
    %v2789 = vadd.f32 0.0, %v2788
    %2790 = vmatmul.f32.gmra.mxu0 %v2392
    %v2791 = vpop.f32.mrf.mxu0
    %v2792 = vadd.f32 0.0, %v2791
    %2793 = vmatmul.f32.gmra.mxu0 %v2393
    %v2794 = vpop.f32.mrf.mxu0
    %v2795 = vadd.f32 0.0, %v2794
    %2796 = vmatmul.f32.gmra.mxu0 %v2394
    %v2797 = vpop.f32.mrf.mxu0
    %v2798 = vadd.f32 0.0, %v2797
    %2799 = vmatmul.f32.gmra.mxu0 %v2395
    %v2800 = vpop.f32.mrf.mxu0
    %v2801 = vadd.f32 0.0, %v2800
    %2802 = vmatmul.f32.gmra.mxu0 %v2396
    %v2803 = vpop.f32.mrf.mxu0
    %v2804 = vadd.f32 0.0, %v2803
    %2805 = vmatmul.f32.gmra.mxu0 %v2397
    %v2806 = vpop.f32.mrf.mxu0
    %v2807 = vadd.f32 0.0, %v2806
    %2808 = vmatmul.f32.gmra.mxu0 %v2398
    %v2809 = vpop.f32.mrf.mxu0
    %v2810 = vadd.f32 0.0, %v2809
    %2811 = vmatmul.f32.gmra.mxu0 %v2399
    %v2812 = vpop.f32.mrf.mxu0
    %v2813 = vadd.f32 0.0, %v2812
    %2814 = vmatmul.f32.gmra.mxu0 %v2400
    %v2815 = vpop.f32.mrf.mxu0
    %v2816 = vadd.f32 0.0, %v2815
    %2817 = vmatmul.f32.gmra.mxu0 %v2401
    %v2818 = vpop.f32.mrf.mxu0
    %v2819 = vadd.f32 0.0, %v2818
    %2820 = vmatmul.f32.gmra.mxu0 %v2402
    %v2821 = vpop.f32.mrf.mxu0
    %v2822 = vadd.f32 0.0, %v2821
    %2823 = vmatmul.f32.gmra.mxu0 %v2403
    %v2824 = vpop.f32.mrf.mxu0
    %v2825 = vadd.f32 0.0, %v2824
    %2826 = vmatmul.f32.gmra.mxu0 %v2404
    %v2827 = vpop.f32.mrf.mxu0
    %v2828 = vadd.f32 0.0, %v2827
    %2829 = vmatmul.f32.gmra.mxu0 %v2405
    %v2830 = vpop.f32.mrf.mxu0
    %v2831 = vadd.f32 0.0, %v2830
    %2832 = vmatmul.f32.gmra.mxu0 %v2406
    %v2833 = vpop.f32.mrf.mxu0
    %v2834 = vadd.f32 0.0, %v2833
    %2835 = vmatmul.f32.gmra.mxu0 %v2407
    %v2836 = vpop.f32.mrf.mxu0
    %v2837 = vadd.f32 0.0, %v2836
    %2838 = vmatmul.f32.gmra.mxu0 %v2408
    %v2839 = vpop.f32.mrf.mxu0
    %v2840 = vadd.f32 0.0, %v2839
    %2841 = vmatmul.f32.gmra.mxu0 %v2409
    %v2842 = vpop.f32.mrf.mxu0
    %v2843 = vadd.f32 0.0, %v2842
    %2844 = vmatmul.f32.gmra.mxu0 %v2410
    %v2845 = vpop.f32.mrf.mxu0
    %v2846 = vadd.f32 0.0, %v2845
    %2847 = vmatmul.f32.gmra.mxu0 %v2411
    %v2848 = vpop.f32.mrf.mxu0
    %v2849 = vadd.f32 0.0, %v2848
    %2850 = vmatmul.f32.gmra.mxu0 %v2412
    %v2851 = vpop.f32.mrf.mxu0
    %v2852 = vadd.f32 0.0, %v2851
    %2853 = vmatmul.f32.gmra.mxu0 %v2413
    %v2854 = vpop.f32.mrf.mxu0
    %v2855 = vadd.f32 0.0, %v2854
    %2856 = vmatmul.f32.gmra.mxu0 %v2414
    %v2857 = vpop.f32.mrf.mxu0
    %v2858 = vadd.f32 0.0, %v2857
    %2859 = vmatmul.f32.gmra.mxu0 %v2415
    %v2860 = vpop.f32.mrf.mxu0
    %v2861 = vadd.f32 0.0, %v2860
    %2862 = vmatmul.f32.gmra.mxu0 %v2416
    %v2863 = vpop.f32.mrf.mxu0
    %v2864 = vadd.f32 0.0, %v2863
    %2865 = vmatmul.f32.gmra.mxu0 %v2417
    %v2866 = vpop.f32.mrf.mxu0
    %v2867 = vadd.f32 0.0, %v2866
    %2868 = vdwg.mxu0
    %v2869 = vadd.f32 %v2226, %v2469
    %v2870 = vadd.f32 %v2227, %v2678
    %v2871 = vadd.f32 %v2228, %v2472
    %v2872 = vadd.f32 %v2229, %v2681
    %v2873 = vadd.f32 %v2230, %v2475
    %v2874 = vadd.f32 %v2231, %v2684
    %v2875 = vadd.f32 %v2232, %v2478
    %v2876 = vadd.f32 %v2233, %v2687
    %v2877 = vadd.f32 %v2234, %v2481
    %v2878 = vadd.f32 %v2235, %v2690
    %v2879 = vadd.f32 %v2236, %v2484
    %v2880 = vadd.f32 %v2237, %v2693
    %v2881 = vadd.f32 %v2238, %v2487
    %v2882 = vadd.f32 %v2239, %v2696
    %v2883 = vadd.f32 %v2240, %v2490
    %v2884 = vadd.f32 %v2241, %v2699
    %v2885 = vadd.f32 %v2242, %v2493
    %v2886 = vadd.f32 %v2243, %v2702
    %v2887 = vadd.f32 %v2244, %v2496
    %v2888 = vadd.f32 %v2245, %v2705
    %v2889 = vadd.f32 %v2246, %v2499
    %v2890 = vadd.f32 %v2247, %v2708
    %v2891 = vadd.f32 %v2248, %v2502
    %v2892 = vadd.f32 %v2249, %v2711
    %v2893 = vadd.f32 %v2250, %v2505
    %v2894 = vadd.f32 %v2251, %v2714
    %v2895 = vadd.f32 %v2252, %v2508
    %v2896 = vadd.f32 %v2253, %v2717
    %v2897 = vadd.f32 %v2254, %v2511
    %v2898 = vadd.f32 %v2255, %v2720
    %v2899 = vadd.f32 %v2256, %v2514
    %v2900 = vadd.f32 %v2257, %v2723
    %v2901 = vadd.f32 %v2258, %v2517
    %v2902 = vadd.f32 %v2259, %v2726
    %v2903 = vadd.f32 %v2260, %v2520
    %v2904 = vadd.f32 %v2261, %v2729
    %v2905 = vadd.f32 %v2262, %v2523
    %v2906 = vadd.f32 %v2263, %v2732
    %v2907 = vadd.f32 %v2264, %v2526
    %v2908 = vadd.f32 %v2265, %v2735
    %v2909 = vadd.f32 %v2266, %v2529
    %v2910 = vadd.f32 %v2267, %v2738
    %v2911 = vadd.f32 %v2268, %v2532
    %v2912 = vadd.f32 %v2269, %v2741
    %v2913 = vadd.f32 %v2270, %v2535
    %v2914 = vadd.f32 %v2271, %v2744
    %v2915 = vadd.f32 %v2272, %v2538
    %v2916 = vadd.f32 %v2273, %v2747
    %v2917 = vadd.f32 %v2274, %v2541
    %v2918 = vadd.f32 %v2275, %v2750
    %v2919 = vadd.f32 %v2276, %v2544
    %v2920 = vadd.f32 %v2277, %v2753
    %v2921 = vadd.f32 %v2278, %v2547
    %v2922 = vadd.f32 %v2279, %v2756
    %v2923 = vadd.f32 %v2280, %v2550
    %v2924 = vadd.f32 %v2281, %v2759
    %v2925 = vadd.f32 %v2282, %v2553
    %v2926 = vadd.f32 %v2283, %v2762
    %v2927 = vadd.f32 %v2284, %v2556
    %v2928 = vadd.f32 %v2285, %v2765
    %v2929 = vadd.f32 %v2286, %v2559
    %v2930 = vadd.f32 %v2287, %v2768
    %v2931 = vadd.f32 %v2288, %v2562
    %v2932 = vadd.f32 %v2289, %v2771
    %v2933 = vadd.f32 %v2290, %v2565
    %v2934 = vadd.f32 %v2291, %v2774
    %v2935 = vadd.f32 %v2292, %v2568
    %v2936 = vadd.f32 %v2293, %v2777
    %v2937 = vadd.f32 %v2294, %v2571
    %v2938 = vadd.f32 %v2295, %v2780
    %v2939 = vadd.f32 %v2296, %v2574
    %v2940 = vadd.f32 %v2297, %v2783
    %v2941 = vadd.f32 %v2298, %v2577
    %v2942 = vadd.f32 %v2299, %v2786
    %v2943 = vadd.f32 %v2300, %v2580
    %v2944 = vadd.f32 %v2301, %v2789
    %v2945 = vadd.f32 %v2302, %v2583
    %v2946 = vadd.f32 %v2303, %v2792
    %v2947 = vadd.f32 %v2304, %v2586
    %v2948 = vadd.f32 %v2305, %v2795
    %v2949 = vadd.f32 %v2306, %v2589
    %v2950 = vadd.f32 %v2307, %v2798
    %v2951 = vadd.f32 %v2308, %v2592
    %v2952 = vadd.f32 %v2309, %v2801
    %v2953 = vadd.f32 %v2310, %v2595
    %v2954 = vadd.f32 %v2311, %v2804
    %v2955 = vadd.f32 %v2312, %v2598
    %v2956 = vadd.f32 %v2313, %v2807
    %v2957 = vadd.f32 %v2314, %v2601
    %v2958 = vadd.f32 %v2315, %v2810
    %v2959 = vadd.f32 %v2316, %v2604
    %v2960 = vadd.f32 %v2317, %v2813
    %v2961 = vadd.f32 %v2318, %v2607
    %v2962 = vadd.f32 %v2319, %v2816
    %v2963 = vadd.f32 %v2320, %v2610
    %v2964 = vadd.f32 %v2321, %v2819
    %v2965 = vadd.f32 %v2322, %v2613
    %v2966 = vadd.f32 %v2323, %v2822
    %v2967 = vadd.f32 %v2324, %v2616
    %v2968 = vadd.f32 %v2325, %v2825
    %v2969 = vadd.f32 %v2326, %v2619
    %v2970 = vadd.f32 %v2327, %v2828
    %v2971 = vadd.f32 %v2328, %v2622
    %v2972 = vadd.f32 %v2329, %v2831
    %v2973 = vadd.f32 %v2330, %v2625
    %v2974 = vadd.f32 %v2331, %v2834
    %v2975 = vadd.f32 %v2332, %v2628
    %v2976 = vadd.f32 %v2333, %v2837
    %v2977 = vadd.f32 %v2334, %v2631
    %v2978 = vadd.f32 %v2335, %v2840
    %v2979 = vadd.f32 %v2336, %v2634
    %v2980 = vadd.f32 %v2337, %v2843
    %v2981 = vadd.f32 %v2338, %v2637
    %v2982 = vadd.f32 %v2339, %v2846
    %v2983 = vadd.f32 %v2340, %v2640
    %v2984 = vadd.f32 %v2341, %v2849
    %v2985 = vadd.f32 %v2342, %v2643
    %v2986 = vadd.f32 %v2343, %v2852
    %v2987 = vadd.f32 %v2344, %v2646
    %v2988 = vadd.f32 %v2345, %v2855
    %v2989 = vadd.f32 %v2346, %v2649
    %v2990 = vadd.f32 %v2347, %v2858
    %v2991 = vadd.f32 %v2348, %v2652
    %v2992 = vadd.f32 %v2349, %v2861
    %v2993 = vadd.f32 %v2350, %v2655
    %v2994 = vadd.f32 %v2351, %v2864
    %v2995 = vadd.f32 %v2352, %v2658
    %v2996 = vadd.f32 %v2353, %v2867
    %v2997 = vmax.f32 %v2869, %v2870
    %v2998 = vmax.f32 %v2871, %v2872
    %v2999 = vmax.f32 %v2873, %v2874
    %v3000 = vmax.f32 %v2875, %v2876
    %v3001 = vmax.f32 %v2877, %v2878
    %v3002 = vmax.f32 %v2879, %v2880
    %v3003 = vmax.f32 %v2881, %v2882
    %v3004 = vmax.f32 %v2883, %v2884
    %v3005 = vmax.f32 %v2885, %v2886
    %v3006 = vmax.f32 %v2887, %v2888
    %v3007 = vmax.f32 %v2889, %v2890
    %v3008 = vmax.f32 %v2891, %v2892
    %v3009 = vmax.f32 %v2893, %v2894
    %v3010 = vmax.f32 %v2895, %v2896
    %v3011 = vmax.f32 %v2897, %v2898
    %v3012 = vmax.f32 %v2899, %v2900
    %v3013 = vmax.f32 %v2901, %v2902
    %v3014 = vmax.f32 %v2903, %v2904
    %v3015 = vmax.f32 %v2905, %v2906
    %v3016 = vmax.f32 %v2907, %v2908
    %v3017 = vmax.f32 %v2909, %v2910
    %v3018 = vmax.f32 %v2911, %v2912
    %v3019 = vmax.f32 %v2913, %v2914
    %v3020 = vmax.f32 %v2915, %v2916
    %v3021 = vmax.f32 %v2917, %v2918
    %v3022 = vmax.f32 %v2919, %v2920
    %v3023 = vmax.f32 %v2921, %v2922
    %v3024 = vmax.f32 %v2923, %v2924
    %v3025 = vmax.f32 %v2925, %v2926
    %v3026 = vmax.f32 %v2927, %v2928
    %v3027 = vmax.f32 %v2929, %v2930
    %v3028 = vmax.f32 %v2931, %v2932
    %v3029 = vmax.f32 %v2933, %v2934
    %v3030 = vmax.f32 %v2935, %v2936
    %v3031 = vmax.f32 %v2937, %v2938
    %v3032 = vmax.f32 %v2939, %v2940
    %v3033 = vmax.f32 %v2941, %v2942
    %v3034 = vmax.f32 %v2943, %v2944
    %v3035 = vmax.f32 %v2945, %v2946
    %v3036 = vmax.f32 %v2947, %v2948
    %v3037 = vmax.f32 %v2949, %v2950
    %v3038 = vmax.f32 %v2951, %v2952
    %v3039 = vmax.f32 %v2953, %v2954
    %v3040 = vmax.f32 %v2955, %v2956
    %v3041 = vmax.f32 %v2957, %v2958
    %v3042 = vmax.f32 %v2959, %v2960
    %v3043 = vmax.f32 %v2961, %v2962
    %v3044 = vmax.f32 %v2963, %v2964
    %v3045 = vmax.f32 %v2965, %v2966
    %v3046 = vmax.f32 %v2967, %v2968
    %v3047 = vmax.f32 %v2969, %v2970
    %v3048 = vmax.f32 %v2971, %v2972
    %v3049 = vmax.f32 %v2973, %v2974
    %v3050 = vmax.f32 %v2975, %v2976
    %v3051 = vmax.f32 %v2977, %v2978
    %v3052 = vmax.f32 %v2979, %v2980
    %v3053 = vmax.f32 %v2981, %v2982
    %v3054 = vmax.f32 %v2983, %v2984
    %v3055 = vmax.f32 %v2985, %v2986
    %v3056 = vmax.f32 %v2987, %v2988
    %v3057 = vmax.f32 %v2989, %v2990
    %v3058 = vmax.f32 %v2991, %v2992
    %v3059 = vmax.f32 %v2993, %v2994
    %v3060 = vmax.f32 %v2995, %v2996
    %v3061 = vld [vmem:[%s2] sm:$0x1]
    %v3063 = vperm.slane %v3061, 0
    %v3065 = vadd.f32 %v2997, %v3063
    %v3066 = vadd.f32 %v2998, %v3063
    %v3067 = vadd.f32 %v2999, %v3063
    %v3068 = vadd.f32 %v3000, %v3063
    %v3069 = vadd.f32 %v3001, %v3063
    %v3070 = vadd.f32 %v3002, %v3063
    %v3071 = vadd.f32 %v3003, %v3063
    %v3072 = vadd.f32 %v3004, %v3063
    %v3073 = vadd.f32 %v3005, %v3063
    %v3074 = vadd.f32 %v3006, %v3063
    %v3075 = vadd.f32 %v3007, %v3063
    %v3076 = vadd.f32 %v3008, %v3063
    %v3077 = vadd.f32 %v3009, %v3063
    %v3078 = vadd.f32 %v3010, %v3063
    %v3079 = vadd.f32 %v3011, %v3063
    %v3080 = vadd.f32 %v3012, %v3063
    %v3081 = vadd.f32 %v3013, %v3063
    %v3082 = vadd.f32 %v3014, %v3063
    %v3083 = vadd.f32 %v3015, %v3063
    %v3084 = vadd.f32 %v3016, %v3063
    %v3085 = vadd.f32 %v3017, %v3063
    %v3086 = vadd.f32 %v3018, %v3063
    %v3087 = vadd.f32 %v3019, %v3063
    %v3088 = vadd.f32 %v3020, %v3063
    %v3089 = vadd.f32 %v3021, %v3063
    %v3090 = vadd.f32 %v3022, %v3063
    %v3091 = vadd.f32 %v3023, %v3063
    %v3092 = vadd.f32 %v3024, %v3063
    %v3093 = vadd.f32 %v3025, %v3063
    %v3094 = vadd.f32 %v3026, %v3063
    %v3095 = vadd.f32 %v3027, %v3063
    %v3096 = vadd.f32 %v3028, %v3063
    %v3097 = vadd.f32 %v3029, %v3063
    %v3098 = vadd.f32 %v3030, %v3063
    %v3099 = vadd.f32 %v3031, %v3063
    %v3100 = vadd.f32 %v3032, %v3063
    %v3101 = vadd.f32 %v3033, %v3063
    %v3102 = vadd.f32 %v3034, %v3063
    %v3103 = vadd.f32 %v3035, %v3063
    %v3104 = vadd.f32 %v3036, %v3063
    %v3105 = vadd.f32 %v3037, %v3063
    %v3106 = vadd.f32 %v3038, %v3063
    %v3107 = vadd.f32 %v3039, %v3063
    %v3108 = vadd.f32 %v3040, %v3063
    %v3109 = vadd.f32 %v3041, %v3063
    %v3110 = vadd.f32 %v3042, %v3063
    %v3111 = vadd.f32 %v3043, %v3063
    %v3112 = vadd.f32 %v3044, %v3063
    %v3113 = vadd.f32 %v3045, %v3063
    %v3114 = vadd.f32 %v3046, %v3063
    %v3115 = vadd.f32 %v3047, %v3063
    %v3116 = vadd.f32 %v3048, %v3063
    %v3117 = vadd.f32 %v3049, %v3063
    %v3118 = vadd.f32 %v3050, %v3063
    %v3119 = vadd.f32 %v3051, %v3063
    %v3120 = vadd.f32 %v3052, %v3063
    %v3121 = vadd.f32 %v3053, %v3063
    %v3122 = vadd.f32 %v3054, %v3063
    %v3123 = vadd.f32 %v3055, %v3063
    %v3124 = vadd.f32 %v3056, %v3063
    %v3125 = vadd.f32 %v3057, %v3063
    %v3126 = vadd.f32 %v3058, %v3063
    %v3127 = vadd.f32 %v3059, %v3063
    %v3128 = vadd.f32 %v3060, %v3063
    %v3129 = vmax.f32 %v3065, 0.0
    %v3130 = vmax.f32 %v3066, 0.0
    %v3131 = vmax.f32 %v3067, 0.0
    %v3132 = vmax.f32 %v3068, 0.0
    %v3133 = vmax.f32 %v3069, 0.0
    %v3134 = vmax.f32 %v3070, 0.0
    %v3135 = vmax.f32 %v3071, 0.0
    %v3136 = vmax.f32 %v3072, 0.0
    %v3137 = vmax.f32 %v3073, 0.0
    %v3138 = vmax.f32 %v3074, 0.0
    %v3139 = vmax.f32 %v3075, 0.0
    %v3140 = vmax.f32 %v3076, 0.0
    %v3141 = vmax.f32 %v3077, 0.0
    %v3142 = vmax.f32 %v3078, 0.0
    %v3143 = vmax.f32 %v3079, 0.0
    %v3144 = vmax.f32 %v3080, 0.0
    %v3145 = vmax.f32 %v3081, 0.0
    %v3146 = vmax.f32 %v3082, 0.0
    %v3147 = vmax.f32 %v3083, 0.0
    %v3148 = vmax.f32 %v3084, 0.0
    %v3149 = vmax.f32 %v3085, 0.0
    %v3150 = vmax.f32 %v3086, 0.0
    %v3151 = vmax.f32 %v3087, 0.0
    %v3152 = vmax.f32 %v3088, 0.0
    %v3153 = vmax.f32 %v3089, 0.0
    %v3154 = vmax.f32 %v3090, 0.0
    %v3155 = vmax.f32 %v3091, 0.0
    %v3156 = vmax.f32 %v3092, 0.0
    %v3157 = vmax.f32 %v3093, 0.0
    %v3158 = vmax.f32 %v3094, 0.0
    %v3159 = vmax.f32 %v3095, 0.0
    %v3160 = vmax.f32 %v3096, 0.0
    %v3161 = vmax.f32 %v3097, 0.0
    %v3162 = vmax.f32 %v3098, 0.0
    %v3163 = vmax.f32 %v3099, 0.0
    %v3164 = vmax.f32 %v3100, 0.0
    %v3165 = vmax.f32 %v3101, 0.0
    %v3166 = vmax.f32 %v3102, 0.0
    %v3167 = vmax.f32 %v3103, 0.0
    %v3168 = vmax.f32 %v3104, 0.0
    %v3169 = vmax.f32 %v3105, 0.0
    %v3170 = vmax.f32 %v3106, 0.0
    %v3171 = vmax.f32 %v3107, 0.0
    %v3172 = vmax.f32 %v3108, 0.0
    %v3173 = vmax.f32 %v3109, 0.0
    %v3174 = vmax.f32 %v3110, 0.0
    %v3175 = vmax.f32 %v3111, 0.0
    %v3176 = vmax.f32 %v3112, 0.0
    %v3177 = vmax.f32 %v3113, 0.0
    %v3178 = vmax.f32 %v3114, 0.0
    %v3179 = vmax.f32 %v3115, 0.0
    %v3180 = vmax.f32 %v3116, 0.0
    %v3181 = vmax.f32 %v3117, 0.0
    %v3182 = vmax.f32 %v3118, 0.0
    %v3183 = vmax.f32 %v3119, 0.0
    %v3184 = vmax.f32 %v3120, 0.0
    %v3185 = vmax.f32 %v3121, 0.0
    %v3186 = vmax.f32 %v3122, 0.0
    %v3187 = vmax.f32 %v3123, 0.0
    %v3188 = vmax.f32 %v3124, 0.0
    %v3189 = vmax.f32 %v3125, 0.0
    %v3190 = vmax.f32 %v3126, 0.0
    %v3191 = vmax.f32 %v3127, 0.0
    %v3192 = vmax.f32 %v3128, 0.0
    %3193 = vst [vmem:[#allocation2] sm:$0xff] %v3129
    %3194 = vst [vmem:[#allocation2 + $0x8] sm:$0xff] %v3130
    %3195 = vst [vmem:[#allocation2 + $0x10] sm:$0xff] %v3131
    %3196 = vst [vmem:[#allocation2 + $0x18] sm:$0xff] %v3132
    %3197 = vst [vmem:[#allocation2 + $0x20] sm:$0xff] %v3133
    %3198 = vst [vmem:[#allocation2 + $0x28] sm:$0xff] %v3134
    %3199 = vst [vmem:[#allocation2 + $0x30] sm:$0xff] %v3135
    %3200 = vst [vmem:[#allocation2 + $0x38] sm:$0xff] %v3136
    %3201 = vst [vmem:[#allocation2 + $0x40] sm:$0xff] %v3137
    %3202 = vst [vmem:[#allocation2 + $0x48] sm:$0xff] %v3138
    %3203 = vst [vmem:[#allocation2 + $0x50] sm:$0xff] %v3139
    %3204 = vst [vmem:[#allocation2 + $0x58] sm:$0xff] %v3140
    %3205 = vst [vmem:[#allocation2 + $0x60] sm:$0xff] %v3141
    %3206 = vst [vmem:[#allocation2 + $0x68] sm:$0xff] %v3142
    %3207 = vst [vmem:[#allocation2 + $0x70] sm:$0xff] %v3143
    %3208 = vst [vmem:[#allocation2 + $0x78] sm:$0xff] %v3144
    %3209 = vst [vmem:[#allocation2 + $0x80] sm:$0xff] %v3145
    %3210 = vst [vmem:[#allocation2 + $0x88] sm:$0xff] %v3146
    %3211 = vst [vmem:[#allocation2 + $0x90] sm:$0xff] %v3147
    %3212 = vst [vmem:[#allocation2 + $0x98] sm:$0xff] %v3148
    %3213 = vst [vmem:[#allocation2 + $0xa0] sm:$0xff] %v3149
    %3214 = vst [vmem:[#allocation2 + $0xa8] sm:$0xff] %v3150
    %3215 = vst [vmem:[#allocation2 + $0xb0] sm:$0xff] %v3151
    %3216 = vst [vmem:[#allocation2 + $0xb8] sm:$0xff] %v3152
    %3217 = vst [vmem:[#allocation2 + $0xc0] sm:$0xff] %v3153
    %3218 = vst [vmem:[#allocation2 + $0xc8] sm:$0xff] %v3154
    %3219 = vst [vmem:[#allocation2 + $0xd0] sm:$0xff] %v3155
    %3220 = vst [vmem:[#allocation2 + $0xd8] sm:$0xff] %v3156
    %3221 = vst [vmem:[#allocation2 + $0xe0] sm:$0xff] %v3157
    %3222 = vst [vmem:[#allocation2 + $0xe8] sm:$0xff] %v3158
    %3223 = vst [vmem:[#allocation2 + $0xf0] sm:$0xff] %v3159
    %3224 = vst [vmem:[#allocation2 + $0xf8] sm:$0xff] %v3160
    %3225 = vst [vmem:[#allocation2 + $0x100] sm:$0xff] %v3161
    %3226 = vst [vmem:[#allocation2 + $0x108] sm:$0xff] %v3162
    %3227 = vst [vmem:[#allocation2 + $0x110] sm:$0xff] %v3163
    %3228 = vst [vmem:[#allocation2 + $0x118] sm:$0xff] %v3164
    %3229 = vst [vmem:[#allocation2 + $0x120] sm:$0xff] %v3165
    %3230 = vst [vmem:[#allocation2 + $0x128] sm:$0xff] %v3166
    %3231 = vst [vmem:[#allocation2 + $0x130] sm:$0xff] %v3167
    %3232 = vst [vmem:[#allocation2 + $0x138] sm:$0xff] %v3168
    %3233 = vst [vmem:[#allocation2 + $0x140] sm:$0xff] %v3169
    %3234 = vst [vmem:[#allocation2 + $0x148] sm:$0xff] %v3170
    %3235 = vst [vmem:[#allocation2 + $0x150] sm:$0xff] %v3171
    %3236 = vst [vmem:[#allocation2 + $0x158] sm:$0xff] %v3172
    %3237 = vst [vmem:[#allocation2 + $0x160] sm:$0xff] %v3173
    %3238 = vst [vmem:[#allocation2 + $0x168] sm:$0xff] %v3174
    %3239 = vst [vmem:[#allocation2 + $0x170] sm:$0xff] %v3175
    %3240 = vst [vmem:[#allocation2 + $0x178] sm:$0xff] %v3176
    %3241 = vst [vmem:[#allocation2 + $0x180] sm:$0xff] %v3177
    %3242 = vst [vmem:[#allocation2 + $0x188] sm:$0xff] %v3178
    %3243 = vst [vmem:[#allocation2 + $0x190] sm:$0xff] %v3179
    %3244 = vst [vmem:[#allocation2 + $0x198] sm:$0xff] %v3180
    %3245 = vst [vmem:[#allocation2 + $0x1a0] sm:$0xff] %v3181
    %3246 = vst [vmem:[#allocation2 + $0x1a8] sm:$0xff] %v3182
    %3247 = vst [vmem:[#allocation2 + $0x1b0] sm:$0xff] %v3183
    %3248 = vst [vmem:[#allocation2 + $0x1b8] sm:$0xff] %v3184
    %3249 = vst [vmem:[#allocation2 + $0x1c0] sm:$0xff] %v3185
    %3250 = vst [vmem:[#allocation2 + $0x1c8] sm:$0xff] %v3186
    %3251 = vst [vmem:[#allocation2 + $0x1d0] sm:$0xff] %v3187
    %3252 = vst [vmem:[#allocation2 + $0x1d8] sm:$0xff] %v3188
    %3253 = vst [vmem:[#allocation2 + $0x1e0] sm:$0xff] %v3189
    %3254 = vst [vmem:[#allocation2 + $0x1e8] sm:$0xff] %v3190
    %3255 = vst [vmem:[#allocation2 + $0x1f0] sm:$0xff] %v3191
    %3256 = vst [vmem:[#allocation2 + $0x1f8] sm:$0xf] %v3192
    %v3257 = vld [vmem:[#allocation2] ss:$2 sm:$0xff]
    %s3258 = scalar_lea.vmem [#allocation2], 16
    %v3259 = vld [vmem:[%s3258] ss:$2 sm:$0xff]
    %s3260 = scalar_lea.vmem [#allocation2], 32
    %v3261 = vld [vmem:[%s3260] ss:$2 sm:$0xff]
    %s3262 = scalar_lea.vmem [#allocation2], 48
    %v3263 = vld [vmem:[%s3262] ss:$2 sm:$0xff]
    %s3264 = scalar_lea.vmem [#allocation2], 64
    %v3265 = vld [vmem:[%s3264] ss:$2 sm:$0xff]
    %s3266 = scalar_lea.vmem [#allocation2], 80
    %v3267 = vld [vmem:[%s3266] ss:$2 sm:$0xff]
    %s3268 = scalar_lea.vmem [#allocation2], 96
    %v3269 = vld [vmem:[%s3268] ss:$2 sm:$0xff]
    %s3270 = scalar_lea.vmem [#allocation2], 112
    %v3271 = vld [vmem:[%s3270] ss:$2 sm:$0xff]
    %s3272 = scalar_lea.vmem [#allocation2], 128
    %v3273 = vld [vmem:[%s3272] ss:$2 sm:$0xff]
    %s3274 = scalar_lea.vmem [#allocation2], 144
    %v3275 = vld [vmem:[%s3274] ss:$2 sm:$0xff]
    %s3276 = scalar_lea.vmem [#allocation2], 160
    %v3277 = vld [vmem:[%s3276] ss:$2 sm:$0xff]
    %s3278 = scalar_lea.vmem [#allocation2], 176
    %v3279 = vld [vmem:[%s3278] ss:$2 sm:$0xff]
    %s3280 = scalar_lea.vmem [#allocation2], 192
    %v3281 = vld [vmem:[%s3280] ss:$2 sm:$0xff]
    %s3282 = scalar_lea.vmem [#allocation2], 208
    %v3283 = vld [vmem:[%s3282] ss:$2 sm:$0xff]
    %s3284 = scalar_lea.vmem [#allocation2], 224
    %v3285 = vld [vmem:[%s3284] ss:$2 sm:$0xff]
    %s3286 = scalar_lea.vmem [#allocation2], 240
    %v3287 = vld [vmem:[%s3286] ss:$2 sm:$0xff]
    %s3288 = scalar_lea.vmem [#allocation2], 256
    %v3289 = vld [vmem:[%s3288] ss:$2 sm:$0xff]
    %s3290 = scalar_lea.vmem [#allocation2], 272
    %v3291 = vld [vmem:[%s3290] ss:$2 sm:$0xff]
    %s3292 = scalar_lea.vmem [#allocation2], 288
    %v3293 = vld [vmem:[%s3292] ss:$2 sm:$0xff]
    %s3294 = scalar_lea.vmem [#allocation2], 304
    %v3295 = vld [vmem:[%s3294] ss:$2 sm:$0xff]
    %s3296 = scalar_lea.vmem [#allocation2], 320
    %v3297 = vld [vmem:[%s3296] ss:$2 sm:$0xff]
    %s3298 = scalar_lea.vmem [#allocation2], 336
    %v3299 = vld [vmem:[%s3298] ss:$2 sm:$0xff]
    %s3300 = scalar_lea.vmem [#allocation2], 352
    %v3301 = vld [vmem:[%s3300] ss:$2 sm:$0xff]
    %s3302 = scalar_lea.vmem [#allocation2], 368
    %v3303 = vld [vmem:[%s3302] ss:$2 sm:$0xff]
    %s3304 = scalar_lea.vmem [#allocation2], 384
    %v3305 = vld [vmem:[%s3304] ss:$2 sm:$0xff]
    %s3306 = scalar_lea.vmem [#allocation2], 400
    %v3307 = vld [vmem:[%s3306] ss:$2 sm:$0xff]
    %s3308 = scalar_lea.vmem [#allocation2], 416
    %v3309 = vld [vmem:[%s3308] ss:$2 sm:$0xff]
    %s3310 = scalar_lea.vmem [#allocation2], 432
    %v3311 = vld [vmem:[%s3310] ss:$2 sm:$0xff]
    %s3312 = scalar_lea.vmem [#allocation2], 448
    %v3313 = vld [vmem:[%s3312] ss:$2 sm:$0xff]
    %s3314 = scalar_lea.vmem [#allocation2], 464
    %v3315 = vld [vmem:[%s3314] ss:$2 sm:$0xff]
    %s3316 = scalar_lea.vmem [#allocation2], 480
    %v3317 = vld [vmem:[%s3316] ss:$2 sm:$0xff]
    %s3318 = scalar_lea.vmem [#allocation2], 496
    %v3319 = vld [vmem:[%s3318] ss:$2 sm:$0x3f]
    %s3320 = scalar_lea.vmem [#allocation2], 1
    %v3321 = vld [vmem:[%s3320] ss:$2 sm:$0xff]
    %s3322 = scalar_lea.vmem [#allocation2], 17
    %v3323 = vld [vmem:[%s3322] ss:$2 sm:$0xff]
    %s3324 = scalar_lea.vmem [#allocation2], 33
    %v3325 = vld [vmem:[%s3324] ss:$2 sm:$0xff]
    %s3326 = scalar_lea.vmem [#allocation2], 49
    %v3327 = vld [vmem:[%s3326] ss:$2 sm:$0xff]
    %s3328 = scalar_lea.vmem [#allocation2], 65
    %v3329 = vld [vmem:[%s3328] ss:$2 sm:$0xff]
    %s3330 = scalar_lea.vmem [#allocation2], 81
    %v3331 = vld [vmem:[%s3330] ss:$2 sm:$0xff]
    %s3332 = scalar_lea.vmem [#allocation2], 97
    %v3333 = vld [vmem:[%s3332] ss:$2 sm:$0xff]
    %s3334 = scalar_lea.vmem [#allocation2], 113
    %v3335 = vld [vmem:[%s3334] ss:$2 sm:$0xff]
    %s3336 = scalar_lea.vmem [#allocation2], 129
    %v3337 = vld [vmem:[%s3336] ss:$2 sm:$0xff]
    %s3338 = scalar_lea.vmem [#allocation2], 145
    %v3339 = vld [vmem:[%s3338] ss:$2 sm:$0xff]
    %s3340 = scalar_lea.vmem [#allocation2], 161
    %v3341 = vld [vmem:[%s3340] ss:$2 sm:$0xff]
    %s3342 = scalar_lea.vmem [#allocation2], 177
    %v3343 = vld [vmem:[%s3342] ss:$2 sm:$0xff]
    %s3344 = scalar_lea.vmem [#allocation2], 193
    %v3345 = vld [vmem:[%s3344] ss:$2 sm:$0xff]
    %s3346 = scalar_lea.vmem [#allocation2], 209
    %v3347 = vld [vmem:[%s3346] ss:$2 sm:$0xff]
    %s3348 = scalar_lea.vmem [#allocation2], 225
    %v3349 = vld [vmem:[%s3348] ss:$2 sm:$0xff]
    %s3350 = scalar_lea.vmem [#allocation2], 241
    %v3351 = vld [vmem:[%s3350] ss:$2 sm:$0xff]
    %s3352 = scalar_lea.vmem [#allocation2], 257
    %v3353 = vld [vmem:[%s3352] ss:$2 sm:$0xff]
    %s3354 = scalar_lea.vmem [#allocation2], 273
    %v3355 = vld [vmem:[%s3354] ss:$2 sm:$0xff]
    %s3356 = scalar_lea.vmem [#allocation2], 289
    %v3357 = vld [vmem:[%s3356] ss:$2 sm:$0xff]
    %s3358 = scalar_lea.vmem [#allocation2], 305
    %v3359 = vld [vmem:[%s3358] ss:$2 sm:$0xff]
    %s3360 = scalar_lea.vmem [#allocation2], 321
    %v3361 = vld [vmem:[%s3360] ss:$2 sm:$0xff]
    %s3362 = scalar_lea.vmem [#allocation2], 337
    %v3363 = vld [vmem:[%s3362] ss:$2 sm:$0xff]
    %s3364 = scalar_lea.vmem [#allocation2], 353
    %v3365 = vld [vmem:[%s3364] ss:$2 sm:$0xff]
    %s3366 = scalar_lea.vmem [#allocation2], 369
    %v3367 = vld [vmem:[%s3366] ss:$2 sm:$0xff]
    %s3368 = scalar_lea.vmem [#allocation2], 385
    %v3369 = vld [vmem:[%s3368] ss:$2 sm:$0xff]
    %s3370 = scalar_lea.vmem [#allocation2], 401
    %v3371 = vld [vmem:[%s3370] ss:$2 sm:$0xff]
    %s3372 = scalar_lea.vmem [#allocation2], 417
    %v3373 = vld [vmem:[%s3372] ss:$2 sm:$0xff]
    %s3374 = scalar_lea.vmem [#allocation2], 433
    %v3375 = vld [vmem:[%s3374] ss:$2 sm:$0xff]
    %s3376 = scalar_lea.vmem [#allocation2], 449
    %v3377 = vld [vmem:[%s3376] ss:$2 sm:$0xff]
    %s3378 = scalar_lea.vmem [#allocation2], 465
    %v3379 = vld [vmem:[%s3378] ss:$2 sm:$0xff]
    %s3380 = scalar_lea.vmem [#allocation2], 481
    %v3381 = vld [vmem:[%s3380] ss:$2 sm:$0xff]
    %s3382 = scalar_lea.vmem [#allocation2], 497
    %v3383 = vld [vmem:[%s3382] ss:$2 sm:$0x3f]
    %v3384 = vmax.f32 %v3257, %v3321
    %v3385 = vmax.f32 %v3259, %v3323
    %v3386 = vmax.f32 %v3261, %v3325
    %v3387 = vmax.f32 %v3263, %v3327
    %v3388 = vmax.f32 %v3265, %v3329
    %v3389 = vmax.f32 %v3267, %v3331
    %v3390 = vmax.f32 %v3269, %v3333
    %v3391 = vmax.f32 %v3271, %v3335
    %v3392 = vmax.f32 %v3273, %v3337
    %v3393 = vmax.f32 %v3275, %v3339
    %v3394 = vmax.f32 %v3277, %v3341
    %v3395 = vmax.f32 %v3279, %v3343
    %v3396 = vmax.f32 %v3281, %v3345
    %v3397 = vmax.f32 %v3283, %v3347
    %v3398 = vmax.f32 %v3285, %v3349
    %v3399 = vmax.f32 %v3287, %v3351
    %v3400 = vmax.f32 %v3289, %v3353
    %v3401 = vmax.f32 %v3291, %v3355
    %v3402 = vmax.f32 %v3293, %v3357
    %v3403 = vmax.f32 %v3295, %v3359
    %v3404 = vmax.f32 %v3297, %v3361
    %v3405 = vmax.f32 %v3299, %v3363
    %v3406 = vmax.f32 %v3301, %v3365
    %v3407 = vmax.f32 %v3303, %v3367
    %v3408 = vmax.f32 %v3305, %v3369
    %v3409 = vmax.f32 %v3307, %v3371
    %v3410 = vmax.f32 %v3309, %v3373
    %v3411 = vmax.f32 %v3311, %v3375
    %v3412 = vmax.f32 %v3313, %v3377
    %v3413 = vmax.f32 %v3315, %v3379
    %v3414 = vmax.f32 %v3317, %v3381
    %v3415 = vmax.f32 %v3319, %v3383
    %3416 = vst [vmem:[#allocation3] sm:$0xff] %v3384
    %3417 = vst [vmem:[#allocation3 + $0x8] sm:$0xff] %v3385
    %3418 = vst [vmem:[#allocation3 + $0x10] sm:$0xff] %v3386
    %3419 = vst [vmem:[#allocation3 + $0x18] sm:$0xff] %v3387
    %3420 = vst [vmem:[#allocation3 + $0x20] sm:$0xff] %v3388
    %3421 = vst [vmem:[#allocation3 + $0x28] sm:$0xff] %v3389
    %3422 = vst [vmem:[#allocation3 + $0x30] sm:$0xff] %v3390
    %3423 = vst [vmem:[#allocation3 + $0x38] sm:$0xff] %v3391
    %3424 = vst [vmem:[#allocation3 + $0x40] sm:$0xff] %v3392
    %3425 = vst [vmem:[#allocation3 + $0x48] sm:$0xff] %v3393
    %3426 = vst [vmem:[#allocation3 + $0x50] sm:$0xff] %v3394
    %3427 = vst [vmem:[#allocation3 + $0x58] sm:$0xff] %v3395
    %3428 = vst [vmem:[#allocation3 + $0x60] sm:$0xff] %v3396
    %3429 = vst [vmem:[#allocation3 + $0x68] sm:$0xff] %v3397
    %3430 = vst [vmem:[#allocation3 + $0x70] sm:$0xff] %v3398
    %3431 = vst [vmem:[#allocation3 + $0x78] sm:$0xff] %v3399
    %3432 = vst [vmem:[#allocation3 + $0x80] sm:$0xff] %v3400
    %3433 = vst [vmem:[#allocation3 + $0x88] sm:$0xff] %v3401
    %3434 = vst [vmem:[#allocation3 + $0x90] sm:$0xff] %v3402
    %3435 = vst [vmem:[#allocation3 + $0x98] sm:$0xff] %v3403
    %3436 = vst [vmem:[#allocation3 + $0xa0] sm:$0xff] %v3404
    %3437 = vst [vmem:[#allocation3 + $0xa8] sm:$0xff] %v3405
    %3438 = vst [vmem:[#allocation3 + $0xb0] sm:$0xff] %v3406
    %3439 = vst [vmem:[#allocation3 + $0xb8] sm:$0xff] %v3407
    %3440 = vst [vmem:[#allocation3 + $0xc0] sm:$0xff] %v3408
    %3441 = vst [vmem:[#allocation3 + $0xc8] sm:$0xff] %v3409
    %3442 = vst [vmem:[#allocation3 + $0xd0] sm:$0xff] %v3410
    %3443 = vst [vmem:[#allocation3 + $0xd8] sm:$0xff] %v3411
    %3444 = vst [vmem:[#allocation3 + $0xe0] sm:$0xff] %v3412
    %3445 = vst [vmem:[#allocation3 + $0xe8] sm:$0xff] %v3413
    %3446 = vst [vmem:[#allocation3 + $0xf0] sm:$0xff] %v3414
    %3447 = vst [vmem:[#allocation3 + $0xf8] sm:$0x3f] %v3415
    %v3448 = vld [vmem:[#allocation3] sm:$0xff]
    %v3449 = vld [vmem:[#allocation3 + $0x8] sm:$0xff]
    %v3450 = vld [vmem:[#allocation3 + $0x10] sm:$0xff]
    %v3451 = vld [vmem:[#allocation3 + $0x18] sm:$0xff]
    %v3452 = vld [vmem:[#allocation3 + $0x20] sm:$0xff]
    %v3453 = vld [vmem:[#allocation3 + $0x28] sm:$0xff]
    %v3454 = vld [vmem:[#allocation3 + $0x30] sm:$0xff]
    %v3455 = vld [vmem:[#allocation3 + $0x38] sm:$0xff]
    %v3456 = vld [vmem:[#allocation3 + $0x40] sm:$0xff]
    %v3457 = vld [vmem:[#allocation3 + $0x48] sm:$0xff]
    %v3458 = vld [vmem:[#allocation3 + $0x50] sm:$0xff]
    %v3459 = vld [vmem:[#allocation3 + $0x58] sm:$0xff]
    %v3460 = vld [vmem:[#allocation3 + $0x60] sm:$0xff]
    %v3461 = vld [vmem:[#allocation3 + $0x68] sm:$0xff]
    %v3462 = vld [vmem:[#allocation3 + $0x70] sm:$0xff]
    %v3463 = vld [vmem:[#allocation3 + $0x78] sm:$0xff]
    %v3464 = vld [vmem:[#allocation3 + $0x80] sm:$0xff]
    %v3465 = vld [vmem:[#allocation3 + $0x88] sm:$0xff]
    %v3466 = vld [vmem:[#allocation3 + $0x90] sm:$0xff]
    %v3467 = vld [vmem:[#allocation3 + $0x98] sm:$0xff]
    %v3468 = vld [vmem:[#allocation3 + $0xa0] sm:$0xff]
    %v3469 = vld [vmem:[#allocation3 + $0xa8] sm:$0xff]
    %v3470 = vld [vmem:[#allocation3 + $0xb0] sm:$0xff]
    %v3471 = vld [vmem:[#allocation3 + $0xb8] sm:$0xff]
    %v3472 = vld [vmem:[#allocation3 + $0xc0] sm:$0xff]
    %v3473 = vld [vmem:[#allocation3 + $0xc8] sm:$0xff]
    %v3474 = vld [vmem:[#allocation3 + $0xd0] sm:$0xff]
    %v3475 = vld [vmem:[#allocation3 + $0xd8] sm:$0xff]
    %v3476 = vld [vmem:[#allocation3 + $0xe0] sm:$0xff]
    %v3477 = vld [vmem:[#allocation3 + $0xe8] sm:$0xff]
    %v3478 = vld [vmem:[#allocation3 + $0xf0] sm:$0xff]
    %v3479 = vld [vmem:[#allocation3 + $0xf8] sm:$0x3]
    %v3480 = vld [vmem:[%s3] sm:$0xff]
    %v3481 = vld [vmem:[%s3 + $0x8] sm:$0xff]
    %v3482 = vld [vmem:[%s3 + $0x10] sm:$0xff]
    %v3483 = vld [vmem:[%s3 + $0x18] sm:$0xff]
    %v3484 = vld [vmem:[%s3 + $0x20] sm:$0xff]
    %v3485 = vld [vmem:[%s3 + $0x28] sm:$0xff]
    %v3486 = vld [vmem:[%s3 + $0x30] sm:$0xff]
    %v3487 = vld [vmem:[%s3 + $0x38] sm:$0xff]
    %v3488 = vld [vmem:[%s3 + $0x40] sm:$0xff]
    %v3489 = vld [vmem:[%s3 + $0x48] sm:$0xff]
    %v3490 = vld [vmem:[%s3 + $0x50] sm:$0xff]
    %v3491 = vld [vmem:[%s3 + $0x58] sm:$0xff]
    %v3492 = vld [vmem:[%s3 + $0x60] sm:$0xff]
    %v3493 = vld [vmem:[%s3 + $0x68] sm:$0xff]
    %v3494 = vld [vmem:[%s3 + $0x70] sm:$0xff]
    %v3495 = vld [vmem:[%s3 + $0x78] sm:$0xff]
    %v3496 = vld [vmem:[%s3 + $0x80] sm:$0xff]
    %v3497 = vld [vmem:[%s3 + $0x88] sm:$0xff]
    %v3498 = vld [vmem:[%s3 + $0x90] sm:$0xff]
    %v3499 = vld [vmem:[%s3 + $0x98] sm:$0xff]
    %v3500 = vld [vmem:[%s3 + $0xa0] sm:$0xff]
    %v3501 = vld [vmem:[%s3 + $0xa8] sm:$0xff]
    %v3502 = vld [vmem:[%s3 + $0xb0] sm:$0xff]
    %v3503 = vld [vmem:[%s3 + $0xb8] sm:$0xff]
    %v3504 = vld [vmem:[%s3 + $0xc0] sm:$0xff]
    %v3505 = vld [vmem:[%s3 + $0xc8] sm:$0xff]
    %v3506 = vld [vmem:[%s3 + $0xd0] sm:$0xff]
    %v3507 = vld [vmem:[%s3 + $0xd8] sm:$0xff]
    %v3508 = vld [vmem:[%s3 + $0xe0] sm:$0xff]
    %v3509 = vld [vmem:[%s3 + $0xe8] sm:$0xff]
    %v3510 = vld [vmem:[%s3 + $0xf0] sm:$0xff]
    %v3511 = vld [vmem:[%s3 + $0xf8] sm:$0xff]
    %v3512 = vld [vmem:[#allocation3 + $0x1] sm:$0xff]
    %v3513 = vld [vmem:[#allocation3 + $0x9] sm:$0xff]
    %v3514 = vld [vmem:[#allocation3 + $0x11] sm:$0xff]
    %v3515 = vld [vmem:[#allocation3 + $0x19] sm:$0xff]
    %v3516 = vld [vmem:[#allocation3 + $0x21] sm:$0xff]
    %v3517 = vld [vmem:[#allocation3 + $0x29] sm:$0xff]
    %v3518 = vld [vmem:[#allocation3 + $0x31] sm:$0xff]
    %v3519 = vld [vmem:[#allocation3 + $0x39] sm:$0xff]
    %v3520 = vld [vmem:[#allocation3 + $0x41] sm:$0xff]
    %v3521 = vld [vmem:[#allocation3 + $0x49] sm:$0xff]
    %v3522 = vld [vmem:[#allocation3 + $0x51] sm:$0xff]
    %v3523 = vld [vmem:[#allocation3 + $0x59] sm:$0xff]
    %v3524 = vld [vmem:[#allocation3 + $0x61] sm:$0xff]
    %v3525 = vld [vmem:[#allocation3 + $0x69] sm:$0xff]
    %v3526 = vld [vmem:[#allocation3 + $0x71] sm:$0xff]
    %v3527 = vld [vmem:[#allocation3 + $0x79] sm:$0xff]
    %v3528 = vld [vmem:[#allocation3 + $0x81] sm:$0xff]
    %v3529 = vld [vmem:[#allocation3 + $0x89] sm:$0xff]
    %v3530 = vld [vmem:[#allocation3 + $0x91] sm:$0xff]
    %v3531 = vld [vmem:[#allocation3 + $0x99] sm:$0xff]
    %v3532 = vld [vmem:[#allocation3 + $0xa1] sm:$0xff]
    %v3533 = vld [vmem:[#allocation3 + $0xa9] sm:$0xff]
    %v3534 = vld [vmem:[#allocation3 + $0xb1] sm:$0xff]
    %v3535 = vld [vmem:[#allocation3 + $0xb9] sm:$0xff]
    %v3536 = vld [vmem:[#allocation3 + $0xc1] sm:$0xff]
    %v3537 = vld [vmem:[#allocation3 + $0xc9] sm:$0xff]
    %v3538 = vld [vmem:[#allocation3 + $0xd1] sm:$0xff]
    %v3539 = vld [vmem:[#allocation3 + $0xd9] sm:$0xff]
    %v3540 = vld [vmem:[#allocation3 + $0xe1] sm:$0xff]
    %v3541 = vld [vmem:[#allocation3 + $0xe9] sm:$0xff]
    %v3542 = vld [vmem:[#allocation3 + $0xf1] sm:$0xff]
    %v3543 = vld [vmem:[#allocation3 + $0xf9] sm:$0x3]
    %s3544 = scalar_lea.vmem %s3, 256
    %v3545 = vld [vmem:[%s3544] sm:$0xff]
    %v3546 = vld [vmem:[%s3544 + $0x8] sm:$0xff]
    %v3547 = vld [vmem:[%s3544 + $0x10] sm:$0xff]
    %v3548 = vld [vmem:[%s3544 + $0x18] sm:$0xff]
    %v3549 = vld [vmem:[%s3544 + $0x20] sm:$0xff]
    %v3550 = vld [vmem:[%s3544 + $0x28] sm:$0xff]
    %v3551 = vld [vmem:[%s3544 + $0x30] sm:$0xff]
    %v3552 = vld [vmem:[%s3544 + $0x38] sm:$0xff]
    %v3553 = vld [vmem:[%s3544 + $0x40] sm:$0xff]
    %v3554 = vld [vmem:[%s3544 + $0x48] sm:$0xff]
    %v3555 = vld [vmem:[%s3544 + $0x50] sm:$0xff]
    %v3556 = vld [vmem:[%s3544 + $0x58] sm:$0xff]
    %v3557 = vld [vmem:[%s3544 + $0x60] sm:$0xff]
    %v3558 = vld [vmem:[%s3544 + $0x68] sm:$0xff]
    %v3559 = vld [vmem:[%s3544 + $0x70] sm:$0xff]
    %v3560 = vld [vmem:[%s3544 + $0x78] sm:$0xff]
    %v3561 = vld [vmem:[%s3544 + $0x80] sm:$0xff]
    %v3562 = vld [vmem:[%s3544 + $0x88] sm:$0xff]
    %v3563 = vld [vmem:[%s3544 + $0x90] sm:$0xff]
    %v3564 = vld [vmem:[%s3544 + $0x98] sm:$0xff]
    %v3565 = vld [vmem:[%s3544 + $0xa0] sm:$0xff]
    %v3566 = vld [vmem:[%s3544 + $0xa8] sm:$0xff]
    %v3567 = vld [vmem:[%s3544 + $0xb0] sm:$0xff]
    %v3568 = vld [vmem:[%s3544 + $0xb8] sm:$0xff]
    %v3569 = vld [vmem:[%s3544 + $0xc0] sm:$0xff]
    %v3570 = vld [vmem:[%s3544 + $0xc8] sm:$0xff]
    %v3571 = vld [vmem:[%s3544 + $0xd0] sm:$0xff]
    %v3572 = vld [vmem:[%s3544 + $0xd8] sm:$0xff]
    %v3573 = vld [vmem:[%s3544 + $0xe0] sm:$0xff]
    %v3574 = vld [vmem:[%s3544 + $0xe8] sm:$0xff]
    %v3575 = vld [vmem:[%s3544 + $0xf0] sm:$0xff]
    %v3576 = vld [vmem:[%s3544 + $0xf8] sm:$0xff]
    %3577 = vmatpush.msra.mxu0 %v3575
    %3578 = vmatpush.msra.mxu0 %v3573
    %3579 = vmatpush.msra.mxu0 %v3571
    %3580 = vmatpush.msra.mxu0 %v3569
    %3581 = vmatpush.msra.mxu0 %v3567
    %3582 = vmatpush.msra.mxu0 %v3565
    %3583 = vmatpush.msra.mxu0 %v3563
    %3584 = vmatpush.msra.mxu0 %v3561
    %3585 = vmatpush.msra.mxu0 %v3559
    %3586 = vmatpush.msra.mxu0 %v3557
    %3587 = vmatpush.msra.mxu0 %v3555
    %3588 = vmatpush.msra.mxu0 %v3553
    %3589 = vmatpush.msra.mxu0 %v3551
    %3590 = vmatpush.msra.mxu0 %v3549
    %3591 = vmatpush.msra.mxu0 %v3547
    %3592 = vmatpush.msra.mxu0 %v3545
    %3593 = vmatmul.f32.gmra.mxu0 %v3512
    %v3594 = vpop.f32.mrf.mxu0
    %v3595 = vadd.f32 0.0, %v3594
    %3596 = vmatmul.f32.gmra.mxu0 %v3513
    %v3597 = vpop.f32.mrf.mxu0
    %v3598 = vadd.f32 0.0, %v3597
    %3599 = vmatmul.f32.gmra.mxu0 %v3514
    %v3600 = vpop.f32.mrf.mxu0
    %v3601 = vadd.f32 0.0, %v3600
    %3602 = vmatmul.f32.gmra.mxu0 %v3515
    %v3603 = vpop.f32.mrf.mxu0
    %v3604 = vadd.f32 0.0, %v3603
    %3605 = vmatmul.f32.gmra.mxu0 %v3516
    %v3606 = vpop.f32.mrf.mxu0
    %v3607 = vadd.f32 0.0, %v3606
    %3608 = vmatmul.f32.gmra.mxu0 %v3517
    %v3609 = vpop.f32.mrf.mxu0
    %v3610 = vadd.f32 0.0, %v3609
    %3611 = vmatmul.f32.gmra.mxu0 %v3518
    %v3612 = vpop.f32.mrf.mxu0
    %v3613 = vadd.f32 0.0, %v3612
    %3614 = vmatmul.f32.gmra.mxu0 %v3519
    %v3615 = vpop.f32.mrf.mxu0
    %v3616 = vadd.f32 0.0, %v3615
    %3617 = vmatmul.f32.gmra.mxu0 %v3520
    %v3618 = vpop.f32.mrf.mxu0
    %v3619 = vadd.f32 0.0, %v3618
    %3620 = vmatmul.f32.gmra.mxu0 %v3521
    %v3621 = vpop.f32.mrf.mxu0
    %v3622 = vadd.f32 0.0, %v3621
    %3623 = vmatmul.f32.gmra.mxu0 %v3522
    %v3624 = vpop.f32.mrf.mxu0
    %v3625 = vadd.f32 0.0, %v3624
    %3626 = vmatmul.f32.gmra.mxu0 %v3523
    %v3627 = vpop.f32.mrf.mxu0
    %v3628 = vadd.f32 0.0, %v3627
    %3629 = vmatmul.f32.gmra.mxu0 %v3524
    %v3630 = vpop.f32.mrf.mxu0
    %v3631 = vadd.f32 0.0, %v3630
    %3632 = vmatmul.f32.gmra.mxu0 %v3525
    %v3633 = vpop.f32.mrf.mxu0
    %v3634 = vadd.f32 0.0, %v3633
    %3635 = vmatmul.f32.gmra.mxu0 %v3526
    %v3636 = vpop.f32.mrf.mxu0
    %v3637 = vadd.f32 0.0, %v3636
    %3638 = vmatmul.f32.gmra.mxu0 %v3527
    %v3639 = vpop.f32.mrf.mxu0
    %v3640 = vadd.f32 0.0, %v3639
    %3641 = vmatmul.f32.gmra.mxu0 %v3528
    %v3642 = vpop.f32.mrf.mxu0
    %v3643 = vadd.f32 0.0, %v3642
    %3644 = vmatmul.f32.gmra.mxu0 %v3529
    %v3645 = vpop.f32.mrf.mxu0
    %v3646 = vadd.f32 0.0, %v3645
    %3647 = vmatmul.f32.gmra.mxu0 %v3530
    %v3648 = vpop.f32.mrf.mxu0
    %v3649 = vadd.f32 0.0, %v3648
    %3650 = vmatmul.f32.gmra.mxu0 %v3531
    %v3651 = vpop.f32.mrf.mxu0
    %v3652 = vadd.f32 0.0, %v3651
    %3653 = vmatmul.f32.gmra.mxu0 %v3532
    %v3654 = vpop.f32.mrf.mxu0
    %v3655 = vadd.f32 0.0, %v3654
    %3656 = vmatmul.f32.gmra.mxu0 %v3533
    %v3657 = vpop.f32.mrf.mxu0
    %v3658 = vadd.f32 0.0, %v3657
    %3659 = vmatmul.f32.gmra.mxu0 %v3534
    %v3660 = vpop.f32.mrf.mxu0
    %v3661 = vadd.f32 0.0, %v3660
    %3662 = vmatmul.f32.gmra.mxu0 %v3535
    %v3663 = vpop.f32.mrf.mxu0
    %v3664 = vadd.f32 0.0, %v3663
    %3665 = vmatmul.f32.gmra.mxu0 %v3536
    %v3666 = vpop.f32.mrf.mxu0
    %v3667 = vadd.f32 0.0, %v3666
    %3668 = vmatmul.f32.gmra.mxu0 %v3537
    %v3669 = vpop.f32.mrf.mxu0
    %v3670 = vadd.f32 0.0, %v3669
    %3671 = vmatmul.f32.gmra.mxu0 %v3538
    %v3672 = vpop.f32.mrf.mxu0
    %v3673 = vadd.f32 0.0, %v3672
    %3674 = vmatmul.f32.gmra.mxu0 %v3539
    %v3675 = vpop.f32.mrf.mxu0
    %v3676 = vadd.f32 0.0, %v3675
    %3677 = vmatmul.f32.gmra.mxu0 %v3540
    %v3678 = vpop.f32.mrf.mxu0
    %v3679 = vadd.f32 0.0, %v3678
    %3680 = vmatmul.f32.gmra.mxu0 %v3541
    %v3681 = vpop.f32.mrf.mxu0
    %v3682 = vadd.f32 0.0, %v3681
    %3683 = vmatmul.f32.gmra.mxu0 %v3542
    %v3684 = vpop.f32.mrf.mxu0
    %v3685 = vadd.f32 0.0, %v3684
    %3686 = vmatmul.f32.gmra.mxu0 %v3543
    %v3687 = vpop.f32.mrf.mxu0
    %v3688 = vadd.f32 0.0, %v3687
    %3689 = vdwg.mxu0
    %3690 = vmatpush.msra.mxu0 %v3576
    %3691 = vmatpush.msra.mxu0 %v3574
    %3692 = vmatpush.msra.mxu0 %v3572
    %3693 = vmatpush.msra.mxu0 %v3570
    %3694 = vmatpush.msra.mxu0 %v3568
    %3695 = vmatpush.msra.mxu0 %v3566
    %3696 = vmatpush.msra.mxu0 %v3564
    %3697 = vmatpush.msra.mxu0 %v3562
    %3698 = vmatpush.msra.mxu0 %v3560
    %3699 = vmatpush.msra.mxu0 %v3558
    %3700 = vmatpush.msra.mxu0 %v3556
    %3701 = vmatpush.msra.mxu0 %v3554
    %3702 = vmatpush.msra.mxu0 %v3552
    %3703 = vmatpush.msra.mxu0 %v3550
    %3704 = vmatpush.msra.mxu0 %v3548
    %3705 = vmatpush.msra.mxu0 %v3546
    %3706 = vmatmul.f32.gmra.mxu0 %v3512
    %v3707 = vpop.f32.mrf.mxu0
    %v3708 = vadd.f32 0.0, %v3707
    %3709 = vmatmul.f32.gmra.mxu0 %v3513
    %v3710 = vpop.f32.mrf.mxu0
    %v3711 = vadd.f32 0.0, %v3710
    %3712 = vmatmul.f32.gmra.mxu0 %v3514
    %v3713 = vpop.f32.mrf.mxu0
    %v3714 = vadd.f32 0.0, %v3713
    %3715 = vmatmul.f32.gmra.mxu0 %v3515
    %v3716 = vpop.f32.mrf.mxu0
    %v3717 = vadd.f32 0.0, %v3716
    %3718 = vmatmul.f32.gmra.mxu0 %v3516
    %v3719 = vpop.f32.mrf.mxu0
    %v3720 = vadd.f32 0.0, %v3719
    %3721 = vmatmul.f32.gmra.mxu0 %v3517
    %v3722 = vpop.f32.mrf.mxu0
    %v3723 = vadd.f32 0.0, %v3722
    %3724 = vmatmul.f32.gmra.mxu0 %v3518
    %v3725 = vpop.f32.mrf.mxu0
    %v3726 = vadd.f32 0.0, %v3725
    %3727 = vmatmul.f32.gmra.mxu0 %v3519
    %v3728 = vpop.f32.mrf.mxu0
    %v3729 = vadd.f32 0.0, %v3728
    %3730 = vmatmul.f32.gmra.mxu0 %v3520
    %v3731 = vpop.f32.mrf.mxu0
    %v3732 = vadd.f32 0.0, %v3731
    %3733 = vmatmul.f32.gmra.mxu0 %v3521
    %v3734 = vpop.f32.mrf.mxu0
    %v3735 = vadd.f32 0.0, %v3734
    %3736 = vmatmul.f32.gmra.mxu0 %v3522
    %v3737 = vpop.f32.mrf.mxu0
    %v3738 = vadd.f32 0.0, %v3737
    %3739 = vmatmul.f32.gmra.mxu0 %v3523
    %v3740 = vpop.f32.mrf.mxu0
    %v3741 = vadd.f32 0.0, %v3740
    %3742 = vmatmul.f32.gmra.mxu0 %v3524
    %v3743 = vpop.f32.mrf.mxu0
    %v3744 = vadd.f32 0.0, %v3743
    %3745 = vmatmul.f32.gmra.mxu0 %v3525
    %v3746 = vpop.f32.mrf.mxu0
    %v3747 = vadd.f32 0.0, %v3746
    %3748 = vmatmul.f32.gmra.mxu0 %v3526
    %v3749 = vpop.f32.mrf.mxu0
    %v3750 = vadd.f32 0.0, %v3749
    %3751 = vmatmul.f32.gmra.mxu0 %v3527
    %v3752 = vpop.f32.mrf.mxu0
    %v3753 = vadd.f32 0.0, %v3752
    %3754 = vmatmul.f32.gmra.mxu0 %v3528
    %v3755 = vpop.f32.mrf.mxu0
    %v3756 = vadd.f32 0.0, %v3755
    %3757 = vmatmul.f32.gmra.mxu0 %v3529
    %v3758 = vpop.f32.mrf.mxu0
    %v3759 = vadd.f32 0.0, %v3758
    %3760 = vmatmul.f32.gmra.mxu0 %v3530
    %v3761 = vpop.f32.mrf.mxu0
    %v3762 = vadd.f32 0.0, %v3761
    %3763 = vmatmul.f32.gmra.mxu0 %v3531
    %v3764 = vpop.f32.mrf.mxu0
    %v3765 = vadd.f32 0.0, %v3764
    %3766 = vmatmul.f32.gmra.mxu0 %v3532
    %v3767 = vpop.f32.mrf.mxu0
    %v3768 = vadd.f32 0.0, %v3767
    %3769 = vmatmul.f32.gmra.mxu0 %v3533
    %v3770 = vpop.f32.mrf.mxu0
    %v3771 = vadd.f32 0.0, %v3770
    %3772 = vmatmul.f32.gmra.mxu0 %v3534
    %v3773 = vpop.f32.mrf.mxu0
    %v3774 = vadd.f32 0.0, %v3773
    %3775 = vmatmul.f32.gmra.mxu0 %v3535
    %v3776 = vpop.f32.mrf.mxu0
    %v3777 = vadd.f32 0.0, %v3776
    %3778 = vmatmul.f32.gmra.mxu0 %v3536
    %v3779 = vpop.f32.mrf.mxu0
    %v3780 = vadd.f32 0.0, %v3779
    %3781 = vmatmul.f32.gmra.mxu0 %v3537
    %v3782 = vpop.f32.mrf.mxu0
    %v3783 = vadd.f32 0.0, %v3782
    %3784 = vmatmul.f32.gmra.mxu0 %v3538
    %v3785 = vpop.f32.mrf.mxu0
    %v3786 = vadd.f32 0.0, %v3785
    %3787 = vmatmul.f32.gmra.mxu0 %v3539
    %v3788 = vpop.f32.mrf.mxu0
    %v3789 = vadd.f32 0.0, %v3788
    %3790 = vmatmul.f32.gmra.mxu0 %v3540
    %v3791 = vpop.f32.mrf.mxu0
    %v3792 = vadd.f32 0.0, %v3791
    %3793 = vmatmul.f32.gmra.mxu0 %v3541
    %v3794 = vpop.f32.mrf.mxu0
    %v3795 = vadd.f32 0.0, %v3794
    %3796 = vmatmul.f32.gmra.mxu0 %v3542
    %v3797 = vpop.f32.mrf.mxu0
    %v3798 = vadd.f32 0.0, %v3797
    %3799 = vmatmul.f32.gmra.mxu0 %v3543
    %v3800 = vpop.f32.mrf.mxu0
    %v3801 = vadd.f32 0.0, %v3800
    %3802 = vdwg.mxu0
    %3803 = vmatpush.msra.mxu0 %v3510
    %3804 = vmatpush.msra.mxu0 %v3508
    %3805 = vmatpush.msra.mxu0 %v3506
    %3806 = vmatpush.msra.mxu0 %v3504
    %3807 = vmatpush.msra.mxu0 %v3502
    %3808 = vmatpush.msra.mxu0 %v3500
    %3809 = vmatpush.msra.mxu0 %v3498
    %3810 = vmatpush.msra.mxu0 %v3496
    %3811 = vmatpush.msra.mxu0 %v3494
    %3812 = vmatpush.msra.mxu0 %v3492
    %3813 = vmatpush.msra.mxu0 %v3490
    %3814 = vmatpush.msra.mxu0 %v3488
    %3815 = vmatpush.msra.mxu0 %v3486
    %3816 = vmatpush.msra.mxu0 %v3484
    %3817 = vmatpush.msra.mxu0 %v3482
    %3818 = vmatpush.msra.mxu0 %v3480
    %3819 = vmatmul.f32.gmra.mxu0 %v3448
    %v3820 = vpop.f32.mrf.mxu0
    %v3821 = vadd.f32 %v3595, %v3820
    %3822 = vmatmul.f32.gmra.mxu0 %v3449
    %v3823 = vpop.f32.mrf.mxu0
    %v3824 = vadd.f32 %v3598, %v3823
    %3825 = vmatmul.f32.gmra.mxu0 %v3450
    %v3826 = vpop.f32.mrf.mxu0
    %v3827 = vadd.f32 %v3601, %v3826
    %3828 = vmatmul.f32.gmra.mxu0 %v3451
    %v3829 = vpop.f32.mrf.mxu0
    %v3830 = vadd.f32 %v3604, %v3829
    %3831 = vmatmul.f32.gmra.mxu0 %v3452
    %v3832 = vpop.f32.mrf.mxu0
    %v3833 = vadd.f32 %v3607, %v3832
    %3834 = vmatmul.f32.gmra.mxu0 %v3453
    %v3835 = vpop.f32.mrf.mxu0
    %v3836 = vadd.f32 %v3610, %v3835
    %3837 = vmatmul.f32.gmra.mxu0 %v3454
    %v3838 = vpop.f32.mrf.mxu0
    %v3839 = vadd.f32 %v3613, %v3838
    %3840 = vmatmul.f32.gmra.mxu0 %v3455
    %v3841 = vpop.f32.mrf.mxu0
    %v3842 = vadd.f32 %v3616, %v3841
    %3843 = vmatmul.f32.gmra.mxu0 %v3456
    %v3844 = vpop.f32.mrf.mxu0
    %v3845 = vadd.f32 %v3619, %v3844
    %3846 = vmatmul.f32.gmra.mxu0 %v3457
    %v3847 = vpop.f32.mrf.mxu0
    %v3848 = vadd.f32 %v3622, %v3847
    %3849 = vmatmul.f32.gmra.mxu0 %v3458
    %v3850 = vpop.f32.mrf.mxu0
    %v3851 = vadd.f32 %v3625, %v3850
    %3852 = vmatmul.f32.gmra.mxu0 %v3459
    %v3853 = vpop.f32.mrf.mxu0
    %v3854 = vadd.f32 %v3628, %v3853
    %3855 = vmatmul.f32.gmra.mxu0 %v3460
    %v3856 = vpop.f32.mrf.mxu0
    %v3857 = vadd.f32 %v3631, %v3856
    %3858 = vmatmul.f32.gmra.mxu0 %v3461
    %v3859 = vpop.f32.mrf.mxu0
    %v3860 = vadd.f32 %v3634, %v3859
    %3861 = vmatmul.f32.gmra.mxu0 %v3462
    %v3862 = vpop.f32.mrf.mxu0
    %v3863 = vadd.f32 %v3637, %v3862
    %3864 = vmatmul.f32.gmra.mxu0 %v3463
    %v3865 = vpop.f32.mrf.mxu0
    %v3866 = vadd.f32 %v3640, %v3865
    %3867 = vmatmul.f32.gmra.mxu0 %v3464
    %v3868 = vpop.f32.mrf.mxu0
    %v3869 = vadd.f32 %v3643, %v3868
    %3870 = vmatmul.f32.gmra.mxu0 %v3465
    %v3871 = vpop.f32.mrf.mxu0
    %v3872 = vadd.f32 %v3646, %v3871
    %3873 = vmatmul.f32.gmra.mxu0 %v3466
    %v3874 = vpop.f32.mrf.mxu0
    %v3875 = vadd.f32 %v3649, %v3874
    %3876 = vmatmul.f32.gmra.mxu0 %v3467
    %v3877 = vpop.f32.mrf.mxu0
    %v3878 = vadd.f32 %v3652, %v3877
    %3879 = vmatmul.f32.gmra.mxu0 %v3468
    %v3880 = vpop.f32.mrf.mxu0
    %v3881 = vadd.f32 %v3655, %v3880
    %3882 = vmatmul.f32.gmra.mxu0 %v3469
    %v3883 = vpop.f32.mrf.mxu0
    %v3884 = vadd.f32 %v3658, %v3883
    %3885 = vmatmul.f32.gmra.mxu0 %v3470
    %v3886 = vpop.f32.mrf.mxu0
    %v3887 = vadd.f32 %v3661, %v3886
    %3888 = vmatmul.f32.gmra.mxu0 %v3471
    %v3889 = vpop.f32.mrf.mxu0
    %v3890 = vadd.f32 %v3664, %v3889
    %3891 = vmatmul.f32.gmra.mxu0 %v3472
    %v3892 = vpop.f32.mrf.mxu0
    %v3893 = vadd.f32 %v3667, %v3892
    %3894 = vmatmul.f32.gmra.mxu0 %v3473
    %v3895 = vpop.f32.mrf.mxu0
    %v3896 = vadd.f32 %v3670, %v3895
    %3897 = vmatmul.f32.gmra.mxu0 %v3474
    %v3898 = vpop.f32.mrf.mxu0
    %v3899 = vadd.f32 %v3673, %v3898
    %3900 = vmatmul.f32.gmra.mxu0 %v3475
    %v3901 = vpop.f32.mrf.mxu0
    %v3902 = vadd.f32 %v3676, %v3901
    %3903 = vmatmul.f32.gmra.mxu0 %v3476
    %v3904 = vpop.f32.mrf.mxu0
    %v3905 = vadd.f32 %v3679, %v3904
    %3906 = vmatmul.f32.gmra.mxu0 %v3477
    %v3907 = vpop.f32.mrf.mxu0
    %v3908 = vadd.f32 %v3682, %v3907
    %3909 = vmatmul.f32.gmra.mxu0 %v3478
    %v3910 = vpop.f32.mrf.mxu0
    %v3911 = vadd.f32 %v3685, %v3910
    %3912 = vmatmul.f32.gmra.mxu0 %v3479
    %v3913 = vpop.f32.mrf.mxu0
    %v3914 = vadd.f32 %v3688, %v3913
    %3915 = vdwg.mxu0
    %3916 = vmatpush.msra.mxu0 %v3511
    %3917 = vmatpush.msra.mxu0 %v3509
    %3918 = vmatpush.msra.mxu0 %v3507
    %3919 = vmatpush.msra.mxu0 %v3505
    %3920 = vmatpush.msra.mxu0 %v3503
    %3921 = vmatpush.msra.mxu0 %v3501
    %3922 = vmatpush.msra.mxu0 %v3499
    %3923 = vmatpush.msra.mxu0 %v3497
    %3924 = vmatpush.msra.mxu0 %v3495
    %3925 = vmatpush.msra.mxu0 %v3493
    %3926 = vmatpush.msra.mxu0 %v3491
    %3927 = vmatpush.msra.mxu0 %v3489
    %3928 = vmatpush.msra.mxu0 %v3487
    %3929 = vmatpush.msra.mxu0 %v3485
    %3930 = vmatpush.msra.mxu0 %v3483
    %3931 = vmatpush.msra.mxu0 %v3481
    %3932 = vmatmul.f32.gmra.mxu0 %v3448
    %v3933 = vpop.f32.mrf.mxu0
    %v3934 = vadd.f32 %v3708, %v3933
    %3935 = vmatmul.f32.gmra.mxu0 %v3449
    %v3936 = vpop.f32.mrf.mxu0
    %v3937 = vadd.f32 %v3711, %v3936
    %3938 = vmatmul.f32.gmra.mxu0 %v3450
    %v3939 = vpop.f32.mrf.mxu0
    %v3940 = vadd.f32 %v3714, %v3939
    %3941 = vmatmul.f32.gmra.mxu0 %v3451
    %v3942 = vpop.f32.mrf.mxu0
    %v3943 = vadd.f32 %v3717, %v3942
    %3944 = vmatmul.f32.gmra.mxu0 %v3452
    %v3945 = vpop.f32.mrf.mxu0
    %v3946 = vadd.f32 %v3720, %v3945
    %3947 = vmatmul.f32.gmra.mxu0 %v3453
    %v3948 = vpop.f32.mrf.mxu0
    %v3949 = vadd.f32 %v3723, %v3948
    %3950 = vmatmul.f32.gmra.mxu0 %v3454
    %v3951 = vpop.f32.mrf.mxu0
    %v3952 = vadd.f32 %v3726, %v3951
    %3953 = vmatmul.f32.gmra.mxu0 %v3455
    %v3954 = vpop.f32.mrf.mxu0
    %v3955 = vadd.f32 %v3729, %v3954
    %3956 = vmatmul.f32.gmra.mxu0 %v3456
    %v3957 = vpop.f32.mrf.mxu0
    %v3958 = vadd.f32 %v3732, %v3957
    %3959 = vmatmul.f32.gmra.mxu0 %v3457
    %v3960 = vpop.f32.mrf.mxu0
    %v3961 = vadd.f32 %v3735, %v3960
    %3962 = vmatmul.f32.gmra.mxu0 %v3458
    %v3963 = vpop.f32.mrf.mxu0
    %v3964 = vadd.f32 %v3738, %v3963
    %3965 = vmatmul.f32.gmra.mxu0 %v3459
    %v3966 = vpop.f32.mrf.mxu0
    %v3967 = vadd.f32 %v3741, %v3966
    %3968 = vmatmul.f32.gmra.mxu0 %v3460
    %v3969 = vpop.f32.mrf.mxu0
    %v3970 = vadd.f32 %v3744, %v3969
    %3971 = vmatmul.f32.gmra.mxu0 %v3461
    %v3972 = vpop.f32.mrf.mxu0
    %v3973 = vadd.f32 %v3747, %v3972
    %3974 = vmatmul.f32.gmra.mxu0 %v3462
    %v3975 = vpop.f32.mrf.mxu0
    %v3976 = vadd.f32 %v3750, %v3975
    %3977 = vmatmul.f32.gmra.mxu0 %v3463
    %v3978 = vpop.f32.mrf.mxu0
    %v3979 = vadd.f32 %v3753, %v3978
    %3980 = vmatmul.f32.gmra.mxu0 %v3464
    %v3981 = vpop.f32.mrf.mxu0
    %v3982 = vadd.f32 %v3756, %v3981
    %3983 = vmatmul.f32.gmra.mxu0 %v3465
    %v3984 = vpop.f32.mrf.mxu0
    %v3985 = vadd.f32 %v3759, %v3984
    %3986 = vmatmul.f32.gmra.mxu0 %v3466
    %v3987 = vpop.f32.mrf.mxu0
    %v3988 = vadd.f32 %v3762, %v3987
    %3989 = vmatmul.f32.gmra.mxu0 %v3467
    %v3990 = vpop.f32.mrf.mxu0
    %v3991 = vadd.f32 %v3765, %v3990
    %3992 = vmatmul.f32.gmra.mxu0 %v3468
    %v3993 = vpop.f32.mrf.mxu0
    %v3994 = vadd.f32 %v3768, %v3993
    %3995 = vmatmul.f32.gmra.mxu0 %v3469
    %v3996 = vpop.f32.mrf.mxu0
    %v3997 = vadd.f32 %v3771, %v3996
    %3998 = vmatmul.f32.gmra.mxu0 %v3470
    %v3999 = vpop.f32.mrf.mxu0
    %v4000 = vadd.f32 %v3774, %v3999
    %4001 = vmatmul.f32.gmra.mxu0 %v3471
    %v4002 = vpop.f32.mrf.mxu0
    %v4003 = vadd.f32 %v3777, %v4002
    %4004 = vmatmul.f32.gmra.mxu0 %v3472
    %v4005 = vpop.f32.mrf.mxu0
    %v4006 = vadd.f32 %v3780, %v4005
    %4007 = vmatmul.f32.gmra.mxu0 %v3473
    %v4008 = vpop.f32.mrf.mxu0
    %v4009 = vadd.f32 %v3783, %v4008
    %4010 = vmatmul.f32.gmra.mxu0 %v3474
    %v4011 = vpop.f32.mrf.mxu0
    %v4012 = vadd.f32 %v3786, %v4011
    %4013 = vmatmul.f32.gmra.mxu0 %v3475
    %v4014 = vpop.f32.mrf.mxu0
    %v4015 = vadd.f32 %v3789, %v4014
    %4016 = vmatmul.f32.gmra.mxu0 %v3476
    %v4017 = vpop.f32.mrf.mxu0
    %v4018 = vadd.f32 %v3792, %v4017
    %4019 = vmatmul.f32.gmra.mxu0 %v3477
    %v4020 = vpop.f32.mrf.mxu0
    %v4021 = vadd.f32 %v3795, %v4020
    %4022 = vmatmul.f32.gmra.mxu0 %v3478
    %v4023 = vpop.f32.mrf.mxu0
    %v4024 = vadd.f32 %v3798, %v4023
    %4025 = vmatmul.f32.gmra.mxu0 %v3479
    %v4026 = vpop.f32.mrf.mxu0
    %v4027 = vadd.f32 %v3801, %v4026
    %4028 = vdwg.mxu0
    %v4029 = vld [vmem:[#allocation3 + $0x2] sm:$0xff]
    %v4030 = vld [vmem:[#allocation3 + $0xa] sm:$0xff]
    %v4031 = vld [vmem:[#allocation3 + $0x12] sm:$0xff]
    %v4032 = vld [vmem:[#allocation3 + $0x1a] sm:$0xff]
    %v4033 = vld [vmem:[#allocation3 + $0x22] sm:$0xff]
    %v4034 = vld [vmem:[#allocation3 + $0x2a] sm:$0xff]
    %v4035 = vld [vmem:[#allocation3 + $0x32] sm:$0xff]
    %v4036 = vld [vmem:[#allocation3 + $0x3a] sm:$0xff]
    %v4037 = vld [vmem:[#allocation3 + $0x42] sm:$0xff]
    %v4038 = vld [vmem:[#allocation3 + $0x4a] sm:$0xff]
    %v4039 = vld [vmem:[#allocation3 + $0x52] sm:$0xff]
    %v4040 = vld [vmem:[#allocation3 + $0x5a] sm:$0xff]
    %v4041 = vld [vmem:[#allocation3 + $0x62] sm:$0xff]
    %v4042 = vld [vmem:[#allocation3 + $0x6a] sm:$0xff]
    %v4043 = vld [vmem:[#allocation3 + $0x72] sm:$0xff]
    %v4044 = vld [vmem:[#allocation3 + $0x7a] sm:$0xff]
    %v4045 = vld [vmem:[#allocation3 + $0x82] sm:$0xff]
    %v4046 = vld [vmem:[#allocation3 + $0x8a] sm:$0xff]
    %v4047 = vld [vmem:[#allocation3 + $0x92] sm:$0xff]
    %v4048 = vld [vmem:[#allocation3 + $0x9a] sm:$0xff]
    %v4049 = vld [vmem:[#allocation3 + $0xa2] sm:$0xff]
    %v4050 = vld [vmem:[#allocation3 + $0xaa] sm:$0xff]
    %v4051 = vld [vmem:[#allocation3 + $0xb2] sm:$0xff]
    %v4052 = vld [vmem:[#allocation3 + $0xba] sm:$0xff]
    %v4053 = vld [vmem:[#allocation3 + $0xc2] sm:$0xff]
    %v4054 = vld [vmem:[#allocation3 + $0xca] sm:$0xff]
    %v4055 = vld [vmem:[#allocation3 + $0xd2] sm:$0xff]
    %v4056 = vld [vmem:[#allocation3 + $0xda] sm:$0xff]
    %v4057 = vld [vmem:[#allocation3 + $0xe2] sm:$0xff]
    %v4058 = vld [vmem:[#allocation3 + $0xea] sm:$0xff]
    %v4059 = vld [vmem:[#allocation3 + $0xf2] sm:$0xff]
    %v4060 = vld [vmem:[#allocation3 + $0xfa] sm:$0x3]
    %s4061 = scalar_lea.vmem %s3, 512
    %v4062 = vld [vmem:[%s4061] sm:$0xff]
    %v4063 = vld [vmem:[%s4061 + $0x8] sm:$0xff]
    %v4064 = vld [vmem:[%s4061 + $0x10] sm:$0xff]
    %v4065 = vld [vmem:[%s4061 + $0x18] sm:$0xff]
    %v4066 = vld [vmem:[%s4061 + $0x20] sm:$0xff]
    %v4067 = vld [vmem:[%s4061 + $0x28] sm:$0xff]
    %v4068 = vld [vmem:[%s4061 + $0x30] sm:$0xff]
    %v4069 = vld [vmem:[%s4061 + $0x38] sm:$0xff]
    %v4070 = vld [vmem:[%s4061 + $0x40] sm:$0xff]
    %v4071 = vld [vmem:[%s4061 + $0x48] sm:$0xff]
    %v4072 = vld [vmem:[%s4061 + $0x50] sm:$0xff]
    %v4073 = vld [vmem:[%s4061 + $0x58] sm:$0xff]
    %v4074 = vld [vmem:[%s4061 + $0x60] sm:$0xff]
    %v4075 = vld [vmem:[%s4061 + $0x68] sm:$0xff]
    %v4076 = vld [vmem:[%s4061 + $0x70] sm:$0xff]
    %v4077 = vld [vmem:[%s4061 + $0x78] sm:$0xff]
    %v4078 = vld [vmem:[%s4061 + $0x80] sm:$0xff]
    %v4079 = vld [vmem:[%s4061 + $0x88] sm:$0xff]
    %v4080 = vld [vmem:[%s4061 + $0x90] sm:$0xff]
    %v4081 = vld [vmem:[%s4061 + $0x98] sm:$0xff]
    %v4082 = vld [vmem:[%s4061 + $0xa0] sm:$0xff]
    %v4083 = vld [vmem:[%s4061 + $0xa8] sm:$0xff]
    %v4084 = vld [vmem:[%s4061 + $0xb0] sm:$0xff]
    %v4085 = vld [vmem:[%s4061 + $0xb8] sm:$0xff]
    %v4086 = vld [vmem:[%s4061 + $0xc0] sm:$0xff]
    %v4087 = vld [vmem:[%s4061 + $0xc8] sm:$0xff]
    %v4088 = vld [vmem:[%s4061 + $0xd0] sm:$0xff]
    %v4089 = vld [vmem:[%s4061 + $0xd8] sm:$0xff]
    %v4090 = vld [vmem:[%s4061 + $0xe0] sm:$0xff]
    %v4091 = vld [vmem:[%s4061 + $0xe8] sm:$0xff]
    %v4092 = vld [vmem:[%s4061 + $0xf0] sm:$0xff]
    %v4093 = vld [vmem:[%s4061 + $0xf8] sm:$0xff]
    %4094 = vmatpush.msra.mxu0 %v4092
    %4095 = vmatpush.msra.mxu0 %v4090
    %4096 = vmatpush.msra.mxu0 %v4088
    %4097 = vmatpush.msra.mxu0 %v4086
    %4098 = vmatpush.msra.mxu0 %v4084
    %4099 = vmatpush.msra.mxu0 %v4082
    %4100 = vmatpush.msra.mxu0 %v4080
    %4101 = vmatpush.msra.mxu0 %v4078
    %4102 = vmatpush.msra.mxu0 %v4076
    %4103 = vmatpush.msra.mxu0 %v4074
    %4104 = vmatpush.msra.mxu0 %v4072
    %4105 = vmatpush.msra.mxu0 %v4070
    %4106 = vmatpush.msra.mxu0 %v4068
    %4107 = vmatpush.msra.mxu0 %v4066
    %4108 = vmatpush.msra.mxu0 %v4064
    %4109 = vmatpush.msra.mxu0 %v4062
    %4110 = vmatmul.f32.gmra.mxu0 %v4029
    %v4111 = vpop.f32.mrf.mxu0
    %v4112 = vadd.f32 0.0, %v4111
    %4113 = vmatmul.f32.gmra.mxu0 %v4030
    %v4114 = vpop.f32.mrf.mxu0
    %v4115 = vadd.f32 0.0, %v4114
    %4116 = vmatmul.f32.gmra.mxu0 %v4031
    %v4117 = vpop.f32.mrf.mxu0
    %v4118 = vadd.f32 0.0, %v4117
    %4119 = vmatmul.f32.gmra.mxu0 %v4032
    %v4120 = vpop.f32.mrf.mxu0
    %v4121 = vadd.f32 0.0, %v4120
    %4122 = vmatmul.f32.gmra.mxu0 %v4033
    %v4123 = vpop.f32.mrf.mxu0
    %v4124 = vadd.f32 0.0, %v4123
    %4125 = vmatmul.f32.gmra.mxu0 %v4034
    %v4126 = vpop.f32.mrf.mxu0
    %v4127 = vadd.f32 0.0, %v4126
    %4128 = vmatmul.f32.gmra.mxu0 %v4035
    %v4129 = vpop.f32.mrf.mxu0
    %v4130 = vadd.f32 0.0, %v4129
    %4131 = vmatmul.f32.gmra.mxu0 %v4036
    %v4132 = vpop.f32.mrf.mxu0
    %v4133 = vadd.f32 0.0, %v4132
    %4134 = vmatmul.f32.gmra.mxu0 %v4037
    %v4135 = vpop.f32.mrf.mxu0
    %v4136 = vadd.f32 0.0, %v4135
    %4137 = vmatmul.f32.gmra.mxu0 %v4038
    %v4138 = vpop.f32.mrf.mxu0
    %v4139 = vadd.f32 0.0, %v4138
    %4140 = vmatmul.f32.gmra.mxu0 %v4039
    %v4141 = vpop.f32.mrf.mxu0
    %v4142 = vadd.f32 0.0, %v4141
    %4143 = vmatmul.f32.gmra.mxu0 %v4040
    %v4144 = vpop.f32.mrf.mxu0
    %v4145 = vadd.f32 0.0, %v4144
    %4146 = vmatmul.f32.gmra.mxu0 %v4041
    %v4147 = vpop.f32.mrf.mxu0
    %v4148 = vadd.f32 0.0, %v4147
    %4149 = vmatmul.f32.gmra.mxu0 %v4042
    %v4150 = vpop.f32.mrf.mxu0
    %v4151 = vadd.f32 0.0, %v4150
    %4152 = vmatmul.f32.gmra.mxu0 %v4043
    %v4153 = vpop.f32.mrf.mxu0
    %v4154 = vadd.f32 0.0, %v4153
    %4155 = vmatmul.f32.gmra.mxu0 %v4044
    %v4156 = vpop.f32.mrf.mxu0
    %v4157 = vadd.f32 0.0, %v4156
    %4158 = vmatmul.f32.gmra.mxu0 %v4045
    %v4159 = vpop.f32.mrf.mxu0
    %v4160 = vadd.f32 0.0, %v4159
    %4161 = vmatmul.f32.gmra.mxu0 %v4046
    %v4162 = vpop.f32.mrf.mxu0
    %v4163 = vadd.f32 0.0, %v4162
    %4164 = vmatmul.f32.gmra.mxu0 %v4047
    %v4165 = vpop.f32.mrf.mxu0
    %v4166 = vadd.f32 0.0, %v4165
    %4167 = vmatmul.f32.gmra.mxu0 %v4048
    %v4168 = vpop.f32.mrf.mxu0
    %v4169 = vadd.f32 0.0, %v4168
    %4170 = vmatmul.f32.gmra.mxu0 %v4049
    %v4171 = vpop.f32.mrf.mxu0
    %v4172 = vadd.f32 0.0, %v4171
    %4173 = vmatmul.f32.gmra.mxu0 %v4050
    %v4174 = vpop.f32.mrf.mxu0
    %v4175 = vadd.f32 0.0, %v4174
    %4176 = vmatmul.f32.gmra.mxu0 %v4051
    %v4177 = vpop.f32.mrf.mxu0
    %v4178 = vadd.f32 0.0, %v4177
    %4179 = vmatmul.f32.gmra.mxu0 %v4052
    %v4180 = vpop.f32.mrf.mxu0
    %v4181 = vadd.f32 0.0, %v4180
    %4182 = vmatmul.f32.gmra.mxu0 %v4053
    %v4183 = vpop.f32.mrf.mxu0
    %v4184 = vadd.f32 0.0, %v4183
    %4185 = vmatmul.f32.gmra.mxu0 %v4054
    %v4186 = vpop.f32.mrf.mxu0
    %v4187 = vadd.f32 0.0, %v4186
    %4188 = vmatmul.f32.gmra.mxu0 %v4055
    %v4189 = vpop.f32.mrf.mxu0
    %v4190 = vadd.f32 0.0, %v4189
    %4191 = vmatmul.f32.gmra.mxu0 %v4056
    %v4192 = vpop.f32.mrf.mxu0
    %v4193 = vadd.f32 0.0, %v4192
    %4194 = vmatmul.f32.gmra.mxu0 %v4057
    %v4195 = vpop.f32.mrf.mxu0
    %v4196 = vadd.f32 0.0, %v4195
    %4197 = vmatmul.f32.gmra.mxu0 %v4058
    %v4198 = vpop.f32.mrf.mxu0
    %v4199 = vadd.f32 0.0, %v4198
    %4200 = vmatmul.f32.gmra.mxu0 %v4059
    %v4201 = vpop.f32.mrf.mxu0
    %v4202 = vadd.f32 0.0, %v4201
    %4203 = vmatmul.f32.gmra.mxu0 %v4060
    %v4204 = vpop.f32.mrf.mxu0
    %v4205 = vadd.f32 0.0, %v4204
    %4206 = vdwg.mxu0
    %4207 = vmatpush.msra.mxu0 %v4093
    %4208 = vmatpush.msra.mxu0 %v4091
    %4209 = vmatpush.msra.mxu0 %v4089
    %4210 = vmatpush.msra.mxu0 %v4087
    %4211 = vmatpush.msra.mxu0 %v4085
    %4212 = vmatpush.msra.mxu0 %v4083
    %4213 = vmatpush.msra.mxu0 %v4081
    %4214 = vmatpush.msra.mxu0 %v4079
    %4215 = vmatpush.msra.mxu0 %v4077
    %4216 = vmatpush.msra.mxu0 %v4075
    %4217 = vmatpush.msra.mxu0 %v4073
    %4218 = vmatpush.msra.mxu0 %v4071
    %4219 = vmatpush.msra.mxu0 %v4069
    %4220 = vmatpush.msra.mxu0 %v4067
    %4221 = vmatpush.msra.mxu0 %v4065
    %4222 = vmatpush.msra.mxu0 %v4063
    %4223 = vmatmul.f32.gmra.mxu0 %v4029
    %v4224 = vpop.f32.mrf.mxu0
    %v4225 = vadd.f32 0.0, %v4224
    %4226 = vmatmul.f32.gmra.mxu0 %v4030
    %v4227 = vpop.f32.mrf.mxu0
    %v4228 = vadd.f32 0.0, %v4227
    %4229 = vmatmul.f32.gmra.mxu0 %v4031
    %v4230 = vpop.f32.mrf.mxu0
    %v4231 = vadd.f32 0.0, %v4230
    %4232 = vmatmul.f32.gmra.mxu0 %v4032
    %v4233 = vpop.f32.mrf.mxu0
    %v4234 = vadd.f32 0.0, %v4233
    %4235 = vmatmul.f32.gmra.mxu0 %v4033
    %v4236 = vpop.f32.mrf.mxu0
    %v4237 = vadd.f32 0.0, %v4236
    %4238 = vmatmul.f32.gmra.mxu0 %v4034
    %v4239 = vpop.f32.mrf.mxu0
    %v4240 = vadd.f32 0.0, %v4239
    %4241 = vmatmul.f32.gmra.mxu0 %v4035
    %v4242 = vpop.f32.mrf.mxu0
    %v4243 = vadd.f32 0.0, %v4242
    %4244 = vmatmul.f32.gmra.mxu0 %v4036
    %v4245 = vpop.f32.mrf.mxu0
    %v4246 = vadd.f32 0.0, %v4245
    %4247 = vmatmul.f32.gmra.mxu0 %v4037
    %v4248 = vpop.f32.mrf.mxu0
    %v4249 = vadd.f32 0.0, %v4248
    %4250 = vmatmul.f32.gmra.mxu0 %v4038
    %v4251 = vpop.f32.mrf.mxu0
    %v4252 = vadd.f32 0.0, %v4251
    %4253 = vmatmul.f32.gmra.mxu0 %v4039
    %v4254 = vpop.f32.mrf.mxu0
    %v4255 = vadd.f32 0.0, %v4254
    %4256 = vmatmul.f32.gmra.mxu0 %v4040
    %v4257 = vpop.f32.mrf.mxu0
    %v4258 = vadd.f32 0.0, %v4257
    %4259 = vmatmul.f32.gmra.mxu0 %v4041
    %v4260 = vpop.f32.mrf.mxu0
    %v4261 = vadd.f32 0.0, %v4260
    %4262 = vmatmul.f32.gmra.mxu0 %v4042
    %v4263 = vpop.f32.mrf.mxu0
    %v4264 = vadd.f32 0.0, %v4263
    %4265 = vmatmul.f32.gmra.mxu0 %v4043
    %v4266 = vpop.f32.mrf.mxu0
    %v4267 = vadd.f32 0.0, %v4266
    %4268 = vmatmul.f32.gmra.mxu0 %v4044
    %v4269 = vpop.f32.mrf.mxu0
    %v4270 = vadd.f32 0.0, %v4269
    %4271 = vmatmul.f32.gmra.mxu0 %v4045
    %v4272 = vpop.f32.mrf.mxu0
    %v4273 = vadd.f32 0.0, %v4272
    %4274 = vmatmul.f32.gmra.mxu0 %v4046
    %v4275 = vpop.f32.mrf.mxu0
    %v4276 = vadd.f32 0.0, %v4275
    %4277 = vmatmul.f32.gmra.mxu0 %v4047
    %v4278 = vpop.f32.mrf.mxu0
    %v4279 = vadd.f32 0.0, %v4278
    %4280 = vmatmul.f32.gmra.mxu0 %v4048
    %v4281 = vpop.f32.mrf.mxu0
    %v4282 = vadd.f32 0.0, %v4281
    %4283 = vmatmul.f32.gmra.mxu0 %v4049
    %v4284 = vpop.f32.mrf.mxu0
    %v4285 = vadd.f32 0.0, %v4284
    %4286 = vmatmul.f32.gmra.mxu0 %v4050
    %v4287 = vpop.f32.mrf.mxu0
    %v4288 = vadd.f32 0.0, %v4287
    %4289 = vmatmul.f32.gmra.mxu0 %v4051
    %v4290 = vpop.f32.mrf.mxu0
    %v4291 = vadd.f32 0.0, %v4290
    %4292 = vmatmul.f32.gmra.mxu0 %v4052
    %v4293 = vpop.f32.mrf.mxu0
    %v4294 = vadd.f32 0.0, %v4293
    %4295 = vmatmul.f32.gmra.mxu0 %v4053
    %v4296 = vpop.f32.mrf.mxu0
    %v4297 = vadd.f32 0.0, %v4296
    %4298 = vmatmul.f32.gmra.mxu0 %v4054
    %v4299 = vpop.f32.mrf.mxu0
    %v4300 = vadd.f32 0.0, %v4299
    %4301 = vmatmul.f32.gmra.mxu0 %v4055
    %v4302 = vpop.f32.mrf.mxu0
    %v4303 = vadd.f32 0.0, %v4302
    %4304 = vmatmul.f32.gmra.mxu0 %v4056
    %v4305 = vpop.f32.mrf.mxu0
    %v4306 = vadd.f32 0.0, %v4305
    %4307 = vmatmul.f32.gmra.mxu0 %v4057
    %v4308 = vpop.f32.mrf.mxu0
    %v4309 = vadd.f32 0.0, %v4308
    %4310 = vmatmul.f32.gmra.mxu0 %v4058
    %v4311 = vpop.f32.mrf.mxu0
    %v4312 = vadd.f32 0.0, %v4311
    %4313 = vmatmul.f32.gmra.mxu0 %v4059
    %v4314 = vpop.f32.mrf.mxu0
    %v4315 = vadd.f32 0.0, %v4314
    %4316 = vmatmul.f32.gmra.mxu0 %v4060
    %v4317 = vpop.f32.mrf.mxu0
    %v4318 = vadd.f32 0.0, %v4317
    %4319 = vdwg.mxu0
    %v4320 = vadd.f32 %v3821, %v4112
    %v4321 = vadd.f32 %v3934, %v4225
    %v4322 = vadd.f32 %v3824, %v4115
    %v4323 = vadd.f32 %v3937, %v4228
    %v4324 = vadd.f32 %v3827, %v4118
    %v4325 = vadd.f32 %v3940, %v4231
    %v4326 = vadd.f32 %v3830, %v4121
    %v4327 = vadd.f32 %v3943, %v4234
    %v4328 = vadd.f32 %v3833, %v4124
    %v4329 = vadd.f32 %v3946, %v4237
    %v4330 = vadd.f32 %v3836, %v4127
    %v4331 = vadd.f32 %v3949, %v4240
    %v4332 = vadd.f32 %v3839, %v4130
    %v4333 = vadd.f32 %v3952, %v4243
    %v4334 = vadd.f32 %v3842, %v4133
    %v4335 = vadd.f32 %v3955, %v4246
    %v4336 = vadd.f32 %v3845, %v4136
    %v4337 = vadd.f32 %v3958, %v4249
    %v4338 = vadd.f32 %v3848, %v4139
    %v4339 = vadd.f32 %v3961, %v4252
    %v4340 = vadd.f32 %v3851, %v4142
    %v4341 = vadd.f32 %v3964, %v4255
    %v4342 = vadd.f32 %v3854, %v4145
    %v4343 = vadd.f32 %v3967, %v4258
    %v4344 = vadd.f32 %v3857, %v4148
    %v4345 = vadd.f32 %v3970, %v4261
    %v4346 = vadd.f32 %v3860, %v4151
    %v4347 = vadd.f32 %v3973, %v4264
    %v4348 = vadd.f32 %v3863, %v4154
    %v4349 = vadd.f32 %v3976, %v4267
    %v4350 = vadd.f32 %v3866, %v4157
    %v4351 = vadd.f32 %v3979, %v4270
    %v4352 = vadd.f32 %v3869, %v4160
    %v4353 = vadd.f32 %v3982, %v4273
    %v4354 = vadd.f32 %v3872, %v4163
    %v4355 = vadd.f32 %v3985, %v4276
    %v4356 = vadd.f32 %v3875, %v4166
    %v4357 = vadd.f32 %v3988, %v4279
    %v4358 = vadd.f32 %v3878, %v4169
    %v4359 = vadd.f32 %v3991, %v4282
    %v4360 = vadd.f32 %v3881, %v4172
    %v4361 = vadd.f32 %v3994, %v4285
    %v4362 = vadd.f32 %v3884, %v4175
    %v4363 = vadd.f32 %v3997, %v4288
    %v4364 = vadd.f32 %v3887, %v4178
    %v4365 = vadd.f32 %v4000, %v4291
    %v4366 = vadd.f32 %v3890, %v4181
    %v4367 = vadd.f32 %v4003, %v4294
    %v4368 = vadd.f32 %v3893, %v4184
    %v4369 = vadd.f32 %v4006, %v4297
    %v4370 = vadd.f32 %v3896, %v4187
    %v4371 = vadd.f32 %v4009, %v4300
    %v4372 = vadd.f32 %v3899, %v4190
    %v4373 = vadd.f32 %v4012, %v4303
    %v4374 = vadd.f32 %v3902, %v4193
    %v4375 = vadd.f32 %v4015, %v4306
    %v4376 = vadd.f32 %v3905, %v4196
    %v4377 = vadd.f32 %v4018, %v4309
    %v4378 = vadd.f32 %v3908, %v4199
    %v4379 = vadd.f32 %v4021, %v4312
    %v4380 = vadd.f32 %v3911, %v4202
    %v4381 = vadd.f32 %v4024, %v4315
    %v4382 = vadd.f32 %v3914, %v4205
    %v4383 = vadd.f32 %v4027, %v4318
    %v4384 = vld [vmem:[#allocation3 + $0x3] sm:$0xff]
    %v4385 = vld [vmem:[#allocation3 + $0xb] sm:$0xff]
    %v4386 = vld [vmem:[#allocation3 + $0x13] sm:$0xff]
    %v4387 = vld [vmem:[#allocation3 + $0x1b] sm:$0xff]
    %v4388 = vld [vmem:[#allocation3 + $0x23] sm:$0xff]
    %v4389 = vld [vmem:[#allocation3 + $0x2b] sm:$0xff]
    %v4390 = vld [vmem:[#allocation3 + $0x33] sm:$0xff]
    %v4391 = vld [vmem:[#allocation3 + $0x3b] sm:$0xff]
    %v4392 = vld [vmem:[#allocation3 + $0x43] sm:$0xff]
    %v4393 = vld [vmem:[#allocation3 + $0x4b] sm:$0xff]
    %v4394 = vld [vmem:[#allocation3 + $0x53] sm:$0xff]
    %v4395 = vld [vmem:[#allocation3 + $0x5b] sm:$0xff]
    %v4396 = vld [vmem:[#allocation3 + $0x63] sm:$0xff]
    %v4397 = vld [vmem:[#allocation3 + $0x6b] sm:$0xff]
    %v4398 = vld [vmem:[#allocation3 + $0x73] sm:$0xff]
    %v4399 = vld [vmem:[#allocation3 + $0x7b] sm:$0xff]
    %v4400 = vld [vmem:[#allocation3 + $0x83] sm:$0xff]
    %v4401 = vld [vmem:[#allocation3 + $0x8b] sm:$0xff]
    %v4402 = vld [vmem:[#allocation3 + $0x93] sm:$0xff]
    %v4403 = vld [vmem:[#allocation3 + $0x9b] sm:$0xff]
    %v4404 = vld [vmem:[#allocation3 + $0xa3] sm:$0xff]
    %v4405 = vld [vmem:[#allocation3 + $0xab] sm:$0xff]
    %v4406 = vld [vmem:[#allocation3 + $0xb3] sm:$0xff]
    %v4407 = vld [vmem:[#allocation3 + $0xbb] sm:$0xff]
    %v4408 = vld [vmem:[#allocation3 + $0xc3] sm:$0xff]
    %v4409 = vld [vmem:[#allocation3 + $0xcb] sm:$0xff]
    %v4410 = vld [vmem:[#allocation3 + $0xd3] sm:$0xff]
    %v4411 = vld [vmem:[#allocation3 + $0xdb] sm:$0xff]
    %v4412 = vld [vmem:[#allocation3 + $0xe3] sm:$0xff]
    %v4413 = vld [vmem:[#allocation3 + $0xeb] sm:$0xff]
    %v4414 = vld [vmem:[#allocation3 + $0xf3] sm:$0xff]
    %v4415 = vld [vmem:[#allocation3 + $0xfb] sm:$0x3]
    %s4416 = scalar_lea.vmem %s3, 768
    %v4417 = vld [vmem:[%s4416] sm:$0xff]
    %v4418 = vld [vmem:[%s4416 + $0x8] sm:$0xff]
    %v4419 = vld [vmem:[%s4416 + $0x10] sm:$0xff]
    %v4420 = vld [vmem:[%s4416 + $0x18] sm:$0xff]
    %v4421 = vld [vmem:[%s4416 + $0x20] sm:$0xff]
    %v4422 = vld [vmem:[%s4416 + $0x28] sm:$0xff]
    %v4423 = vld [vmem:[%s4416 + $0x30] sm:$0xff]
    %v4424 = vld [vmem:[%s4416 + $0x38] sm:$0xff]
    %v4425 = vld [vmem:[%s4416 + $0x40] sm:$0xff]
    %v4426 = vld [vmem:[%s4416 + $0x48] sm:$0xff]
    %v4427 = vld [vmem:[%s4416 + $0x50] sm:$0xff]
    %v4428 = vld [vmem:[%s4416 + $0x58] sm:$0xff]
    %v4429 = vld [vmem:[%s4416 + $0x60] sm:$0xff]
    %v4430 = vld [vmem:[%s4416 + $0x68] sm:$0xff]
    %v4431 = vld [vmem:[%s4416 + $0x70] sm:$0xff]
    %v4432 = vld [vmem:[%s4416 + $0x78] sm:$0xff]
    %v4433 = vld [vmem:[%s4416 + $0x80] sm:$0xff]
    %v4434 = vld [vmem:[%s4416 + $0x88] sm:$0xff]
    %v4435 = vld [vmem:[%s4416 + $0x90] sm:$0xff]
    %v4436 = vld [vmem:[%s4416 + $0x98] sm:$0xff]
    %v4437 = vld [vmem:[%s4416 + $0xa0] sm:$0xff]
    %v4438 = vld [vmem:[%s4416 + $0xa8] sm:$0xff]
    %v4439 = vld [vmem:[%s4416 + $0xb0] sm:$0xff]
    %v4440 = vld [vmem:[%s4416 + $0xb8] sm:$0xff]
    %v4441 = vld [vmem:[%s4416 + $0xc0] sm:$0xff]
    %v4442 = vld [vmem:[%s4416 + $0xc8] sm:$0xff]
    %v4443 = vld [vmem:[%s4416 + $0xd0] sm:$0xff]
    %v4444 = vld [vmem:[%s4416 + $0xd8] sm:$0xff]
    %v4445 = vld [vmem:[%s4416 + $0xe0] sm:$0xff]
    %v4446 = vld [vmem:[%s4416 + $0xe8] sm:$0xff]
    %v4447 = vld [vmem:[%s4416 + $0xf0] sm:$0xff]
    %v4448 = vld [vmem:[%s4416 + $0xf8] sm:$0xff]
    %4449 = vmatpush.msra.mxu0 %v4447
    %4450 = vmatpush.msra.mxu0 %v4445
    %4451 = vmatpush.msra.mxu0 %v4443
    %4452 = vmatpush.msra.mxu0 %v4441
    %4453 = vmatpush.msra.mxu0 %v4439
    %4454 = vmatpush.msra.mxu0 %v4437
    %4455 = vmatpush.msra.mxu0 %v4435
    %4456 = vmatpush.msra.mxu0 %v4433
    %4457 = vmatpush.msra.mxu0 %v4431
    %4458 = vmatpush.msra.mxu0 %v4429
    %4459 = vmatpush.msra.mxu0 %v4427
    %4460 = vmatpush.msra.mxu0 %v4425
    %4461 = vmatpush.msra.mxu0 %v4423
    %4462 = vmatpush.msra.mxu0 %v4421
    %4463 = vmatpush.msra.mxu0 %v4419
    %4464 = vmatpush.msra.mxu0 %v4417
    %4465 = vmatmul.f32.gmra.mxu0 %v4384
    %v4466 = vpop.f32.mrf.mxu0
    %v4467 = vadd.f32 0.0, %v4466
    %4468 = vmatmul.f32.gmra.mxu0 %v4385
    %v4469 = vpop.f32.mrf.mxu0
    %v4470 = vadd.f32 0.0, %v4469
    %4471 = vmatmul.f32.gmra.mxu0 %v4386
    %v4472 = vpop.f32.mrf.mxu0
    %v4473 = vadd.f32 0.0, %v4472
    %4474 = vmatmul.f32.gmra.mxu0 %v4387
    %v4475 = vpop.f32.mrf.mxu0
    %v4476 = vadd.f32 0.0, %v4475
    %4477 = vmatmul.f32.gmra.mxu0 %v4388
    %v4478 = vpop.f32.mrf.mxu0
    %v4479 = vadd.f32 0.0, %v4478
    %4480 = vmatmul.f32.gmra.mxu0 %v4389
    %v4481 = vpop.f32.mrf.mxu0
    %v4482 = vadd.f32 0.0, %v4481
    %4483 = vmatmul.f32.gmra.mxu0 %v4390
    %v4484 = vpop.f32.mrf.mxu0
    %v4485 = vadd.f32 0.0, %v4484
    %4486 = vmatmul.f32.gmra.mxu0 %v4391
    %v4487 = vpop.f32.mrf.mxu0
    %v4488 = vadd.f32 0.0, %v4487
    %4489 = vmatmul.f32.gmra.mxu0 %v4392
    %v4490 = vpop.f32.mrf.mxu0
    %v4491 = vadd.f32 0.0, %v4490
    %4492 = vmatmul.f32.gmra.mxu0 %v4393
    %v4493 = vpop.f32.mrf.mxu0
    %v4494 = vadd.f32 0.0, %v4493
    %4495 = vmatmul.f32.gmra.mxu0 %v4394
    %v4496 = vpop.f32.mrf.mxu0
    %v4497 = vadd.f32 0.0, %v4496
    %4498 = vmatmul.f32.gmra.mxu0 %v4395
    %v4499 = vpop.f32.mrf.mxu0
    %v4500 = vadd.f32 0.0, %v4499
    %4501 = vmatmul.f32.gmra.mxu0 %v4396
    %v4502 = vpop.f32.mrf.mxu0
    %v4503 = vadd.f32 0.0, %v4502
    %4504 = vmatmul.f32.gmra.mxu0 %v4397
    %v4505 = vpop.f32.mrf.mxu0
    %v4506 = vadd.f32 0.0, %v4505
    %4507 = vmatmul.f32.gmra.mxu0 %v4398
    %v4508 = vpop.f32.mrf.mxu0
    %v4509 = vadd.f32 0.0, %v4508
    %4510 = vmatmul.f32.gmra.mxu0 %v4399
    %v4511 = vpop.f32.mrf.mxu0
    %v4512 = vadd.f32 0.0, %v4511
    %4513 = vmatmul.f32.gmra.mxu0 %v4400
    %v4514 = vpop.f32.mrf.mxu0
    %v4515 = vadd.f32 0.0, %v4514
    %4516 = vmatmul.f32.gmra.mxu0 %v4401
    %v4517 = vpop.f32.mrf.mxu0
    %v4518 = vadd.f32 0.0, %v4517
    %4519 = vmatmul.f32.gmra.mxu0 %v4402
    %v4520 = vpop.f32.mrf.mxu0
    %v4521 = vadd.f32 0.0, %v4520
    %4522 = vmatmul.f32.gmra.mxu0 %v4403
    %v4523 = vpop.f32.mrf.mxu0
    %v4524 = vadd.f32 0.0, %v4523
    %4525 = vmatmul.f32.gmra.mxu0 %v4404
    %v4526 = vpop.f32.mrf.mxu0
    %v4527 = vadd.f32 0.0, %v4526
    %4528 = vmatmul.f32.gmra.mxu0 %v4405
    %v4529 = vpop.f32.mrf.mxu0
    %v4530 = vadd.f32 0.0, %v4529
    %4531 = vmatmul.f32.gmra.mxu0 %v4406
    %v4532 = vpop.f32.mrf.mxu0
    %v4533 = vadd.f32 0.0, %v4532
    %4534 = vmatmul.f32.gmra.mxu0 %v4407
    %v4535 = vpop.f32.mrf.mxu0
    %v4536 = vadd.f32 0.0, %v4535
    %4537 = vmatmul.f32.gmra.mxu0 %v4408
    %v4538 = vpop.f32.mrf.mxu0
    %v4539 = vadd.f32 0.0, %v4538
    %4540 = vmatmul.f32.gmra.mxu0 %v4409
    %v4541 = vpop.f32.mrf.mxu0
    %v4542 = vadd.f32 0.0, %v4541
    %4543 = vmatmul.f32.gmra.mxu0 %v4410
    %v4544 = vpop.f32.mrf.mxu0
    %v4545 = vadd.f32 0.0, %v4544
    %4546 = vmatmul.f32.gmra.mxu0 %v4411
    %v4547 = vpop.f32.mrf.mxu0
    %v4548 = vadd.f32 0.0, %v4547
    %4549 = vmatmul.f32.gmra.mxu0 %v4412
    %v4550 = vpop.f32.mrf.mxu0
    %v4551 = vadd.f32 0.0, %v4550
    %4552 = vmatmul.f32.gmra.mxu0 %v4413
    %v4553 = vpop.f32.mrf.mxu0
    %v4554 = vadd.f32 0.0, %v4553
    %4555 = vmatmul.f32.gmra.mxu0 %v4414
    %v4556 = vpop.f32.mrf.mxu0
    %v4557 = vadd.f32 0.0, %v4556
    %4558 = vmatmul.f32.gmra.mxu0 %v4415
    %v4559 = vpop.f32.mrf.mxu0
    %v4560 = vadd.f32 0.0, %v4559
    %4561 = vdwg.mxu0
    %4562 = vmatpush.msra.mxu0 %v4448
    %4563 = vmatpush.msra.mxu0 %v4446
    %4564 = vmatpush.msra.mxu0 %v4444
    %4565 = vmatpush.msra.mxu0 %v4442
    %4566 = vmatpush.msra.mxu0 %v4440
    %4567 = vmatpush.msra.mxu0 %v4438
    %4568 = vmatpush.msra.mxu0 %v4436
    %4569 = vmatpush.msra.mxu0 %v4434
    %4570 = vmatpush.msra.mxu0 %v4432
    %4571 = vmatpush.msra.mxu0 %v4430
    %4572 = vmatpush.msra.mxu0 %v4428
    %4573 = vmatpush.msra.mxu0 %v4426
    %4574 = vmatpush.msra.mxu0 %v4424
    %4575 = vmatpush.msra.mxu0 %v4422
    %4576 = vmatpush.msra.mxu0 %v4420
    %4577 = vmatpush.msra.mxu0 %v4418
    %4578 = vmatmul.f32.gmra.mxu0 %v4384
    %v4579 = vpop.f32.mrf.mxu0
    %v4580 = vadd.f32 0.0, %v4579
    %4581 = vmatmul.f32.gmra.mxu0 %v4385
    %v4582 = vpop.f32.mrf.mxu0
    %v4583 = vadd.f32 0.0, %v4582
    %4584 = vmatmul.f32.gmra.mxu0 %v4386
    %v4585 = vpop.f32.mrf.mxu0
    %v4586 = vadd.f32 0.0, %v4585
    %4587 = vmatmul.f32.gmra.mxu0 %v4387
    %v4588 = vpop.f32.mrf.mxu0
    %v4589 = vadd.f32 0.0, %v4588
    %4590 = vmatmul.f32.gmra.mxu0 %v4388
    %v4591 = vpop.f32.mrf.mxu0
    %v4592 = vadd.f32 0.0, %v4591
    %4593 = vmatmul.f32.gmra.mxu0 %v4389
    %v4594 = vpop.f32.mrf.mxu0
    %v4595 = vadd.f32 0.0, %v4594
    %4596 = vmatmul.f32.gmra.mxu0 %v4390
    %v4597 = vpop.f32.mrf.mxu0
    %v4598 = vadd.f32 0.0, %v4597
    %4599 = vmatmul.f32.gmra.mxu0 %v4391
    %v4600 = vpop.f32.mrf.mxu0
    %v4601 = vadd.f32 0.0, %v4600
    %4602 = vmatmul.f32.gmra.mxu0 %v4392
    %v4603 = vpop.f32.mrf.mxu0
    %v4604 = vadd.f32 0.0, %v4603
    %4605 = vmatmul.f32.gmra.mxu0 %v4393
    %v4606 = vpop.f32.mrf.mxu0
    %v4607 = vadd.f32 0.0, %v4606
    %4608 = vmatmul.f32.gmra.mxu0 %v4394
    %v4609 = vpop.f32.mrf.mxu0
    %v4610 = vadd.f32 0.0, %v4609
    %4611 = vmatmul.f32.gmra.mxu0 %v4395
    %v4612 = vpop.f32.mrf.mxu0
    %v4613 = vadd.f32 0.0, %v4612
    %4614 = vmatmul.f32.gmra.mxu0 %v4396
    %v4615 = vpop.f32.mrf.mxu0
    %v4616 = vadd.f32 0.0, %v4615
    %4617 = vmatmul.f32.gmra.mxu0 %v4397
    %v4618 = vpop.f32.mrf.mxu0
    %v4619 = vadd.f32 0.0, %v4618
    %4620 = vmatmul.f32.gmra.mxu0 %v4398
    %v4621 = vpop.f32.mrf.mxu0
    %v4622 = vadd.f32 0.0, %v4621
    %4623 = vmatmul.f32.gmra.mxu0 %v4399
    %v4624 = vpop.f32.mrf.mxu0
    %v4625 = vadd.f32 0.0, %v4624
    %4626 = vmatmul.f32.gmra.mxu0 %v4400
    %v4627 = vpop.f32.mrf.mxu0
    %v4628 = vadd.f32 0.0, %v4627
    %4629 = vmatmul.f32.gmra.mxu0 %v4401
    %v4630 = vpop.f32.mrf.mxu0
    %v4631 = vadd.f32 0.0, %v4630
    %4632 = vmatmul.f32.gmra.mxu0 %v4402
    %v4633 = vpop.f32.mrf.mxu0
    %v4634 = vadd.f32 0.0, %v4633
    %4635 = vmatmul.f32.gmra.mxu0 %v4403
    %v4636 = vpop.f32.mrf.mxu0
    %v4637 = vadd.f32 0.0, %v4636
    %4638 = vmatmul.f32.gmra.mxu0 %v4404
    %v4639 = vpop.f32.mrf.mxu0
    %v4640 = vadd.f32 0.0, %v4639
    %4641 = vmatmul.f32.gmra.mxu0 %v4405
    %v4642 = vpop.f32.mrf.mxu0
    %v4643 = vadd.f32 0.0, %v4642
    %4644 = vmatmul.f32.gmra.mxu0 %v4406
    %v4645 = vpop.f32.mrf.mxu0
    %v4646 = vadd.f32 0.0, %v4645
    %4647 = vmatmul.f32.gmra.mxu0 %v4407
    %v4648 = vpop.f32.mrf.mxu0
    %v4649 = vadd.f32 0.0, %v4648
    %4650 = vmatmul.f32.gmra.mxu0 %v4408
    %v4651 = vpop.f32.mrf.mxu0
    %v4652 = vadd.f32 0.0, %v4651
    %4653 = vmatmul.f32.gmra.mxu0 %v4409
    %v4654 = vpop.f32.mrf.mxu0
    %v4655 = vadd.f32 0.0, %v4654
    %4656 = vmatmul.f32.gmra.mxu0 %v4410
    %v4657 = vpop.f32.mrf.mxu0
    %v4658 = vadd.f32 0.0, %v4657
    %4659 = vmatmul.f32.gmra.mxu0 %v4411
    %v4660 = vpop.f32.mrf.mxu0
    %v4661 = vadd.f32 0.0, %v4660
    %4662 = vmatmul.f32.gmra.mxu0 %v4412
    %v4663 = vpop.f32.mrf.mxu0
    %v4664 = vadd.f32 0.0, %v4663
    %4665 = vmatmul.f32.gmra.mxu0 %v4413
    %v4666 = vpop.f32.mrf.mxu0
    %v4667 = vadd.f32 0.0, %v4666
    %4668 = vmatmul.f32.gmra.mxu0 %v4414
    %v4669 = vpop.f32.mrf.mxu0
    %v4670 = vadd.f32 0.0, %v4669
    %4671 = vmatmul.f32.gmra.mxu0 %v4415
    %v4672 = vpop.f32.mrf.mxu0
    %v4673 = vadd.f32 0.0, %v4672
    %4674 = vdwg.mxu0
    %v4675 = vadd.f32 %v4320, %v4467
    %v4676 = vadd.f32 %v4321, %v4580
    %v4677 = vadd.f32 %v4322, %v4470
    %v4678 = vadd.f32 %v4323, %v4583
    %v4679 = vadd.f32 %v4324, %v4473
    %v4680 = vadd.f32 %v4325, %v4586
    %v4681 = vadd.f32 %v4326, %v4476
    %v4682 = vadd.f32 %v4327, %v4589
    %v4683 = vadd.f32 %v4328, %v4479
    %v4684 = vadd.f32 %v4329, %v4592
    %v4685 = vadd.f32 %v4330, %v4482
    %v4686 = vadd.f32 %v4331, %v4595
    %v4687 = vadd.f32 %v4332, %v4485
    %v4688 = vadd.f32 %v4333, %v4598
    %v4689 = vadd.f32 %v4334, %v4488
    %v4690 = vadd.f32 %v4335, %v4601
    %v4691 = vadd.f32 %v4336, %v4491
    %v4692 = vadd.f32 %v4337, %v4604
    %v4693 = vadd.f32 %v4338, %v4494
    %v4694 = vadd.f32 %v4339, %v4607
    %v4695 = vadd.f32 %v4340, %v4497
    %v4696 = vadd.f32 %v4341, %v4610
    %v4697 = vadd.f32 %v4342, %v4500
    %v4698 = vadd.f32 %v4343, %v4613
    %v4699 = vadd.f32 %v4344, %v4503
    %v4700 = vadd.f32 %v4345, %v4616
    %v4701 = vadd.f32 %v4346, %v4506
    %v4702 = vadd.f32 %v4347, %v4619
    %v4703 = vadd.f32 %v4348, %v4509
    %v4704 = vadd.f32 %v4349, %v4622
    %v4705 = vadd.f32 %v4350, %v4512
    %v4706 = vadd.f32 %v4351, %v4625
    %v4707 = vadd.f32 %v4352, %v4515
    %v4708 = vadd.f32 %v4353, %v4628
    %v4709 = vadd.f32 %v4354, %v4518
    %v4710 = vadd.f32 %v4355, %v4631
    %v4711 = vadd.f32 %v4356, %v4521
    %v4712 = vadd.f32 %v4357, %v4634
    %v4713 = vadd.f32 %v4358, %v4524
    %v4714 = vadd.f32 %v4359, %v4637
    %v4715 = vadd.f32 %v4360, %v4527
    %v4716 = vadd.f32 %v4361, %v4640
    %v4717 = vadd.f32 %v4362, %v4530
    %v4718 = vadd.f32 %v4363, %v4643
    %v4719 = vadd.f32 %v4364, %v4533
    %v4720 = vadd.f32 %v4365, %v4646
    %v4721 = vadd.f32 %v4366, %v4536
    %v4722 = vadd.f32 %v4367, %v4649
    %v4723 = vadd.f32 %v4368, %v4539
    %v4724 = vadd.f32 %v4369, %v4652
    %v4725 = vadd.f32 %v4370, %v4542
    %v4726 = vadd.f32 %v4371, %v4655
    %v4727 = vadd.f32 %v4372, %v4545
    %v4728 = vadd.f32 %v4373, %v4658
    %v4729 = vadd.f32 %v4374, %v4548
    %v4730 = vadd.f32 %v4375, %v4661
    %v4731 = vadd.f32 %v4376, %v4551
    %v4732 = vadd.f32 %v4377, %v4664
    %v4733 = vadd.f32 %v4378, %v4554
    %v4734 = vadd.f32 %v4379, %v4667
    %v4735 = vadd.f32 %v4380, %v4557
    %v4736 = vadd.f32 %v4381, %v4670
    %v4737 = vadd.f32 %v4382, %v4560
    %v4738 = vadd.f32 %v4383, %v4673
    %v4739 = vld [vmem:[#allocation3 + $0x4] sm:$0xff]
    %v4740 = vld [vmem:[#allocation3 + $0xc] sm:$0xff]
    %v4741 = vld [vmem:[#allocation3 + $0x14] sm:$0xff]
    %v4742 = vld [vmem:[#allocation3 + $0x1c] sm:$0xff]
    %v4743 = vld [vmem:[#allocation3 + $0x24] sm:$0xff]
    %v4744 = vld [vmem:[#allocation3 + $0x2c] sm:$0xff]
    %v4745 = vld [vmem:[#allocation3 + $0x34] sm:$0xff]
    %v4746 = vld [vmem:[#allocation3 + $0x3c] sm:$0xff]
    %v4747 = vld [vmem:[#allocation3 + $0x44] sm:$0xff]
    %v4748 = vld [vmem:[#allocation3 + $0x4c] sm:$0xff]
    %v4749 = vld [vmem:[#allocation3 + $0x54] sm:$0xff]
    %v4750 = vld [vmem:[#allocation3 + $0x5c] sm:$0xff]
    %v4751 = vld [vmem:[#allocation3 + $0x64] sm:$0xff]
    %v4752 = vld [vmem:[#allocation3 + $0x6c] sm:$0xff]
    %v4753 = vld [vmem:[#allocation3 + $0x74] sm:$0xff]
    %v4754 = vld [vmem:[#allocation3 + $0x7c] sm:$0xff]
    %v4755 = vld [vmem:[#allocation3 + $0x84] sm:$0xff]
    %v4756 = vld [vmem:[#allocation3 + $0x8c] sm:$0xff]
    %v4757 = vld [vmem:[#allocation3 + $0x94] sm:$0xff]
    %v4758 = vld [vmem:[#allocation3 + $0x9c] sm:$0xff]
    %v4759 = vld [vmem:[#allocation3 + $0xa4] sm:$0xff]
    %v4760 = vld [vmem:[#allocation3 + $0xac] sm:$0xff]
    %v4761 = vld [vmem:[#allocation3 + $0xb4] sm:$0xff]
    %v4762 = vld [vmem:[#allocation3 + $0xbc] sm:$0xff]
    %v4763 = vld [vmem:[#allocation3 + $0xc4] sm:$0xff]
    %v4764 = vld [vmem:[#allocation3 + $0xcc] sm:$0xff]
    %v4765 = vld [vmem:[#allocation3 + $0xd4] sm:$0xff]
    %v4766 = vld [vmem:[#allocation3 + $0xdc] sm:$0xff]
    %v4767 = vld [vmem:[#allocation3 + $0xe4] sm:$0xff]
    %v4768 = vld [vmem:[#allocation3 + $0xec] sm:$0xff]
    %v4769 = vld [vmem:[#allocation3 + $0xf4] sm:$0xff]
    %v4770 = vld [vmem:[#allocation3 + $0xfc] sm:$0x3]
    %s4771 = scalar_lea.vmem %s3, 1024
    %v4772 = vld [vmem:[%s4771] sm:$0xff]
    %v4773 = vld [vmem:[%s4771 + $0x8] sm:$0xff]
    %v4774 = vld [vmem:[%s4771 + $0x10] sm:$0xff]
    %v4775 = vld [vmem:[%s4771 + $0x18] sm:$0xff]
    %v4776 = vld [vmem:[%s4771 + $0x20] sm:$0xff]
    %v4777 = vld [vmem:[%s4771 + $0x28] sm:$0xff]
    %v4778 = vld [vmem:[%s4771 + $0x30] sm:$0xff]
    %v4779 = vld [vmem:[%s4771 + $0x38] sm:$0xff]
    %v4780 = vld [vmem:[%s4771 + $0x40] sm:$0xff]
    %v4781 = vld [vmem:[%s4771 + $0x48] sm:$0xff]
    %v4782 = vld [vmem:[%s4771 + $0x50] sm:$0xff]
    %v4783 = vld [vmem:[%s4771 + $0x58] sm:$0xff]
    %v4784 = vld [vmem:[%s4771 + $0x60] sm:$0xff]
    %v4785 = vld [vmem:[%s4771 + $0x68] sm:$0xff]
    %v4786 = vld [vmem:[%s4771 + $0x70] sm:$0xff]
    %v4787 = vld [vmem:[%s4771 + $0x78] sm:$0xff]
    %v4788 = vld [vmem:[%s4771 + $0x80] sm:$0xff]
    %v4789 = vld [vmem:[%s4771 + $0x88] sm:$0xff]
    %v4790 = vld [vmem:[%s4771 + $0x90] sm:$0xff]
    %v4791 = vld [vmem:[%s4771 + $0x98] sm:$0xff]
    %v4792 = vld [vmem:[%s4771 + $0xa0] sm:$0xff]
    %v4793 = vld [vmem:[%s4771 + $0xa8] sm:$0xff]
    %v4794 = vld [vmem:[%s4771 + $0xb0] sm:$0xff]
    %v4795 = vld [vmem:[%s4771 + $0xb8] sm:$0xff]
    %v4796 = vld [vmem:[%s4771 + $0xc0] sm:$0xff]
    %v4797 = vld [vmem:[%s4771 + $0xc8] sm:$0xff]
    %v4798 = vld [vmem:[%s4771 + $0xd0] sm:$0xff]
    %v4799 = vld [vmem:[%s4771 + $0xd8] sm:$0xff]
    %v4800 = vld [vmem:[%s4771 + $0xe0] sm:$0xff]
    %v4801 = vld [vmem:[%s4771 + $0xe8] sm:$0xff]
    %v4802 = vld [vmem:[%s4771 + $0xf0] sm:$0xff]
    %v4803 = vld [vmem:[%s4771 + $0xf8] sm:$0xff]
    %4804 = vmatpush.msra.mxu0 %v4802
    %4805 = vmatpush.msra.mxu0 %v4800
    %4806 = vmatpush.msra.mxu0 %v4798
    %4807 = vmatpush.msra.mxu0 %v4796
    %4808 = vmatpush.msra.mxu0 %v4794
    %4809 = vmatpush.msra.mxu0 %v4792
    %4810 = vmatpush.msra.mxu0 %v4790
    %4811 = vmatpush.msra.mxu0 %v4788
    %4812 = vmatpush.msra.mxu0 %v4786
    %4813 = vmatpush.msra.mxu0 %v4784
    %4814 = vmatpush.msra.mxu0 %v4782
    %4815 = vmatpush.msra.mxu0 %v4780
    %4816 = vmatpush.msra.mxu0 %v4778
    %4817 = vmatpush.msra.mxu0 %v4776
    %4818 = vmatpush.msra.mxu0 %v4774
    %4819 = vmatpush.msra.mxu0 %v4772
    %4820 = vmatmul.f32.gmra.mxu0 %v4739
    %v4821 = vpop.f32.mrf.mxu0
    %v4822 = vadd.f32 0.0, %v4821
    %4823 = vmatmul.f32.gmra.mxu0 %v4740
    %v4824 = vpop.f32.mrf.mxu0
    %v4825 = vadd.f32 0.0, %v4824
    %4826 = vmatmul.f32.gmra.mxu0 %v4741
    %v4827 = vpop.f32.mrf.mxu0
    %v4828 = vadd.f32 0.0, %v4827
    %4829 = vmatmul.f32.gmra.mxu0 %v4742
    %v4830 = vpop.f32.mrf.mxu0
    %v4831 = vadd.f32 0.0, %v4830
    %4832 = vmatmul.f32.gmra.mxu0 %v4743
    %v4833 = vpop.f32.mrf.mxu0
    %v4834 = vadd.f32 0.0, %v4833
    %4835 = vmatmul.f32.gmra.mxu0 %v4744
    %v4836 = vpop.f32.mrf.mxu0
    %v4837 = vadd.f32 0.0, %v4836
    %4838 = vmatmul.f32.gmra.mxu0 %v4745
    %v4839 = vpop.f32.mrf.mxu0
    %v4840 = vadd.f32 0.0, %v4839
    %4841 = vmatmul.f32.gmra.mxu0 %v4746
    %v4842 = vpop.f32.mrf.mxu0
    %v4843 = vadd.f32 0.0, %v4842
    %4844 = vmatmul.f32.gmra.mxu0 %v4747
    %v4845 = vpop.f32.mrf.mxu0
    %v4846 = vadd.f32 0.0, %v4845
    %4847 = vmatmul.f32.gmra.mxu0 %v4748
    %v4848 = vpop.f32.mrf.mxu0
    %v4849 = vadd.f32 0.0, %v4848
    %4850 = vmatmul.f32.gmra.mxu0 %v4749
    %v4851 = vpop.f32.mrf.mxu0
    %v4852 = vadd.f32 0.0, %v4851
    %4853 = vmatmul.f32.gmra.mxu0 %v4750
    %v4854 = vpop.f32.mrf.mxu0
    %v4855 = vadd.f32 0.0, %v4854
    %4856 = vmatmul.f32.gmra.mxu0 %v4751
    %v4857 = vpop.f32.mrf.mxu0
    %v4858 = vadd.f32 0.0, %v4857
    %4859 = vmatmul.f32.gmra.mxu0 %v4752
    %v4860 = vpop.f32.mrf.mxu0
    %v4861 = vadd.f32 0.0, %v4860
    %4862 = vmatmul.f32.gmra.mxu0 %v4753
    %v4863 = vpop.f32.mrf.mxu0
    %v4864 = vadd.f32 0.0, %v4863
    %4865 = vmatmul.f32.gmra.mxu0 %v4754
    %v4866 = vpop.f32.mrf.mxu0
    %v4867 = vadd.f32 0.0, %v4866
    %4868 = vmatmul.f32.gmra.mxu0 %v4755
    %v4869 = vpop.f32.mrf.mxu0
    %v4870 = vadd.f32 0.0, %v4869
    %4871 = vmatmul.f32.gmra.mxu0 %v4756
    %v4872 = vpop.f32.mrf.mxu0
    %v4873 = vadd.f32 0.0, %v4872
    %4874 = vmatmul.f32.gmra.mxu0 %v4757
    %v4875 = vpop.f32.mrf.mxu0
    %v4876 = vadd.f32 0.0, %v4875
    %4877 = vmatmul.f32.gmra.mxu0 %v4758
    %v4878 = vpop.f32.mrf.mxu0
    %v4879 = vadd.f32 0.0, %v4878
    %4880 = vmatmul.f32.gmra.mxu0 %v4759
    %v4881 = vpop.f32.mrf.mxu0
    %v4882 = vadd.f32 0.0, %v4881
    %4883 = vmatmul.f32.gmra.mxu0 %v4760
    %v4884 = vpop.f32.mrf.mxu0
    %v4885 = vadd.f32 0.0, %v4884
    %4886 = vmatmul.f32.gmra.mxu0 %v4761
    %v4887 = vpop.f32.mrf.mxu0
    %v4888 = vadd.f32 0.0, %v4887
    %4889 = vmatmul.f32.gmra.mxu0 %v4762
    %v4890 = vpop.f32.mrf.mxu0
    %v4891 = vadd.f32 0.0, %v4890
    %4892 = vmatmul.f32.gmra.mxu0 %v4763
    %v4893 = vpop.f32.mrf.mxu0
    %v4894 = vadd.f32 0.0, %v4893
    %4895 = vmatmul.f32.gmra.mxu0 %v4764
    %v4896 = vpop.f32.mrf.mxu0
    %v4897 = vadd.f32 0.0, %v4896
    %4898 = vmatmul.f32.gmra.mxu0 %v4765
    %v4899 = vpop.f32.mrf.mxu0
    %v4900 = vadd.f32 0.0, %v4899
    %4901 = vmatmul.f32.gmra.mxu0 %v4766
    %v4902 = vpop.f32.mrf.mxu0
    %v4903 = vadd.f32 0.0, %v4902
    %4904 = vmatmul.f32.gmra.mxu0 %v4767
    %v4905 = vpop.f32.mrf.mxu0
    %v4906 = vadd.f32 0.0, %v4905
    %4907 = vmatmul.f32.gmra.mxu0 %v4768
    %v4908 = vpop.f32.mrf.mxu0
    %v4909 = vadd.f32 0.0, %v4908
    %4910 = vmatmul.f32.gmra.mxu0 %v4769
    %v4911 = vpop.f32.mrf.mxu0
    %v4912 = vadd.f32 0.0, %v4911
    %4913 = vmatmul.f32.gmra.mxu0 %v4770
    %v4914 = vpop.f32.mrf.mxu0
    %v4915 = vadd.f32 0.0, %v4914
    %4916 = vdwg.mxu0
    %4917 = vmatpush.msra.mxu0 %v4803
    %4918 = vmatpush.msra.mxu0 %v4801
    %4919 = vmatpush.msra.mxu0 %v4799
    %4920 = vmatpush.msra.mxu0 %v4797
    %4921 = vmatpush.msra.mxu0 %v4795
    %4922 = vmatpush.msra.mxu0 %v4793
    %4923 = vmatpush.msra.mxu0 %v4791
    %4924 = vmatpush.msra.mxu0 %v4789
    %4925 = vmatpush.msra.mxu0 %v4787
    %4926 = vmatpush.msra.mxu0 %v4785
    %4927 = vmatpush.msra.mxu0 %v4783
    %4928 = vmatpush.msra.mxu0 %v4781
    %4929 = vmatpush.msra.mxu0 %v4779
    %4930 = vmatpush.msra.mxu0 %v4777
    %4931 = vmatpush.msra.mxu0 %v4775
    %4932 = vmatpush.msra.mxu0 %v4773
    %4933 = vmatmul.f32.gmra.mxu0 %v4739
    %v4934 = vpop.f32.mrf.mxu0
    %v4935 = vadd.f32 0.0, %v4934
    %4936 = vmatmul.f32.gmra.mxu0 %v4740
    %v4937 = vpop.f32.mrf.mxu0
    %v4938 = vadd.f32 0.0, %v4937
    %4939 = vmatmul.f32.gmra.mxu0 %v4741
    %v4940 = vpop.f32.mrf.mxu0
    %v4941 = vadd.f32 0.0, %v4940
    %4942 = vmatmul.f32.gmra.mxu0 %v4742
    %v4943 = vpop.f32.mrf.mxu0
    %v4944 = vadd.f32 0.0, %v4943
    %4945 = vmatmul.f32.gmra.mxu0 %v4743
    %v4946 = vpop.f32.mrf.mxu0
    %v4947 = vadd.f32 0.0, %v4946
    %4948 = vmatmul.f32.gmra.mxu0 %v4744
    %v4949 = vpop.f32.mrf.mxu0
    %v4950 = vadd.f32 0.0, %v4949
    %4951 = vmatmul.f32.gmra.mxu0 %v4745
    %v4952 = vpop.f32.mrf.mxu0
    %v4953 = vadd.f32 0.0, %v4952
    %4954 = vmatmul.f32.gmra.mxu0 %v4746
    %v4955 = vpop.f32.mrf.mxu0
    %v4956 = vadd.f32 0.0, %v4955
    %4957 = vmatmul.f32.gmra.mxu0 %v4747
    %v4958 = vpop.f32.mrf.mxu0
    %v4959 = vadd.f32 0.0, %v4958
    %4960 = vmatmul.f32.gmra.mxu0 %v4748
    %v4961 = vpop.f32.mrf.mxu0
    %v4962 = vadd.f32 0.0, %v4961
    %4963 = vmatmul.f32.gmra.mxu0 %v4749
    %v4964 = vpop.f32.mrf.mxu0
    %v4965 = vadd.f32 0.0, %v4964
    %4966 = vmatmul.f32.gmra.mxu0 %v4750
    %v4967 = vpop.f32.mrf.mxu0
    %v4968 = vadd.f32 0.0, %v4967
    %4969 = vmatmul.f32.gmra.mxu0 %v4751
    %v4970 = vpop.f32.mrf.mxu0
    %v4971 = vadd.f32 0.0, %v4970
    %4972 = vmatmul.f32.gmra.mxu0 %v4752
    %v4973 = vpop.f32.mrf.mxu0
    %v4974 = vadd.f32 0.0, %v4973
    %4975 = vmatmul.f32.gmra.mxu0 %v4753
    %v4976 = vpop.f32.mrf.mxu0
    %v4977 = vadd.f32 0.0, %v4976
    %4978 = vmatmul.f32.gmra.mxu0 %v4754
    %v4979 = vpop.f32.mrf.mxu0
    %v4980 = vadd.f32 0.0, %v4979
    %4981 = vmatmul.f32.gmra.mxu0 %v4755
    %v4982 = vpop.f32.mrf.mxu0
    %v4983 = vadd.f32 0.0, %v4982
    %4984 = vmatmul.f32.gmra.mxu0 %v4756
    %v4985 = vpop.f32.mrf.mxu0
    %v4986 = vadd.f32 0.0, %v4985
    %4987 = vmatmul.f32.gmra.mxu0 %v4757
    %v4988 = vpop.f32.mrf.mxu0
    %v4989 = vadd.f32 0.0, %v4988
    %4990 = vmatmul.f32.gmra.mxu0 %v4758
    %v4991 = vpop.f32.mrf.mxu0
    %v4992 = vadd.f32 0.0, %v4991
    %4993 = vmatmul.f32.gmra.mxu0 %v4759
    %v4994 = vpop.f32.mrf.mxu0
    %v4995 = vadd.f32 0.0, %v4994
    %4996 = vmatmul.f32.gmra.mxu0 %v4760
    %v4997 = vpop.f32.mrf.mxu0
    %v4998 = vadd.f32 0.0, %v4997
    %4999 = vmatmul.f32.gmra.mxu0 %v4761
    %v5000 = vpop.f32.mrf.mxu0
    %v5001 = vadd.f32 0.0, %v5000
    %5002 = vmatmul.f32.gmra.mxu0 %v4762
    %v5003 = vpop.f32.mrf.mxu0
    %v5004 = vadd.f32 0.0, %v5003
    %5005 = vmatmul.f32.gmra.mxu0 %v4763
    %v5006 = vpop.f32.mrf.mxu0
    %v5007 = vadd.f32 0.0, %v5006
    %5008 = vmatmul.f32.gmra.mxu0 %v4764
    %v5009 = vpop.f32.mrf.mxu0
    %v5010 = vadd.f32 0.0, %v5009
    %5011 = vmatmul.f32.gmra.mxu0 %v4765
    %v5012 = vpop.f32.mrf.mxu0
    %v5013 = vadd.f32 0.0, %v5012
    %5014 = vmatmul.f32.gmra.mxu0 %v4766
    %v5015 = vpop.f32.mrf.mxu0
    %v5016 = vadd.f32 0.0, %v5015
    %5017 = vmatmul.f32.gmra.mxu0 %v4767
    %v5018 = vpop.f32.mrf.mxu0
    %v5019 = vadd.f32 0.0, %v5018
    %5020 = vmatmul.f32.gmra.mxu0 %v4768
    %v5021 = vpop.f32.mrf.mxu0
    %v5022 = vadd.f32 0.0, %v5021
    %5023 = vmatmul.f32.gmra.mxu0 %v4769
    %v5024 = vpop.f32.mrf.mxu0
    %v5025 = vadd.f32 0.0, %v5024
    %5026 = vmatmul.f32.gmra.mxu0 %v4770
    %v5027 = vpop.f32.mrf.mxu0
    %v5028 = vadd.f32 0.0, %v5027
    %5029 = vdwg.mxu0
    %v5030 = vadd.f32 %v4675, %v4822
    %v5031 = vadd.f32 %v4676, %v4935
    %v5032 = vadd.f32 %v4677, %v4825
    %v5033 = vadd.f32 %v4678, %v4938
    %v5034 = vadd.f32 %v4679, %v4828
    %v5035 = vadd.f32 %v4680, %v4941
    %v5036 = vadd.f32 %v4681, %v4831
    %v5037 = vadd.f32 %v4682, %v4944
    %v5038 = vadd.f32 %v4683, %v4834
    %v5039 = vadd.f32 %v4684, %v4947
    %v5040 = vadd.f32 %v4685, %v4837
    %v5041 = vadd.f32 %v4686, %v4950
    %v5042 = vadd.f32 %v4687, %v4840
    %v5043 = vadd.f32 %v4688, %v4953
    %v5044 = vadd.f32 %v4689, %v4843
    %v5045 = vadd.f32 %v4690, %v4956
    %v5046 = vadd.f32 %v4691, %v4846
    %v5047 = vadd.f32 %v4692, %v4959
    %v5048 = vadd.f32 %v4693, %v4849
    %v5049 = vadd.f32 %v4694, %v4962
    %v5050 = vadd.f32 %v4695, %v4852
    %v5051 = vadd.f32 %v4696, %v4965
    %v5052 = vadd.f32 %v4697, %v4855
    %v5053 = vadd.f32 %v4698, %v4968
    %v5054 = vadd.f32 %v4699, %v4858
    %v5055 = vadd.f32 %v4700, %v4971
    %v5056 = vadd.f32 %v4701, %v4861
    %v5057 = vadd.f32 %v4702, %v4974
    %v5058 = vadd.f32 %v4703, %v4864
    %v5059 = vadd.f32 %v4704, %v4977
    %v5060 = vadd.f32 %v4705, %v4867
    %v5061 = vadd.f32 %v4706, %v4980
    %v5062 = vadd.f32 %v4707, %v4870
    %v5063 = vadd.f32 %v4708, %v4983
    %v5064 = vadd.f32 %v4709, %v4873
    %v5065 = vadd.f32 %v4710, %v4986
    %v5066 = vadd.f32 %v4711, %v4876
    %v5067 = vadd.f32 %v4712, %v4989
    %v5068 = vadd.f32 %v4713, %v4879
    %v5069 = vadd.f32 %v4714, %v4992
    %v5070 = vadd.f32 %v4715, %v4882
    %v5071 = vadd.f32 %v4716, %v4995
    %v5072 = vadd.f32 %v4717, %v4885
    %v5073 = vadd.f32 %v4718, %v4998
    %v5074 = vadd.f32 %v4719, %v4888
    %v5075 = vadd.f32 %v4720, %v5001
    %v5076 = vadd.f32 %v4721, %v4891
    %v5077 = vadd.f32 %v4722, %v5004
    %v5078 = vadd.f32 %v4723, %v4894
    %v5079 = vadd.f32 %v4724, %v5007
    %v5080 = vadd.f32 %v4725, %v4897
    %v5081 = vadd.f32 %v4726, %v5010
    %v5082 = vadd.f32 %v4727, %v4900
    %v5083 = vadd.f32 %v4728, %v5013
    %v5084 = vadd.f32 %v4729, %v4903
    %v5085 = vadd.f32 %v4730, %v5016
    %v5086 = vadd.f32 %v4731, %v4906
    %v5087 = vadd.f32 %v4732, %v5019
    %v5088 = vadd.f32 %v4733, %v4909
    %v5089 = vadd.f32 %v4734, %v5022
    %v5090 = vadd.f32 %v4735, %v4912
    %v5091 = vadd.f32 %v4736, %v5025
    %v5092 = vadd.f32 %v4737, %v4915
    %v5093 = vadd.f32 %v4738, %v5028
    %v5094 = vmax.f32 %v5030, %v5031
    %v5095 = vmax.f32 %v5032, %v5033
    %v5096 = vmax.f32 %v5034, %v5035
    %v5097 = vmax.f32 %v5036, %v5037
    %v5098 = vmax.f32 %v5038, %v5039
    %v5099 = vmax.f32 %v5040, %v5041
    %v5100 = vmax.f32 %v5042, %v5043
    %v5101 = vmax.f32 %v5044, %v5045
    %v5102 = vmax.f32 %v5046, %v5047
    %v5103 = vmax.f32 %v5048, %v5049
    %v5104 = vmax.f32 %v5050, %v5051
    %v5105 = vmax.f32 %v5052, %v5053
    %v5106 = vmax.f32 %v5054, %v5055
    %v5107 = vmax.f32 %v5056, %v5057
    %v5108 = vmax.f32 %v5058, %v5059
    %v5109 = vmax.f32 %v5060, %v5061
    %v5110 = vmax.f32 %v5062, %v5063
    %v5111 = vmax.f32 %v5064, %v5065
    %v5112 = vmax.f32 %v5066, %v5067
    %v5113 = vmax.f32 %v5068, %v5069
    %v5114 = vmax.f32 %v5070, %v5071
    %v5115 = vmax.f32 %v5072, %v5073
    %v5116 = vmax.f32 %v5074, %v5075
    %v5117 = vmax.f32 %v5076, %v5077
    %v5118 = vmax.f32 %v5078, %v5079
    %v5119 = vmax.f32 %v5080, %v5081
    %v5120 = vmax.f32 %v5082, %v5083
    %v5121 = vmax.f32 %v5084, %v5085
    %v5122 = vmax.f32 %v5086, %v5087
    %v5123 = vmax.f32 %v5088, %v5089
    %v5124 = vmax.f32 %v5090, %v5091
    %v5125 = vmax.f32 %v5092, %v5093
    %v5126 = vld [vmem:[%s4] sm:$0x1]
    %v5128 = vperm.slane %v5126, 0
    %v5130 = vadd.f32 %v5094, %v5128
    %v5131 = vadd.f32 %v5095, %v5128
    %v5132 = vadd.f32 %v5096, %v5128
    %v5133 = vadd.f32 %v5097, %v5128
    %v5134 = vadd.f32 %v5098, %v5128
    %v5135 = vadd.f32 %v5099, %v5128
    %v5136 = vadd.f32 %v5100, %v5128
    %v5137 = vadd.f32 %v5101, %v5128
    %v5138 = vadd.f32 %v5102, %v5128
    %v5139 = vadd.f32 %v5103, %v5128
    %v5140 = vadd.f32 %v5104, %v5128
    %v5141 = vadd.f32 %v5105, %v5128
    %v5142 = vadd.f32 %v5106, %v5128
    %v5143 = vadd.f32 %v5107, %v5128
    %v5144 = vadd.f32 %v5108, %v5128
    %v5145 = vadd.f32 %v5109, %v5128
    %v5146 = vadd.f32 %v5110, %v5128
    %v5147 = vadd.f32 %v5111, %v5128
    %v5148 = vadd.f32 %v5112, %v5128
    %v5149 = vadd.f32 %v5113, %v5128
    %v5150 = vadd.f32 %v5114, %v5128
    %v5151 = vadd.f32 %v5115, %v5128
    %v5152 = vadd.f32 %v5116, %v5128
    %v5153 = vadd.f32 %v5117, %v5128
    %v5154 = vadd.f32 %v5118, %v5128
    %v5155 = vadd.f32 %v5119, %v5128
    %v5156 = vadd.f32 %v5120, %v5128
    %v5157 = vadd.f32 %v5121, %v5128
    %v5158 = vadd.f32 %v5122, %v5128
    %v5159 = vadd.f32 %v5123, %v5128
    %v5160 = vadd.f32 %v5124, %v5128
    %v5161 = vadd.f32 %v5125, %v5128
    %v5162 = vmax.f32 %v5130, 0.0
    %v5163 = vmax.f32 %v5131, 0.0
    %v5164 = vmax.f32 %v5132, 0.0
    %v5165 = vmax.f32 %v5133, 0.0
    %v5166 = vmax.f32 %v5134, 0.0
    %v5167 = vmax.f32 %v5135, 0.0
    %v5168 = vmax.f32 %v5136, 0.0
    %v5169 = vmax.f32 %v5137, 0.0
    %v5170 = vmax.f32 %v5138, 0.0
    %v5171 = vmax.f32 %v5139, 0.0
    %v5172 = vmax.f32 %v5140, 0.0
    %v5173 = vmax.f32 %v5141, 0.0
    %v5174 = vmax.f32 %v5142, 0.0
    %v5175 = vmax.f32 %v5143, 0.0
    %v5176 = vmax.f32 %v5144, 0.0
    %v5177 = vmax.f32 %v5145, 0.0
    %v5178 = vmax.f32 %v5146, 0.0
    %v5179 = vmax.f32 %v5147, 0.0
    %v5180 = vmax.f32 %v5148, 0.0
    %v5181 = vmax.f32 %v5149, 0.0
    %v5182 = vmax.f32 %v5150, 0.0
    %v5183 = vmax.f32 %v5151, 0.0
    %v5184 = vmax.f32 %v5152, 0.0
    %v5185 = vmax.f32 %v5153, 0.0
    %v5186 = vmax.f32 %v5154, 0.0
    %v5187 = vmax.f32 %v5155, 0.0
    %v5188 = vmax.f32 %v5156, 0.0
    %v5189 = vmax.f32 %v5157, 0.0
    %v5190 = vmax.f32 %v5158, 0.0
    %v5191 = vmax.f32 %v5159, 0.0
    %v5192 = vmax.f32 %v5160, 0.0
    %v5193 = vmax.f32 %v5161, 0.0
    %5194 = vst [vmem:[#allocation4] sm:$0xff] %v5162
    %5195 = vst [vmem:[#allocation4 + $0x8] sm:$0xff] %v5163
    %5196 = vst [vmem:[#allocation4 + $0x10] sm:$0xff] %v5164
    %5197 = vst [vmem:[#allocation4 + $0x18] sm:$0xff] %v5165
    %5198 = vst [vmem:[#allocation4 + $0x20] sm:$0xff] %v5166
    %5199 = vst [vmem:[#allocation4 + $0x28] sm:$0xff] %v5167
    %5200 = vst [vmem:[#allocation4 + $0x30] sm:$0xff] %v5168
    %5201 = vst [vmem:[#allocation4 + $0x38] sm:$0xff] %v5169
    %5202 = vst [vmem:[#allocation4 + $0x40] sm:$0xff] %v5170
    %5203 = vst [vmem:[#allocation4 + $0x48] sm:$0xff] %v5171
    %5204 = vst [vmem:[#allocation4 + $0x50] sm:$0xff] %v5172
    %5205 = vst [vmem:[#allocation4 + $0x58] sm:$0xff] %v5173
    %5206 = vst [vmem:[#allocation4 + $0x60] sm:$0xff] %v5174
    %5207 = vst [vmem:[#allocation4 + $0x68] sm:$0xff] %v5175
    %5208 = vst [vmem:[#allocation4 + $0x70] sm:$0xff] %v5176
    %5209 = vst [vmem:[#allocation4 + $0x78] sm:$0xff] %v5177
    %5210 = vst [vmem:[#allocation4 + $0x80] sm:$0xff] %v5178
    %5211 = vst [vmem:[#allocation4 + $0x88] sm:$0xff] %v5179
    %5212 = vst [vmem:[#allocation4 + $0x90] sm:$0xff] %v5180
    %5213 = vst [vmem:[#allocation4 + $0x98] sm:$0xff] %v5181
    %5214 = vst [vmem:[#allocation4 + $0xa0] sm:$0xff] %v5182
    %5215 = vst [vmem:[#allocation4 + $0xa8] sm:$0xff] %v5183
    %5216 = vst [vmem:[#allocation4 + $0xb0] sm:$0xff] %v5184
    %5217 = vst [vmem:[#allocation4 + $0xb8] sm:$0xff] %v5185
    %5218 = vst [vmem:[#allocation4 + $0xc0] sm:$0xff] %v5186
    %5219 = vst [vmem:[#allocation4 + $0xc8] sm:$0xff] %v5187
    %5220 = vst [vmem:[#allocation4 + $0xd0] sm:$0xff] %v5188
    %5221 = vst [vmem:[#allocation4 + $0xd8] sm:$0xff] %v5189
    %5222 = vst [vmem:[#allocation4 + $0xe0] sm:$0xff] %v5190
    %5223 = vst [vmem:[#allocation4 + $0xe8] sm:$0xff] %v5191
    %5224 = vst [vmem:[#allocation4 + $0xf0] sm:$0xff] %v5192
    %5225 = vst [vmem:[#allocation4 + $0xf8] sm:$0x3] %v5193
    %v5226 = vld [vmem:[#allocation4] ss:$2 sm:$0xff]
    %s5227 = scalar_lea.vmem [#allocation4], 16
    %v5228 = vld [vmem:[%s5227] ss:$2 sm:$0xff]
    %s5229 = scalar_lea.vmem [#allocation4], 32
    %v5230 = vld [vmem:[%s5229] ss:$2 sm:$0xff]
    %s5231 = scalar_lea.vmem [#allocation4], 48
    %v5232 = vld [vmem:[%s5231] ss:$2 sm:$0xff]
    %s5233 = scalar_lea.vmem [#allocation4], 64
    %v5234 = vld [vmem:[%s5233] ss:$2 sm:$0xff]
    %s5235 = scalar_lea.vmem [#allocation4], 80
    %v5236 = vld [vmem:[%s5235] ss:$2 sm:$0xff]
    %s5237 = scalar_lea.vmem [#allocation4], 96
    %v5238 = vld [vmem:[%s5237] ss:$2 sm:$0xff]
    %s5239 = scalar_lea.vmem [#allocation4], 112
    %v5240 = vld [vmem:[%s5239] ss:$2 sm:$0xff]
    %s5241 = scalar_lea.vmem [#allocation4], 128
    %v5242 = vld [vmem:[%s5241] ss:$2 sm:$0xff]
    %s5243 = scalar_lea.vmem [#allocation4], 144
    %v5244 = vld [vmem:[%s5243] ss:$2 sm:$0xff]
    %s5245 = scalar_lea.vmem [#allocation4], 160
    %v5246 = vld [vmem:[%s5245] ss:$2 sm:$0xff]
    %s5247 = scalar_lea.vmem [#allocation4], 176
    %v5248 = vld [vmem:[%s5247] ss:$2 sm:$0xff]
    %s5249 = scalar_lea.vmem [#allocation4], 192
    %v5250 = vld [vmem:[%s5249] ss:$2 sm:$0xff]
    %s5251 = scalar_lea.vmem [#allocation4], 208
    %v5252 = vld [vmem:[%s5251] ss:$2 sm:$0xff]
    %s5253 = scalar_lea.vmem [#allocation4], 224
    %v5254 = vld [vmem:[%s5253] ss:$2 sm:$0xff]
    %s5255 = scalar_lea.vmem [#allocation4], 240
    %v5256 = vld [vmem:[%s5255] ss:$2 sm:$0x1f]
    %s5257 = scalar_lea.vmem [#allocation4], 1
    %v5258 = vld [vmem:[%s5257] ss:$2 sm:$0xff]
    %s5259 = scalar_lea.vmem [#allocation4], 17
    %v5260 = vld [vmem:[%s5259] ss:$2 sm:$0xff]
    %s5261 = scalar_lea.vmem [#allocation4], 33
    %v5262 = vld [vmem:[%s5261] ss:$2 sm:$0xff]
    %s5263 = scalar_lea.vmem [#allocation4], 49
    %v5264 = vld [vmem:[%s5263] ss:$2 sm:$0xff]
    %s5265 = scalar_lea.vmem [#allocation4], 65
    %v5266 = vld [vmem:[%s5265] ss:$2 sm:$0xff]
    %s5267 = scalar_lea.vmem [#allocation4], 81
    %v5268 = vld [vmem:[%s5267] ss:$2 sm:$0xff]
    %s5269 = scalar_lea.vmem [#allocation4], 97
    %v5270 = vld [vmem:[%s5269] ss:$2 sm:$0xff]
    %s5271 = scalar_lea.vmem [#allocation4], 113
    %v5272 = vld [vmem:[%s5271] ss:$2 sm:$0xff]
    %s5273 = scalar_lea.vmem [#allocation4], 129
    %v5274 = vld [vmem:[%s5273] ss:$2 sm:$0xff]
    %s5275 = scalar_lea.vmem [#allocation4], 145
    %v5276 = vld [vmem:[%s5275] ss:$2 sm:$0xff]
    %s5277 = scalar_lea.vmem [#allocation4], 161
    %v5278 = vld [vmem:[%s5277] ss:$2 sm:$0xff]
    %s5279 = scalar_lea.vmem [#allocation4], 177
    %v5280 = vld [vmem:[%s5279] ss:$2 sm:$0xff]
    %s5281 = scalar_lea.vmem [#allocation4], 193
    %v5282 = vld [vmem:[%s5281] ss:$2 sm:$0xff]
    %s5283 = scalar_lea.vmem [#allocation4], 209
    %v5284 = vld [vmem:[%s5283] ss:$2 sm:$0xff]
    %s5285 = scalar_lea.vmem [#allocation4], 225
    %v5286 = vld [vmem:[%s5285] ss:$2 sm:$0xff]
    %s5287 = scalar_lea.vmem [#allocation4], 241
    %v5288 = vld [vmem:[%s5287] ss:$2 sm:$0x1f]
    %v5289 = vmax.f32 %v5226, %v5258
    %v5290 = vmax.f32 %v5228, %v5260
    %v5291 = vmax.f32 %v5230, %v5262
    %v5292 = vmax.f32 %v5232, %v5264
    %v5293 = vmax.f32 %v5234, %v5266
    %v5294 = vmax.f32 %v5236, %v5268
    %v5295 = vmax.f32 %v5238, %v5270
    %v5296 = vmax.f32 %v5240, %v5272
    %v5297 = vmax.f32 %v5242, %v5274
    %v5298 = vmax.f32 %v5244, %v5276
    %v5299 = vmax.f32 %v5246, %v5278
    %v5300 = vmax.f32 %v5248, %v5280
    %v5301 = vmax.f32 %v5250, %v5282
    %v5302 = vmax.f32 %v5252, %v5284
    %v5303 = vmax.f32 %v5254, %v5286
    %v5304 = vmax.f32 %v5256, %v5288
    %5305 = vst [vmem:[#allocation5] sm:$0xff] %v5289
    %5306 = vst [vmem:[#allocation5 + $0x8] sm:$0xff] %v5290
    %5307 = vst [vmem:[#allocation5 + $0x10] sm:$0xff] %v5291
    %5308 = vst [vmem:[#allocation5 + $0x18] sm:$0xff] %v5292
    %5309 = vst [vmem:[#allocation5 + $0x20] sm:$0xff] %v5293
    %5310 = vst [vmem:[#allocation5 + $0x28] sm:$0xff] %v5294
    %5311 = vst [vmem:[#allocation5 + $0x30] sm:$0xff] %v5295
    %5312 = vst [vmem:[#allocation5 + $0x38] sm:$0xff] %v5296
    %5313 = vst [vmem:[#allocation5 + $0x40] sm:$0xff] %v5297
    %5314 = vst [vmem:[#allocation5 + $0x48] sm:$0xff] %v5298
    %5315 = vst [vmem:[#allocation5 + $0x50] sm:$0xff] %v5299
    %5316 = vst [vmem:[#allocation5 + $0x58] sm:$0xff] %v5300
    %5317 = vst [vmem:[#allocation5 + $0x60] sm:$0xff] %v5301
    %5318 = vst [vmem:[#allocation5 + $0x68] sm:$0xff] %v5302
    %5319 = vst [vmem:[#allocation5 + $0x70] sm:$0xff] %v5303
    %5320 = vst [vmem:[#allocation5 + $0x78] sm:$0x1f] %v5304
    %v5321 = vld [vmem:[#allocation5] ss:$8 sm:$0xf]
    %v5322 = vld [vmem:[#allocation5] ss:$8 sm:$0xf0]
    %v5323 = vor.u32 %v5321, %v5322
    %s5324 = scalar_lea.vmem [#allocation5], 64
    %v5325 = vld [vmem:[%s5324] ss:$8 sm:$0xf]
    %v5326 = vld [vmem:[%s5324] ss:$8 sm:$0xf0]
    %v5327 = vor.u32 %v5325, %v5326
    %v5328 = vld [vmem:[%s5] sm:$0xff]
    %v5329 = vld [vmem:[%s5 + $0x8] sm:$0xff]
    %v5330 = vld [vmem:[%s5 + $0x10] sm:$0xff]
    %v5331 = vld [vmem:[%s5 + $0x18] sm:$0xff]
    %v5332 = vld [vmem:[%s5 + $0x20] sm:$0xff]
    %v5333 = vld [vmem:[%s5 + $0x28] sm:$0xff]
    %v5334 = vld [vmem:[%s5 + $0x30] sm:$0xff]
    %v5335 = vld [vmem:[%s5 + $0x38] sm:$0xff]
    %v5336 = vld [vmem:[%s5 + $0x40] sm:$0xff]
    %v5337 = vld [vmem:[%s5 + $0x48] sm:$0xff]
    %v5338 = vld [vmem:[%s5 + $0x50] sm:$0xff]
    %v5339 = vld [vmem:[%s5 + $0x58] sm:$0xff]
    %v5340 = vld [vmem:[%s5 + $0x60] sm:$0xff]
    %v5341 = vld [vmem:[%s5 + $0x68] sm:$0xff]
    %v5342 = vld [vmem:[%s5 + $0x70] sm:$0xff]
    %v5343 = vld [vmem:[%s5 + $0x78] sm:$0xff]
    %s5344 = scalar_lea.vmem [#allocation5], 1
    %v5345 = vld [vmem:[%s5344] ss:$8 sm:$0xf]
    %v5346 = vld [vmem:[%s5344] ss:$8 sm:$0xf0]
    %v5347 = vor.u32 %v5345, %v5346
    %s5348 = scalar_lea.vmem [#allocation5], 65
    %v5349 = vld [vmem:[%s5348] ss:$8 sm:$0xf]
    %v5350 = vld [vmem:[%s5348] ss:$8 sm:$0xf0]
    %v5351 = vor.u32 %v5349, %v5350
    %s5352 = scalar_lea.vmem %s5, 128
    %v5353 = vld [vmem:[%s5352] sm:$0xff]
    %v5354 = vld [vmem:[%s5352 + $0x8] sm:$0xff]
    %v5355 = vld [vmem:[%s5352 + $0x10] sm:$0xff]
    %v5356 = vld [vmem:[%s5352 + $0x18] sm:$0xff]
    %v5357 = vld [vmem:[%s5352 + $0x20] sm:$0xff]
    %v5358 = vld [vmem:[%s5352 + $0x28] sm:$0xff]
    %v5359 = vld [vmem:[%s5352 + $0x30] sm:$0xff]
    %v5360 = vld [vmem:[%s5352 + $0x38] sm:$0xff]
    %v5361 = vld [vmem:[%s5352 + $0x40] sm:$0xff]
    %v5362 = vld [vmem:[%s5352 + $0x48] sm:$0xff]
    %v5363 = vld [vmem:[%s5352 + $0x50] sm:$0xff]
    %v5364 = vld [vmem:[%s5352 + $0x58] sm:$0xff]
    %v5365 = vld [vmem:[%s5352 + $0x60] sm:$0xff]
    %v5366 = vld [vmem:[%s5352 + $0x68] sm:$0xff]
    %v5367 = vld [vmem:[%s5352 + $0x70] sm:$0xff]
    %v5368 = vld [vmem:[%s5352 + $0x78] sm:$0xff]
    %5369 = vmatpush.msra.mxu0 %v5368
    %5370 = vmatpush.msra.mxu0 %v5367
    %5371 = vmatpush.msra.mxu0 %v5366
    %5372 = vmatpush.msra.mxu0 %v5365
    %5373 = vmatpush.msra.mxu0 %v5364
    %5374 = vmatpush.msra.mxu0 %v5363
    %5375 = vmatpush.msra.mxu0 %v5362
    %5376 = vmatpush.msra.mxu0 %v5361
    %5377 = vmatpush.msra.mxu0 %v5360
    %5378 = vmatpush.msra.mxu0 %v5359
    %5379 = vmatpush.msra.mxu0 %v5358
    %5380 = vmatpush.msra.mxu0 %v5357
    %5381 = vmatpush.msra.mxu0 %v5356
    %5382 = vmatpush.msra.mxu0 %v5355
    %5383 = vmatpush.msra.mxu0 %v5354
    %5384 = vmatpush.msra.mxu0 %v5353
    %5385 = vmatmul.f32.gmra.mxu0 %v5347
    %v5386 = vpop.f32.mrf.mxu0
    %v5387 = vadd.f32 0.0, %v5386
    %5388 = vmatmul.f32.gmra.mxu0 %v5351
    %v5389 = vpop.f32.mrf.mxu0
    %v5390 = vadd.f32 0.0, %v5389
    %5391 = vdwg.mxu0
    %5392 = vmatpush.msra.mxu0 %v5343
    %5393 = vmatpush.msra.mxu0 %v5342
    %5394 = vmatpush.msra.mxu0 %v5341
    %5395 = vmatpush.msra.mxu0 %v5340
    %5396 = vmatpush.msra.mxu0 %v5339
    %5397 = vmatpush.msra.mxu0 %v5338
    %5398 = vmatpush.msra.mxu0 %v5337
    %5399 = vmatpush.msra.mxu0 %v5336
    %5400 = vmatpush.msra.mxu0 %v5335
    %5401 = vmatpush.msra.mxu0 %v5334
    %5402 = vmatpush.msra.mxu0 %v5333
    %5403 = vmatpush.msra.mxu0 %v5332
    %5404 = vmatpush.msra.mxu0 %v5331
    %5405 = vmatpush.msra.mxu0 %v5330
    %5406 = vmatpush.msra.mxu0 %v5329
    %5407 = vmatpush.msra.mxu0 %v5328
    %5408 = vmatmul.f32.gmra.mxu0 %v5323
    %v5409 = vpop.f32.mrf.mxu0
    %v5410 = vadd.f32 %v5387, %v5409
    %5411 = vmatmul.f32.gmra.mxu0 %v5327
    %v5412 = vpop.f32.mrf.mxu0
    %v5413 = vadd.f32 %v5390, %v5412
    %5414 = vdwg.mxu0
    %s5415 = scalar_lea.vmem [#allocation5], 2
    %v5416 = vld [vmem:[%s5415] ss:$8 sm:$0xf]
    %v5417 = vld [vmem:[%s5415] ss:$8 sm:$0xf0]
    %v5418 = vor.u32 %v5416, %v5417
    %s5419 = scalar_lea.vmem [#allocation5], 66
    %v5420 = vld [vmem:[%s5419] ss:$8 sm:$0xf]
    %v5421 = vld [vmem:[%s5419] ss:$8 sm:$0xf0]
    %v5422 = vor.u32 %v5420, %v5421
    %s5423 = scalar_lea.vmem %s5, 256
    %v5424 = vld [vmem:[%s5423] sm:$0xff]
    %v5425 = vld [vmem:[%s5423 + $0x8] sm:$0xff]
    %v5426 = vld [vmem:[%s5423 + $0x10] sm:$0xff]
    %v5427 = vld [vmem:[%s5423 + $0x18] sm:$0xff]
    %v5428 = vld [vmem:[%s5423 + $0x20] sm:$0xff]
    %v5429 = vld [vmem:[%s5423 + $0x28] sm:$0xff]
    %v5430 = vld [vmem:[%s5423 + $0x30] sm:$0xff]
    %v5431 = vld [vmem:[%s5423 + $0x38] sm:$0xff]
    %v5432 = vld [vmem:[%s5423 + $0x40] sm:$0xff]
    %v5433 = vld [vmem:[%s5423 + $0x48] sm:$0xff]
    %v5434 = vld [vmem:[%s5423 + $0x50] sm:$0xff]
    %v5435 = vld [vmem:[%s5423 + $0x58] sm:$0xff]
    %v5436 = vld [vmem:[%s5423 + $0x60] sm:$0xff]
    %v5437 = vld [vmem:[%s5423 + $0x68] sm:$0xff]
    %v5438 = vld [vmem:[%s5423 + $0x70] sm:$0xff]
    %v5439 = vld [vmem:[%s5423 + $0x78] sm:$0xff]
    %5440 = vmatpush.msra.mxu0 %v5439
    %5441 = vmatpush.msra.mxu0 %v5438
    %5442 = vmatpush.msra.mxu0 %v5437
    %5443 = vmatpush.msra.mxu0 %v5436
    %5444 = vmatpush.msra.mxu0 %v5435
    %5445 = vmatpush.msra.mxu0 %v5434
    %5446 = vmatpush.msra.mxu0 %v5433
    %5447 = vmatpush.msra.mxu0 %v5432
    %5448 = vmatpush.msra.mxu0 %v5431
    %5449 = vmatpush.msra.mxu0 %v5430
    %5450 = vmatpush.msra.mxu0 %v5429
    %5451 = vmatpush.msra.mxu0 %v5428
    %5452 = vmatpush.msra.mxu0 %v5427
    %5453 = vmatpush.msra.mxu0 %v5426
    %5454 = vmatpush.msra.mxu0 %v5425
    %5455 = vmatpush.msra.mxu0 %v5424
    %5456 = vmatmul.f32.gmra.mxu0 %v5418
    %v5457 = vpop.f32.mrf.mxu0
    %v5458 = vadd.f32 0.0, %v5457
    %5459 = vmatmul.f32.gmra.mxu0 %v5422
    %v5460 = vpop.f32.mrf.mxu0
    %v5461 = vadd.f32 0.0, %v5460
    %5462 = vdwg.mxu0
    %v5463 = vadd.f32 %v5410, %v5458
    %v5464 = vadd.f32 %v5413, %v5461
    %s5465 = scalar_lea.vmem [#allocation5], 3
    %v5466 = vld [vmem:[%s5465] ss:$8 sm:$0xf]
    %v5467 = vld [vmem:[%s5465] ss:$8 sm:$0xf0]
    %v5468 = vor.u32 %v5466, %v5467
    %s5469 = scalar_lea.vmem [#allocation5], 67
    %v5470 = vld [vmem:[%s5469] ss:$8 sm:$0xf]
    %v5471 = vld [vmem:[%s5469] ss:$8 sm:$0xf0]
    %v5472 = vor.u32 %v5470, %v5471
    %s5473 = scalar_lea.vmem %s5, 384
    %v5474 = vld [vmem:[%s5473] sm:$0xff]
    %v5475 = vld [vmem:[%s5473 + $0x8] sm:$0xff]
    %v5476 = vld [vmem:[%s5473 + $0x10] sm:$0xff]
    %v5477 = vld [vmem:[%s5473 + $0x18] sm:$0xff]
    %v5478 = vld [vmem:[%s5473 + $0x20] sm:$0xff]
    %v5479 = vld [vmem:[%s5473 + $0x28] sm:$0xff]
    %v5480 = vld [vmem:[%s5473 + $0x30] sm:$0xff]
    %v5481 = vld [vmem:[%s5473 + $0x38] sm:$0xff]
    %v5482 = vld [vmem:[%s5473 + $0x40] sm:$0xff]
    %v5483 = vld [vmem:[%s5473 + $0x48] sm:$0xff]
    %v5484 = vld [vmem:[%s5473 + $0x50] sm:$0xff]
    %v5485 = vld [vmem:[%s5473 + $0x58] sm:$0xff]
    %v5486 = vld [vmem:[%s5473 + $0x60] sm:$0xff]
    %v5487 = vld [vmem:[%s5473 + $0x68] sm:$0xff]
    %v5488 = vld [vmem:[%s5473 + $0x70] sm:$0xff]
    %v5489 = vld [vmem:[%s5473 + $0x78] sm:$0xff]
    %5490 = vmatpush.msra.mxu0 %v5489
    %5491 = vmatpush.msra.mxu0 %v5488
    %5492 = vmatpush.msra.mxu0 %v5487
    %5493 = vmatpush.msra.mxu0 %v5486
    %5494 = vmatpush.msra.mxu0 %v5485
    %5495 = vmatpush.msra.mxu0 %v5484
    %5496 = vmatpush.msra.mxu0 %v5483
    %5497 = vmatpush.msra.mxu0 %v5482
    %5498 = vmatpush.msra.mxu0 %v5481
    %5499 = vmatpush.msra.mxu0 %v5480
    %5500 = vmatpush.msra.mxu0 %v5479
    %5501 = vmatpush.msra.mxu0 %v5478
    %5502 = vmatpush.msra.mxu0 %v5477
    %5503 = vmatpush.msra.mxu0 %v5476
    %5504 = vmatpush.msra.mxu0 %v5475
    %5505 = vmatpush.msra.mxu0 %v5474
    %5506 = vmatmul.f32.gmra.mxu0 %v5468
    %v5507 = vpop.f32.mrf.mxu0
    %v5508 = vadd.f32 0.0, %v5507
    %5509 = vmatmul.f32.gmra.mxu0 %v5472
    %v5510 = vpop.f32.mrf.mxu0
    %v5511 = vadd.f32 0.0, %v5510
    %5512 = vdwg.mxu0
    %v5513 = vadd.f32 %v5463, %v5508
    %v5514 = vadd.f32 %v5464, %v5511
    %s5515 = scalar_lea.vmem [#allocation5], 4
    %v5516 = vld [vmem:[%s5515] ss:$8 sm:$0xf]
    %v5517 = vld [vmem:[%s5515] ss:$8 sm:$0xf0]
    %v5518 = vor.u32 %v5516, %v5517
    %s5519 = scalar_lea.vmem [#allocation5], 68
    %v5520 = vld [vmem:[%s5519] ss:$8 sm:$0xf]
    %v5521 = vld [vmem:[%s5519] ss:$8 sm:$0xf0]
    %v5522 = vor.u32 %v5520, %v5521
    %s5523 = scalar_lea.vmem %s5, 512
    %v5524 = vld [vmem:[%s5523] sm:$0xff]
    %v5525 = vld [vmem:[%s5523 + $0x8] sm:$0xff]
    %v5526 = vld [vmem:[%s5523 + $0x10] sm:$0xff]
    %v5527 = vld [vmem:[%s5523 + $0x18] sm:$0xff]
    %v5528 = vld [vmem:[%s5523 + $0x20] sm:$0xff]
    %v5529 = vld [vmem:[%s5523 + $0x28] sm:$0xff]
    %v5530 = vld [vmem:[%s5523 + $0x30] sm:$0xff]
    %v5531 = vld [vmem:[%s5523 + $0x38] sm:$0xff]
    %v5532 = vld [vmem:[%s5523 + $0x40] sm:$0xff]
    %v5533 = vld [vmem:[%s5523 + $0x48] sm:$0xff]
    %v5534 = vld [vmem:[%s5523 + $0x50] sm:$0xff]
    %v5535 = vld [vmem:[%s5523 + $0x58] sm:$0xff]
    %v5536 = vld [vmem:[%s5523 + $0x60] sm:$0xff]
    %v5537 = vld [vmem:[%s5523 + $0x68] sm:$0xff]
    %v5538 = vld [vmem:[%s5523 + $0x70] sm:$0xff]
    %v5539 = vld [vmem:[%s5523 + $0x78] sm:$0xff]
    %5540 = vmatpush.msra.mxu0 %v5539
    %5541 = vmatpush.msra.mxu0 %v5538
    %5542 = vmatpush.msra.mxu0 %v5537
    %5543 = vmatpush.msra.mxu0 %v5536
    %5544 = vmatpush.msra.mxu0 %v5535
    %5545 = vmatpush.msra.mxu0 %v5534
    %5546 = vmatpush.msra.mxu0 %v5533
    %5547 = vmatpush.msra.mxu0 %v5532
    %5548 = vmatpush.msra.mxu0 %v5531
    %5549 = vmatpush.msra.mxu0 %v5530
    %5550 = vmatpush.msra.mxu0 %v5529
    %5551 = vmatpush.msra.mxu0 %v5528
    %5552 = vmatpush.msra.mxu0 %v5527
    %5553 = vmatpush.msra.mxu0 %v5526
    %5554 = vmatpush.msra.mxu0 %v5525
    %5555 = vmatpush.msra.mxu0 %v5524
    %5556 = vmatmul.f32.gmra.mxu0 %v5518
    %v5557 = vpop.f32.mrf.mxu0
    %v5558 = vadd.f32 0.0, %v5557
    %5559 = vmatmul.f32.gmra.mxu0 %v5522
    %v5560 = vpop.f32.mrf.mxu0
    %v5561 = vadd.f32 0.0, %v5560
    %5562 = vdwg.mxu0
    %v5563 = vadd.f32 %v5513, %v5558
    %v5564 = vadd.f32 %v5514, %v5561
    %v5565 = vld [vmem:[%s6] sm:$0x1]
    %v5567 = vperm.slane %v5565, 0
    %v5569 = vadd.f32 %v5563, %v5567
    %v5570 = vadd.f32 %v5564, %v5567
    %v5571 = vmax.f32 %v5569, 0.0
    %v5572 = vmax.f32 %v5570, 0.0
    %v5573 = vld [vmem:[%s7] sm:$0xff]
    %v5574 = vld [vmem:[%s7 + $0x8] sm:$0xff]
    %v5575 = vld [vmem:[%s7 + $0x10] sm:$0xff]
    %v5576 = vld [vmem:[%s7 + $0x18] sm:$0xff]
    %v5577 = vld [vmem:[%s7 + $0x20] sm:$0xff]
    %v5578 = vld [vmem:[%s7 + $0x28] sm:$0xff]
    %v5579 = vld [vmem:[%s7 + $0x30] sm:$0xff]
    %v5580 = vld [vmem:[%s7 + $0x38] sm:$0xff]
    %v5581 = vld [vmem:[%s7 + $0x40] sm:$0xff]
    %v5582 = vld [vmem:[%s7 + $0x48] sm:$0xff]
    %v5583 = vld [vmem:[%s7 + $0x50] sm:$0xff]
    %v5584 = vld [vmem:[%s7 + $0x58] sm:$0xff]
    %v5585 = vld [vmem:[%s7 + $0x60] sm:$0xff]
    %v5586 = vld [vmem:[%s7 + $0x68] sm:$0xff]
    %v5587 = vld [vmem:[%s7 + $0x70] sm:$0xff]
    %v5588 = vld [vmem:[%s7 + $0x78] sm:$0xff]
    %v5589 = vld [vmem:[%s8] sm:$0x1]
    %v5591 = vperm.slane %v5589, 0
    %5593 = vmatpush.msra.mxu0 %v5588
    %5594 = vmatpush.msra.mxu0 %v5587
    %5595 = vmatpush.msra.mxu0 %v5586
    %5596 = vmatpush.msra.mxu0 %v5585
    %5597 = vmatpush.msra.mxu0 %v5584
    %5598 = vmatpush.msra.mxu0 %v5583
    %5599 = vmatpush.msra.mxu0 %v5582
    %5600 = vmatpush.msra.mxu0 %v5581
    %5601 = vmatpush.msra.mxu0 %v5580
    %5602 = vmatpush.msra.mxu0 %v5579
    %5603 = vmatpush.msra.mxu0 %v5578
    %5604 = vmatpush.msra.mxu0 %v5577
    %5605 = vmatpush.msra.mxu0 %v5576
    %5606 = vmatpush.msra.mxu0 %v5575
    %5607 = vmatpush.msra.mxu0 %v5574
    %5608 = vmatpush.msra.mxu0 %v5573
    %5609 = vmatmul.f32.gmra.mxu0 %v5571
    %v5610 = vpop.f32.mrf.mxu0
    %v5611 = vadd.f32 %v5591, %v5610
    %5612 = vmatmul.f32.gmra.mxu0 %v5572
    %v5613 = vpop.f32.mrf.mxu0
    %v5614 = vadd.f32 %v5591, %v5613
    %5615 = vdwg.mxu0
    %v5616 = vmax.f32 %v5611, 0.0
    %v5617 = vmax.f32 %v5614, 0.0
    %v5618 = vld [vmem:[%s9] sm:$0xff]
    %v5619 = vld [vmem:[%s9 + $0x8] sm:$0xff]
    %v5620 = vld [vmem:[%s9 + $0x10] sm:$0xff]
    %v5621 = vld [vmem:[%s9 + $0x18] sm:$0xff]
    %v5622 = vld [vmem:[%s9 + $0x20] sm:$0xff]
    %v5623 = vld [vmem:[%s9 + $0x28] sm:$0xff]
    %v5624 = vld [vmem:[%s9 + $0x30] sm:$0xff]
    %v5625 = vld [vmem:[%s9 + $0x38] sm:$0xff]
    %v5626 = vld [vmem:[%s9 + $0x40] sm:$0xff]
    %v5627 = vld [vmem:[%s9 + $0x48] sm:$0xff]
    %v5628 = vld [vmem:[%s9 + $0x50] sm:$0xff]
    %v5629 = vld [vmem:[%s9 + $0x58] sm:$0xff]
    %v5630 = vld [vmem:[%s9 + $0x60] sm:$0xff]
    %v5631 = vld [vmem:[%s9 + $0x68] sm:$0xff]
    %v5632 = vld [vmem:[%s9 + $0x70] sm:$0xff]
    %v5633 = vld [vmem:[%s9 + $0x78] sm:$0xff]
    %v5634 = vld [vmem:[%s10] sm:$0x1]
    %v5636 = vperm.slane %v5634, 0
    %5638 = vmatpush.msra.mxu0 %v5633
    %5639 = vmatpush.msra.mxu0 %v5632
    %5640 = vmatpush.msra.mxu0 %v5631
    %5641 = vmatpush.msra.mxu0 %v5630
    %5642 = vmatpush.msra.mxu0 %v5629
    %5643 = vmatpush.msra.mxu0 %v5628
    %5644 = vmatpush.msra.mxu0 %v5627
    %5645 = vmatpush.msra.mxu0 %v5626
    %5646 = vmatpush.msra.mxu0 %v5625
    %5647 = vmatpush.msra.mxu0 %v5624
    %5648 = vmatpush.msra.mxu0 %v5623
    %5649 = vmatpush.msra.mxu0 %v5622
    %5650 = vmatpush.msra.mxu0 %v5621
    %5651 = vmatpush.msra.mxu0 %v5620
    %5652 = vmatpush.msra.mxu0 %v5619
    %5653 = vmatpush.msra.mxu0 %v5618
    %5654 = vmatmul.f32.gmra.mxu0 %v5616
    %v5655 = vpop.f32.mrf.mxu0
    %v5656 = vadd.f32 %v5636, %v5655
    %5657 = vmatmul.f32.gmra.mxu0 %v5617
    %v5658 = vpop.f32.mrf.mxu0
    %v5659 = vadd.f32 %v5636, %v5658
    %5660 = vdwg.mxu0
    %5661 = vmax.xlane.f32.xlu0 %v5656
    %v5662 = vpop.xlane.xlu0 %5661
    %5663 = vmax.xlane.f32.xlu0 %v5659
    %v5664 = vpop.xlane.xlu0 %5663
    %v5665 = vsub.f32 %v5656, %v5662
    %v5666 = vsub.f32 %v5659, %v5664
    %v5667 = vmul.f32 %v5665, 1.442695
    %v5668 = vpow.pop %v5667
    %v5669 = vmul.f32 %v5666, 1.442695
    %v5670 = vpow.pop %v5669
    %5671 = vadd.xlane.f32.xlu0 %v5668
    %v5672 = vpop.xlane.xlu0 %5671
    %5673 = vadd.xlane.f32.xlu0 %v5670
    %v5674 = vpop.xlane.xlu0 %5673
    %v5675 = vlog2.pop %v5672
    %v5676 = vmul.f32 %v5675, 0.6931472
    %v5677 = vlog2.pop %v5674
    %v5678 = vmul.f32 %v5677, 0.6931472
    %v5679 = vsub.f32 %v5665, %v5676
    %v5680 = vsub.f32 %v5666, %v5678
    %5681 = vst [vmem:[#allocation6] sm:$0xff] %v5679
    %5682 = vst [vmem:[#allocation6 + $0x8] sm:$0xff] %v5680
    // Predicated region
    $region46: #{cnn_cifar_forward.1} parent=1 // pred_check
      _
    $region47: #{cnn_cifar_forward.1} parent=1 // pred_check_branch
      %5684 = sbr.rel (0) target = $region49
    $region48: #{cnn_cifar_forward.1} parent=1 // pred_region
      %5686 = vsyncadd [#allocation7], 0
      %s5687 = sshll.u32 [#allocation6], 4
      %s5688 = int_to_ptr.vmem [resolvable:$true] %s5687
      %s5689 = sshll.u32 %s11, 4
      %s5690 = int_to_ptr.hbm [resolvable:$true] %s5689
      %5695 = dma.vmem_to_hbm [thread:$0]  %s5688, 256, %s5690, [#allocation7], 128, 128, 8
    $region49: #{cnn_cifar_forward.1} parent=1 // pred_fallthru
      _
    // Predicated region
    $region50: #{cnn_cifar_forward.1} parent=1 // pred_check
      _
    $region51: #{cnn_cifar_forward.1} parent=1 // pred_check_branch
      %5697 = sbr.rel (0) target = $region53
    $region52: #{cnn_cifar_forward.1} parent=1 // pred_region
      %5699 = dma.done [#allocation7], 256
    $region53: #{cnn_cifar_forward.1} parent=1 // pred_fallthru
      _
    %5700 = vsyncpa [#allocation7], 1

</llo_original>
